<compile_context>
chip_gen: v7x
topology: tpu7x:2x2x1
jax: 0.10.0
libtpu: 0.0.40
codegen_flags: <defaults>
</compile_context>

<pallas_src>
import math

import jax
import jax.numpy as jnp
from jax import lax
from jax.experimental import pallas as pl
from jax.experimental.pallas import tpu as pltpu

_EPS = 1e-5
_INV_SQRT2 = 1.0 / math.sqrt(2.0)
_CONV_DTYPE = jnp.bfloat16            # MXU operand / activation-storage dtype


def _gelu(v):
    # exact (erf-based) GELU, matching torch.nn.GELU() default
    return 0.5 * v * (1.0 + lax.erf(v * _INV_SQRT2))


def _vmem_limit_bytes():
    # Per-generation VMEM cap: ~3/4 of physical, never above 100 MiB.
    #   v5e/v6e (128 MiB) -> 96 MiB ; v7x (64 MiB) -> 48 MiB.
    try:
        cap = int(pltpu.get_tpu_info().vmem_capacity_bytes)
    except Exception:
        cap = 64 * 1024 * 1024        # conservative fallback, safe on all gens
    return min((cap * 3) // 4, 100 * 1024 * 1024)


def _compiler_params():
    return pltpu.CompilerParams(
        dimension_semantics=("parallel",),
        vmem_limit_bytes=_vmem_limit_bytes(),
    )


def _pick_strip_rows(H, W, c_in, c_out, require_even, budget_bytes):
    # Choose the im2col row-strip height tH (a power-of-two divisor of H) so
    # the per-strip bf16 patches scratch + f32 matmul/GELU temporaries stay
    # under `budget_bytes`.  At toy / small sizes this returns H (one strip).
    def fp(th):
        return th * W * (9 * c_in * 2 + 3 * c_out * 4)
    t_h = H
    min_th = 2 if require_even else 1
    while fp(t_h) > budget_bytes:
        nxt = t_h // 2
        if t_h % 2 != 0 or nxt < min_th or (require_even and nxt % 2 != 0):
            break
        t_h = nxt
    return t_h


# ---------------------------------------------------------------------------
# in-kernel helpers (operate on Refs / traced values)
# ---------------------------------------------------------------------------
def _fill_padded(dst, interior):
    # dst: (H+2, W+2, C) VMEM scratch; interior: (H, W, C) value.
    # Zero ONLY the 1-pixel border, then write the interior (no full zero-fill).
    H, W, C = interior.shape
    dt = dst.dtype
    dst[0:1, :, :] = jnp.zeros((1, W + 2, C), dt)
    dst[H + 1:H + 2, :, :] = jnp.zeros((1, W + 2, C), dt)
    dst[:, 0:1, :] = jnp.zeros((H + 2, 1, C), dt)
    dst[:, W + 1:W + 2, :] = jnp.zeros((H + 2, 1, C), dt)
    dst[1:H + 1, 1:W + 1, :] = interior.astype(dt)


def _im2col_strip(patches, padded, r0, t_h, W, C):
    # patches: (t_h, W, 9*C) VMEM scratch; padded: (H+2, W+2, C) VMEM scratch.
    # 9 contiguous window copies of the [r0, r0+t_h) row strip; the conv then
    # becomes a single MXU matmul per strip.
    for ky in range(3):
        for kx in range(3):
            t9 = ky * 3 + kx
            patches[:, :, t9 * C:(t9 + 1) * C] = \
                padded[pl.ds(r0 + ky, t_h), kx:kx + W, :]


def _update_stats(stat, g, s, nb):
    # Chan-style stable (mean, M2) running merge across row strips.
    # stat: (2, C) f32 scratch, rows = (running mean, running M2), zeroed at s=0.
    # g: (nb, C) f32 activations of this strip; s: strip index; nb rows/strip.
    mean_b = jnp.sum(g, axis=0, keepdims=True) * (1.0 / nb)       # (1, C)
    d = g - mean_b
    m2_b = jnp.sum(d * d, axis=0, keepdims=True)                  # (1, C)
    na = (s * nb) * jnp.float32(1.0)                              # prior count
    nbf = jnp.float32(nb)
    nt = na + nbf
    mean_a = stat[0:1, :]
    m2_a = stat[1:2, :]
    delta = mean_b - mean_a
    stat[0:1, :] = mean_a + delta * (nbf / nt)
    stat[1:2, :] = m2_a + m2_b + (delta * delta) * (na * nbf / nt)


# ---------------------------------------------------------------------------
# kernels (one batch element per grid step, row-strip loop inside)
# ---------------------------------------------------------------------------
def conv1_kernel(x_ref, w1_ref, h1_ref, st_ref, xpad, patches, stat):
    # x_ref: (1,H,W,Cin) bf16   w1_ref: (9*Cin, Cmid) bf16
    # h1_ref: (1,H,W,Cmid) bf16   st_ref: (1,2,Cmid) f32
    _, H, W, Cin = x_ref.shape
    Cmid = w1_ref.shape[1]
    t_h = patches.shape[0]
    S = H // t_h
    nb = t_h * W

    _fill_padded(xpad, x_ref[0])
    stat[...] = jnp.zeros_like(stat)

    def strip(s):
        r0 = s * t_h if isinstance(s, int) else pl.multiple_of(s * t_h, t_h)
        _im2col_strip(patches, xpad, r0, t_h, W, Cin)
        acc = jnp.dot(patches[...].reshape(nb, 9 * Cin), w1_ref[...],
                      preferred_element_type=jnp.float32)         # (nb, Cmid) f32
        g = _gelu(acc)
        _update_stats(stat, g, s, nb)
        h1_ref[:, pl.ds(r0, t_h), :, :] = \
            g.astype(h1_ref.dtype).reshape(1, t_h, W, Cmid)

    if S == 1:
        strip(0)                      # static path (no dynamic offsets)
    else:
        pl.loop(0, S)(strip)

    st_ref[...] = stat[...].reshape(1, 2, Cmid)


def conv2_kernel(h1_ref, sh1_ref, w2_ref, hp_ref, st_ref, hpad, patches, stat):
    # h1_ref: (1,H,W,Cmid) bf16   sh1_ref: (1,Cmid) f32 (BN1 shift/scale)
    # w2_ref: (9*Cmid, Cout) bf16 (BN1 scale already folded in)
    # hp_ref: (1,H/2,W/2,Cout) bf16 pooled pre-BN2 output
    # st_ref: (1,2,Cout) f32 full-resolution BN2 statistics
    _, H, W, Cmid = h1_ref.shape
    Cout = w2_ref.shape[1]
    t_h = patches.shape[0]
    S = H // t_h
    nb = t_h * W
    t_ho, Wo = t_h // 2, W // 2

    # BN1: scale folded into w2 in the wrapper; only the shift remains and it
    # must be applied BEFORE zero padding (padding is zero *after* BN in the
    # reference).
    shiftp = sh1_ref[...].astype(h1_ref.dtype).reshape(1, 1, Cmid)
    _fill_padded(hpad, h1_ref[0] + shiftp)
    stat[...] = jnp.zeros_like(stat)

    def strip(s):
        r0 = s * t_h if isinstance(s, int) else pl.multiple_of(s * t_h, t_h)
        _im2col_strip(patches, hpad, r0, t_h, W, Cmid)
        acc = jnp.dot(patches[...].reshape(nb, 9 * Cmid), w2_ref[...],
                      preferred_element_type=jnp.float32)         # (nb, Cout) f32
        g = _gelu(acc)
        _update_stats(stat, g, s, nb)                 # BN2 stats at FULL res
        # fused MaxPool2d(2) on the pre-BN2 activations (BN2 scale > 0)
        g3 = g.reshape(t_h, W, Cout)
        r = g3.reshape(t_ho, 2, W, Cout)
        rows = jnp.maximum(r[:, 0, :, :], r[:, 1, :, :])          # (t_ho, W, Cout)
        c = rows.reshape(t_ho, Wo, 2, Cout)
        pooled = jnp.maximum(c[:, :, 0, :], c[:, :, 1, :])        # (t_ho, Wo, Cout)
        ro = s * t_ho if isinstance(s, int) else pl.multiple_of(s * t_ho, t_ho)
        hp_ref[:, pl.ds(ro, t_ho), :, :] = \
            pooled.astype(hp_ref.dtype).reshape(1, t_ho, Wo, Cout)

    if S == 1:
        strip(0)
    else:
        pl.loop(0, S)(strip)

    st_ref[...] = stat[...].reshape(1, 2, Cout)


# ---------------------------------------------------------------------------
# wrapper-level glue (tiny per-channel reductions / BN folding / epilogue)
# ---------------------------------------------------------------------------
def _combine_block_stats(st, n_per_block):
    # st: (B, 2, C) with rows (mean_b, M2_b).  Stable parallel-variance merge.
    means = st[:, 0, :]                                           # (B, C)
    m2s = st[:, 1, :]                                             # (B, C)
    nb_blocks = st.shape[0]
    mu = jnp.mean(means, axis=0)                                  # (C,)
    m2 = jnp.sum(m2s, axis=0) + n_per_block * jnp.sum((means - mu) ** 2, axis=0)
    var = m2 / (nb_blocks * n_per_block)                          # biased variance
    return mu, var


def make_params(in_ch, out_ch, time_emb_dim, key):
    k1, k2, k3, k4 = jax.random.split(key, 4)
    a1 = 1.0 / math.sqrt(in_ch * 9)
    w1 = jax.random.uniform(k1, (3, 3, in_ch, out_ch), jnp.float32, -a1, a1)
    a2 = 1.0 / math.sqrt(out_ch * 9)
    w2 = jax.random.uniform(k2, (3, 3, out_ch, out_ch), jnp.float32, -a2, a2)
    at = 1.0 / math.sqrt(time_emb_dim)
    wt = jax.random.uniform(k3, (time_emb_dim, out_ch), jnp.float32, -at, at)
    bt = jax.random.uniform(k4, (1, out_ch), jnp.float32, -at, at)
    g1 = jnp.ones((1, out_ch), jnp.float32)
    b1 = jnp.zeros((1, out_ch), jnp.float32)
    g2 = jnp.ones((1, out_ch), jnp.float32)
    b2 = jnp.zeros((1, out_ch), jnp.float32)
    return dict(w1=w1, g1=g1, b1=b1, w2=w2, g2=g2, b2=b2, wt=wt, bt=bt)


def down_forward_nhwc(x_nhwc, t, params):
    """`Down` forward.  x_nhwc: (B,H,W,Cin), t: (B,time_emb_dim).
    Returns (B, H//2, W//2, Cout) f32 in NHWC."""
    B, H, W, Cin = x_nhwc.shape
    assert H % 2 == 0 and W % 2 == 0, "MaxPool2d(2) requires even H, W"
    w1, w2 = params["w1"], params["w2"]
    Cmid, Cout = w1.shape[3], w2.shape[3]

    cp = _compiler_params()
    strip_budget = _vmem_limit_bytes() // 4
    t_h1 = _pick_strip_rows(H, W, Cin, Cmid, require_even=False,
                            budget_bytes=strip_budget)
    t_h2 = _pick_strip_rows(H, W, Cmid, Cout, require_even=True,
                            budget_bytes=strip_budget)

    # bf16 stage-1 input (halves the HBM->VMEM input DMA; MXU operand is bf16)
    x = x_nhwc.astype(_CONV_DTYPE)
    w1r = w1.reshape(9 * Cin, Cmid).astype(_CONV_DTYPE)

    # ---- stage 1: conv1 + GELU (+ per-block BN1 statistics) ----
    h1, st1 = pl.pallas_call(
        conv1_kernel,
        grid=(B,),
        in_specs=[
            pl.BlockSpec((1, H, W, Cin), lambda b: (b, 0, 0, 0)),
            pl.BlockSpec((9 * Cin, Cmid), lambda b: (0, 0)),
        ],
        out_specs=[
            pl.BlockSpec((1, H, W, Cmid), lambda b: (b, 0, 0, 0)),
            pl.BlockSpec((1, 2, Cmid), lambda b: (b, 0, 0)),
        ],
        out_shape=[
            jax.ShapeDtypeStruct((B, H, W, Cmid), _CONV_DTYPE),
            jax.ShapeDtypeStruct((B, 2, Cmid), jnp.float32),
        ],
        scratch_shapes=[
            pltpu.VMEM((H + 2, W + 2, Cin), _CONV_DTYPE),
            pltpu.VMEM((t_h1, W, 9 * Cin), _CONV_DTYPE),
            pltpu.VMEM((2, Cmid), jnp.float32),
        ],
        compiler_params=cp,
    )(x, w1r)

    mu1, var1 = _combine_block_stats(st1, H * W)
    scale1 = params["g1"].reshape(-1) * lax.rsqrt(var1 + _EPS)    # (Cmid,) > 0
    shift1 = params["b1"].reshape(-1) - mu1 * scale1
    # Fold the BN1 scale into the conv2 weights (exact); keep shift/scale
    # in-kernel (must be applied before the zero padding).
    w2r = (w2 * scale1.reshape(1, 1, Cmid, 1)) \
        .reshape(9 * Cmid, Cout).astype(_CONV_DTYPE)
    sh1 = (shift1 / scale1).reshape(1, Cmid).astype(jnp.float32)

    # ---- stage 2: BN1 + conv2 + GELU + fused MaxPool2d(2)
    #               (+ full-resolution BN2 statistics) ----
    hp, st2 = pl.pallas_call(
        conv2_kernel,
        grid=(B,),
        in_specs=[
            pl.BlockSpec((1, H, W, Cmid), lambda b: (b, 0, 0, 0)),
            pl.BlockSpec((1, Cmid), lambda b: (0, 0)),
            pl.BlockSpec((9 * Cmid, Cout), lambda b: (0, 0)),
        ],
        out_specs=[
            pl.BlockSpec((1, H // 2, W // 2, Cout), lambda b: (b, 0, 0, 0)),
            pl.BlockSpec((1, 2, Cout), lambda b: (b, 0, 0)),
        ],
        out_shape=[
            jax.ShapeDtypeStruct((B, H // 2, W // 2, Cout), _CONV_DTYPE),
            jax.ShapeDtypeStruct((B, 2, Cout), jnp.float32),
        ],
        scratch_shapes=[
            pltpu.VMEM((H + 2, W + 2, Cmid), _CONV_DTYPE),
            pltpu.VMEM((t_h2, W, 9 * Cmid), _CONV_DTYPE),
            pltpu.VMEM((2, Cout), jnp.float32),
        ],
        compiler_params=cp,
    )(h1, sh1, w2r)

    mu2, var2 = _combine_block_stats(st2, H * W)
    scale2 = params["g2"].reshape(-1) * lax.rsqrt(var2 + _EPS)    # (Cout,) > 0
    shift2 = params["b2"].reshape(-1) - mu2 * scale2

    # time embedding: single batch-level XLA matmul + SiLU (wrapper side)
    emb = t.astype(jnp.float32) @ params["wt"].astype(jnp.float32) \
        + params["bt"].astype(jnp.float32)                        # (B, Cout)
    emb = jax.nn.silu(emb)

    # Epilogue (plain XLA elementwise on the 4x-smaller pooled tensor):
    # BN2 affine + broadcast time-embedding add.  Commutes with the fused
    # max-pool because scale2 > 0 (gamma=1).
    out = (hp.astype(jnp.float32) * scale2.reshape(1, 1, 1, Cout)
           + shift2.reshape(1, 1, 1, Cout)
           + emb[:, None, None, :])
    return out


def down_forward(x_nchw, t, params):
    # PyTorch-convention wrapper (NCHW in / NCHW out).  Prefer
    # down_forward_nhwc when the caller can accept NHWC (avoids the two
    # full-activation transposes).
    x = jnp.transpose(x_nchw, (0, 2, 3, 1))
    out = down_forward_nhwc(x, t, params)
    return jnp.transpose(out, (0, 3, 1, 2))


if __name__ == "__main__":
    B, in_ch, out_ch, H, W, time_emb_dim = 2, 4, 8, 16, 16, 32
    key = jax.random.PRNGKey(0)
    kx, kt, kp = jax.random.split(key, 3)
    x = jax.random.normal(kx, (B, in_ch, H, W), jnp.float32)
    t = jax.random.normal(kt, (B, time_emb_dim), jnp.float32)
    params = make_params(in_ch, out_ch, time_emb_dim, kp)

    fwd = jax.jit(down_forward)
    out = fwd(x, t, params)
    out = jax.block_until_ready(out)
    assert out.shape == (B, out_ch, H // 2, W // 2), out.shape
    assert bool(jnp.all(jnp.isfinite(out)))
    print("KERNEL_OK")
</pallas_src>

<mosaic_0001>
module attributes {stable_mosaic.version = 11 : i64} {
  func.func @conv1_kernel(%arg0: i32, %arg1: memref<1x16x16x4xbf16, #tpu.memory_space<vmem>>, %arg2: memref<36x8xbf16, #tpu.memory_space<vmem>>, %arg3: memref<1x16x16x8xbf16, #tpu.memory_space<vmem>>, %arg4: memref<1x2x8xf32, #tpu.memory_space<vmem>>, %arg5: memref<18x18x4xbf16, #tpu.memory_space<vmem>>, %arg6: memref<16x16x36xbf16, #tpu.memory_space<vmem>>, %arg7: memref<2x8xf32, #tpu.memory_space<vmem>>) attributes {dimension_semantics = [#tpu.dimension_semantics<parallel>], iteration_bounds = array<i64: 2>, scalar_prefetch = 0 : i64, scratch_operands = 3 : i64, tpu.core_type = #tpu.core_type<tc>, window_params = [{transform_indices = @transform_0, window_bounds = array<i64: 1, 16, 16, 4>}, {pipeline_mode = #tpu.pipeline_mode<synchronous>, transform_indices = @transform_1, window_bounds = array<i64: 36, 8>}, {transform_indices = @transform_2, window_bounds = array<i64: 1, 16, 16, 8>}, {transform_indices = @transform_3, window_bounds = array<i64: 1, 2, 8>}]} {
    %c0 = arith.constant 0 : index
    %c0_0 = arith.constant 0 : index
    %c0_1 = arith.constant 0 : index
    %c0_2 = arith.constant 0 : index
    %0 = vector.load %arg1[%c0, %c0_0, %c0_1, %c0_2] : memref<1x16x16x4xbf16, #tpu.memory_space<vmem>>, vector<1x16x16x4xbf16>
    %1 = vector.shape_cast %0 : vector<1x16x16x4xbf16> to vector<16x16x4xbf16>
    %cst = arith.constant 0.000000e+00 : bf16
    %2 = vector.broadcast %cst : bf16 to vector<1x18x4xbf16>
    %c0_3 = arith.constant 0 : index
    %c0_4 = arith.constant 0 : index
    %c0_5 = arith.constant 0 : index
    %3 = vector.load %arg5[%c0_3, %c0_4, %c0_5] : memref<18x18x4xbf16, #tpu.memory_space<vmem>>, vector<1x18x4xbf16>
    tpu.vector_store %arg5[%c0_3, %c0_4, %c0_5], %2 {strides = array<i32>} : memref<18x18x4xbf16, #tpu.memory_space<vmem>>, vector<1x18x4xbf16>,
    %cst_6 = arith.constant 0.000000e+00 : bf16
    %4 = vector.broadcast %cst_6 : bf16 to vector<1x18x4xbf16>
    %c17 = arith.constant 17 : index
    %c0_7 = arith.constant 0 : index
    %c0_8 = arith.constant 0 : index
    %5 = vector.load %arg5[%c17, %c0_7, %c0_8] : memref<18x18x4xbf16, #tpu.memory_space<vmem>>, vector<1x18x4xbf16>
    tpu.vector_store %arg5[%c17, %c0_7, %c0_8], %4 {strides = array<i32>} : memref<18x18x4xbf16, #tpu.memory_space<vmem>>, vector<1x18x4xbf16>,
    %cst_9 = arith.constant 0.000000e+00 : bf16
    %6 = vector.broadcast %cst_9 : bf16 to vector<18x1x4xbf16>
    %c0_10 = arith.constant 0 : index
    %c0_11 = arith.constant 0 : index
    %c0_12 = arith.constant 0 : index
    %7 = vector.load %arg5[%c0_10, %c0_11, %c0_12] : memref<18x18x4xbf16, #tpu.memory_space<vmem>>, vector<18x1x4xbf16>
    tpu.vector_store %arg5[%c0_10, %c0_11, %c0_12], %6 {strides = array<i32>} : memref<18x18x4xbf16, #tpu.memory_space<vmem>>, vector<18x1x4xbf16>,
    %cst_13 = arith.constant 0.000000e+00 : bf16
    %8 = vector.broadcast %cst_13 : bf16 to vector<18x1x4xbf16>
    %c0_14 = arith.constant 0 : index
    %c17_15 = arith.constant 17 : index
    %c0_16 = arith.constant 0 : index
    %9 = vector.load %arg5[%c0_14, %c17_15, %c0_16] : memref<18x18x4xbf16, #tpu.memory_space<vmem>>, vector<18x1x4xbf16>
    tpu.vector_store %arg5[%c0_14, %c17_15, %c0_16], %8 {strides = array<i32>} : memref<18x18x4xbf16, #tpu.memory_space<vmem>>, vector<18x1x4xbf16>,
    %c1 = arith.constant 1 : index
    %c1_17 = arith.constant 1 : index
    %c0_18 = arith.constant 0 : index
    %10 = vector.load %arg5[%c1, %c1_17, %c0_18] : memref<18x18x4xbf16, #tpu.memory_space<vmem>>, vector<16x16x4xbf16>
    tpu.vector_store %arg5[%c1, %c1_17, %c0_18], %1 {strides = array<i32>} : memref<18x18x4xbf16, #tpu.memory_space<vmem>>, vector<16x16x4xbf16>,
    %cst_19 = arith.constant 0.000000e+00 : f32
    %11 = vector.broadcast %cst_19 : f32 to vector<2x8xf32>
    %c0_20 = arith.constant 0 : index
    %c0_21 = arith.constant 0 : index
    %12 = vector.load %arg7[%c0_20, %c0_21] : memref<2x8xf32, #tpu.memory_space<vmem>>, vector<2x8xf32>
    tpu.vector_store %arg7[%c0_20, %c0_21], %11 {strides = array<i32>} : memref<2x8xf32, #tpu.memory_space<vmem>>, vector<2x8xf32>,
    %c0_22 = arith.constant 0 : index
    %c0_23 = arith.constant 0 : index
    %c0_24 = arith.constant 0 : index
    %13 = vector.load %arg5[%c0_22, %c0_23, %c0_24] : memref<18x18x4xbf16, #tpu.memory_space<vmem>>, vector<16x16x4xbf16>
    %c0_25 = arith.constant 0 : index
    %c0_26 = arith.constant 0 : index
    %c0_27 = arith.constant 0 : index
    %14 = vector.load %arg6[%c0_25, %c0_26, %c0_27] : memref<16x16x36xbf16, #tpu.memory_space<vmem>>, vector<16x16x4xbf16>
    tpu.vector_store %arg6[%c0_25, %c0_26, %c0_27], %13 {strides = array<i32>} : memref<16x16x36xbf16, #tpu.memory_space<vmem>>, vector<16x16x4xbf16>,
    %c0_28 = arith.constant 0 : index
    %c1_29 = arith.constant 1 : index
    %c0_30 = arith.constant 0 : index
    %15 = vector.load %arg5[%c0_28, %c1_29, %c0_30] : memref<18x18x4xbf16, #tpu.memory_space<vmem>>, vector<16x16x4xbf16>
    %c0_31 = arith.constant 0 : index
    %c0_32 = arith.constant 0 : index
    %c4 = arith.constant 4 : index
    %16 = vector.load %arg6[%c0_31, %c0_32, %c4] : memref<16x16x36xbf16, #tpu.memory_space<vmem>>, vector<16x16x4xbf16>
    tpu.vector_store %arg6[%c0_31, %c0_32, %c4], %15 {strides = array<i32>} : memref<16x16x36xbf16, #tpu.memory_space<vmem>>, vector<16x16x4xbf16>,
    %c0_33 = arith.constant 0 : index
    %c2 = arith.constant 2 : index
    %c0_34 = arith.constant 0 : index
    %17 = vector.load %arg5[%c0_33, %c2, %c0_34] : memref<18x18x4xbf16, #tpu.memory_space<vmem>>, vector<16x16x4xbf16>
    %c0_35 = arith.constant 0 : index
    %c0_36 = arith.constant 0 : index
    %c8 = arith.constant 8 : index
    %18 = vector.load %arg6[%c0_35, %c0_36, %c8] : memref<16x16x36xbf16, #tpu.memory_space<vmem>>, vector<16x16x4xbf16>
    tpu.vector_store %arg6[%c0_35, %c0_36, %c8], %17 {strides = array<i32>} : memref<16x16x36xbf16, #tpu.memory_space<vmem>>, vector<16x16x4xbf16>,
    %c1_37 = arith.constant 1 : index
    %c0_38 = arith.constant 0 : index
    %c0_39 = arith.constant 0 : index
    %19 = vector.load %arg5[%c1_37, %c0_38, %c0_39] : memref<18x18x4xbf16, #tpu.memory_space<vmem>>, vector<16x16x4xbf16>
    %c0_40 = arith.constant 0 : index
    %c0_41 = arith.constant 0 : index
    %c12 = arith.constant 12 : index
    %20 = vector.load %arg6[%c0_40, %c0_41, %c12] : memref<16x16x36xbf16, #tpu.memory_space<vmem>>, vector<16x16x4xbf16>
    tpu.vector_store %arg6[%c0_40, %c0_41, %c12], %19 {strides = array<i32>} : memref<16x16x36xbf16, #tpu.memory_space<vmem>>, vector<16x16x4xbf16>,
    %c1_42 = arith.constant 1 : index
    %c1_43 = arith.constant 1 : index
    %c0_44 = arith.constant 0 : index
    %21 = vector.load %arg5[%c1_42, %c1_43, %c0_44] : memref<18x18x4xbf16, #tpu.memory_space<vmem>>, vector<16x16x4xbf16>
    %c0_45 = arith.constant 0 : index
    %c0_46 = arith.constant 0 : index
    %c16 = arith.constant 16 : index
    %22 = vector.load %arg6[%c0_45, %c0_46, %c16] : memref<16x16x36xbf16, #tpu.memory_space<vmem>>, vector<16x16x4xbf16>
    tpu.vector_store %arg6[%c0_45, %c0_46, %c16], %21 {strides = array<i32>} : memref<16x16x36xbf16, #tpu.memory_space<vmem>>, vector<16x16x4xbf16>,
    %c1_47 = arith.constant 1 : index
    %c2_48 = arith.constant 2 : index
    %c0_49 = arith.constant 0 : index
    %23 = vector.load %arg5[%c1_47, %c2_48, %c0_49] : memref<18x18x4xbf16, #tpu.memory_space<vmem>>, vector<16x16x4xbf16>
    %c0_50 = arith.constant 0 : index
    %c0_51 = arith.constant 0 : index
    %c20 = arith.constant 20 : index
    %24 = vector.load %arg6[%c0_50, %c0_51, %c20] : memref<16x16x36xbf16, #tpu.memory_space<vmem>>, vector<16x16x4xbf16>
    tpu.vector_store %arg6[%c0_50, %c0_51, %c20], %23 {strides = array<i32>} : memref<16x16x36xbf16, #tpu.memory_space<vmem>>, vector<16x16x4xbf16>,
    %c2_52 = arith.constant 2 : index
    %c0_53 = arith.constant 0 : index
    %c0_54 = arith.constant 0 : index
    %25 = vector.load %arg5[%c2_52, %c0_53, %c0_54] : memref<18x18x4xbf16, #tpu.memory_space<vmem>>, vector<16x16x4xbf16>
    %c0_55 = arith.constant 0 : index
    %c0_56 = arith.constant 0 : index
    %c24 = arith.constant 24 : index
    %26 = vector.load %arg6[%c0_55, %c0_56, %c24] : memref<16x16x36xbf16, #tpu.memory_space<vmem>>, vector<16x16x4xbf16>
    tpu.vector_store %arg6[%c0_55, %c0_56, %c24], %25 {strides = array<i32>} : memref<16x16x36xbf16, #tpu.memory_space<vmem>>, vector<16x16x4xbf16>,
    %c2_57 = arith.constant 2 : index
    %c1_58 = arith.constant 1 : index
    %c0_59 = arith.constant 0 : index
    %27 = vector.load %arg5[%c2_57, %c1_58, %c0_59] : memref<18x18x4xbf16, #tpu.memory_space<vmem>>, vector<16x16x4xbf16>
    %c0_60 = arith.constant 0 : index
    %c0_61 = arith.constant 0 : index
    %c28 = arith.constant 28 : index
    %28 = vector.load %arg6[%c0_60, %c0_61, %c28] : memref<16x16x36xbf16, #tpu.memory_space<vmem>>, vector<16x16x4xbf16>
    tpu.vector_store %arg6[%c0_60, %c0_61, %c28], %27 {strides = array<i32>} : memref<16x16x36xbf16, #tpu.memory_space<vmem>>, vector<16x16x4xbf16>,
    %c2_62 = arith.constant 2 : index
    %c2_63 = arith.constant 2 : index
    %c0_64 = arith.constant 0 : index
    %29 = vector.load %arg5[%c2_62, %c2_63, %c0_64] : memref<18x18x4xbf16, #tpu.memory_space<vmem>>, vector<16x16x4xbf16>
    %c0_65 = arith.constant 0 : index
    %c0_66 = arith.constant 0 : index
    %c32 = arith.constant 32 : index
    %30 = vector.load %arg6[%c0_65, %c0_66, %c32] : memref<16x16x36xbf16, #tpu.memory_space<vmem>>, vector<16x16x4xbf16>
    tpu.vector_store %arg6[%c0_65, %c0_66, %c32], %29 {strides = array<i32>} : memref<16x16x36xbf16, #tpu.memory_space<vmem>>, vector<16x16x4xbf16>,
    %c0_67 = arith.constant 0 : index
    %c0_68 = arith.constant 0 : index
    %c0_69 = arith.constant 0 : index
    %31 = vector.load %arg6[%c0_67, %c0_68, %c0_69] : memref<16x16x36xbf16, #tpu.memory_space<vmem>>, vector<16x16x36xbf16>
    %32 = vector.shape_cast %31 : vector<16x16x36xbf16> to vector<256x36xbf16>
    %c0_70 = arith.constant 0 : index
    %c0_71 = arith.constant 0 : index
    %33 = vector.load %arg2[%c0_70, %c0_71] : memref<36x8xbf16, #tpu.memory_space<vmem>>, vector<36x8xbf16>
    %cst_72 = arith.constant dense<0.000000e+00> : vector<256x8xf32>
    %34 = tpu.matmul %32, %33, %cst_72 {dimension_numbers = #tpu.dot_dimension_numbers<[1], [0], [0], [1], [0, 0, 1, 1], [], []>} : vector<256x36xbf16>, vector<36x8xbf16>, vector<256x8xf32> -> vector<256x8xf32>
    %cst_73 = arith.constant 5.000000e-01 : f32
    %35 = vector.broadcast %cst_73 : f32 to vector<256x8xf32>
    %36 = arith.mulf %35, %34 : vector<256x8xf32>
    %cst_74 = arith.constant 0.707106769 : f32
    %37 = vector.broadcast %cst_74 : f32 to vector<256x8xf32>
    %38 = arith.mulf %34, %37 : vector<256x8xf32>
    %39 = math.erf %38 : vector<256x8xf32>
    %cst_75 = arith.constant 1.000000e+00 : f32
    %40 = vector.broadcast %cst_75 : f32 to vector<256x8xf32>
    %41 = arith.addf %40, %39 : vector<256x8xf32>
    %42 = arith.mulf %36, %41 : vector<256x8xf32>
    %cst_76 = arith.constant dense<0.000000e+00> : vector<8xf32>
    %43 = vector.multi_reduction <add>, %42, %cst_76 [0] : vector<256x8xf32> to vector<8xf32>
    %44 = vector.shape_cast %43 : vector<8xf32> to vector<1x8xf32>
    %cst_77 = arith.constant 3.906250e-03 : f32
    %45 = vector.broadcast %cst_77 : f32 to vector<1x8xf32>
    %46 = arith.mulf %44, %45 : vector<1x8xf32>
    %47 = vector.broadcast %46 : vector<1x8xf32> to vector<256x8xf32>
    %48 = arith.subf %42, %47 : vector<256x8xf32>
    %49 = arith.mulf %48, %48 : vector<256x8xf32>
    %cst_78 = arith.constant dense<0.000000e+00> : vector<8xf32>
    %50 = vector.multi_reduction <add>, %49, %cst_78 [0] : vector<256x8xf32> to vector<8xf32>
    %51 = vector.shape_cast %50 : vector<8xf32> to vector<1x8xf32>
    %cst_79 = arith.constant 0.000000e+00 : f32
    %cst_80 = arith.constant 1.000000e+00 : f32
    %52 = arith.mulf %cst_79, %cst_80 : f32
    %cst_81 = arith.constant 2.560000e+02 : f32
    %53 = arith.addf %52, %cst_81 : f32
    %c0_82 = arith.constant 0 : index
    %c0_83 = arith.constant 0 : index
    %54 = vector.load %arg7[%c0_82, %c0_83] : memref<2x8xf32, #tpu.memory_space<vmem>>, vector<1x8xf32>
    %c1_84 = arith.constant 1 : index
    %c0_85 = arith.constant 0 : index
    %55 = vector.load %arg7[%c1_84, %c0_85] : memref<2x8xf32, #tpu.memory_space<vmem>>, vector<1x8xf32>
    %56 = arith.subf %46, %54 : vector<1x8xf32>
    %cst_86 = arith.constant 2.560000e+02 : f32
    %57 = arith.divf %cst_86, %53 : f32
    %58 = vector.broadcast %57 : f32 to vector<1x8xf32>
    %59 = arith.mulf %56, %58 : vector<1x8xf32>
    %60 = arith.addf %54, %59 : vector<1x8xf32>
    %c0_87 = arith.constant 0 : index
    %c0_88 = arith.constant 0 : index
    %61 = vector.load %arg7[%c0_87, %c0_88] : memref<2x8xf32, #tpu.memory_space<vmem>>, vector<1x8xf32>
    tpu.vector_store %arg7[%c0_87, %c0_88], %60 {strides = array<i32>} : memref<2x8xf32, #tpu.memory_space<vmem>>, vector<1x8xf32>,
    %62 = arith.addf %55, %51 : vector<1x8xf32>
    %63 = arith.mulf %56, %56 : vector<1x8xf32>
    %cst_89 = arith.constant 2.560000e+02 : f32
    %64 = arith.mulf %52, %cst_89 : f32
    %65 = arith.divf %64, %53 : f32
    %66 = vector.broadcast %65 : f32 to vector<1x8xf32>
    %67 = arith.mulf %63, %66 : vector<1x8xf32>
    %68 = arith.addf %62, %67 : vector<1x8xf32>
    %c1_90 = arith.constant 1 : index
    %c0_91 = arith.constant 0 : index
    %69 = vector.load %arg7[%c1_90, %c0_91] : memref<2x8xf32, #tpu.memory_space<vmem>>, vector<1x8xf32>
    tpu.vector_store %arg7[%c1_90, %c0_91], %68 {strides = array<i32>} : memref<2x8xf32, #tpu.memory_space<vmem>>, vector<1x8xf32>,
    %70 = arith.truncf %42 : vector<256x8xf32> to vector<256x8xbf16>
    %71 = vector.shape_cast %70 : vector<256x8xbf16> to vector<1x16x16x8xbf16>
    %c0_92 = arith.constant 0 : index
    %c0_93 = arith.constant 0 : index
    %c0_94 = arith.constant 0 : index
    %c0_95 = arith.constant 0 : index
    %72 = vector.load %arg3[%c0_92, %c0_93, %c0_94, %c0_95] : memref<1x16x16x8xbf16, #tpu.memory_space<vmem>>, vector<1x16x16x8xbf16>
    tpu.vector_store %arg3[%c0_92, %c0_93, %c0_94, %c0_95], %71 {strides = array<i32>} : memref<1x16x16x8xbf16, #tpu.memory_space<vmem>>, vector<1x16x16x8xbf16>,
    %c0_96 = arith.constant 0 : index
    %c0_97 = arith.constant 0 : index
    %73 = vector.load %arg7[%c0_96, %c0_97] : memref<2x8xf32, #tpu.memory_space<vmem>>, vector<2x8xf32>
    %74 = vector.shape_cast %73 : vector<2x8xf32> to vector<1x2x8xf32>
    %c0_98 = arith.constant 0 : index
    %c0_99 = arith.constant 0 : index
    %c0_100 = arith.constant 0 : index
    %75 = vector.load %arg4[%c0_98, %c0_99, %c0_100] : memref<1x2x8xf32, #tpu.memory_space<vmem>>, vector<1x2x8xf32>
    tpu.vector_store %arg4[%c0_98, %c0_99, %c0_100], %74 {strides = array<i32>} : memref<1x2x8xf32, #tpu.memory_space<vmem>>, vector<1x2x8xf32>,
    return
  }
  func.func @transform_0(%arg0: i32) -> (i32, i32, i32, i32) {
    %c0_i32 = arith.constant 0 : i32
    %c0_i32_0 = arith.constant 0 : i32
    %c0_i32_1 = arith.constant 0 : i32
    %c0_i32_2 = arith.constant 0 : i32
    return %arg0, %c0_i32, %c0_i32_0, %c0_i32_1 : i32, i32, i32, i32
  }
  func.func @transform_1(%arg0: i32) -> (i32, i32) {
    %c0_i32 = arith.constant 0 : i32
    %c0_i32_0 = arith.constant 0 : i32
    %c0_i32_1 = arith.constant 0 : i32
    return %c0_i32, %c0_i32_0 : i32, i32
  }
  func.func @transform_2(%arg0: i32) -> (i32, i32, i32, i32) {
    %c0_i32 = arith.constant 0 : i32
    %c0_i32_0 = arith.constant 0 : i32
    %c0_i32_1 = arith.constant 0 : i32
    %c0_i32_2 = arith.constant 0 : i32
    return %arg0, %c0_i32, %c0_i32_0, %c0_i32_1 : i32, i32, i32, i32
  }
  func.func @transform_3(%arg0: i32) -> (i32, i32, i32) {
    %c0_i32 = arith.constant 0 : i32
    %c0_i32_0 = arith.constant 0 : i32
    %c0_i32_1 = arith.constant 0 : i32
    return %arg0, %c0_i32, %c0_i32_0 : i32, i32, i32
  }
}

module attributes {stable_mosaic.version = 11 : i64} {
  func.func @conv2_kernel(%arg0: i32, %arg1: memref<1x16x16x8xbf16, #tpu.memory_space<vmem>>, %arg2: memref<1x8xf32, #tpu.memory_space<vmem>>, %arg3: memref<72x8xbf16, #tpu.memory_space<vmem>>, %arg4: memref<1x8x8x8xbf16, #tpu.memory_space<vmem>>, %arg5: memref<1x2x8xf32, #tpu.memory_space<vmem>>, %arg6: memref<18x18x8xbf16, #tpu.memory_space<vmem>>, %arg7: memref<16x16x72xbf16, #tpu.memory_space<vmem>>, %arg8: memref<2x8xf32, #tpu.memory_space<vmem>>) attributes {dimension_semantics = [#tpu.dimension_semantics<parallel>], iteration_bounds = array<i64: 2>, scalar_prefetch = 0 : i64, scratch_operands = 3 : i64, tpu.core_type = #tpu.core_type<tc>, window_params = [{transform_indices = @transform_0, window_bounds = array<i64: 1, 16, 16, 8>}, {pipeline_mode = #tpu.pipeline_mode<synchronous>, transform_indices = @transform_1, window_bounds = array<i64: 1, 8>}, {pipeline_mode = #tpu.pipeline_mode<synchronous>, transform_indices = @transform_2, window_bounds = array<i64: 72, 8>}, {transform_indices = @transform_3, window_bounds = array<i64: 1, 8, 8, 8>}, {transform_indices = @transform_4, window_bounds = array<i64: 1, 2, 8>}]} {
    %c0 = arith.constant 0 : index
    %c0_0 = arith.constant 0 : index
    %0 = vector.load %arg2[%c0, %c0_0] : memref<1x8xf32, #tpu.memory_space<vmem>>, vector<1x8xf32>
    %1 = arith.truncf %0 : vector<1x8xf32> to vector<1x8xbf16>
    %2 = vector.shape_cast %1 : vector<1x8xbf16> to vector<1x1x8xbf16>
    %c0_1 = arith.constant 0 : index
    %c0_2 = arith.constant 0 : index
    %c0_3 = arith.constant 0 : index
    %c0_4 = arith.constant 0 : index
    %3 = vector.load %arg1[%c0_1, %c0_2, %c0_3, %c0_4] : memref<1x16x16x8xbf16, #tpu.memory_space<vmem>>, vector<1x16x16x8xbf16>
    %4 = vector.shape_cast %3 : vector<1x16x16x8xbf16> to vector<16x16x8xbf16>
    %5 = vector.broadcast %2 : vector<1x1x8xbf16> to vector<16x16x8xbf16>
    %6 = arith.addf %4, %5 : vector<16x16x8xbf16>
    %cst = arith.constant 0.000000e+00 : bf16
    %7 = vector.broadcast %cst : bf16 to vector<1x18x8xbf16>
    %c0_5 = arith.constant 0 : index
    %c0_6 = arith.constant 0 : index
    %c0_7 = arith.constant 0 : index
    %8 = vector.load %arg6[%c0_5, %c0_6, %c0_7] : memref<18x18x8xbf16, #tpu.memory_space<vmem>>, vector<1x18x8xbf16>
    tpu.vector_store %arg6[%c0_5, %c0_6, %c0_7], %7 {strides = array<i32>} : memref<18x18x8xbf16, #tpu.memory_space<vmem>>, vector<1x18x8xbf16>,
    %cst_8 = arith.constant 0.000000e+00 : bf16
    %9 = vector.broadcast %cst_8 : bf16 to vector<1x18x8xbf16>
    %c17 = arith.constant 17 : index
    %c0_9 = arith.constant 0 : index
    %c0_10 = arith.constant 0 : index
    %10 = vector.load %arg6[%c17, %c0_9, %c0_10] : memref<18x18x8xbf16, #tpu.memory_space<vmem>>, vector<1x18x8xbf16>
    tpu.vector_store %arg6[%c17, %c0_9, %c0_10], %9 {strides = array<i32>} : memref<18x18x8xbf16, #tpu.memory_space<vmem>>, vector<1x18x8xbf16>,
    %cst_11 = arith.constant 0.000000e+00 : bf16
    %11 = vector.broadcast %cst_11 : bf16 to vector<18x1x8xbf16>
    %c0_12 = arith.constant 0 : index
    %c0_13 = arith.constant 0 : index
    %c0_14 = arith.constant 0 : index
    %12 = vector.load %arg6[%c0_12, %c0_13, %c0_14] : memref<18x18x8xbf16, #tpu.memory_space<vmem>>, vector<18x1x8xbf16>
    tpu.vector_store %arg6[%c0_12, %c0_13, %c0_14], %11 {strides = array<i32>} : memref<18x18x8xbf16, #tpu.memory_space<vmem>>, vector<18x1x8xbf16>,
    %cst_15 = arith.constant 0.000000e+00 : bf16
    %13 = vector.broadcast %cst_15 : bf16 to vector<18x1x8xbf16>
    %c0_16 = arith.constant 0 : index
    %c17_17 = arith.constant 17 : index
    %c0_18 = arith.constant 0 : index
    %14 = vector.load %arg6[%c0_16, %c17_17, %c0_18] : memref<18x18x8xbf16, #tpu.memory_space<vmem>>, vector<18x1x8xbf16>
    tpu.vector_store %arg6[%c0_16, %c17_17, %c0_18], %13 {strides = array<i32>} : memref<18x18x8xbf16, #tpu.memory_space<vmem>>, vector<18x1x8xbf16>,
    %c1 = arith.constant 1 : index
    %c1_19 = arith.constant 1 : index
    %c0_20 = arith.constant 0 : index
    %15 = vector.load %arg6[%c1, %c1_19, %c0_20] : memref<18x18x8xbf16, #tpu.memory_space<vmem>>, vector<16x16x8xbf16>
    tpu.vector_store %arg6[%c1, %c1_19, %c0_20], %6 {strides = array<i32>} : memref<18x18x8xbf16, #tpu.memory_space<vmem>>, vector<16x16x8xbf16>,
    %cst_21 = arith.constant 0.000000e+00 : f32
    %16 = vector.broadcast %cst_21 : f32 to vector<2x8xf32>
    %c0_22 = arith.constant 0 : index
    %c0_23 = arith.constant 0 : index
    %17 = vector.load %arg8[%c0_22, %c0_23] : memref<2x8xf32, #tpu.memory_space<vmem>>, vector<2x8xf32>
    tpu.vector_store %arg8[%c0_22, %c0_23], %16 {strides = array<i32>} : memref<2x8xf32, #tpu.memory_space<vmem>>, vector<2x8xf32>,
    %c0_24 = arith.constant 0 : index
    %c0_25 = arith.constant 0 : index
    %c0_26 = arith.constant 0 : index
    %18 = vector.load %arg6[%c0_24, %c0_25, %c0_26] : memref<18x18x8xbf16, #tpu.memory_space<vmem>>, vector<16x16x8xbf16>
    %c0_27 = arith.constant 0 : index
    %c0_28 = arith.constant 0 : index
    %c0_29 = arith.constant 0 : index
    %19 = vector.load %arg7[%c0_27, %c0_28, %c0_29] : memref<16x16x72xbf16, #tpu.memory_space<vmem>>, vector<16x16x8xbf16>
    tpu.vector_store %arg7[%c0_27, %c0_28, %c0_29], %18 {strides = array<i32>} : memref<16x16x72xbf16, #tpu.memory_space<vmem>>, vector<16x16x8xbf16>,
    %c0_30 = arith.constant 0 : index
    %c1_31 = arith.constant 1 : index
    %c0_32 = arith.constant 0 : index
    %20 = vector.load %arg6[%c0_30, %c1_31, %c0_32] : memref<18x18x8xbf16, #tpu.memory_space<vmem>>, vector<16x16x8xbf16>
    %c0_33 = arith.constant 0 : index
    %c0_34 = arith.constant 0 : index
    %c8 = arith.constant 8 : index
    %21 = vector.load %arg7[%c0_33, %c0_34, %c8] : memref<16x16x72xbf16, #tpu.memory_space<vmem>>, vector<16x16x8xbf16>
    tpu.vector_store %arg7[%c0_33, %c0_34, %c8], %20 {strides = array<i32>} : memref<16x16x72xbf16, #tpu.memory_space<vmem>>, vector<16x16x8xbf16>,
    %c0_35 = arith.constant 0 : index
    %c2 = arith.constant 2 : index
    %c0_36 = arith.constant 0 : index
    %22 = vector.load %arg6[%c0_35, %c2, %c0_36] : memref<18x18x8xbf16, #tpu.memory_space<vmem>>, vector<16x16x8xbf16>
    %c0_37 = arith.constant 0 : index
    %c0_38 = arith.constant 0 : index
    %c16 = arith.constant 16 : index
    %23 = vector.load %arg7[%c0_37, %c0_38, %c16] : memref<16x16x72xbf16, #tpu.memory_space<vmem>>, vector<16x16x8xbf16>
    tpu.vector_store %arg7[%c0_37, %c0_38, %c16], %22 {strides = array<i32>} : memref<16x16x72xbf16, #tpu.memory_space<vmem>>, vector<16x16x8xbf16>,
    %c1_39 = arith.constant 1 : index
    %c0_40 = arith.constant 0 : index
    %c0_41 = arith.constant 0 : index
    %24 = vector.load %arg6[%c1_39, %c0_40, %c0_41] : memref<18x18x8xbf16, #tpu.memory_space<vmem>>, vector<16x16x8xbf16>
    %c0_42 = arith.constant 0 : index
    %c0_43 = arith.constant 0 : index
    %c24 = arith.constant 24 : index
    %25 = vector.load %arg7[%c0_42, %c0_43, %c24] : memref<16x16x72xbf16, #tpu.memory_space<vmem>>, vector<16x16x8xbf16>
    tpu.vector_store %arg7[%c0_42, %c0_43, %c24], %24 {strides = array<i32>} : memref<16x16x72xbf16, #tpu.memory_space<vmem>>, vector<16x16x8xbf16>,
    %c1_44 = arith.constant 1 : index
    %c1_45 = arith.constant 1 : index
    %c0_46 = arith.constant 0 : index
    %26 = vector.load %arg6[%c1_44, %c1_45, %c0_46] : memref<18x18x8xbf16, #tpu.memory_space<vmem>>, vector<16x16x8xbf16>
    %c0_47 = arith.constant 0 : index
    %c0_48 = arith.constant 0 : index
    %c32 = arith.constant 32 : index
    %27 = vector.load %arg7[%c0_47, %c0_48, %c32] : memref<16x16x72xbf16, #tpu.memory_space<vmem>>, vector<16x16x8xbf16>
    tpu.vector_store %arg7[%c0_47, %c0_48, %c32], %26 {strides = array<i32>} : memref<16x16x72xbf16, #tpu.memory_space<vmem>>, vector<16x16x8xbf16>,
    %c1_49 = arith.constant 1 : index
    %c2_50 = arith.constant 2 : index
    %c0_51 = arith.constant 0 : index
    %28 = vector.load %arg6[%c1_49, %c2_50, %c0_51] : memref<18x18x8xbf16, #tpu.memory_space<vmem>>, vector<16x16x8xbf16>
    %c0_52 = arith.constant 0 : index
    %c0_53 = arith.constant 0 : index
    %c40 = arith.constant 40 : index
    %29 = vector.load %arg7[%c0_52, %c0_53, %c40] : memref<16x16x72xbf16, #tpu.memory_space<vmem>>, vector<16x16x8xbf16>
    tpu.vector_store %arg7[%c0_52, %c0_53, %c40], %28 {strides = array<i32>} : memref<16x16x72xbf16, #tpu.memory_space<vmem>>, vector<16x16x8xbf16>,
    %c2_54 = arith.constant 2 : index
    %c0_55 = arith.constant 0 : index
    %c0_56 = arith.constant 0 : index
    %30 = vector.load %arg6[%c2_54, %c0_55, %c0_56] : memref<18x18x8xbf16, #tpu.memory_space<vmem>>, vector<16x16x8xbf16>
    %c0_57 = arith.constant 0 : index
    %c0_58 = arith.constant 0 : index
    %c48 = arith.constant 48 : index
    %31 = vector.load %arg7[%c0_57, %c0_58, %c48] : memref<16x16x72xbf16, #tpu.memory_space<vmem>>, vector<16x16x8xbf16>
    tpu.vector_store %arg7[%c0_57, %c0_58, %c48], %30 {strides = array<i32>} : memref<16x16x72xbf16, #tpu.memory_space<vmem>>, vector<16x16x8xbf16>,
    %c2_59 = arith.constant 2 : index
    %c1_60 = arith.constant 1 : index
    %c0_61 = arith.constant 0 : index
    %32 = vector.load %arg6[%c2_59, %c1_60, %c0_61] : memref<18x18x8xbf16, #tpu.memory_space<vmem>>, vector<16x16x8xbf16>
    %c0_62 = arith.constant 0 : index
    %c0_63 = arith.constant 0 : index
    %c56 = arith.constant 56 : index
    %33 = vector.load %arg7[%c0_62, %c0_63, %c56] : memref<16x16x72xbf16, #tpu.memory_space<vmem>>, vector<16x16x8xbf16>
    tpu.vector_store %arg7[%c0_62, %c0_63, %c56], %32 {strides = array<i32>} : memref<16x16x72xbf16, #tpu.memory_space<vmem>>, vector<16x16x8xbf16>,
    %c2_64 = arith.constant 2 : index
    %c2_65 = arith.constant 2 : index
    %c0_66 = arith.constant 0 : index
    %34 = vector.load %arg6[%c2_64, %c2_65, %c0_66] : memref<18x18x8xbf16, #tpu.memory_space<vmem>>, vector<16x16x8xbf16>
    %c0_67 = arith.constant 0 : index
    %c0_68 = arith.constant 0 : index
    %c64 = arith.constant 64 : index
    %35 = vector.load %arg7[%c0_67, %c0_68, %c64] : memref<16x16x72xbf16, #tpu.memory_space<vmem>>, vector<16x16x8xbf16>
    tpu.vector_store %arg7[%c0_67, %c0_68, %c64], %34 {strides = array<i32>} : memref<16x16x72xbf16, #tpu.memory_space<vmem>>, vector<16x16x8xbf16>,
    %c0_69 = arith.constant 0 : index
    %c0_70 = arith.constant 0 : index
    %c0_71 = arith.constant 0 : index
    %36 = vector.load %arg7[%c0_69, %c0_70, %c0_71] : memref<16x16x72xbf16, #tpu.memory_space<vmem>>, vector<16x16x72xbf16>
    %37 = vector.shape_cast %36 : vector<16x16x72xbf16> to vector<256x72xbf16>
    %c0_72 = arith.constant 0 : index
    %c0_73 = arith.constant 0 : index
    %38 = vector.load %arg3[%c0_72, %c0_73] : memref<72x8xbf16, #tpu.memory_space<vmem>>, vector<72x8xbf16>
    %cst_74 = arith.constant dense<0.000000e+00> : vector<256x8xf32>
    %39 = tpu.matmul %37, %38, %cst_74 {dimension_numbers = #tpu.dot_dimension_numbers<[1], [0], [0], [1], [0, 0, 1, 1], [], []>} : vector<256x72xbf16>, vector<72x8xbf16>, vector<256x8xf32> -> vector<256x8xf32>
    %cst_75 = arith.constant 5.000000e-01 : f32
    %40 = vector.broadcast %cst_75 : f32 to vector<256x8xf32>
    %41 = arith.mulf %40, %39 : vector<256x8xf32>
    %cst_76 = arith.constant 0.707106769 : f32
    %42 = vector.broadcast %cst_76 : f32 to vector<256x8xf32>
    %43 = arith.mulf %39, %42 : vector<256x8xf32>
    %44 = math.erf %43 : vector<256x8xf32>
    %cst_77 = arith.constant 1.000000e+00 : f32
    %45 = vector.broadcast %cst_77 : f32 to vector<256x8xf32>
    %46 = arith.addf %45, %44 : vector<256x8xf32>
    %47 = arith.mulf %41, %46 : vector<256x8xf32>
    %cst_78 = arith.constant dense<0.000000e+00> : vector<8xf32>
    %48 = vector.multi_reduction <add>, %47, %cst_78 [0] : vector<256x8xf32> to vector<8xf32>
    %49 = vector.shape_cast %48 : vector<8xf32> to vector<1x8xf32>
    %cst_79 = arith.constant 3.906250e-03 : f32
    %50 = vector.broadcast %cst_79 : f32 to vector<1x8xf32>
    %51 = arith.mulf %49, %50 : vector<1x8xf32>
    %52 = vector.broadcast %51 : vector<1x8xf32> to vector<256x8xf32>
    %53 = arith.subf %47, %52 : vector<256x8xf32>
    %54 = arith.mulf %53, %53 : vector<256x8xf32>
    %cst_80 = arith.constant dense<0.000000e+00> : vector<8xf32>
    %55 = vector.multi_reduction <add>, %54, %cst_80 [0] : vector<256x8xf32> to vector<8xf32>
    %56 = vector.shape_cast %55 : vector<8xf32> to vector<1x8xf32>
    %cst_81 = arith.constant 0.000000e+00 : f32
    %cst_82 = arith.constant 1.000000e+00 : f32
    %57 = arith.mulf %cst_81, %cst_82 : f32
    %cst_83 = arith.constant 2.560000e+02 : f32
    %58 = arith.addf %57, %cst_83 : f32
    %c0_84 = arith.constant 0 : index
    %c0_85 = arith.constant 0 : index
    %59 = vector.load %arg8[%c0_84, %c0_85] : memref<2x8xf32, #tpu.memory_space<vmem>>, vector<1x8xf32>
    %c1_86 = arith.constant 1 : index
    %c0_87 = arith.constant 0 : index
    %60 = vector.load %arg8[%c1_86, %c0_87] : memref<2x8xf32, #tpu.memory_space<vmem>>, vector<1x8xf32>
    %61 = arith.subf %51, %59 : vector<1x8xf32>
    %cst_88 = arith.constant 2.560000e+02 : f32
    %62 = arith.divf %cst_88, %58 : f32
    %63 = vector.broadcast %62 : f32 to vector<1x8xf32>
    %64 = arith.mulf %61, %63 : vector<1x8xf32>
    %65 = arith.addf %59, %64 : vector<1x8xf32>
    %c0_89 = arith.constant 0 : index
    %c0_90 = arith.constant 0 : index
    %66 = vector.load %arg8[%c0_89, %c0_90] : memref<2x8xf32, #tpu.memory_space<vmem>>, vector<1x8xf32>
    tpu.vector_store %arg8[%c0_89, %c0_90], %65 {strides = array<i32>} : memref<2x8xf32, #tpu.memory_space<vmem>>, vector<1x8xf32>,
    %67 = arith.addf %60, %56 : vector<1x8xf32>
    %68 = arith.mulf %61, %61 : vector<1x8xf32>
    %cst_91 = arith.constant 2.560000e+02 : f32
    %69 = arith.mulf %57, %cst_91 : f32
    %70 = arith.divf %69, %58 : f32
    %71 = vector.broadcast %70 : f32 to vector<1x8xf32>
    %72 = arith.mulf %68, %71 : vector<1x8xf32>
    %73 = arith.addf %67, %72 : vector<1x8xf32>
    %c1_92 = arith.constant 1 : index
    %c0_93 = arith.constant 0 : index
    %74 = vector.load %arg8[%c1_92, %c0_93] : memref<2x8xf32, #tpu.memory_space<vmem>>, vector<1x8xf32>
    tpu.vector_store %arg8[%c1_92, %c0_93], %73 {strides = array<i32>} : memref<2x8xf32, #tpu.memory_space<vmem>>, vector<1x8xf32>,
    %75 = vector.shape_cast %47 : vector<256x8xf32> to vector<16x16x8xf32>
    %76 = vector.shape_cast %75 : vector<16x16x8xf32> to vector<8x2x16x8xf32>
    %77 = vector.extract_strided_slice %76 {offsets = [0, 0, 0, 0], sizes = [8, 1, 16, 8], strides = [1, 1, 1, 1]} : vector<8x2x16x8xf32> to vector<8x1x16x8xf32>
    %78 = vector.shape_cast %77 : vector<8x1x16x8xf32> to vector<8x16x8xf32>
    %79 = vector.extract_strided_slice %76 {offsets = [0, 1, 0, 0], sizes = [8, 1, 16, 8], strides = [1, 1, 1, 1]} : vector<8x2x16x8xf32> to vector<8x1x16x8xf32>
    %80 = vector.shape_cast %79 : vector<8x1x16x8xf32> to vector<8x16x8xf32>
    %81 = arith.maximumf %78, %80 : vector<8x16x8xf32>
    %82 = vector.shape_cast %81 : vector<8x16x8xf32> to vector<8x8x2x8xf32>
    %83 = vector.extract_strided_slice %82 {offsets = [0, 0, 0, 0], sizes = [8, 8, 1, 8], strides = [1, 1, 1, 1]} : vector<8x8x2x8xf32> to vector<8x8x1x8xf32>
    %84 = vector.shape_cast %83 : vector<8x8x1x8xf32> to vector<8x8x8xf32>
    %85 = vector.extract_strided_slice %82 {offsets = [0, 0, 1, 0], sizes = [8, 8, 1, 8], strides = [1, 1, 1, 1]} : vector<8x8x2x8xf32> to vector<8x8x1x8xf32>
    %86 = vector.shape_cast %85 : vector<8x8x1x8xf32> to vector<8x8x8xf32>
    %87 = arith.maximumf %84, %86 : vector<8x8x8xf32>
    %88 = arith.truncf %87 : vector<8x8x8xf32> to vector<8x8x8xbf16>
    %89 = vector.shape_cast %88 : vector<8x8x8xbf16> to vector<1x8x8x8xbf16>
    %c0_94 = arith.constant 0 : index
    %c0_95 = arith.constant 0 : index
    %c0_96 = arith.constant 0 : index
    %c0_97 = arith.constant 0 : index
    %90 = vector.load %arg4[%c0_94, %c0_95, %c0_96, %c0_97] : memref<1x8x8x8xbf16, #tpu.memory_space<vmem>>, vector<1x8x8x8xbf16>
    tpu.vector_store %arg4[%c0_94, %c0_95, %c0_96, %c0_97], %89 {strides = array<i32>} : memref<1x8x8x8xbf16, #tpu.memory_space<vmem>>, vector<1x8x8x8xbf16>,
    %c0_98 = arith.constant 0 : index
    %c0_99 = arith.constant 0 : index
    %91 = vector.load %arg8[%c0_98, %c0_99] : memref<2x8xf32, #tpu.memory_space<vmem>>, vector<2x8xf32>
    %92 = vector.shape_cast %91 : vector<2x8xf32> to vector<1x2x8xf32>
    %c0_100 = arith.constant 0 : index
    %c0_101 = arith.constant 0 : index
    %c0_102 = arith.constant 0 : index
    %93 = vector.load %arg5[%c0_100, %c0_101, %c0_102] : memref<1x2x8xf32, #tpu.memory_space<vmem>>, vector<1x2x8xf32>
    tpu.vector_store %arg5[%c0_100, %c0_101, %c0_102], %92 {strides = array<i32>} : memref<1x2x8xf32, #tpu.memory_space<vmem>>, vector<1x2x8xf32>,
    return
  }
  func.func @transform_0(%arg0: i32) -> (i32, i32, i32, i32) {
    %c0_i32 = arith.constant 0 : i32
    %c0_i32_0 = arith.constant 0 : i32
    %c0_i32_1 = arith.constant 0 : i32
    %c0_i32_2 = arith.constant 0 : i32
    return %arg0, %c0_i32, %c0_i32_0, %c0_i32_1 : i32, i32, i32, i32
  }
  func.func @transform_1(%arg0: i32) -> (i32, i32) {
    %c0_i32 = arith.constant 0 : i32
    %c0_i32_0 = arith.constant 0 : i32
    %c0_i32_1 = arith.constant 0 : i32
    return %c0_i32, %c0_i32_0 : i32, i32
  }
  func.func @transform_2(%arg0: i32) -> (i32, i32) {
    %c0_i32 = arith.constant 0 : i32
    %c0_i32_0 = arith.constant 0 : i32
    %c0_i32_1 = arith.constant 0 : i32
    return %c0_i32, %c0_i32_0 : i32, i32
  }
  func.func @transform_3(%arg0: i32) -> (i32, i32, i32, i32) {
    %c0_i32 = arith.constant 0 : i32
    %c0_i32_0 = arith.constant 0 : i32
    %c0_i32_1 = arith.constant 0 : i32
    %c0_i32_2 = arith.constant 0 : i32
    return %arg0, %c0_i32, %c0_i32_0, %c0_i32_1 : i32, i32, i32, i32
  }
  func.func @transform_4(%arg0: i32) -> (i32, i32, i32) {
    %c0_i32 = arith.constant 0 : i32
    %c0_i32_0 = arith.constant 0 : i32
    %c0_i32_1 = arith.constant 0 : i32
    return %arg0, %c0_i32, %c0_i32_0 : i32, i32, i32
  }
}

</mosaic_0001>

<llo_original>
// kernel: down_forward.2
$region0: #{down_forward.2}
  #allocation0 [shape = 'u32[]', space=smem, size = 0x4, offset = 0x4, fixed_abs, tag = 'smem constant byte address 0x4 - core index']
  #allocation1 [shape = 'u32[144,128]{1,0:T(1,128)}', space=vmem, size = 0x12000, scoped, tag = 'internal scratch']
  #allocation2 [shape = 'bf16[18,18,4]{2,1,0:T(8,128)(2,1)}', space=vmem, size = 0x1b000, scoped, tag = 'scratch operand']
  #allocation3 [shape = 'bf16[16,16,36]{2,1,0:T(16,128)(2,1)}', space=vmem, size = 0x10000, scoped, tag = 'scratch operand']
  #allocation4 [shape = 'f32[2,8]{1,0:T(2,128)}', space=vmem, size = 0x400, scoped, tag = 'scratch operand']
  %s0 = inlined_call_operand.vmem [shape: bf16[2,16,16,4], index: 0, kind: input, shape index: {}]
  %s1 = inlined_call_operand.vmem [shape: bf16[36,8], index: 1, kind: input, shape index: {}]
  %s2 = inlined_call_operand.vmem [shape: bf16[2,16,16,8], index: 2, kind: output, shape index: {0}]
  %s3 = inlined_call_operand.vmem [shape: f32[2,2,8], index: 3, kind: output, shape index: {1}]
  %4 = xla_tuple %s2, %s3
  %s5 = sld [smem:[#allocation0]]
  $region49: #{down_forward.2} parent=0
    _
  %s7 = ssub.s32 1, %s5
  %s8 = scalar_select 0, %s7, %s5
  loop: start=0, step=1, limit=4
  $region2: #{down_forward.2} parent=0 // loop_pre_header
    _
  $region3: #{down_forward.2} parent=0 // loop_header
    %s10 = sphi 0, %s14
    %p11 = scmp.ge.s32.totalorder %s10, 4
    %s20 = sphi 0, %s22
    %s23 = sphi 0, %s20
    %s24 = sphi 0, %s23
    %s40 = sphi 0, %s24
    %s44 = sphi 0, %s44
    %s46 = sphi 0, %s44
    %s47 = sphi 0, %s46
    %s61 = sphi 0, %s47
    %s67 = sphi 0, %s69
    %s70 = sphi 0, %s67
    %s71 = sphi 0, %s70
    %s87 = sphi 0, %s71
    %s93 = sphi 0, %s95
    %s96 = sphi 0, %s93
    %s97 = sphi 0, %s96
    %s113 = sphi 0, %s97
  $region4: #{down_forward.2} parent=0 // loop_header_branch
    %13 = sbr.rel (%p11) target = $region8
  $region5: #{down_forward.2} parent=0 // loop_body
    %s15 = ssub.s32 %s10, 1
    %s16 = ssub.s32 %s10, 2
    %s17 = sadd.s32 %s10, 1
    %s18 = ssub.s32 %s10, %s17
    %p19 = scmp.eq.s32.totalorder %s18, 0
    %s21 = sadd.s32 %s20, 1
    %s22 = scalar_select %p19, %s20, %s21
    %p25 = pneg %p19
    %p26 = scmp.eq.s32.totalorder %s10, 1
    %p27 = por %p25, %p26
    %p28 = scmp.ne.s32.totalorder %s20, %s23
    %p29 = scmp.eq.s32.totalorder %s10, 0
    %p30 = por %p28, %p29
    %p31 = scmp.ne.s32.totalorder %s20, %s23
    %p32 = scmp.eq.s32.totalorder %s15, 1
    %p33 = por %p31, %p32
    %p34 = scmp.ne.s32.totalorder %s23, %s24
    %p35 = scmp.eq.s32.totalorder %s15, 0
    %p36 = por %p34, %p35
    %p37 = scmp.ne.s32.totalorder %s23, %s24
    %p38 = scmp.eq.s32.totalorder %s16, 1
    %p39 = por %p37, %p38
    %p41 = scmp.ne.s32.totalorder %s24, %s40
    %p42 = scmp.eq.s32.totalorder %s16, 0
    %p43 = por %p41, %p42
    %s45 = sadd.s32 %s44, 1
    %p48 = scmp.eq.s32.totalorder %s10, 1
    %p49 = scmp.ne.s32.totalorder %s44, %s46
    %p50 = scmp.eq.s32.totalorder %s10, 0
    %p51 = por %p49, %p50
    %p52 = scmp.ne.s32.totalorder %s44, %s46
    %p53 = scmp.eq.s32.totalorder %s15, 1
    %p54 = por %p52, %p53
    %p55 = scmp.ne.s32.totalorder %s46, %s47
    %p56 = scmp.eq.s32.totalorder %s15, 0
    %p57 = por %p55, %p56
    %p58 = scmp.ne.s32.totalorder %s46, %s47
    %p59 = scmp.eq.s32.totalorder %s16, 1
    %p60 = por %p58, %p59
    %p62 = scmp.ne.s32.totalorder %s47, %s61
    %p63 = scmp.eq.s32.totalorder %s16, 0
    %p64 = por %p62, %p63
    %s65 = ssub.s32 %s10, %s17
    %p66 = scmp.eq.s32.totalorder %s65, 0
    %s68 = sadd.s32 %s67, 1
    %s69 = scalar_select %p66, %s67, %s68
    %p72 = pneg %p66
    %p73 = scmp.eq.s32.totalorder %s10, 1
    %p74 = por %p72, %p73
    %p75 = scmp.ne.s32.totalorder %s67, %s70
    %p76 = scmp.eq.s32.totalorder %s10, 0
    %p77 = por %p75, %p76
    %p78 = scmp.ne.s32.totalorder %s67, %s70
    %p79 = scmp.eq.s32.totalorder %s15, 1
    %p80 = por %p78, %p79
    %p81 = scmp.ne.s32.totalorder %s70, %s71
    %p82 = scmp.eq.s32.totalorder %s15, 0
    %p83 = por %p81, %p82
    %p84 = scmp.ne.s32.totalorder %s70, %s71
    %p85 = scmp.eq.s32.totalorder %s16, 1
    %p86 = por %p84, %p85
    %p88 = scmp.ne.s32.totalorder %s71, %s87
    %p89 = scmp.eq.s32.totalorder %s16, 0
    %p90 = por %p88, %p89
    %s91 = ssub.s32 %s10, %s17
    %p92 = scmp.eq.s32.totalorder %s91, 0
    %s94 = sadd.s32 %s93, 1
    %s95 = scalar_select %p92, %s93, %s94
    %p98 = pneg %p92
    %p99 = scmp.eq.s32.totalorder %s10, 1
    %p100 = por %p98, %p99
    %p101 = scmp.ne.s32.totalorder %s93, %s96
    %p102 = scmp.eq.s32.totalorder %s10, 0
    %p103 = por %p101, %p102
    %p104 = scmp.ne.s32.totalorder %s93, %s96
    %p105 = scmp.eq.s32.totalorder %s15, 1
    %p106 = por %p104, %p105
    %p107 = scmp.ne.s32.totalorder %s96, %s97
    %p108 = scmp.eq.s32.totalorder %s15, 0
    %p109 = por %p107, %p108
    %p110 = scmp.ne.s32.totalorder %s96, %s97
    %p111 = scmp.eq.s32.totalorder %s16, 1
    %p112 = por %p110, %p111
    %p114 = scmp.ne.s32.totalorder %s97, %s113
    %p115 = scmp.eq.s32.totalorder %s16, 0
    %p116 = por %p114, %p115
    %p117 = scmp.le.s32.totalorder 1, %s10
    %p118 = scmp.lt.s32.totalorder %s10, 3
    %p119 = pnand %p117, %p118
    %p120 = pneg %p119
    // Predicated region
    $region9: #{down_forward.2} parent=5 // pred_check
      _
    $region10: #{down_forward.2} parent=5 // pred_check_branch
      %122 = sbr.rel (%p119) target = $region12
    $region11: #{down_forward.2} parent=5 // pred_region
      %s123 = ssub.s32 %s10, 1
      // Predicated region
      $region13: #{down_forward.2} parent=11 // pred_check
        %p124 = pneg %p57
      $region14: #{down_forward.2} parent=11 // pred_check_branch
        %126 = sbr.rel (%p124) target = $region16
      $region15: #{down_forward.2} parent=11 // pred_region
        _
      $region16: #{down_forward.2} parent=11 // pred_fallthru
        _
    $region12: #{down_forward.2} parent=5 // pred_fallthru
      _
    %p127 = scmp.lt.s32.totalorder %s10, 2
    // Predicated region
    $region17: #{down_forward.2} parent=5 // pred_check
      %p128 = pneg %p127
    $region18: #{down_forward.2} parent=5 // pred_check_branch
      %130 = sbr.rel (%p128) target = $region20
    $region19: #{down_forward.2} parent=5 // pred_region
      // Predicated region
      $region21: #{down_forward.2} parent=19 // pred_check
        %p131 = pneg %p30
      $region22: #{down_forward.2} parent=19 // pred_check_branch
        %133 = sbr.rel (%p131) target = $region24
      $region23: #{down_forward.2} parent=19 // pred_region
        %p134 = scmp.lt.s32.totalorder %s10, 1
        %s135 = scalar_select %p134, %s10, 1
        %s136 = smul.addr %s135, 32
        %s137 = smul.addr %s136, 4
        %s138 = scalar_lea.vmem %s0, %s137
      $region24: #{down_forward.2} parent=19 // pred_fallthru
        _
    $region20: #{down_forward.2} parent=5 // pred_fallthru
      _
    %p139 = scmp.le.s32.totalorder 1, %s10
    %p140 = scmp.lt.s32.totalorder %s10, 3
    %p141 = pnand %p139, %p140
    %p142 = pneg %p141
    // Predicated region
    $region25: #{down_forward.2} parent=5 // pred_check
      _
    $region26: #{down_forward.2} parent=5 // pred_check_branch
      %144 = sbr.rel (%p141) target = $region28
    $region27: #{down_forward.2} parent=5 // pred_region
      %s145 = ssub.s32 %s10, 1
      %p146 = scmp.lt.s32.totalorder %s15, 1
      %s147 = scalar_select %p146, %s15, 1
      %s148 = smul.addr %s147, 32
      %s149 = smul.addr %s148, 4
      %s150 = scalar_lea.vmem %s0, %s149
      %p151 = pneg %p36
      %p152 = pneg %p33
      %p153 = pneg %p57
      %p154 = pneg %p54
      %p155 = pneg %p83
      %p156 = pneg %p80
      %p157 = scmp.lt.s32.totalorder %s15, 1
      %s158 = scalar_select %p157, %s15, 1
      %s159 = smul.addr %s158, 32
      %s160 = smul.addr %s159, 4
      %s161 = scalar_lea.vmem %s2, %s160
      %p162 = pneg %p109
      %p163 = pneg %p106
      %p164 = scmp.lt.s32.totalorder %s15, 1
      %s165 = scalar_select %p164, %s15, 1
      %s166 = smul.addr %s165, 2
      %s167 = scalar_lea.vmem %s3, %s166
      %p168 = scmp.lt.s32.totalorder %s15, 1
      %s169 = scalar_select %p168, %s15, 1
      %s170 = smul.addr %s169, 32
      %s171 = smul.addr %s170, 4
      %s172 = scalar_lea.vmem %s0, %s171
      %p173 = scmp.lt.s32.totalorder %s15, 1
      %s174 = scalar_select %p173, %s15, 1
      %s175 = smul.addr %s174, 32
      %s176 = smul.addr %s175, 4
      %s177 = scalar_lea.vmem %s2, %s176
      %p178 = scmp.lt.s32.totalorder %s15, 1
      %s179 = scalar_select %p178, %s15, 1
      %s180 = smul.addr %s179, 2
      %s181 = scalar_lea.vmem %s3, %s180
      %v183 = vld [vmem:[%s172] sm:$0xf]
      %v184 = vld [vmem:[%s172 + $0x4] sm:$0xf]
      %v185 = vld [vmem:[%s172 + $0x8] sm:$0xf]
      %v186 = vld [vmem:[%s172 + $0xc] sm:$0xf]
      %v187 = vld [vmem:[%s172 + $0x10] sm:$0xf]
      %v188 = vld [vmem:[%s172 + $0x14] sm:$0xf]
      %v189 = vld [vmem:[%s172 + $0x18] sm:$0xf]
      %v190 = vld [vmem:[%s172 + $0x1c] sm:$0xf]
      %v191 = vld [vmem:[%s172 + $0x20] sm:$0xf]
      %v192 = vld [vmem:[%s172 + $0x24] sm:$0xf]
      %v193 = vld [vmem:[%s172 + $0x28] sm:$0xf]
      %v194 = vld [vmem:[%s172 + $0x2c] sm:$0xf]
      %v195 = vld [vmem:[%s172 + $0x30] sm:$0xf]
      %v196 = vld [vmem:[%s172 + $0x34] sm:$0xf]
      %v197 = vld [vmem:[%s172 + $0x38] sm:$0xf]
      %v198 = vld [vmem:[%s172 + $0x3c] sm:$0xf]
      %v199 = vld [vmem:[%s172 + $0x40] sm:$0xf]
      %v200 = vld [vmem:[%s172 + $0x44] sm:$0xf]
      %v201 = vld [vmem:[%s172 + $0x48] sm:$0xf]
      %v202 = vld [vmem:[%s172 + $0x4c] sm:$0xf]
      %v203 = vld [vmem:[%s172 + $0x50] sm:$0xf]
      %v204 = vld [vmem:[%s172 + $0x54] sm:$0xf]
      %v205 = vld [vmem:[%s172 + $0x58] sm:$0xf]
      %v206 = vld [vmem:[%s172 + $0x5c] sm:$0xf]
      %v207 = vld [vmem:[%s172 + $0x60] sm:$0xf]
      %v208 = vld [vmem:[%s172 + $0x64] sm:$0xf]
      %v209 = vld [vmem:[%s172 + $0x68] sm:$0xf]
      %v210 = vld [vmem:[%s172 + $0x6c] sm:$0xf]
      %v211 = vld [vmem:[%s172 + $0x70] sm:$0xf]
      %v212 = vld [vmem:[%s172 + $0x74] sm:$0xf]
      %v213 = vld [vmem:[%s172 + $0x78] sm:$0xf]
      %v214 = vld [vmem:[%s172 + $0x7c] sm:$0xf]
      %vm215 = vcmask 27648
      %216 = vst.msk [vmem:[#allocation2] sm:$0xf] %vm215, 0
      %217 = vst.msk [vmem:[#allocation2 + $0x4] sm:$0xf] %vm215, 0
      %vm218 = vcmask 24576
      %219 = vst.msk [vmem:[#allocation2 + $0x8] sm:$0x1] %vm218, 0
      %s220 = scalar_lea.vmem [#allocation2], 204
      %221 = vst.msk [vmem:[%s220] sm:$0xf] %vm215, 0
      %222 = vst.msk [vmem:[%s220 + $0x4] sm:$0xf] %vm215, 0
      %223 = vst.msk [vmem:[%s220 + $0x8] sm:$0x1] %vm218, 0
      %vm224 = vcmask 24576
      %vm225 = vsmask.f32 256
      %vm226 = vmand %vm224, %vm225
      %v227 = vld [vmem:[#allocation2] sm:$0x1]
      %v228 = vsel %vm226, 0, %v227
      %229 = vst [vmem:[#allocation2] sm:$0x1] %v228
      %v230 = vld [vmem:[#allocation2 + $0xc] sm:$0x1]
      %v231 = vsel %vm226, 0, %v230
      %232 = vst [vmem:[#allocation2 + $0xc] sm:$0x1] %v231
      %v233 = vld [vmem:[#allocation2 + $0x18] sm:$0x1]
      %v234 = vsel %vm226, 0, %v233
      %235 = vst [vmem:[#allocation2 + $0x18] sm:$0x1] %v234
      %v236 = vld [vmem:[#allocation2 + $0x24] sm:$0x1]
      %v237 = vsel %vm226, 0, %v236
      %238 = vst [vmem:[#allocation2 + $0x24] sm:$0x1] %v237
      %v239 = vld [vmem:[#allocation2 + $0x30] sm:$0x1]
      %v240 = vsel %vm226, 0, %v239
      %241 = vst [vmem:[#allocation2 + $0x30] sm:$0x1] %v240
      %v242 = vld [vmem:[#allocation2 + $0x3c] sm:$0x1]
      %v243 = vsel %vm226, 0, %v242
      %244 = vst [vmem:[#allocation2 + $0x3c] sm:$0x1] %v243
      %v245 = vld [vmem:[#allocation2 + $0x48] sm:$0x1]
      %v246 = vsel %vm226, 0, %v245
      %247 = vst [vmem:[#allocation2 + $0x48] sm:$0x1] %v246
      %v248 = vld [vmem:[#allocation2 + $0x54] sm:$0x1]
      %v249 = vsel %vm226, 0, %v248
      %250 = vst [vmem:[#allocation2 + $0x54] sm:$0x1] %v249
      %v251 = vld [vmem:[#allocation2 + $0x60] sm:$0x1]
      %v252 = vsel %vm226, 0, %v251
      %253 = vst [vmem:[#allocation2 + $0x60] sm:$0x1] %v252
      %v254 = vld [vmem:[#allocation2 + $0x6c] sm:$0x1]
      %v255 = vsel %vm226, 0, %v254
      %256 = vst [vmem:[#allocation2 + $0x6c] sm:$0x1] %v255
      %v257 = vld [vmem:[#allocation2 + $0x78] sm:$0x1]
      %v258 = vsel %vm226, 0, %v257
      %259 = vst [vmem:[#allocation2 + $0x78] sm:$0x1] %v258
      %v260 = vld [vmem:[#allocation2 + $0x84] sm:$0x1]
      %v261 = vsel %vm226, 0, %v260
      %262 = vst [vmem:[#allocation2 + $0x84] sm:$0x1] %v261
      %v263 = vld [vmem:[#allocation2 + $0x90] sm:$0x1]
      %v264 = vsel %vm226, 0, %v263
      %265 = vst [vmem:[#allocation2 + $0x90] sm:$0x1] %v264
      %v266 = vld [vmem:[#allocation2 + $0x9c] sm:$0x1]
      %v267 = vsel %vm226, 0, %v266
      %268 = vst [vmem:[#allocation2 + $0x9c] sm:$0x1] %v267
      %v269 = vld [vmem:[#allocation2 + $0xa8] sm:$0x1]
      %v270 = vsel %vm226, 0, %v269
      %271 = vst [vmem:[#allocation2 + $0xa8] sm:$0x1] %v270
      %v272 = vld [vmem:[#allocation2 + $0xb4] sm:$0x1]
      %v273 = vsel %vm226, 0, %v272
      %274 = vst [vmem:[#allocation2 + $0xb4] sm:$0x1] %v273
      %v275 = vld [vmem:[#allocation2 + $0xc0] sm:$0x1]
      %v276 = vsel %vm226, 0, %v275
      %277 = vst [vmem:[#allocation2 + $0xc0] sm:$0x1] %v276
      %v278 = vld [vmem:[#allocation2 + $0xcc] sm:$0x1]
      %v279 = vsel %vm226, 0, %v278
      %280 = vst [vmem:[#allocation2 + $0xcc] sm:$0x1] %v279
      %vm281 = vsmask.f32 7938
      %vm282 = vmand %vm224, %vm281
      %v283 = vld [vmem:[#allocation2 + $0x8] sm:$0x1]
      %v284 = vsel %vm282, 0, %v283
      %285 = vst [vmem:[#allocation2 + $0x8] sm:$0x1] %v284
      %v286 = vld [vmem:[#allocation2 + $0x14] sm:$0x1]
      %v287 = vsel %vm282, 0, %v286
      %288 = vst [vmem:[#allocation2 + $0x14] sm:$0x1] %v287
      %v289 = vld [vmem:[#allocation2 + $0x20] sm:$0x1]
      %v290 = vsel %vm282, 0, %v289
      %291 = vst [vmem:[#allocation2 + $0x20] sm:$0x1] %v290
      %v292 = vld [vmem:[#allocation2 + $0x2c] sm:$0x1]
      %v293 = vsel %vm282, 0, %v292
      %294 = vst [vmem:[#allocation2 + $0x2c] sm:$0x1] %v293
      %v295 = vld [vmem:[#allocation2 + $0x38] sm:$0x1]
      %v296 = vsel %vm282, 0, %v295
      %297 = vst [vmem:[#allocation2 + $0x38] sm:$0x1] %v296
      %v298 = vld [vmem:[#allocation2 + $0x44] sm:$0x1]
      %v299 = vsel %vm282, 0, %v298
      %300 = vst [vmem:[#allocation2 + $0x44] sm:$0x1] %v299
      %v301 = vld [vmem:[#allocation2 + $0x50] sm:$0x1]
      %v302 = vsel %vm282, 0, %v301
      %303 = vst [vmem:[#allocation2 + $0x50] sm:$0x1] %v302
      %v304 = vld [vmem:[#allocation2 + $0x5c] sm:$0x1]
      %v305 = vsel %vm282, 0, %v304
      %306 = vst [vmem:[#allocation2 + $0x5c] sm:$0x1] %v305
      %v307 = vld [vmem:[#allocation2 + $0x68] sm:$0x1]
      %v308 = vsel %vm282, 0, %v307
      %309 = vst [vmem:[#allocation2 + $0x68] sm:$0x1] %v308
      %v310 = vld [vmem:[#allocation2 + $0x74] sm:$0x1]
      %v311 = vsel %vm282, 0, %v310
      %312 = vst [vmem:[#allocation2 + $0x74] sm:$0x1] %v311
      %v313 = vld [vmem:[#allocation2 + $0x80] sm:$0x1]
      %v314 = vsel %vm282, 0, %v313
      %315 = vst [vmem:[#allocation2 + $0x80] sm:$0x1] %v314
      %v316 = vld [vmem:[#allocation2 + $0x8c] sm:$0x1]
      %v317 = vsel %vm282, 0, %v316
      %318 = vst [vmem:[#allocation2 + $0x8c] sm:$0x1] %v317
      %v319 = vld [vmem:[#allocation2 + $0x98] sm:$0x1]
      %v320 = vsel %vm282, 0, %v319
      %321 = vst [vmem:[#allocation2 + $0x98] sm:$0x1] %v320
      %v322 = vld [vmem:[#allocation2 + $0xa4] sm:$0x1]
      %v323 = vsel %vm282, 0, %v322
      %324 = vst [vmem:[#allocation2 + $0xa4] sm:$0x1] %v323
      %v325 = vld [vmem:[#allocation2 + $0xb0] sm:$0x1]
      %v326 = vsel %vm282, 0, %v325
      %327 = vst [vmem:[#allocation2 + $0xb0] sm:$0x1] %v326
      %v328 = vld [vmem:[#allocation2 + $0xbc] sm:$0x1]
      %v329 = vsel %vm282, 0, %v328
      %330 = vst [vmem:[#allocation2 + $0xbc] sm:$0x1] %v329
      %v331 = vld [vmem:[#allocation2 + $0xc8] sm:$0x1]
      %v332 = vsel %vm282, 0, %v331
      %333 = vst [vmem:[#allocation2 + $0xc8] sm:$0x1] %v332
      %v334 = vld [vmem:[#allocation2 + $0xd4] sm:$0x1]
      %v335 = vsel %vm282, 0, %v334
      %336 = vst [vmem:[#allocation2 + $0xd4] sm:$0x1] %v335
      %vm337 = vsmask.f32 4368
      %vm338 = vmor %vm225, %vm337
      %v340 = vshrl.u32 %v183, 16
      %v342 = vrot.slane %v340, 7
      %v343 = vshll.u32 %v183, 16
      %v345 = vor.u32 %v342, %v343
      %v346 = vrot.slane %v342, 4
      %v348 = vshrl.u32 %v184, 16
      %v350 = vrot.slane %v348, 7
      %v351 = vshll.u32 %v184, 16
      %v353 = vor.u32 %v350, %v351
      %v354 = vsel %vm338, %v346, %v353
      %v355 = vrot.slane %v350, 4
      %v357 = vshrl.u32 %v185, 16
      %v359 = vrot.slane %v357, 7
      %v360 = vshll.u32 %v185, 16
      %v362 = vor.u32 %v359, %v360
      %v363 = vrot.slane %v359, 4
      %v365 = vshrl.u32 %v186, 16
      %v367 = vrot.slane %v365, 7
      %v368 = vshll.u32 %v186, 16
      %v370 = vor.u32 %v367, %v368
      %v371 = vsel %vm338, %v363, %v370
      %v372 = vrot.slane %v367, 4
      %v374 = vshrl.u32 %v187, 16
      %v376 = vrot.slane %v374, 7
      %v377 = vshll.u32 %v187, 16
      %v379 = vor.u32 %v376, %v377
      %v380 = vrot.slane %v376, 4
      %v382 = vshrl.u32 %v188, 16
      %v384 = vrot.slane %v382, 7
      %v385 = vshll.u32 %v188, 16
      %v387 = vor.u32 %v384, %v385
      %v388 = vsel %vm338, %v380, %v387
      %v389 = vrot.slane %v384, 4
      %v391 = vshrl.u32 %v189, 16
      %v393 = vrot.slane %v391, 7
      %v394 = vshll.u32 %v189, 16
      %v396 = vor.u32 %v393, %v394
      %v397 = vrot.slane %v393, 4
      %v399 = vshrl.u32 %v190, 16
      %v401 = vrot.slane %v399, 7
      %v402 = vshll.u32 %v190, 16
      %v404 = vor.u32 %v401, %v402
      %v405 = vsel %vm338, %v397, %v404
      %v406 = vrot.slane %v401, 4
      %v408 = vshrl.u32 %v191, 16
      %v410 = vrot.slane %v408, 7
      %v411 = vshll.u32 %v191, 16
      %v413 = vor.u32 %v410, %v411
      %v414 = vrot.slane %v410, 4
      %v416 = vshrl.u32 %v192, 16
      %v418 = vrot.slane %v416, 7
      %v419 = vshll.u32 %v192, 16
      %v421 = vor.u32 %v418, %v419
      %v422 = vsel %vm338, %v414, %v421
      %v423 = vrot.slane %v418, 4
      %v425 = vshrl.u32 %v193, 16
      %v427 = vrot.slane %v425, 7
      %v428 = vshll.u32 %v193, 16
      %v430 = vor.u32 %v427, %v428
      %v431 = vrot.slane %v427, 4
      %v433 = vshrl.u32 %v194, 16
      %v435 = vrot.slane %v433, 7
      %v436 = vshll.u32 %v194, 16
      %v438 = vor.u32 %v435, %v436
      %v439 = vsel %vm338, %v431, %v438
      %v440 = vrot.slane %v435, 4
      %v442 = vshrl.u32 %v195, 16
      %v444 = vrot.slane %v442, 7
      %v445 = vshll.u32 %v195, 16
      %v447 = vor.u32 %v444, %v445
      %v448 = vrot.slane %v444, 4
      %v450 = vshrl.u32 %v196, 16
      %v452 = vrot.slane %v450, 7
      %v453 = vshll.u32 %v196, 16
      %v455 = vor.u32 %v452, %v453
      %v456 = vsel %vm338, %v448, %v455
      %v457 = vrot.slane %v452, 4
      %v459 = vshrl.u32 %v197, 16
      %v461 = vrot.slane %v459, 7
      %v462 = vshll.u32 %v197, 16
      %v464 = vor.u32 %v461, %v462
      %v465 = vrot.slane %v461, 4
      %v467 = vshrl.u32 %v198, 16
      %v469 = vrot.slane %v467, 7
      %v470 = vshll.u32 %v198, 16
      %v472 = vor.u32 %v469, %v470
      %v473 = vsel %vm338, %v465, %v472
      %v474 = vrot.slane %v469, 4
      %v476 = vshrl.u32 %v199, 16
      %v478 = vrot.slane %v476, 7
      %v479 = vshll.u32 %v199, 16
      %v481 = vor.u32 %v478, %v479
      %v482 = vrot.slane %v478, 4
      %v484 = vshrl.u32 %v200, 16
      %v486 = vrot.slane %v484, 7
      %v487 = vshll.u32 %v200, 16
      %v489 = vor.u32 %v486, %v487
      %v490 = vsel %vm338, %v482, %v489
      %v491 = vrot.slane %v486, 4
      %v493 = vshrl.u32 %v201, 16
      %v495 = vrot.slane %v493, 7
      %v496 = vshll.u32 %v201, 16
      %v498 = vor.u32 %v495, %v496
      %v499 = vrot.slane %v495, 4
      %v501 = vshrl.u32 %v202, 16
      %v503 = vrot.slane %v501, 7
      %v504 = vshll.u32 %v202, 16
      %v506 = vor.u32 %v503, %v504
      %v507 = vsel %vm338, %v499, %v506
      %v508 = vrot.slane %v503, 4
      %v510 = vshrl.u32 %v203, 16
      %v512 = vrot.slane %v510, 7
      %v513 = vshll.u32 %v203, 16
      %v515 = vor.u32 %v512, %v513
      %v516 = vrot.slane %v512, 4
      %v518 = vshrl.u32 %v204, 16
      %v520 = vrot.slane %v518, 7
      %v521 = vshll.u32 %v204, 16
      %v523 = vor.u32 %v520, %v521
      %v524 = vsel %vm338, %v516, %v523
      %v525 = vrot.slane %v520, 4
      %v527 = vshrl.u32 %v205, 16
      %v529 = vrot.slane %v527, 7
      %v530 = vshll.u32 %v205, 16
      %v532 = vor.u32 %v529, %v530
      %v533 = vrot.slane %v529, 4
      %v535 = vshrl.u32 %v206, 16
      %v537 = vrot.slane %v535, 7
      %v538 = vshll.u32 %v206, 16
      %v540 = vor.u32 %v537, %v538
      %v541 = vsel %vm338, %v533, %v540
      %v542 = vrot.slane %v537, 4
      %v544 = vshrl.u32 %v207, 16
      %v546 = vrot.slane %v544, 7
      %v547 = vshll.u32 %v207, 16
      %v549 = vor.u32 %v546, %v547
      %v550 = vrot.slane %v546, 4
      %v552 = vshrl.u32 %v208, 16
      %v554 = vrot.slane %v552, 7
      %v555 = vshll.u32 %v208, 16
      %v557 = vor.u32 %v554, %v555
      %v558 = vsel %vm338, %v550, %v557
      %v559 = vrot.slane %v554, 4
      %v561 = vshrl.u32 %v209, 16
      %v563 = vrot.slane %v561, 7
      %v564 = vshll.u32 %v209, 16
      %v566 = vor.u32 %v563, %v564
      %v567 = vrot.slane %v563, 4
      %v569 = vshrl.u32 %v210, 16
      %v571 = vrot.slane %v569, 7
      %v572 = vshll.u32 %v210, 16
      %v574 = vor.u32 %v571, %v572
      %v575 = vsel %vm338, %v567, %v574
      %v576 = vrot.slane %v571, 4
      %v578 = vshrl.u32 %v211, 16
      %v580 = vrot.slane %v578, 7
      %v581 = vshll.u32 %v211, 16
      %v583 = vor.u32 %v580, %v581
      %v584 = vrot.slane %v580, 4
      %v586 = vshrl.u32 %v212, 16
      %v588 = vrot.slane %v586, 7
      %v589 = vshll.u32 %v212, 16
      %v591 = vor.u32 %v588, %v589
      %v592 = vsel %vm338, %v584, %v591
      %v593 = vrot.slane %v588, 4
      %v595 = vshrl.u32 %v213, 16
      %v597 = vrot.slane %v595, 7
      %v598 = vshll.u32 %v213, 16
      %v600 = vor.u32 %v597, %v598
      %v601 = vrot.slane %v597, 4
      %v603 = vshrl.u32 %v214, 16
      %v605 = vrot.slane %v603, 7
      %v606 = vshll.u32 %v214, 16
      %v608 = vor.u32 %v605, %v606
      %v609 = vsel %vm338, %v601, %v608
      %v610 = vrot.slane %v605, 4
      %s659 = scalar_lea.vmem [#allocation2], 12
      %vm660 = vcmask 27648
      %vm661 = vmand %vm660, %vm281
      %v662 = vld [vmem:[%s659] sm:$0xf]
      %v663 = vsel %vm661, %v345, %v662
      %664 = vst [vmem:[%s659] sm:$0xf] %v663
      %665 = vst.msk [vmem:[%s659 + $0x4] sm:$0xf] %vm215, %v354
      %v666 = vld [vmem:[%s659 + $0x8] sm:$0x1]
      %v667 = vsel %vm226, %v355, %v666
      %668 = vst [vmem:[%s659 + $0x8] sm:$0x1] %v667
      %v669 = vld [vmem:[%s659 + $0xc] sm:$0xf]
      %v670 = vsel %vm661, %v362, %v669
      %671 = vst [vmem:[%s659 + $0xc] sm:$0xf] %v670
      %672 = vst.msk [vmem:[%s659 + $0x10] sm:$0xf] %vm215, %v371
      %v673 = vld [vmem:[%s659 + $0x14] sm:$0x1]
      %v674 = vsel %vm226, %v372, %v673
      %675 = vst [vmem:[%s659 + $0x14] sm:$0x1] %v674
      %v676 = vld [vmem:[%s659 + $0x18] sm:$0xf]
      %v677 = vsel %vm661, %v379, %v676
      %678 = vst [vmem:[%s659 + $0x18] sm:$0xf] %v677
      %679 = vst.msk [vmem:[%s659 + $0x1c] sm:$0xf] %vm215, %v388
      %v680 = vld [vmem:[%s659 + $0x20] sm:$0x1]
      %v681 = vsel %vm226, %v389, %v680
      %682 = vst [vmem:[%s659 + $0x20] sm:$0x1] %v681
      %v683 = vld [vmem:[%s659 + $0x24] sm:$0xf]
      %v684 = vsel %vm661, %v396, %v683
      %685 = vst [vmem:[%s659 + $0x24] sm:$0xf] %v684
      %686 = vst.msk [vmem:[%s659 + $0x28] sm:$0xf] %vm215, %v405
      %v687 = vld [vmem:[%s659 + $0x2c] sm:$0x1]
      %v688 = vsel %vm226, %v406, %v687
      %689 = vst [vmem:[%s659 + $0x2c] sm:$0x1] %v688
      %v690 = vld [vmem:[%s659 + $0x30] sm:$0xf]
      %v691 = vsel %vm661, %v413, %v690
      %692 = vst [vmem:[%s659 + $0x30] sm:$0xf] %v691
      %693 = vst.msk [vmem:[%s659 + $0x34] sm:$0xf] %vm215, %v422
      %v694 = vld [vmem:[%s659 + $0x38] sm:$0x1]
      %v695 = vsel %vm226, %v423, %v694
      %696 = vst [vmem:[%s659 + $0x38] sm:$0x1] %v695
      %v697 = vld [vmem:[%s659 + $0x3c] sm:$0xf]
      %v698 = vsel %vm661, %v430, %v697
      %699 = vst [vmem:[%s659 + $0x3c] sm:$0xf] %v698
      %700 = vst.msk [vmem:[%s659 + $0x40] sm:$0xf] %vm215, %v439
      %v701 = vld [vmem:[%s659 + $0x44] sm:$0x1]
      %v702 = vsel %vm226, %v440, %v701
      %703 = vst [vmem:[%s659 + $0x44] sm:$0x1] %v702
      %v704 = vld [vmem:[%s659 + $0x48] sm:$0xf]
      %v705 = vsel %vm661, %v447, %v704
      %706 = vst [vmem:[%s659 + $0x48] sm:$0xf] %v705
      %707 = vst.msk [vmem:[%s659 + $0x4c] sm:$0xf] %vm215, %v456
      %v708 = vld [vmem:[%s659 + $0x50] sm:$0x1]
      %v709 = vsel %vm226, %v457, %v708
      %710 = vst [vmem:[%s659 + $0x50] sm:$0x1] %v709
      %v711 = vld [vmem:[%s659 + $0x54] sm:$0xf]
      %v712 = vsel %vm661, %v464, %v711
      %713 = vst [vmem:[%s659 + $0x54] sm:$0xf] %v712
      %714 = vst.msk [vmem:[%s659 + $0x58] sm:$0xf] %vm215, %v473
      %v715 = vld [vmem:[%s659 + $0x5c] sm:$0x1]
      %v716 = vsel %vm226, %v474, %v715
      %717 = vst [vmem:[%s659 + $0x5c] sm:$0x1] %v716
      %v718 = vld [vmem:[%s659 + $0x60] sm:$0xf]
      %v719 = vsel %vm661, %v481, %v718
      %720 = vst [vmem:[%s659 + $0x60] sm:$0xf] %v719
      %721 = vst.msk [vmem:[%s659 + $0x64] sm:$0xf] %vm215, %v490
      %v722 = vld [vmem:[%s659 + $0x68] sm:$0x1]
      %v723 = vsel %vm226, %v491, %v722
      %724 = vst [vmem:[%s659 + $0x68] sm:$0x1] %v723
      %v725 = vld [vmem:[%s659 + $0x6c] sm:$0xf]
      %v726 = vsel %vm661, %v498, %v725
      %727 = vst [vmem:[%s659 + $0x6c] sm:$0xf] %v726
      %728 = vst.msk [vmem:[%s659 + $0x70] sm:$0xf] %vm215, %v507
      %v729 = vld [vmem:[%s659 + $0x74] sm:$0x1]
      %v730 = vsel %vm226, %v508, %v729
      %731 = vst [vmem:[%s659 + $0x74] sm:$0x1] %v730
      %v732 = vld [vmem:[%s659 + $0x78] sm:$0xf]
      %v733 = vsel %vm661, %v515, %v732
      %734 = vst [vmem:[%s659 + $0x78] sm:$0xf] %v733
      %735 = vst.msk [vmem:[%s659 + $0x7c] sm:$0xf] %vm215, %v524
      %v736 = vld [vmem:[%s659 + $0x80] sm:$0x1]
      %v737 = vsel %vm226, %v525, %v736
      %738 = vst [vmem:[%s659 + $0x80] sm:$0x1] %v737
      %v739 = vld [vmem:[%s659 + $0x84] sm:$0xf]
      %v740 = vsel %vm661, %v532, %v739
      %741 = vst [vmem:[%s659 + $0x84] sm:$0xf] %v740
      %742 = vst.msk [vmem:[%s659 + $0x88] sm:$0xf] %vm215, %v541
      %v743 = vld [vmem:[%s659 + $0x8c] sm:$0x1]
      %v744 = vsel %vm226, %v542, %v743
      %745 = vst [vmem:[%s659 + $0x8c] sm:$0x1] %v744
      %v746 = vld [vmem:[%s659 + $0x90] sm:$0xf]
      %v747 = vsel %vm661, %v549, %v746
      %748 = vst [vmem:[%s659 + $0x90] sm:$0xf] %v747
      %749 = vst.msk [vmem:[%s659 + $0x94] sm:$0xf] %vm215, %v558
      %v750 = vld [vmem:[%s659 + $0x98] sm:$0x1]
      %v751 = vsel %vm226, %v559, %v750
      %752 = vst [vmem:[%s659 + $0x98] sm:$0x1] %v751
      %v753 = vld [vmem:[%s659 + $0x9c] sm:$0xf]
      %v754 = vsel %vm661, %v566, %v753
      %755 = vst [vmem:[%s659 + $0x9c] sm:$0xf] %v754
      %756 = vst.msk [vmem:[%s659 + $0xa0] sm:$0xf] %vm215, %v575
      %v757 = vld [vmem:[%s659 + $0xa4] sm:$0x1]
      %v758 = vsel %vm226, %v576, %v757
      %759 = vst [vmem:[%s659 + $0xa4] sm:$0x1] %v758
      %v760 = vld [vmem:[%s659 + $0xa8] sm:$0xf]
      %v761 = vsel %vm661, %v583, %v760
      %762 = vst [vmem:[%s659 + $0xa8] sm:$0xf] %v761
      %763 = vst.msk [vmem:[%s659 + $0xac] sm:$0xf] %vm215, %v592
      %v764 = vld [vmem:[%s659 + $0xb0] sm:$0x1]
      %v765 = vsel %vm226, %v593, %v764
      %766 = vst [vmem:[%s659 + $0xb0] sm:$0x1] %v765
      %v767 = vld [vmem:[%s659 + $0xb4] sm:$0xf]
      %v768 = vsel %vm661, %v600, %v767
      %769 = vst [vmem:[%s659 + $0xb4] sm:$0xf] %v768
      %770 = vst.msk [vmem:[%s659 + $0xb8] sm:$0xf] %vm215, %v609
      %v771 = vld [vmem:[%s659 + $0xbc] sm:$0x1]
      %v772 = vsel %vm226, %v610, %v771
      %773 = vst [vmem:[%s659 + $0xbc] sm:$0x1] %v772
      %vm774 = vcmask 58368
      %775 = vst.msk [vmem:[#allocation4] sm:$0x3] %vm774, 0.0
      %v776 = vld [vmem:[#allocation2] sm:$0xf]
      %v777 = vld [vmem:[#allocation2 + $0x4] sm:$0xf]
      %v778 = vld [vmem:[#allocation2 + $0xc] sm:$0xf]
      %v779 = vld [vmem:[#allocation2 + $0x10] sm:$0xf]
      %v780 = vld [vmem:[#allocation2 + $0x18] sm:$0xf]
      %v781 = vld [vmem:[#allocation2 + $0x1c] sm:$0xf]
      %v782 = vld [vmem:[#allocation2 + $0x24] sm:$0xf]
      %v783 = vld [vmem:[#allocation2 + $0x28] sm:$0xf]
      %v784 = vld [vmem:[#allocation2 + $0x30] sm:$0xf]
      %v785 = vld [vmem:[#allocation2 + $0x34] sm:$0xf]
      %v786 = vld [vmem:[#allocation2 + $0x3c] sm:$0xf]
      %v787 = vld [vmem:[#allocation2 + $0x40] sm:$0xf]
      %v788 = vld [vmem:[#allocation2 + $0x48] sm:$0xf]
      %v789 = vld [vmem:[#allocation2 + $0x4c] sm:$0xf]
      %v790 = vld [vmem:[#allocation2 + $0x54] sm:$0xf]
      %v791 = vld [vmem:[#allocation2 + $0x58] sm:$0xf]
      %v792 = vld [vmem:[#allocation2 + $0x60] sm:$0xf]
      %v793 = vld [vmem:[#allocation2 + $0x64] sm:$0xf]
      %v794 = vld [vmem:[#allocation2 + $0x6c] sm:$0xf]
      %v795 = vld [vmem:[#allocation2 + $0x70] sm:$0xf]
      %v796 = vld [vmem:[#allocation2 + $0x78] sm:$0xf]
      %v797 = vld [vmem:[#allocation2 + $0x7c] sm:$0xf]
      %v798 = vld [vmem:[#allocation2 + $0x84] sm:$0xf]
      %v799 = vld [vmem:[#allocation2 + $0x88] sm:$0xf]
      %v800 = vld [vmem:[#allocation2 + $0x90] sm:$0xf]
      %v801 = vld [vmem:[#allocation2 + $0x94] sm:$0xf]
      %v802 = vld [vmem:[#allocation2 + $0x9c] sm:$0xf]
      %v803 = vld [vmem:[#allocation2 + $0xa0] sm:$0xf]
      %v804 = vld [vmem:[#allocation2 + $0xa8] sm:$0xf]
      %v805 = vld [vmem:[#allocation2 + $0xac] sm:$0xf]
      %v806 = vld [vmem:[#allocation2 + $0xb4] sm:$0xf]
      %v807 = vld [vmem:[#allocation2 + $0xb8] sm:$0xf]
      %v840 = vunpack.c.l.b16 %v776
      %v841 = vunpack.c.l.b16 %v777
      %v842 = vunpack.c.l.b16 %v778
      %v843 = vunpack.c.l.b16 %v779
      %v844 = vunpack.c.l.b16 %v780
      %v845 = vunpack.c.l.b16 %v781
      %v846 = vunpack.c.l.b16 %v782
      %v847 = vunpack.c.l.b16 %v783
      %v848 = vunpack.c.l.b16 %v784
      %v849 = vunpack.c.l.b16 %v785
      %v850 = vunpack.c.l.b16 %v786
      %v851 = vunpack.c.l.b16 %v787
      %v852 = vunpack.c.l.b16 %v788
      %v853 = vunpack.c.l.b16 %v789
      %v854 = vunpack.c.l.b16 %v790
      %v855 = vunpack.c.l.b16 %v791
      %v856 = vunpack.c.l.b16 %v792
      %v857 = vunpack.c.l.b16 %v793
      %v858 = vunpack.c.l.b16 %v794
      %v859 = vunpack.c.l.b16 %v795
      %v860 = vunpack.c.l.b16 %v796
      %v861 = vunpack.c.l.b16 %v797
      %v862 = vunpack.c.l.b16 %v798
      %v863 = vunpack.c.l.b16 %v799
      %v864 = vunpack.c.l.b16 %v800
      %v865 = vunpack.c.l.b16 %v801
      %v866 = vunpack.c.l.b16 %v802
      %v867 = vunpack.c.l.b16 %v803
      %v868 = vunpack.c.l.b16 %v804
      %v869 = vunpack.c.l.b16 %v805
      %v870 = vunpack.c.l.b16 %v806
      %v871 = vunpack.c.l.b16 %v807
      %v872 = vpack.c.b16 %v841, %v840
      %v873 = vpack.c.b16 %v843, %v842
      %v874 = vpack.c.b16 %v845, %v844
      %v875 = vpack.c.b16 %v847, %v846
      %v876 = vpack.c.b16 %v849, %v848
      %v877 = vpack.c.b16 %v851, %v850
      %v878 = vpack.c.b16 %v853, %v852
      %v879 = vpack.c.b16 %v855, %v854
      %v880 = vpack.c.b16 %v857, %v856
      %v881 = vpack.c.b16 %v859, %v858
      %v882 = vpack.c.b16 %v861, %v860
      %v883 = vpack.c.b16 %v863, %v862
      %v884 = vpack.c.b16 %v865, %v864
      %v885 = vpack.c.b16 %v867, %v866
      %v886 = vpack.c.b16 %v869, %v868
      %v887 = vpack.c.b16 %v871, %v870
      %vm904 = vcmask 31744
      %905 = vst.msk [vmem:[#allocation3] sm:$0xff] %vm904, %v872
      %906 = vst.msk [vmem:[#allocation3 + $0x8] sm:$0xff] %vm904, %v873
      %907 = vst.msk [vmem:[#allocation3 + $0x10] sm:$0xff] %vm904, %v874
      %908 = vst.msk [vmem:[#allocation3 + $0x18] sm:$0xff] %vm904, %v875
      %909 = vst.msk [vmem:[#allocation3 + $0x20] sm:$0xff] %vm904, %v876
      %910 = vst.msk [vmem:[#allocation3 + $0x28] sm:$0xff] %vm904, %v877
      %911 = vst.msk [vmem:[#allocation3 + $0x30] sm:$0xff] %vm904, %v878
      %912 = vst.msk [vmem:[#allocation3 + $0x38] sm:$0xff] %vm904, %v879
      %913 = vst.msk [vmem:[#allocation3 + $0x40] sm:$0xff] %vm904, %v880
      %914 = vst.msk [vmem:[#allocation3 + $0x48] sm:$0xff] %vm904, %v881
      %915 = vst.msk [vmem:[#allocation3 + $0x50] sm:$0xff] %vm904, %v882
      %916 = vst.msk [vmem:[#allocation3 + $0x58] sm:$0xff] %vm904, %v883
      %917 = vst.msk [vmem:[#allocation3 + $0x60] sm:$0xff] %vm904, %v884
      %918 = vst.msk [vmem:[#allocation3 + $0x68] sm:$0xff] %vm904, %v885
      %919 = vst.msk [vmem:[#allocation3 + $0x70] sm:$0xff] %vm904, %v886
      %920 = vst.msk [vmem:[#allocation3 + $0x78] sm:$0xff] %vm904, %v887
      %v921 = vld [vmem:[#allocation2] sm:$0xf]
      %v922 = vld [vmem:[#allocation2 + $0x4] sm:$0xf]
      %v923 = vld [vmem:[#allocation2 + $0x8] sm:$0x1]
      %v924 = vld [vmem:[#allocation2 + $0xc] sm:$0xf]
      %v925 = vld [vmem:[#allocation2 + $0x10] sm:$0xf]
      %v926 = vld [vmem:[#allocation2 + $0x14] sm:$0x1]
      %v927 = vld [vmem:[#allocation2 + $0x18] sm:$0xf]
      %v928 = vld [vmem:[#allocation2 + $0x1c] sm:$0xf]
      %v929 = vld [vmem:[#allocation2 + $0x20] sm:$0x1]
      %v930 = vld [vmem:[#allocation2 + $0x24] sm:$0xf]
      %v931 = vld [vmem:[#allocation2 + $0x28] sm:$0xf]
      %v932 = vld [vmem:[#allocation2 + $0x2c] sm:$0x1]
      %v933 = vld [vmem:[#allocation2 + $0x30] sm:$0xf]
      %v934 = vld [vmem:[#allocation2 + $0x34] sm:$0xf]
      %v935 = vld [vmem:[#allocation2 + $0x38] sm:$0x1]
      %v936 = vld [vmem:[#allocation2 + $0x3c] sm:$0xf]
      %v937 = vld [vmem:[#allocation2 + $0x40] sm:$0xf]
      %v938 = vld [vmem:[#allocation2 + $0x44] sm:$0x1]
      %v939 = vld [vmem:[#allocation2 + $0x48] sm:$0xf]
      %v940 = vld [vmem:[#allocation2 + $0x4c] sm:$0xf]
      %v941 = vld [vmem:[#allocation2 + $0x50] sm:$0x1]
      %v942 = vld [vmem:[#allocation2 + $0x54] sm:$0xf]
      %v943 = vld [vmem:[#allocation2 + $0x58] sm:$0xf]
      %v944 = vld [vmem:[#allocation2 + $0x5c] sm:$0x1]
      %v945 = vld [vmem:[#allocation2 + $0x60] sm:$0xf]
      %v946 = vld [vmem:[#allocation2 + $0x64] sm:$0xf]
      %v947 = vld [vmem:[#allocation2 + $0x68] sm:$0x1]
      %v948 = vld [vmem:[#allocation2 + $0x6c] sm:$0xf]
      %v949 = vld [vmem:[#allocation2 + $0x70] sm:$0xf]
      %v950 = vld [vmem:[#allocation2 + $0x74] sm:$0x1]
      %v951 = vld [vmem:[#allocation2 + $0x78] sm:$0xf]
      %v952 = vld [vmem:[#allocation2 + $0x7c] sm:$0xf]
      %v953 = vld [vmem:[#allocation2 + $0x80] sm:$0x1]
      %v954 = vld [vmem:[#allocation2 + $0x84] sm:$0xf]
      %v955 = vld [vmem:[#allocation2 + $0x88] sm:$0xf]
      %v956 = vld [vmem:[#allocation2 + $0x8c] sm:$0x1]
      %v957 = vld [vmem:[#allocation2 + $0x90] sm:$0xf]
      %v958 = vld [vmem:[#allocation2 + $0x94] sm:$0xf]
      %v959 = vld [vmem:[#allocation2 + $0x98] sm:$0x1]
      %v960 = vld [vmem:[#allocation2 + $0x9c] sm:$0xf]
      %v961 = vld [vmem:[#allocation2 + $0xa0] sm:$0xf]
      %v962 = vld [vmem:[#allocation2 + $0xa4] sm:$0x1]
      %v963 = vld [vmem:[#allocation2 + $0xa8] sm:$0xf]
      %v964 = vld [vmem:[#allocation2 + $0xac] sm:$0xf]
      %v965 = vld [vmem:[#allocation2 + $0xb0] sm:$0x1]
      %v966 = vld [vmem:[#allocation2 + $0xb4] sm:$0xf]
      %v967 = vld [vmem:[#allocation2 + $0xb8] sm:$0xf]
      %v968 = vld [vmem:[#allocation2 + $0xbc] sm:$0x1]
      %v1017 = vunpack.c.l.b16 %v921
      %v1018 = vunpack.c.l.b16 %v922
      %v1019 = vunpack.c.l.b16 %v923
      %v1020 = vunpack.c.l.b16 %v924
      %v1021 = vunpack.c.l.b16 %v925
      %v1022 = vunpack.c.l.b16 %v926
      %v1023 = vunpack.c.l.b16 %v927
      %v1024 = vunpack.c.l.b16 %v928
      %v1025 = vunpack.c.l.b16 %v929
      %v1026 = vunpack.c.l.b16 %v930
      %v1027 = vunpack.c.l.b16 %v931
      %v1028 = vunpack.c.l.b16 %v932
      %v1029 = vunpack.c.l.b16 %v933
      %v1030 = vunpack.c.l.b16 %v934
      %v1031 = vunpack.c.l.b16 %v935
      %v1032 = vunpack.c.l.b16 %v936
      %v1033 = vunpack.c.l.b16 %v937
      %v1034 = vunpack.c.l.b16 %v938
      %v1035 = vunpack.c.l.b16 %v939
      %v1036 = vunpack.c.l.b16 %v940
      %v1037 = vunpack.c.l.b16 %v941
      %v1038 = vunpack.c.l.b16 %v942
      %v1039 = vunpack.c.l.b16 %v943
      %v1040 = vunpack.c.l.b16 %v944
      %v1041 = vunpack.c.l.b16 %v945
      %v1042 = vunpack.c.l.b16 %v946
      %v1043 = vunpack.c.l.b16 %v947
      %v1044 = vunpack.c.l.b16 %v948
      %v1045 = vunpack.c.l.b16 %v949
      %v1046 = vunpack.c.l.b16 %v950
      %v1047 = vunpack.c.l.b16 %v951
      %v1048 = vunpack.c.l.b16 %v952
      %v1049 = vunpack.c.l.b16 %v953
      %v1050 = vunpack.c.l.b16 %v954
      %v1051 = vunpack.c.l.b16 %v955
      %v1052 = vunpack.c.l.b16 %v956
      %v1053 = vunpack.c.l.b16 %v957
      %v1054 = vunpack.c.l.b16 %v958
      %v1055 = vunpack.c.l.b16 %v959
      %v1056 = vunpack.c.l.b16 %v960
      %v1057 = vunpack.c.l.b16 %v961
      %v1058 = vunpack.c.l.b16 %v962
      %v1059 = vunpack.c.l.b16 %v963
      %v1060 = vunpack.c.l.b16 %v964
      %v1061 = vunpack.c.l.b16 %v965
      %v1062 = vunpack.c.l.b16 %v966
      %v1063 = vunpack.c.l.b16 %v967
      %v1064 = vunpack.c.l.b16 %v968
      %v1065 = vpack.c.b16 %v1018, %v1017
      %v1066 = vpack.c.b16 %v1019, %v1019
      %v1067 = vpack.c.b16 %v1021, %v1020
      %v1068 = vpack.c.b16 %v1022, %v1022
      %v1069 = vpack.c.b16 %v1024, %v1023
      %v1070 = vpack.c.b16 %v1025, %v1025
      %v1071 = vpack.c.b16 %v1027, %v1026
      %v1072 = vpack.c.b16 %v1028, %v1028
      %v1073 = vpack.c.b16 %v1030, %v1029
      %v1074 = vpack.c.b16 %v1031, %v1031
      %v1075 = vpack.c.b16 %v1033, %v1032
      %v1076 = vpack.c.b16 %v1034, %v1034
      %v1077 = vpack.c.b16 %v1036, %v1035
      %v1078 = vpack.c.b16 %v1037, %v1037
      %v1079 = vpack.c.b16 %v1039, %v1038
      %v1080 = vpack.c.b16 %v1040, %v1040
      %v1081 = vpack.c.b16 %v1042, %v1041
      %v1082 = vpack.c.b16 %v1043, %v1043
      %v1083 = vpack.c.b16 %v1045, %v1044
      %v1084 = vpack.c.b16 %v1046, %v1046
      %v1085 = vpack.c.b16 %v1048, %v1047
      %v1086 = vpack.c.b16 %v1049, %v1049
      %v1087 = vpack.c.b16 %v1051, %v1050
      %v1088 = vpack.c.b16 %v1052, %v1052
      %v1089 = vpack.c.b16 %v1054, %v1053
      %v1090 = vpack.c.b16 %v1055, %v1055
      %v1091 = vpack.c.b16 %v1057, %v1056
      %v1092 = vpack.c.b16 %v1058, %v1058
      %v1093 = vpack.c.b16 %v1060, %v1059
      %v1094 = vpack.c.b16 %v1061, %v1061
      %v1095 = vpack.c.b16 %v1063, %v1062
      %v1096 = vpack.c.b16 %v1064, %v1064
      %vm1097 = vsmask.f32 7424
      %v1099 = vshrl.u32 %v1065, 16
      %v1101 = vshll.u32 %v1065, 16
      %v1103 = vrot.slane %v1101, 1
      %v1104 = vor.u32 %v1099, %v1103
      %v1106 = vshll.u32 %v1066, 16
      %v1108 = vrot.slane %v1106, 1
      %v1109 = vsel %vm1097, %v1104, %v1108
      %v1111 = vshrl.u32 %v1067, 16
      %v1113 = vshll.u32 %v1067, 16
      %v1115 = vrot.slane %v1113, 1
      %v1116 = vor.u32 %v1111, %v1115
      %v1118 = vshll.u32 %v1068, 16
      %v1120 = vrot.slane %v1118, 1
      %v1121 = vsel %vm1097, %v1116, %v1120
      %v1123 = vshrl.u32 %v1069, 16
      %v1125 = vshll.u32 %v1069, 16
      %v1127 = vrot.slane %v1125, 1
      %v1128 = vor.u32 %v1123, %v1127
      %v1130 = vshll.u32 %v1070, 16
      %v1132 = vrot.slane %v1130, 1
      %v1133 = vsel %vm1097, %v1128, %v1132
      %v1135 = vshrl.u32 %v1071, 16
      %v1137 = vshll.u32 %v1071, 16
      %v1139 = vrot.slane %v1137, 1
      %v1140 = vor.u32 %v1135, %v1139
      %v1142 = vshll.u32 %v1072, 16
      %v1144 = vrot.slane %v1142, 1
      %v1145 = vsel %vm1097, %v1140, %v1144
      %v1147 = vshrl.u32 %v1073, 16
      %v1149 = vshll.u32 %v1073, 16
      %v1151 = vrot.slane %v1149, 1
      %v1152 = vor.u32 %v1147, %v1151
      %v1154 = vshll.u32 %v1074, 16
      %v1156 = vrot.slane %v1154, 1
      %v1157 = vsel %vm1097, %v1152, %v1156
      %v1159 = vshrl.u32 %v1075, 16
      %v1161 = vshll.u32 %v1075, 16
      %v1163 = vrot.slane %v1161, 1
      %v1164 = vor.u32 %v1159, %v1163
      %v1166 = vshll.u32 %v1076, 16
      %v1168 = vrot.slane %v1166, 1
      %v1169 = vsel %vm1097, %v1164, %v1168
      %v1171 = vshrl.u32 %v1077, 16
      %v1173 = vshll.u32 %v1077, 16
      %v1175 = vrot.slane %v1173, 1
      %v1176 = vor.u32 %v1171, %v1175
      %v1178 = vshll.u32 %v1078, 16
      %v1180 = vrot.slane %v1178, 1
      %v1181 = vsel %vm1097, %v1176, %v1180
      %v1183 = vshrl.u32 %v1079, 16
      %v1185 = vshll.u32 %v1079, 16
      %v1187 = vrot.slane %v1185, 1
      %v1188 = vor.u32 %v1183, %v1187
      %v1190 = vshll.u32 %v1080, 16
      %v1192 = vrot.slane %v1190, 1
      %v1193 = vsel %vm1097, %v1188, %v1192
      %v1195 = vshrl.u32 %v1081, 16
      %v1197 = vshll.u32 %v1081, 16
      %v1199 = vrot.slane %v1197, 1
      %v1200 = vor.u32 %v1195, %v1199
      %v1202 = vshll.u32 %v1082, 16
      %v1204 = vrot.slane %v1202, 1
      %v1205 = vsel %vm1097, %v1200, %v1204
      %v1207 = vshrl.u32 %v1083, 16
      %v1209 = vshll.u32 %v1083, 16
      %v1211 = vrot.slane %v1209, 1
      %v1212 = vor.u32 %v1207, %v1211
      %v1214 = vshll.u32 %v1084, 16
      %v1216 = vrot.slane %v1214, 1
      %v1217 = vsel %vm1097, %v1212, %v1216
      %v1219 = vshrl.u32 %v1085, 16
      %v1221 = vshll.u32 %v1085, 16
      %v1223 = vrot.slane %v1221, 1
      %v1224 = vor.u32 %v1219, %v1223
      %v1226 = vshll.u32 %v1086, 16
      %v1228 = vrot.slane %v1226, 1
      %v1229 = vsel %vm1097, %v1224, %v1228
      %v1231 = vshrl.u32 %v1087, 16
      %v1233 = vshll.u32 %v1087, 16
      %v1235 = vrot.slane %v1233, 1
      %v1236 = vor.u32 %v1231, %v1235
      %v1238 = vshll.u32 %v1088, 16
      %v1240 = vrot.slane %v1238, 1
      %v1241 = vsel %vm1097, %v1236, %v1240
      %v1243 = vshrl.u32 %v1089, 16
      %v1245 = vshll.u32 %v1089, 16
      %v1247 = vrot.slane %v1245, 1
      %v1248 = vor.u32 %v1243, %v1247
      %v1250 = vshll.u32 %v1090, 16
      %v1252 = vrot.slane %v1250, 1
      %v1253 = vsel %vm1097, %v1248, %v1252
      %v1255 = vshrl.u32 %v1091, 16
      %v1257 = vshll.u32 %v1091, 16
      %v1259 = vrot.slane %v1257, 1
      %v1260 = vor.u32 %v1255, %v1259
      %v1262 = vshll.u32 %v1092, 16
      %v1264 = vrot.slane %v1262, 1
      %v1265 = vsel %vm1097, %v1260, %v1264
      %v1267 = vshrl.u32 %v1093, 16
      %v1269 = vshll.u32 %v1093, 16
      %v1271 = vrot.slane %v1269, 1
      %v1272 = vor.u32 %v1267, %v1271
      %v1274 = vshll.u32 %v1094, 16
      %v1276 = vrot.slane %v1274, 1
      %v1277 = vsel %vm1097, %v1272, %v1276
      %v1279 = vshrl.u32 %v1095, 16
      %v1281 = vshll.u32 %v1095, 16
      %v1283 = vrot.slane %v1281, 1
      %v1284 = vor.u32 %v1279, %v1283
      %v1286 = vshll.u32 %v1096, 16
      %v1288 = vrot.slane %v1286, 1
      %v1289 = vsel %vm1097, %v1284, %v1288
      %1290 = vrot.lane.b32.xlu0 %v1109, 4
      %v1291 = vpop.permute.xlu0 %1290
      %1292 = vrot.lane.b32.xlu0 %v1121, 4
      %v1293 = vpop.permute.xlu0 %1292
      %1294 = vrot.lane.b32.xlu0 %v1133, 4
      %v1295 = vpop.permute.xlu0 %1294
      %1296 = vrot.lane.b32.xlu0 %v1145, 4
      %v1297 = vpop.permute.xlu0 %1296
      %1298 = vrot.lane.b32.xlu0 %v1157, 4
      %v1299 = vpop.permute.xlu0 %1298
      %1300 = vrot.lane.b32.xlu0 %v1169, 4
      %v1301 = vpop.permute.xlu0 %1300
      %1302 = vrot.lane.b32.xlu0 %v1181, 4
      %v1303 = vpop.permute.xlu0 %1302
      %1304 = vrot.lane.b32.xlu0 %v1193, 4
      %v1305 = vpop.permute.xlu0 %1304
      %1306 = vrot.lane.b32.xlu0 %v1205, 4
      %v1307 = vpop.permute.xlu0 %1306
      %1308 = vrot.lane.b32.xlu0 %v1217, 4
      %v1309 = vpop.permute.xlu0 %1308
      %1310 = vrot.lane.b32.xlu0 %v1229, 4
      %v1311 = vpop.permute.xlu0 %1310
      %1312 = vrot.lane.b32.xlu0 %v1241, 4
      %v1313 = vpop.permute.xlu0 %1312
      %1314 = vrot.lane.b32.xlu0 %v1253, 4
      %v1315 = vpop.permute.xlu0 %1314
      %1316 = vrot.lane.b32.xlu0 %v1265, 4
      %v1317 = vpop.permute.xlu0 %1316
      %1318 = vrot.lane.b32.xlu0 %v1277, 4
      %v1319 = vpop.permute.xlu0 %1318
      %1320 = vrot.lane.b32.xlu0 %v1289, 4
      %v1321 = vpop.permute.xlu0 %1320
      %vm1338 = vcmask 64544
      %1339 = vst.msk [vmem:[#allocation3] sm:$0xff] %vm1338, %v1291
      %1340 = vst.msk [vmem:[#allocation3 + $0x8] sm:$0xff] %vm1338, %v1293
      %1341 = vst.msk [vmem:[#allocation3 + $0x10] sm:$0xff] %vm1338, %v1295
      %1342 = vst.msk [vmem:[#allocation3 + $0x18] sm:$0xff] %vm1338, %v1297
      %1343 = vst.msk [vmem:[#allocation3 + $0x20] sm:$0xff] %vm1338, %v1299
      %1344 = vst.msk [vmem:[#allocation3 + $0x28] sm:$0xff] %vm1338, %v1301
      %1345 = vst.msk [vmem:[#allocation3 + $0x30] sm:$0xff] %vm1338, %v1303
      %1346 = vst.msk [vmem:[#allocation3 + $0x38] sm:$0xff] %vm1338, %v1305
      %1347 = vst.msk [vmem:[#allocation3 + $0x40] sm:$0xff] %vm1338, %v1307
      %1348 = vst.msk [vmem:[#allocation3 + $0x48] sm:$0xff] %vm1338, %v1309
      %1349 = vst.msk [vmem:[#allocation3 + $0x50] sm:$0xff] %vm1338, %v1311
      %1350 = vst.msk [vmem:[#allocation3 + $0x58] sm:$0xff] %vm1338, %v1313
      %1351 = vst.msk [vmem:[#allocation3 + $0x60] sm:$0xff] %vm1338, %v1315
      %1352 = vst.msk [vmem:[#allocation3 + $0x68] sm:$0xff] %vm1338, %v1317
      %1353 = vst.msk [vmem:[#allocation3 + $0x70] sm:$0xff] %vm1338, %v1319
      %1354 = vst.msk [vmem:[#allocation3 + $0x78] sm:$0xff] %vm1338, %v1321
      %v1355 = vld [vmem:[#allocation2] sm:$0xe]
      %v1356 = vld [vmem:[#allocation2 + $0x4] sm:$0xf]
      %v1357 = vld [vmem:[#allocation2 + $0x8] sm:$0x1]
      %v1358 = vld [vmem:[#allocation2 + $0xc] sm:$0xe]
      %v1359 = vld [vmem:[#allocation2 + $0x10] sm:$0xf]
      %v1360 = vld [vmem:[#allocation2 + $0x14] sm:$0x1]
      %v1361 = vld [vmem:[#allocation2 + $0x18] sm:$0xe]
      %v1362 = vld [vmem:[#allocation2 + $0x1c] sm:$0xf]
      %v1363 = vld [vmem:[#allocation2 + $0x20] sm:$0x1]
      %v1364 = vld [vmem:[#allocation2 + $0x24] sm:$0xe]
      %v1365 = vld [vmem:[#allocation2 + $0x28] sm:$0xf]
      %v1366 = vld [vmem:[#allocation2 + $0x2c] sm:$0x1]
      %v1367 = vld [vmem:[#allocation2 + $0x30] sm:$0xe]
      %v1368 = vld [vmem:[#allocation2 + $0x34] sm:$0xf]
      %v1369 = vld [vmem:[#allocation2 + $0x38] sm:$0x1]
      %v1370 = vld [vmem:[#allocation2 + $0x3c] sm:$0xe]
      %v1371 = vld [vmem:[#allocation2 + $0x40] sm:$0xf]
      %v1372 = vld [vmem:[#allocation2 + $0x44] sm:$0x1]
      %v1373 = vld [vmem:[#allocation2 + $0x48] sm:$0xe]
      %v1374 = vld [vmem:[#allocation2 + $0x4c] sm:$0xf]
      %v1375 = vld [vmem:[#allocation2 + $0x50] sm:$0x1]
      %v1376 = vld [vmem:[#allocation2 + $0x54] sm:$0xe]
      %v1377 = vld [vmem:[#allocation2 + $0x58] sm:$0xf]
      %v1378 = vld [vmem:[#allocation2 + $0x5c] sm:$0x1]
      %v1379 = vld [vmem:[#allocation2 + $0x60] sm:$0xe]
      %v1380 = vld [vmem:[#allocation2 + $0x64] sm:$0xf]
      %v1381 = vld [vmem:[#allocation2 + $0x68] sm:$0x1]
      %v1382 = vld [vmem:[#allocation2 + $0x6c] sm:$0xe]
      %v1383 = vld [vmem:[#allocation2 + $0x70] sm:$0xf]
      %v1384 = vld [vmem:[#allocation2 + $0x74] sm:$0x1]
      %v1385 = vld [vmem:[#allocation2 + $0x78] sm:$0xe]
      %v1386 = vld [vmem:[#allocation2 + $0x7c] sm:$0xf]
      %v1387 = vld [vmem:[#allocation2 + $0x80] sm:$0x1]
      %v1388 = vld [vmem:[#allocation2 + $0x84] sm:$0xe]
      %v1389 = vld [vmem:[#allocation2 + $0x88] sm:$0xf]
      %v1390 = vld [vmem:[#allocation2 + $0x8c] sm:$0x1]
      %v1391 = vld [vmem:[#allocation2 + $0x90] sm:$0xe]
      %v1392 = vld [vmem:[#allocation2 + $0x94] sm:$0xf]
      %v1393 = vld [vmem:[#allocation2 + $0x98] sm:$0x1]
      %v1394 = vld [vmem:[#allocation2 + $0x9c] sm:$0xe]
      %v1395 = vld [vmem:[#allocation2 + $0xa0] sm:$0xf]
      %v1396 = vld [vmem:[#allocation2 + $0xa4] sm:$0x1]
      %v1397 = vld [vmem:[#allocation2 + $0xa8] sm:$0xe]
      %v1398 = vld [vmem:[#allocation2 + $0xac] sm:$0xf]
      %v1399 = vld [vmem:[#allocation2 + $0xb0] sm:$0x1]
      %v1400 = vld [vmem:[#allocation2 + $0xb4] sm:$0xe]
      %v1401 = vld [vmem:[#allocation2 + $0xb8] sm:$0xf]
      %v1402 = vld [vmem:[#allocation2 + $0xbc] sm:$0x1]
      %v1451 = vunpack.c.l.b16 %v1355
      %v1452 = vunpack.c.l.b16 %v1356
      %v1453 = vunpack.c.l.b16 %v1357
      %v1454 = vunpack.c.l.b16 %v1358
      %v1455 = vunpack.c.l.b16 %v1359
      %v1456 = vunpack.c.l.b16 %v1360
      %v1457 = vunpack.c.l.b16 %v1361
      %v1458 = vunpack.c.l.b16 %v1362
      %v1459 = vunpack.c.l.b16 %v1363
      %v1460 = vunpack.c.l.b16 %v1364
      %v1461 = vunpack.c.l.b16 %v1365
      %v1462 = vunpack.c.l.b16 %v1366
      %v1463 = vunpack.c.l.b16 %v1367
      %v1464 = vunpack.c.l.b16 %v1368
      %v1465 = vunpack.c.l.b16 %v1369
      %v1466 = vunpack.c.l.b16 %v1370
      %v1467 = vunpack.c.l.b16 %v1371
      %v1468 = vunpack.c.l.b16 %v1372
      %v1469 = vunpack.c.l.b16 %v1373
      %v1470 = vunpack.c.l.b16 %v1374
      %v1471 = vunpack.c.l.b16 %v1375
      %v1472 = vunpack.c.l.b16 %v1376
      %v1473 = vunpack.c.l.b16 %v1377
      %v1474 = vunpack.c.l.b16 %v1378
      %v1475 = vunpack.c.l.b16 %v1379
      %v1476 = vunpack.c.l.b16 %v1380
      %v1477 = vunpack.c.l.b16 %v1381
      %v1478 = vunpack.c.l.b16 %v1382
      %v1479 = vunpack.c.l.b16 %v1383
      %v1480 = vunpack.c.l.b16 %v1384
      %v1481 = vunpack.c.l.b16 %v1385
      %v1482 = vunpack.c.l.b16 %v1386
      %v1483 = vunpack.c.l.b16 %v1387
      %v1484 = vunpack.c.l.b16 %v1388
      %v1485 = vunpack.c.l.b16 %v1389
      %v1486 = vunpack.c.l.b16 %v1390
      %v1487 = vunpack.c.l.b16 %v1391
      %v1488 = vunpack.c.l.b16 %v1392
      %v1489 = vunpack.c.l.b16 %v1393
      %v1490 = vunpack.c.l.b16 %v1394
      %v1491 = vunpack.c.l.b16 %v1395
      %v1492 = vunpack.c.l.b16 %v1396
      %v1493 = vunpack.c.l.b16 %v1397
      %v1494 = vunpack.c.l.b16 %v1398
      %v1495 = vunpack.c.l.b16 %v1399
      %v1496 = vunpack.c.l.b16 %v1400
      %v1497 = vunpack.c.l.b16 %v1401
      %v1498 = vunpack.c.l.b16 %v1402
      %v1499 = vpack.c.b16 %v1452, %v1451
      %v1500 = vpack.c.b16 %v1453, %v1453
      %v1501 = vpack.c.b16 %v1455, %v1454
      %v1502 = vpack.c.b16 %v1456, %v1456
      %v1503 = vpack.c.b16 %v1458, %v1457
      %v1504 = vpack.c.b16 %v1459, %v1459
      %v1505 = vpack.c.b16 %v1461, %v1460
      %v1506 = vpack.c.b16 %v1462, %v1462
      %v1507 = vpack.c.b16 %v1464, %v1463
      %v1508 = vpack.c.b16 %v1465, %v1465
      %v1509 = vpack.c.b16 %v1467, %v1466
      %v1510 = vpack.c.b16 %v1468, %v1468
      %v1511 = vpack.c.b16 %v1470, %v1469
      %v1512 = vpack.c.b16 %v1471, %v1471
      %v1513 = vpack.c.b16 %v1473, %v1472
      %v1514 = vpack.c.b16 %v1474, %v1474
      %v1515 = vpack.c.b16 %v1476, %v1475
      %v1516 = vpack.c.b16 %v1477, %v1477
      %v1517 = vpack.c.b16 %v1479, %v1478
      %v1518 = vpack.c.b16 %v1480, %v1480
      %v1519 = vpack.c.b16 %v1482, %v1481
      %v1520 = vpack.c.b16 %v1483, %v1483
      %v1521 = vpack.c.b16 %v1485, %v1484
      %v1522 = vpack.c.b16 %v1486, %v1486
      %v1523 = vpack.c.b16 %v1488, %v1487
      %v1524 = vpack.c.b16 %v1489, %v1489
      %v1525 = vpack.c.b16 %v1491, %v1490
      %v1526 = vpack.c.b16 %v1492, %v1492
      %v1527 = vpack.c.b16 %v1494, %v1493
      %v1528 = vpack.c.b16 %v1495, %v1495
      %v1529 = vpack.c.b16 %v1497, %v1496
      %v1530 = vpack.c.b16 %v1498, %v1498
      %vm1531 = vcmask 1046528
      %v1532 = vrot.slane %v1499, 1
      %v1533 = vrot.slane %v1500, 1
      %v1534 = vsel %vm1531, %v1532, %v1533
      %v1535 = vrot.slane %v1501, 1
      %v1536 = vrot.slane %v1502, 1
      %v1537 = vsel %vm1531, %v1535, %v1536
      %v1538 = vrot.slane %v1503, 1
      %v1539 = vrot.slane %v1504, 1
      %v1540 = vsel %vm1531, %v1538, %v1539
      %v1541 = vrot.slane %v1505, 1
      %v1542 = vrot.slane %v1506, 1
      %v1543 = vsel %vm1531, %v1541, %v1542
      %v1544 = vrot.slane %v1507, 1
      %v1545 = vrot.slane %v1508, 1
      %v1546 = vsel %vm1531, %v1544, %v1545
      %v1547 = vrot.slane %v1509, 1
      %v1548 = vrot.slane %v1510, 1
      %v1549 = vsel %vm1531, %v1547, %v1548
      %v1550 = vrot.slane %v1511, 1
      %v1551 = vrot.slane %v1512, 1
      %v1552 = vsel %vm1531, %v1550, %v1551
      %v1553 = vrot.slane %v1513, 1
      %v1554 = vrot.slane %v1514, 1
      %v1555 = vsel %vm1531, %v1553, %v1554
      %v1556 = vrot.slane %v1515, 1
      %v1557 = vrot.slane %v1516, 1
      %v1558 = vsel %vm1531, %v1556, %v1557
      %v1559 = vrot.slane %v1517, 1
      %v1560 = vrot.slane %v1518, 1
      %v1561 = vsel %vm1531, %v1559, %v1560
      %v1562 = vrot.slane %v1519, 1
      %v1563 = vrot.slane %v1520, 1
      %v1564 = vsel %vm1531, %v1562, %v1563
      %v1565 = vrot.slane %v1521, 1
      %v1566 = vrot.slane %v1522, 1
      %v1567 = vsel %vm1531, %v1565, %v1566
      %v1568 = vrot.slane %v1523, 1
      %v1569 = vrot.slane %v1524, 1
      %v1570 = vsel %vm1531, %v1568, %v1569
      %v1571 = vrot.slane %v1525, 1
      %v1572 = vrot.slane %v1526, 1
      %v1573 = vsel %vm1531, %v1571, %v1572
      %v1574 = vrot.slane %v1527, 1
      %v1575 = vrot.slane %v1528, 1
      %v1576 = vsel %vm1531, %v1574, %v1575
      %v1577 = vrot.slane %v1529, 1
      %v1578 = vrot.slane %v1530, 1
      %v1579 = vsel %vm1531, %v1577, %v1578
      %1580 = vrot.lane.b32.xlu0 %v1534, 8
      %v1581 = vpop.permute.xlu0 %1580
      %1582 = vrot.lane.b32.xlu0 %v1537, 8
      %v1583 = vpop.permute.xlu0 %1582
      %1584 = vrot.lane.b32.xlu0 %v1540, 8
      %v1585 = vpop.permute.xlu0 %1584
      %1586 = vrot.lane.b32.xlu0 %v1543, 8
      %v1587 = vpop.permute.xlu0 %1586
      %1588 = vrot.lane.b32.xlu0 %v1546, 8
      %v1589 = vpop.permute.xlu0 %1588
      %1590 = vrot.lane.b32.xlu0 %v1549, 8
      %v1591 = vpop.permute.xlu0 %1590
      %1592 = vrot.lane.b32.xlu0 %v1552, 8
      %v1593 = vpop.permute.xlu0 %1592
      %1594 = vrot.lane.b32.xlu0 %v1555, 8
      %v1595 = vpop.permute.xlu0 %1594
      %1596 = vrot.lane.b32.xlu0 %v1558, 8
      %v1597 = vpop.permute.xlu0 %1596
      %1598 = vrot.lane.b32.xlu0 %v1561, 8
      %v1599 = vpop.permute.xlu0 %1598
      %1600 = vrot.lane.b32.xlu0 %v1564, 8
      %v1601 = vpop.permute.xlu0 %1600
      %1602 = vrot.lane.b32.xlu0 %v1567, 8
      %v1603 = vpop.permute.xlu0 %1602
      %1604 = vrot.lane.b32.xlu0 %v1570, 8
      %v1605 = vpop.permute.xlu0 %1604
      %1606 = vrot.lane.b32.xlu0 %v1573, 8
      %v1607 = vpop.permute.xlu0 %1606
      %1608 = vrot.lane.b32.xlu0 %v1576, 8
      %v1609 = vpop.permute.xlu0 %1608
      %1610 = vrot.lane.b32.xlu0 %v1579, 8
      %v1611 = vpop.permute.xlu0 %1610
      %vm1628 = vcmask 97344
      %1629 = vst.msk [vmem:[#allocation3] sm:$0xff] %vm1628, %v1581
      %1630 = vst.msk [vmem:[#allocation3 + $0x8] sm:$0xff] %vm1628, %v1583
      %1631 = vst.msk [vmem:[#allocation3 + $0x10] sm:$0xff] %vm1628, %v1585
      %1632 = vst.msk [vmem:[#allocation3 + $0x18] sm:$0xff] %vm1628, %v1587
      %1633 = vst.msk [vmem:[#allocation3 + $0x20] sm:$0xff] %vm1628, %v1589
      %1634 = vst.msk [vmem:[#allocation3 + $0x28] sm:$0xff] %vm1628, %v1591
      %1635 = vst.msk [vmem:[#allocation3 + $0x30] sm:$0xff] %vm1628, %v1593
      %1636 = vst.msk [vmem:[#allocation3 + $0x38] sm:$0xff] %vm1628, %v1595
      %1637 = vst.msk [vmem:[#allocation3 + $0x40] sm:$0xff] %vm1628, %v1597
      %1638 = vst.msk [vmem:[#allocation3 + $0x48] sm:$0xff] %vm1628, %v1599
      %1639 = vst.msk [vmem:[#allocation3 + $0x50] sm:$0xff] %vm1628, %v1601
      %1640 = vst.msk [vmem:[#allocation3 + $0x58] sm:$0xff] %vm1628, %v1603
      %1641 = vst.msk [vmem:[#allocation3 + $0x60] sm:$0xff] %vm1628, %v1605
      %1642 = vst.msk [vmem:[#allocation3 + $0x68] sm:$0xff] %vm1628, %v1607
      %1643 = vst.msk [vmem:[#allocation3 + $0x70] sm:$0xff] %vm1628, %v1609
      %1644 = vst.msk [vmem:[#allocation3 + $0x78] sm:$0xff] %vm1628, %v1611
      %v1645 = vld [vmem:[%s659] sm:$0xf]
      %v1646 = vld [vmem:[%s659 + $0x4] sm:$0xf]
      %v1647 = vld [vmem:[%s659 + $0xc] sm:$0xf]
      %v1648 = vld [vmem:[%s659 + $0x10] sm:$0xf]
      %v1649 = vld [vmem:[%s659 + $0x18] sm:$0xf]
      %v1650 = vld [vmem:[%s659 + $0x1c] sm:$0xf]
      %v1651 = vld [vmem:[%s659 + $0x24] sm:$0xf]
      %v1652 = vld [vmem:[%s659 + $0x28] sm:$0xf]
      %v1653 = vld [vmem:[%s659 + $0x30] sm:$0xf]
      %v1654 = vld [vmem:[%s659 + $0x34] sm:$0xf]
      %v1655 = vld [vmem:[%s659 + $0x3c] sm:$0xf]
      %v1656 = vld [vmem:[%s659 + $0x40] sm:$0xf]
      %v1657 = vld [vmem:[%s659 + $0x48] sm:$0xf]
      %v1658 = vld [vmem:[%s659 + $0x4c] sm:$0xf]
      %v1659 = vld [vmem:[%s659 + $0x54] sm:$0xf]
      %v1660 = vld [vmem:[%s659 + $0x58] sm:$0xf]
      %v1661 = vld [vmem:[%s659 + $0x60] sm:$0xf]
      %v1662 = vld [vmem:[%s659 + $0x64] sm:$0xf]
      %v1663 = vld [vmem:[%s659 + $0x6c] sm:$0xf]
      %v1664 = vld [vmem:[%s659 + $0x70] sm:$0xf]
      %v1665 = vld [vmem:[%s659 + $0x78] sm:$0xf]
      %v1666 = vld [vmem:[%s659 + $0x7c] sm:$0xf]
      %v1667 = vld [vmem:[%s659 + $0x84] sm:$0xf]
      %v1668 = vld [vmem:[%s659 + $0x88] sm:$0xf]
      %v1669 = vld [vmem:[%s659 + $0x90] sm:$0xf]
      %v1670 = vld [vmem:[%s659 + $0x94] sm:$0xf]
      %v1671 = vld [vmem:[%s659 + $0x9c] sm:$0xf]
      %v1672 = vld [vmem:[%s659 + $0xa0] sm:$0xf]
      %v1673 = vld [vmem:[%s659 + $0xa8] sm:$0xf]
      %v1674 = vld [vmem:[%s659 + $0xac] sm:$0xf]
      %v1675 = vld [vmem:[%s659 + $0xb4] sm:$0xf]
      %v1676 = vld [vmem:[%s659 + $0xb8] sm:$0xf]
      %v1709 = vunpack.c.l.b16 %v1645
      %v1710 = vunpack.c.l.b16 %v1646
      %v1711 = vunpack.c.l.b16 %v1647
      %v1712 = vunpack.c.l.b16 %v1648
      %v1713 = vunpack.c.l.b16 %v1649
      %v1714 = vunpack.c.l.b16 %v1650
      %v1715 = vunpack.c.l.b16 %v1651
      %v1716 = vunpack.c.l.b16 %v1652
      %v1717 = vunpack.c.l.b16 %v1653
      %v1718 = vunpack.c.l.b16 %v1654
      %v1719 = vunpack.c.l.b16 %v1655
      %v1720 = vunpack.c.l.b16 %v1656
      %v1721 = vunpack.c.l.b16 %v1657
      %v1722 = vunpack.c.l.b16 %v1658
      %v1723 = vunpack.c.l.b16 %v1659
      %v1724 = vunpack.c.l.b16 %v1660
      %v1725 = vunpack.c.l.b16 %v1661
      %v1726 = vunpack.c.l.b16 %v1662
      %v1727 = vunpack.c.l.b16 %v1663
      %v1728 = vunpack.c.l.b16 %v1664
      %v1729 = vunpack.c.l.b16 %v1665
      %v1730 = vunpack.c.l.b16 %v1666
      %v1731 = vunpack.c.l.b16 %v1667
      %v1732 = vunpack.c.l.b16 %v1668
      %v1733 = vunpack.c.l.b16 %v1669
      %v1734 = vunpack.c.l.b16 %v1670
      %v1735 = vunpack.c.l.b16 %v1671
      %v1736 = vunpack.c.l.b16 %v1672
      %v1737 = vunpack.c.l.b16 %v1673
      %v1738 = vunpack.c.l.b16 %v1674
      %v1739 = vunpack.c.l.b16 %v1675
      %v1740 = vunpack.c.l.b16 %v1676
      %v1741 = vpack.c.b16 %v1710, %v1709
      %v1742 = vpack.c.b16 %v1712, %v1711
      %v1743 = vpack.c.b16 %v1714, %v1713
      %v1744 = vpack.c.b16 %v1716, %v1715
      %v1745 = vpack.c.b16 %v1718, %v1717
      %v1746 = vpack.c.b16 %v1720, %v1719
      %v1747 = vpack.c.b16 %v1722, %v1721
      %v1748 = vpack.c.b16 %v1724, %v1723
      %v1749 = vpack.c.b16 %v1726, %v1725
      %v1750 = vpack.c.b16 %v1728, %v1727
      %v1751 = vpack.c.b16 %v1730, %v1729
      %v1752 = vpack.c.b16 %v1732, %v1731
      %v1753 = vpack.c.b16 %v1734, %v1733
      %v1754 = vpack.c.b16 %v1736, %v1735
      %v1755 = vpack.c.b16 %v1738, %v1737
      %v1756 = vpack.c.b16 %v1740, %v1739
      %1757 = vrot.lane.b32.xlu0 %v1741, 12
      %v1758 = vpop.permute.xlu0 %1757
      %1759 = vrot.lane.b32.xlu0 %v1742, 12
      %v1760 = vpop.permute.xlu0 %1759
      %1761 = vrot.lane.b32.xlu0 %v1743, 12
      %v1762 = vpop.permute.xlu0 %1761
      %1763 = vrot.lane.b32.xlu0 %v1744, 12
      %v1764 = vpop.permute.xlu0 %1763
      %1765 = vrot.lane.b32.xlu0 %v1745, 12
      %v1766 = vpop.permute.xlu0 %1765
      %1767 = vrot.lane.b32.xlu0 %v1746, 12
      %v1768 = vpop.permute.xlu0 %1767
      %1769 = vrot.lane.b32.xlu0 %v1747, 12
      %v1770 = vpop.permute.xlu0 %1769
      %1771 = vrot.lane.b32.xlu0 %v1748, 12
      %v1772 = vpop.permute.xlu0 %1771
      %1773 = vrot.lane.b32.xlu0 %v1749, 12
      %v1774 = vpop.permute.xlu0 %1773
      %1775 = vrot.lane.b32.xlu0 %v1750, 12
      %v1776 = vpop.permute.xlu0 %1775
      %1777 = vrot.lane.b32.xlu0 %v1751, 12
      %v1778 = vpop.permute.xlu0 %1777
      %1779 = vrot.lane.b32.xlu0 %v1752, 12
      %v1780 = vpop.permute.xlu0 %1779
      %1781 = vrot.lane.b32.xlu0 %v1753, 12
      %v1782 = vpop.permute.xlu0 %1781
      %1783 = vrot.lane.b32.xlu0 %v1754, 12
      %v1784 = vpop.permute.xlu0 %1783
      %1785 = vrot.lane.b32.xlu0 %v1755, 12
      %v1786 = vpop.permute.xlu0 %1785
      %1787 = vrot.lane.b32.xlu0 %v1756, 12
      %v1788 = vpop.permute.xlu0 %1787
      %vm1805 = vcmask 130144
      %1806 = vst.msk [vmem:[#allocation3] sm:$0xff] %vm1805, %v1758
      %1807 = vst.msk [vmem:[#allocation3 + $0x8] sm:$0xff] %vm1805, %v1760
      %1808 = vst.msk [vmem:[#allocation3 + $0x10] sm:$0xff] %vm1805, %v1762
      %1809 = vst.msk [vmem:[#allocation3 + $0x18] sm:$0xff] %vm1805, %v1764
      %1810 = vst.msk [vmem:[#allocation3 + $0x20] sm:$0xff] %vm1805, %v1766
      %1811 = vst.msk [vmem:[#allocation3 + $0x28] sm:$0xff] %vm1805, %v1768
      %1812 = vst.msk [vmem:[#allocation3 + $0x30] sm:$0xff] %vm1805, %v1770
      %1813 = vst.msk [vmem:[#allocation3 + $0x38] sm:$0xff] %vm1805, %v1772
      %1814 = vst.msk [vmem:[#allocation3 + $0x40] sm:$0xff] %vm1805, %v1774
      %1815 = vst.msk [vmem:[#allocation3 + $0x48] sm:$0xff] %vm1805, %v1776
      %1816 = vst.msk [vmem:[#allocation3 + $0x50] sm:$0xff] %vm1805, %v1778
      %1817 = vst.msk [vmem:[#allocation3 + $0x58] sm:$0xff] %vm1805, %v1780
      %1818 = vst.msk [vmem:[#allocation3 + $0x60] sm:$0xff] %vm1805, %v1782
      %1819 = vst.msk [vmem:[#allocation3 + $0x68] sm:$0xff] %vm1805, %v1784
      %1820 = vst.msk [vmem:[#allocation3 + $0x70] sm:$0xff] %vm1805, %v1786
      %1821 = vst.msk [vmem:[#allocation3 + $0x78] sm:$0xff] %vm1805, %v1788
      %v1822 = vld [vmem:[%s659] sm:$0xf]
      %v1823 = vld [vmem:[%s659 + $0x4] sm:$0xf]
      %v1824 = vld [vmem:[%s659 + $0x8] sm:$0x1]
      %v1825 = vld [vmem:[%s659 + $0xc] sm:$0xf]
      %v1826 = vld [vmem:[%s659 + $0x10] sm:$0xf]
      %v1827 = vld [vmem:[%s659 + $0x14] sm:$0x1]
      %v1828 = vld [vmem:[%s659 + $0x18] sm:$0xf]
      %v1829 = vld [vmem:[%s659 + $0x1c] sm:$0xf]
      %v1830 = vld [vmem:[%s659 + $0x20] sm:$0x1]
      %v1831 = vld [vmem:[%s659 + $0x24] sm:$0xf]
      %v1832 = vld [vmem:[%s659 + $0x28] sm:$0xf]
      %v1833 = vld [vmem:[%s659 + $0x2c] sm:$0x1]
      %v1834 = vld [vmem:[%s659 + $0x30] sm:$0xf]
      %v1835 = vld [vmem:[%s659 + $0x34] sm:$0xf]
      %v1836 = vld [vmem:[%s659 + $0x38] sm:$0x1]
      %v1837 = vld [vmem:[%s659 + $0x3c] sm:$0xf]
      %v1838 = vld [vmem:[%s659 + $0x40] sm:$0xf]
      %v1839 = vld [vmem:[%s659 + $0x44] sm:$0x1]
      %v1840 = vld [vmem:[%s659 + $0x48] sm:$0xf]
      %v1841 = vld [vmem:[%s659 + $0x4c] sm:$0xf]
      %v1842 = vld [vmem:[%s659 + $0x50] sm:$0x1]
      %v1843 = vld [vmem:[%s659 + $0x54] sm:$0xf]
      %v1844 = vld [vmem:[%s659 + $0x58] sm:$0xf]
      %v1845 = vld [vmem:[%s659 + $0x5c] sm:$0x1]
      %v1846 = vld [vmem:[%s659 + $0x60] sm:$0xf]
      %v1847 = vld [vmem:[%s659 + $0x64] sm:$0xf]
      %v1848 = vld [vmem:[%s659 + $0x68] sm:$0x1]
      %v1849 = vld [vmem:[%s659 + $0x6c] sm:$0xf]
      %v1850 = vld [vmem:[%s659 + $0x70] sm:$0xf]
      %v1851 = vld [vmem:[%s659 + $0x74] sm:$0x1]
      %v1852 = vld [vmem:[%s659 + $0x78] sm:$0xf]
      %v1853 = vld [vmem:[%s659 + $0x7c] sm:$0xf]
      %v1854 = vld [vmem:[%s659 + $0x80] sm:$0x1]
      %v1855 = vld [vmem:[%s659 + $0x84] sm:$0xf]
      %v1856 = vld [vmem:[%s659 + $0x88] sm:$0xf]
      %v1857 = vld [vmem:[%s659 + $0x8c] sm:$0x1]
      %v1858 = vld [vmem:[%s659 + $0x90] sm:$0xf]
      %v1859 = vld [vmem:[%s659 + $0x94] sm:$0xf]
      %v1860 = vld [vmem:[%s659 + $0x98] sm:$0x1]
      %v1861 = vld [vmem:[%s659 + $0x9c] sm:$0xf]
      %v1862 = vld [vmem:[%s659 + $0xa0] sm:$0xf]
      %v1863 = vld [vmem:[%s659 + $0xa4] sm:$0x1]
      %v1864 = vld [vmem:[%s659 + $0xa8] sm:$0xf]
      %v1865 = vld [vmem:[%s659 + $0xac] sm:$0xf]
      %v1866 = vld [vmem:[%s659 + $0xb0] sm:$0x1]
      %v1867 = vld [vmem:[%s659 + $0xb4] sm:$0xf]
      %v1868 = vld [vmem:[%s659 + $0xb8] sm:$0xf]
      %v1869 = vld [vmem:[%s659 + $0xbc] sm:$0x1]
      %v1918 = vunpack.c.l.b16 %v1822
      %v1919 = vunpack.c.l.b16 %v1823
      %v1920 = vunpack.c.l.b16 %v1824
      %v1921 = vunpack.c.l.b16 %v1825
      %v1922 = vunpack.c.l.b16 %v1826
      %v1923 = vunpack.c.l.b16 %v1827
      %v1924 = vunpack.c.l.b16 %v1828
      %v1925 = vunpack.c.l.b16 %v1829
      %v1926 = vunpack.c.l.b16 %v1830
      %v1927 = vunpack.c.l.b16 %v1831
      %v1928 = vunpack.c.l.b16 %v1832
      %v1929 = vunpack.c.l.b16 %v1833
      %v1930 = vunpack.c.l.b16 %v1834
      %v1931 = vunpack.c.l.b16 %v1835
      %v1932 = vunpack.c.l.b16 %v1836
      %v1933 = vunpack.c.l.b16 %v1837
      %v1934 = vunpack.c.l.b16 %v1838
      %v1935 = vunpack.c.l.b16 %v1839
      %v1936 = vunpack.c.l.b16 %v1840
      %v1937 = vunpack.c.l.b16 %v1841
      %v1938 = vunpack.c.l.b16 %v1842
      %v1939 = vunpack.c.l.b16 %v1843
      %v1940 = vunpack.c.l.b16 %v1844
      %v1941 = vunpack.c.l.b16 %v1845
      %v1942 = vunpack.c.l.b16 %v1846
      %v1943 = vunpack.c.l.b16 %v1847
      %v1944 = vunpack.c.l.b16 %v1848
      %v1945 = vunpack.c.l.b16 %v1849
      %v1946 = vunpack.c.l.b16 %v1850
      %v1947 = vunpack.c.l.b16 %v1851
      %v1948 = vunpack.c.l.b16 %v1852
      %v1949 = vunpack.c.l.b16 %v1853
      %v1950 = vunpack.c.l.b16 %v1854
      %v1951 = vunpack.c.l.b16 %v1855
      %v1952 = vunpack.c.l.b16 %v1856
      %v1953 = vunpack.c.l.b16 %v1857
      %v1954 = vunpack.c.l.b16 %v1858
      %v1955 = vunpack.c.l.b16 %v1859
      %v1956 = vunpack.c.l.b16 %v1860
      %v1957 = vunpack.c.l.b16 %v1861
      %v1958 = vunpack.c.l.b16 %v1862
      %v1959 = vunpack.c.l.b16 %v1863
      %v1960 = vunpack.c.l.b16 %v1864
      %v1961 = vunpack.c.l.b16 %v1865
      %v1962 = vunpack.c.l.b16 %v1866
      %v1963 = vunpack.c.l.b16 %v1867
      %v1964 = vunpack.c.l.b16 %v1868
      %v1965 = vunpack.c.l.b16 %v1869
      %v1966 = vpack.c.b16 %v1919, %v1918
      %v1967 = vpack.c.b16 %v1920, %v1920
      %v1968 = vpack.c.b16 %v1922, %v1921
      %v1969 = vpack.c.b16 %v1923, %v1923
      %v1970 = vpack.c.b16 %v1925, %v1924
      %v1971 = vpack.c.b16 %v1926, %v1926
      %v1972 = vpack.c.b16 %v1928, %v1927
      %v1973 = vpack.c.b16 %v1929, %v1929
      %v1974 = vpack.c.b16 %v1931, %v1930
      %v1975 = vpack.c.b16 %v1932, %v1932
      %v1976 = vpack.c.b16 %v1934, %v1933
      %v1977 = vpack.c.b16 %v1935, %v1935
      %v1978 = vpack.c.b16 %v1937, %v1936
      %v1979 = vpack.c.b16 %v1938, %v1938
      %v1980 = vpack.c.b16 %v1940, %v1939
      %v1981 = vpack.c.b16 %v1941, %v1941
      %v1982 = vpack.c.b16 %v1943, %v1942
      %v1983 = vpack.c.b16 %v1944, %v1944
      %v1984 = vpack.c.b16 %v1946, %v1945
      %v1985 = vpack.c.b16 %v1947, %v1947
      %v1986 = vpack.c.b16 %v1949, %v1948
      %v1987 = vpack.c.b16 %v1950, %v1950
      %v1988 = vpack.c.b16 %v1952, %v1951
      %v1989 = vpack.c.b16 %v1953, %v1953
      %v1990 = vpack.c.b16 %v1955, %v1954
      %v1991 = vpack.c.b16 %v1956, %v1956
      %v1992 = vpack.c.b16 %v1958, %v1957
      %v1993 = vpack.c.b16 %v1959, %v1959
      %v1994 = vpack.c.b16 %v1961, %v1960
      %v1995 = vpack.c.b16 %v1962, %v1962
      %v1996 = vpack.c.b16 %v1964, %v1963
      %v1997 = vpack.c.b16 %v1965, %v1965
      %v1999 = vshrl.u32 %v1966, 16
      %v2001 = vshll.u32 %v1966, 16
      %v2003 = vrot.slane %v2001, 1
      %v2004 = vor.u32 %v1999, %v2003
      %v2006 = vshll.u32 %v1967, 16
      %v2008 = vrot.slane %v2006, 1
      %v2009 = vsel %vm1097, %v2004, %v2008
      %v2011 = vshrl.u32 %v1968, 16
      %v2013 = vshll.u32 %v1968, 16
      %v2015 = vrot.slane %v2013, 1
      %v2016 = vor.u32 %v2011, %v2015
      %v2018 = vshll.u32 %v1969, 16
      %v2020 = vrot.slane %v2018, 1
      %v2021 = vsel %vm1097, %v2016, %v2020
      %v2023 = vshrl.u32 %v1970, 16
      %v2025 = vshll.u32 %v1970, 16
      %v2027 = vrot.slane %v2025, 1
      %v2028 = vor.u32 %v2023, %v2027
      %v2030 = vshll.u32 %v1971, 16
      %v2032 = vrot.slane %v2030, 1
      %v2033 = vsel %vm1097, %v2028, %v2032
      %v2035 = vshrl.u32 %v1972, 16
      %v2037 = vshll.u32 %v1972, 16
      %v2039 = vrot.slane %v2037, 1
      %v2040 = vor.u32 %v2035, %v2039
      %v2042 = vshll.u32 %v1973, 16
      %v2044 = vrot.slane %v2042, 1
      %v2045 = vsel %vm1097, %v2040, %v2044
      %v2047 = vshrl.u32 %v1974, 16
      %v2049 = vshll.u32 %v1974, 16
      %v2051 = vrot.slane %v2049, 1
      %v2052 = vor.u32 %v2047, %v2051
      %v2054 = vshll.u32 %v1975, 16
      %v2056 = vrot.slane %v2054, 1
      %v2057 = vsel %vm1097, %v2052, %v2056
      %v2059 = vshrl.u32 %v1976, 16
      %v2061 = vshll.u32 %v1976, 16
      %v2063 = vrot.slane %v2061, 1
      %v2064 = vor.u32 %v2059, %v2063
      %v2066 = vshll.u32 %v1977, 16
      %v2068 = vrot.slane %v2066, 1
      %v2069 = vsel %vm1097, %v2064, %v2068
      %v2071 = vshrl.u32 %v1978, 16
      %v2073 = vshll.u32 %v1978, 16
      %v2075 = vrot.slane %v2073, 1
      %v2076 = vor.u32 %v2071, %v2075
      %v2078 = vshll.u32 %v1979, 16
      %v2080 = vrot.slane %v2078, 1
      %v2081 = vsel %vm1097, %v2076, %v2080
      %v2083 = vshrl.u32 %v1980, 16
      %v2085 = vshll.u32 %v1980, 16
      %v2087 = vrot.slane %v2085, 1
      %v2088 = vor.u32 %v2083, %v2087
      %v2090 = vshll.u32 %v1981, 16
      %v2092 = vrot.slane %v2090, 1
      %v2093 = vsel %vm1097, %v2088, %v2092
      %v2095 = vshrl.u32 %v1982, 16
      %v2097 = vshll.u32 %v1982, 16
      %v2099 = vrot.slane %v2097, 1
      %v2100 = vor.u32 %v2095, %v2099
      %v2102 = vshll.u32 %v1983, 16
      %v2104 = vrot.slane %v2102, 1
      %v2105 = vsel %vm1097, %v2100, %v2104
      %v2107 = vshrl.u32 %v1984, 16
      %v2109 = vshll.u32 %v1984, 16
      %v2111 = vrot.slane %v2109, 1
      %v2112 = vor.u32 %v2107, %v2111
      %v2114 = vshll.u32 %v1985, 16
      %v2116 = vrot.slane %v2114, 1
      %v2117 = vsel %vm1097, %v2112, %v2116
      %v2119 = vshrl.u32 %v1986, 16
      %v2121 = vshll.u32 %v1986, 16
      %v2123 = vrot.slane %v2121, 1
      %v2124 = vor.u32 %v2119, %v2123
      %v2126 = vshll.u32 %v1987, 16
      %v2128 = vrot.slane %v2126, 1
      %v2129 = vsel %vm1097, %v2124, %v2128
      %v2131 = vshrl.u32 %v1988, 16
      %v2133 = vshll.u32 %v1988, 16
      %v2135 = vrot.slane %v2133, 1
      %v2136 = vor.u32 %v2131, %v2135
      %v2138 = vshll.u32 %v1989, 16
      %v2140 = vrot.slane %v2138, 1
      %v2141 = vsel %vm1097, %v2136, %v2140
      %v2143 = vshrl.u32 %v1990, 16
      %v2145 = vshll.u32 %v1990, 16
      %v2147 = vrot.slane %v2145, 1
      %v2148 = vor.u32 %v2143, %v2147
      %v2150 = vshll.u32 %v1991, 16
      %v2152 = vrot.slane %v2150, 1
      %v2153 = vsel %vm1097, %v2148, %v2152
      %v2155 = vshrl.u32 %v1992, 16
      %v2157 = vshll.u32 %v1992, 16
      %v2159 = vrot.slane %v2157, 1
      %v2160 = vor.u32 %v2155, %v2159
      %v2162 = vshll.u32 %v1993, 16
      %v2164 = vrot.slane %v2162, 1
      %v2165 = vsel %vm1097, %v2160, %v2164
      %v2167 = vshrl.u32 %v1994, 16
      %v2169 = vshll.u32 %v1994, 16
      %v2171 = vrot.slane %v2169, 1
      %v2172 = vor.u32 %v2167, %v2171
      %v2174 = vshll.u32 %v1995, 16
      %v2176 = vrot.slane %v2174, 1
      %v2177 = vsel %vm1097, %v2172, %v2176
      %v2179 = vshrl.u32 %v1996, 16
      %v2181 = vshll.u32 %v1996, 16
      %v2183 = vrot.slane %v2181, 1
      %v2184 = vor.u32 %v2179, %v2183
      %v2186 = vshll.u32 %v1997, 16
      %v2188 = vrot.slane %v2186, 1
      %v2189 = vsel %vm1097, %v2184, %v2188
      %2190 = vrot.lane.b32.xlu0 %v2009, 16
      %v2191 = vpop.permute.xlu0 %2190
      %2192 = vrot.lane.b32.xlu0 %v2021, 16
      %v2193 = vpop.permute.xlu0 %2192
      %2194 = vrot.lane.b32.xlu0 %v2033, 16
      %v2195 = vpop.permute.xlu0 %2194
      %2196 = vrot.lane.b32.xlu0 %v2045, 16
      %v2197 = vpop.permute.xlu0 %2196
      %2198 = vrot.lane.b32.xlu0 %v2057, 16
      %v2199 = vpop.permute.xlu0 %2198
      %2200 = vrot.lane.b32.xlu0 %v2069, 16
      %v2201 = vpop.permute.xlu0 %2200
      %2202 = vrot.lane.b32.xlu0 %v2081, 16
      %v2203 = vpop.permute.xlu0 %2202
      %2204 = vrot.lane.b32.xlu0 %v2093, 16
      %v2205 = vpop.permute.xlu0 %2204
      %2206 = vrot.lane.b32.xlu0 %v2105, 16
      %v2207 = vpop.permute.xlu0 %2206
      %2208 = vrot.lane.b32.xlu0 %v2117, 16
      %v2209 = vpop.permute.xlu0 %2208
      %2210 = vrot.lane.b32.xlu0 %v2129, 16
      %v2211 = vpop.permute.xlu0 %2210
      %2212 = vrot.lane.b32.xlu0 %v2141, 16
      %v2213 = vpop.permute.xlu0 %2212
      %2214 = vrot.lane.b32.xlu0 %v2153, 16
      %v2215 = vpop.permute.xlu0 %2214
      %2216 = vrot.lane.b32.xlu0 %v2165, 16
      %v2217 = vpop.permute.xlu0 %2216
      %2218 = vrot.lane.b32.xlu0 %v2177, 16
      %v2219 = vpop.permute.xlu0 %2218
      %2220 = vrot.lane.b32.xlu0 %v2189, 16
      %v2221 = vpop.permute.xlu0 %2220
      %vm2238 = vcmask 162944
      %2239 = vst.msk [vmem:[#allocation3] sm:$0xff] %vm2238, %v2191
      %2240 = vst.msk [vmem:[#allocation3 + $0x8] sm:$0xff] %vm2238, %v2193
      %2241 = vst.msk [vmem:[#allocation3 + $0x10] sm:$0xff] %vm2238, %v2195
      %2242 = vst.msk [vmem:[#allocation3 + $0x18] sm:$0xff] %vm2238, %v2197
      %2243 = vst.msk [vmem:[#allocation3 + $0x20] sm:$0xff] %vm2238, %v2199
      %2244 = vst.msk [vmem:[#allocation3 + $0x28] sm:$0xff] %vm2238, %v2201
      %2245 = vst.msk [vmem:[#allocation3 + $0x30] sm:$0xff] %vm2238, %v2203
      %2246 = vst.msk [vmem:[#allocation3 + $0x38] sm:$0xff] %vm2238, %v2205
      %2247 = vst.msk [vmem:[#allocation3 + $0x40] sm:$0xff] %vm2238, %v2207
      %2248 = vst.msk [vmem:[#allocation3 + $0x48] sm:$0xff] %vm2238, %v2209
      %2249 = vst.msk [vmem:[#allocation3 + $0x50] sm:$0xff] %vm2238, %v2211
      %2250 = vst.msk [vmem:[#allocation3 + $0x58] sm:$0xff] %vm2238, %v2213
      %2251 = vst.msk [vmem:[#allocation3 + $0x60] sm:$0xff] %vm2238, %v2215
      %2252 = vst.msk [vmem:[#allocation3 + $0x68] sm:$0xff] %vm2238, %v2217
      %2253 = vst.msk [vmem:[#allocation3 + $0x70] sm:$0xff] %vm2238, %v2219
      %2254 = vst.msk [vmem:[#allocation3 + $0x78] sm:$0xff] %vm2238, %v2221
      %v2255 = vld [vmem:[%s659] sm:$0xe]
      %v2256 = vld [vmem:[%s659 + $0x4] sm:$0xf]
      %v2257 = vld [vmem:[%s659 + $0x8] sm:$0x1]
      %v2258 = vld [vmem:[%s659 + $0xc] sm:$0xe]
      %v2259 = vld [vmem:[%s659 + $0x10] sm:$0xf]
      %v2260 = vld [vmem:[%s659 + $0x14] sm:$0x1]
      %v2261 = vld [vmem:[%s659 + $0x18] sm:$0xe]
      %v2262 = vld [vmem:[%s659 + $0x1c] sm:$0xf]
      %v2263 = vld [vmem:[%s659 + $0x20] sm:$0x1]
      %v2264 = vld [vmem:[%s659 + $0x24] sm:$0xe]
      %v2265 = vld [vmem:[%s659 + $0x28] sm:$0xf]
      %v2266 = vld [vmem:[%s659 + $0x2c] sm:$0x1]
      %v2267 = vld [vmem:[%s659 + $0x30] sm:$0xe]
      %v2268 = vld [vmem:[%s659 + $0x34] sm:$0xf]
      %v2269 = vld [vmem:[%s659 + $0x38] sm:$0x1]
      %v2270 = vld [vmem:[%s659 + $0x3c] sm:$0xe]
      %v2271 = vld [vmem:[%s659 + $0x40] sm:$0xf]
      %v2272 = vld [vmem:[%s659 + $0x44] sm:$0x1]
      %v2273 = vld [vmem:[%s659 + $0x48] sm:$0xe]
      %v2274 = vld [vmem:[%s659 + $0x4c] sm:$0xf]
      %v2275 = vld [vmem:[%s659 + $0x50] sm:$0x1]
      %v2276 = vld [vmem:[%s659 + $0x54] sm:$0xe]
      %v2277 = vld [vmem:[%s659 + $0x58] sm:$0xf]
      %v2278 = vld [vmem:[%s659 + $0x5c] sm:$0x1]
      %v2279 = vld [vmem:[%s659 + $0x60] sm:$0xe]
      %v2280 = vld [vmem:[%s659 + $0x64] sm:$0xf]
      %v2281 = vld [vmem:[%s659 + $0x68] sm:$0x1]
      %v2282 = vld [vmem:[%s659 + $0x6c] sm:$0xe]
      %v2283 = vld [vmem:[%s659 + $0x70] sm:$0xf]
      %v2284 = vld [vmem:[%s659 + $0x74] sm:$0x1]
      %v2285 = vld [vmem:[%s659 + $0x78] sm:$0xe]
      %v2286 = vld [vmem:[%s659 + $0x7c] sm:$0xf]
      %v2287 = vld [vmem:[%s659 + $0x80] sm:$0x1]
      %v2288 = vld [vmem:[%s659 + $0x84] sm:$0xe]
      %v2289 = vld [vmem:[%s659 + $0x88] sm:$0xf]
      %v2290 = vld [vmem:[%s659 + $0x8c] sm:$0x1]
      %v2291 = vld [vmem:[%s659 + $0x90] sm:$0xe]
      %v2292 = vld [vmem:[%s659 + $0x94] sm:$0xf]
      %v2293 = vld [vmem:[%s659 + $0x98] sm:$0x1]
      %v2294 = vld [vmem:[%s659 + $0x9c] sm:$0xe]
      %v2295 = vld [vmem:[%s659 + $0xa0] sm:$0xf]
      %v2296 = vld [vmem:[%s659 + $0xa4] sm:$0x1]
      %v2297 = vld [vmem:[%s659 + $0xa8] sm:$0xe]
      %v2298 = vld [vmem:[%s659 + $0xac] sm:$0xf]
      %v2299 = vld [vmem:[%s659 + $0xb0] sm:$0x1]
      %v2300 = vld [vmem:[%s659 + $0xb4] sm:$0xe]
      %v2301 = vld [vmem:[%s659 + $0xb8] sm:$0xf]
      %v2302 = vld [vmem:[%s659 + $0xbc] sm:$0x1]
      %v2351 = vunpack.c.l.b16 %v2255
      %v2352 = vunpack.c.l.b16 %v2256
      %v2353 = vunpack.c.l.b16 %v2257
      %v2354 = vunpack.c.l.b16 %v2258
      %v2355 = vunpack.c.l.b16 %v2259
      %v2356 = vunpack.c.l.b16 %v2260
      %v2357 = vunpack.c.l.b16 %v2261
      %v2358 = vunpack.c.l.b16 %v2262
      %v2359 = vunpack.c.l.b16 %v2263
      %v2360 = vunpack.c.l.b16 %v2264
      %v2361 = vunpack.c.l.b16 %v2265
      %v2362 = vunpack.c.l.b16 %v2266
      %v2363 = vunpack.c.l.b16 %v2267
      %v2364 = vunpack.c.l.b16 %v2268
      %v2365 = vunpack.c.l.b16 %v2269
      %v2366 = vunpack.c.l.b16 %v2270
      %v2367 = vunpack.c.l.b16 %v2271
      %v2368 = vunpack.c.l.b16 %v2272
      %v2369 = vunpack.c.l.b16 %v2273
      %v2370 = vunpack.c.l.b16 %v2274
      %v2371 = vunpack.c.l.b16 %v2275
      %v2372 = vunpack.c.l.b16 %v2276
      %v2373 = vunpack.c.l.b16 %v2277
      %v2374 = vunpack.c.l.b16 %v2278
      %v2375 = vunpack.c.l.b16 %v2279
      %v2376 = vunpack.c.l.b16 %v2280
      %v2377 = vunpack.c.l.b16 %v2281
      %v2378 = vunpack.c.l.b16 %v2282
      %v2379 = vunpack.c.l.b16 %v2283
      %v2380 = vunpack.c.l.b16 %v2284
      %v2381 = vunpack.c.l.b16 %v2285
      %v2382 = vunpack.c.l.b16 %v2286
      %v2383 = vunpack.c.l.b16 %v2287
      %v2384 = vunpack.c.l.b16 %v2288
      %v2385 = vunpack.c.l.b16 %v2289
      %v2386 = vunpack.c.l.b16 %v2290
      %v2387 = vunpack.c.l.b16 %v2291
      %v2388 = vunpack.c.l.b16 %v2292
      %v2389 = vunpack.c.l.b16 %v2293
      %v2390 = vunpack.c.l.b16 %v2294
      %v2391 = vunpack.c.l.b16 %v2295
      %v2392 = vunpack.c.l.b16 %v2296
      %v2393 = vunpack.c.l.b16 %v2297
      %v2394 = vunpack.c.l.b16 %v2298
      %v2395 = vunpack.c.l.b16 %v2299
      %v2396 = vunpack.c.l.b16 %v2300
      %v2397 = vunpack.c.l.b16 %v2301
      %v2398 = vunpack.c.l.b16 %v2302
      %v2399 = vpack.c.b16 %v2352, %v2351
      %v2400 = vpack.c.b16 %v2353, %v2353
      %v2401 = vpack.c.b16 %v2355, %v2354
      %v2402 = vpack.c.b16 %v2356, %v2356
      %v2403 = vpack.c.b16 %v2358, %v2357
      %v2404 = vpack.c.b16 %v2359, %v2359
      %v2405 = vpack.c.b16 %v2361, %v2360
      %v2406 = vpack.c.b16 %v2362, %v2362
      %v2407 = vpack.c.b16 %v2364, %v2363
      %v2408 = vpack.c.b16 %v2365, %v2365
      %v2409 = vpack.c.b16 %v2367, %v2366
      %v2410 = vpack.c.b16 %v2368, %v2368
      %v2411 = vpack.c.b16 %v2370, %v2369
      %v2412 = vpack.c.b16 %v2371, %v2371
      %v2413 = vpack.c.b16 %v2373, %v2372
      %v2414 = vpack.c.b16 %v2374, %v2374
      %v2415 = vpack.c.b16 %v2376, %v2375
      %v2416 = vpack.c.b16 %v2377, %v2377
      %v2417 = vpack.c.b16 %v2379, %v2378
      %v2418 = vpack.c.b16 %v2380, %v2380
      %v2419 = vpack.c.b16 %v2382, %v2381
      %v2420 = vpack.c.b16 %v2383, %v2383
      %v2421 = vpack.c.b16 %v2385, %v2384
      %v2422 = vpack.c.b16 %v2386, %v2386
      %v2423 = vpack.c.b16 %v2388, %v2387
      %v2424 = vpack.c.b16 %v2389, %v2389
      %v2425 = vpack.c.b16 %v2391, %v2390
      %v2426 = vpack.c.b16 %v2392, %v2392
      %v2427 = vpack.c.b16 %v2394, %v2393
      %v2428 = vpack.c.b16 %v2395, %v2395
      %v2429 = vpack.c.b16 %v2397, %v2396
      %v2430 = vpack.c.b16 %v2398, %v2398
      %v2431 = vrot.slane %v2399, 1
      %v2432 = vrot.slane %v2400, 1
      %v2433 = vsel %vm1531, %v2431, %v2432
      %v2434 = vrot.slane %v2401, 1
      %v2435 = vrot.slane %v2402, 1
      %v2436 = vsel %vm1531, %v2434, %v2435
      %v2437 = vrot.slane %v2403, 1
      %v2438 = vrot.slane %v2404, 1
      %v2439 = vsel %vm1531, %v2437, %v2438
      %v2440 = vrot.slane %v2405, 1
      %v2441 = vrot.slane %v2406, 1
      %v2442 = vsel %vm1531, %v2440, %v2441
      %v2443 = vrot.slane %v2407, 1
      %v2444 = vrot.slane %v2408, 1
      %v2445 = vsel %vm1531, %v2443, %v2444
      %v2446 = vrot.slane %v2409, 1
      %v2447 = vrot.slane %v2410, 1
      %v2448 = vsel %vm1531, %v2446, %v2447
      %v2449 = vrot.slane %v2411, 1
      %v2450 = vrot.slane %v2412, 1
      %v2451 = vsel %vm1531, %v2449, %v2450
      %v2452 = vrot.slane %v2413, 1
      %v2453 = vrot.slane %v2414, 1
      %v2454 = vsel %vm1531, %v2452, %v2453
      %v2455 = vrot.slane %v2415, 1
      %v2456 = vrot.slane %v2416, 1
      %v2457 = vsel %vm1531, %v2455, %v2456
      %v2458 = vrot.slane %v2417, 1
      %v2459 = vrot.slane %v2418, 1
      %v2460 = vsel %vm1531, %v2458, %v2459
      %v2461 = vrot.slane %v2419, 1
      %v2462 = vrot.slane %v2420, 1
      %v2463 = vsel %vm1531, %v2461, %v2462
      %v2464 = vrot.slane %v2421, 1
      %v2465 = vrot.slane %v2422, 1
      %v2466 = vsel %vm1531, %v2464, %v2465
      %v2467 = vrot.slane %v2423, 1
      %v2468 = vrot.slane %v2424, 1
      %v2469 = vsel %vm1531, %v2467, %v2468
      %v2470 = vrot.slane %v2425, 1
      %v2471 = vrot.slane %v2426, 1
      %v2472 = vsel %vm1531, %v2470, %v2471
      %v2473 = vrot.slane %v2427, 1
      %v2474 = vrot.slane %v2428, 1
      %v2475 = vsel %vm1531, %v2473, %v2474
      %v2476 = vrot.slane %v2429, 1
      %v2477 = vrot.slane %v2430, 1
      %v2478 = vsel %vm1531, %v2476, %v2477
      %2479 = vrot.lane.b32.xlu0 %v2433, 20
      %v2480 = vpop.permute.xlu0 %2479
      %2481 = vrot.lane.b32.xlu0 %v2436, 20
      %v2482 = vpop.permute.xlu0 %2481
      %2483 = vrot.lane.b32.xlu0 %v2439, 20
      %v2484 = vpop.permute.xlu0 %2483
      %2485 = vrot.lane.b32.xlu0 %v2442, 20
      %v2486 = vpop.permute.xlu0 %2485
      %2487 = vrot.lane.b32.xlu0 %v2445, 20
      %v2488 = vpop.permute.xlu0 %2487
      %2489 = vrot.lane.b32.xlu0 %v2448, 20
      %v2490 = vpop.permute.xlu0 %2489
      %2491 = vrot.lane.b32.xlu0 %v2451, 20
      %v2492 = vpop.permute.xlu0 %2491
      %2493 = vrot.lane.b32.xlu0 %v2454, 20
      %v2494 = vpop.permute.xlu0 %2493
      %2495 = vrot.lane.b32.xlu0 %v2457, 20
      %v2496 = vpop.permute.xlu0 %2495
      %2497 = vrot.lane.b32.xlu0 %v2460, 20
      %v2498 = vpop.permute.xlu0 %2497
      %2499 = vrot.lane.b32.xlu0 %v2463, 20
      %v2500 = vpop.permute.xlu0 %2499
      %2501 = vrot.lane.b32.xlu0 %v2466, 20
      %v2502 = vpop.permute.xlu0 %2501
      %2503 = vrot.lane.b32.xlu0 %v2469, 20
      %v2504 = vpop.permute.xlu0 %2503
      %2505 = vrot.lane.b32.xlu0 %v2472, 20
      %v2506 = vpop.permute.xlu0 %2505
      %2507 = vrot.lane.b32.xlu0 %v2475, 20
      %v2508 = vpop.permute.xlu0 %2507
      %2509 = vrot.lane.b32.xlu0 %v2478, 20
      %v2510 = vpop.permute.xlu0 %2509
      %vm2527 = vcmask 195744
      %2528 = vst.msk [vmem:[#allocation3] sm:$0xff] %vm2527, %v2480
      %2529 = vst.msk [vmem:[#allocation3 + $0x8] sm:$0xff] %vm2527, %v2482
      %2530 = vst.msk [vmem:[#allocation3 + $0x10] sm:$0xff] %vm2527, %v2484
      %2531 = vst.msk [vmem:[#allocation3 + $0x18] sm:$0xff] %vm2527, %v2486
      %2532 = vst.msk [vmem:[#allocation3 + $0x20] sm:$0xff] %vm2527, %v2488
      %2533 = vst.msk [vmem:[#allocation3 + $0x28] sm:$0xff] %vm2527, %v2490
      %2534 = vst.msk [vmem:[#allocation3 + $0x30] sm:$0xff] %vm2527, %v2492
      %2535 = vst.msk [vmem:[#allocation3 + $0x38] sm:$0xff] %vm2527, %v2494
      %2536 = vst.msk [vmem:[#allocation3 + $0x40] sm:$0xff] %vm2527, %v2496
      %2537 = vst.msk [vmem:[#allocation3 + $0x48] sm:$0xff] %vm2527, %v2498
      %2538 = vst.msk [vmem:[#allocation3 + $0x50] sm:$0xff] %vm2527, %v2500
      %2539 = vst.msk [vmem:[#allocation3 + $0x58] sm:$0xff] %vm2527, %v2502
      %2540 = vst.msk [vmem:[#allocation3 + $0x60] sm:$0xff] %vm2527, %v2504
      %2541 = vst.msk [vmem:[#allocation3 + $0x68] sm:$0xff] %vm2527, %v2506
      %2542 = vst.msk [vmem:[#allocation3 + $0x70] sm:$0xff] %vm2527, %v2508
      %2543 = vst.msk [vmem:[#allocation3 + $0x78] sm:$0xff] %vm2527, %v2510
      %s2544 = scalar_lea.vmem [#allocation2], 24
      %v2545 = vld [vmem:[%s2544] sm:$0xf]
      %v2546 = vld [vmem:[%s2544 + $0x4] sm:$0xf]
      %v2547 = vld [vmem:[%s2544 + $0xc] sm:$0xf]
      %v2548 = vld [vmem:[%s2544 + $0x10] sm:$0xf]
      %v2549 = vld [vmem:[%s2544 + $0x18] sm:$0xf]
      %v2550 = vld [vmem:[%s2544 + $0x1c] sm:$0xf]
      %v2551 = vld [vmem:[%s2544 + $0x24] sm:$0xf]
      %v2552 = vld [vmem:[%s2544 + $0x28] sm:$0xf]
      %v2553 = vld [vmem:[%s2544 + $0x30] sm:$0xf]
      %v2554 = vld [vmem:[%s2544 + $0x34] sm:$0xf]
      %v2555 = vld [vmem:[%s2544 + $0x3c] sm:$0xf]
      %v2556 = vld [vmem:[%s2544 + $0x40] sm:$0xf]
      %v2557 = vld [vmem:[%s2544 + $0x48] sm:$0xf]
      %v2558 = vld [vmem:[%s2544 + $0x4c] sm:$0xf]
      %v2559 = vld [vmem:[%s2544 + $0x54] sm:$0xf]
      %v2560 = vld [vmem:[%s2544 + $0x58] sm:$0xf]
      %v2561 = vld [vmem:[%s2544 + $0x60] sm:$0xf]
      %v2562 = vld [vmem:[%s2544 + $0x64] sm:$0xf]
      %v2563 = vld [vmem:[%s2544 + $0x6c] sm:$0xf]
      %v2564 = vld [vmem:[%s2544 + $0x70] sm:$0xf]
      %v2565 = vld [vmem:[%s2544 + $0x78] sm:$0xf]
      %v2566 = vld [vmem:[%s2544 + $0x7c] sm:$0xf]
      %v2567 = vld [vmem:[%s2544 + $0x84] sm:$0xf]
      %v2568 = vld [vmem:[%s2544 + $0x88] sm:$0xf]
      %v2569 = vld [vmem:[%s2544 + $0x90] sm:$0xf]
      %v2570 = vld [vmem:[%s2544 + $0x94] sm:$0xf]
      %v2571 = vld [vmem:[%s2544 + $0x9c] sm:$0xf]
      %v2572 = vld [vmem:[%s2544 + $0xa0] sm:$0xf]
      %v2573 = vld [vmem:[%s2544 + $0xa8] sm:$0xf]
      %v2574 = vld [vmem:[%s2544 + $0xac] sm:$0xf]
      %v2575 = vld [vmem:[%s2544 + $0xb4] sm:$0xf]
      %v2576 = vld [vmem:[%s2544 + $0xb8] sm:$0xf]
      %v2609 = vunpack.c.l.b16 %v2545
      %v2610 = vunpack.c.l.b16 %v2546
      %v2611 = vunpack.c.l.b16 %v2547
      %v2612 = vunpack.c.l.b16 %v2548
      %v2613 = vunpack.c.l.b16 %v2549
      %v2614 = vunpack.c.l.b16 %v2550
      %v2615 = vunpack.c.l.b16 %v2551
      %v2616 = vunpack.c.l.b16 %v2552
      %v2617 = vunpack.c.l.b16 %v2553
      %v2618 = vunpack.c.l.b16 %v2554
      %v2619 = vunpack.c.l.b16 %v2555
      %v2620 = vunpack.c.l.b16 %v2556
      %v2621 = vunpack.c.l.b16 %v2557
      %v2622 = vunpack.c.l.b16 %v2558
      %v2623 = vunpack.c.l.b16 %v2559
      %v2624 = vunpack.c.l.b16 %v2560
      %v2625 = vunpack.c.l.b16 %v2561
      %v2626 = vunpack.c.l.b16 %v2562
      %v2627 = vunpack.c.l.b16 %v2563
      %v2628 = vunpack.c.l.b16 %v2564
      %v2629 = vunpack.c.l.b16 %v2565
      %v2630 = vunpack.c.l.b16 %v2566
      %v2631 = vunpack.c.l.b16 %v2567
      %v2632 = vunpack.c.l.b16 %v2568
      %v2633 = vunpack.c.l.b16 %v2569
      %v2634 = vunpack.c.l.b16 %v2570
      %v2635 = vunpack.c.l.b16 %v2571
      %v2636 = vunpack.c.l.b16 %v2572
      %v2637 = vunpack.c.l.b16 %v2573
      %v2638 = vunpack.c.l.b16 %v2574
      %v2639 = vunpack.c.l.b16 %v2575
      %v2640 = vunpack.c.l.b16 %v2576
      %v2641 = vpack.c.b16 %v2610, %v2609
      %v2642 = vpack.c.b16 %v2612, %v2611
      %v2643 = vpack.c.b16 %v2614, %v2613
      %v2644 = vpack.c.b16 %v2616, %v2615
      %v2645 = vpack.c.b16 %v2618, %v2617
      %v2646 = vpack.c.b16 %v2620, %v2619
      %v2647 = vpack.c.b16 %v2622, %v2621
      %v2648 = vpack.c.b16 %v2624, %v2623
      %v2649 = vpack.c.b16 %v2626, %v2625
      %v2650 = vpack.c.b16 %v2628, %v2627
      %v2651 = vpack.c.b16 %v2630, %v2629
      %v2652 = vpack.c.b16 %v2632, %v2631
      %v2653 = vpack.c.b16 %v2634, %v2633
      %v2654 = vpack.c.b16 %v2636, %v2635
      %v2655 = vpack.c.b16 %v2638, %v2637
      %v2656 = vpack.c.b16 %v2640, %v2639
      %2657 = vrot.lane.b32.xlu0 %v2641, 24
      %v2658 = vpop.permute.xlu0 %2657
      %2659 = vrot.lane.b32.xlu0 %v2642, 24
      %v2660 = vpop.permute.xlu0 %2659
      %2661 = vrot.lane.b32.xlu0 %v2643, 24
      %v2662 = vpop.permute.xlu0 %2661
      %2663 = vrot.lane.b32.xlu0 %v2644, 24
      %v2664 = vpop.permute.xlu0 %2663
      %2665 = vrot.lane.b32.xlu0 %v2645, 24
      %v2666 = vpop.permute.xlu0 %2665
      %2667 = vrot.lane.b32.xlu0 %v2646, 24
      %v2668 = vpop.permute.xlu0 %2667
      %2669 = vrot.lane.b32.xlu0 %v2647, 24
      %v2670 = vpop.permute.xlu0 %2669
      %2671 = vrot.lane.b32.xlu0 %v2648, 24
      %v2672 = vpop.permute.xlu0 %2671
      %2673 = vrot.lane.b32.xlu0 %v2649, 24
      %v2674 = vpop.permute.xlu0 %2673
      %2675 = vrot.lane.b32.xlu0 %v2650, 24
      %v2676 = vpop.permute.xlu0 %2675
      %2677 = vrot.lane.b32.xlu0 %v2651, 24
      %v2678 = vpop.permute.xlu0 %2677
      %2679 = vrot.lane.b32.xlu0 %v2652, 24
      %v2680 = vpop.permute.xlu0 %2679
      %2681 = vrot.lane.b32.xlu0 %v2653, 24
      %v2682 = vpop.permute.xlu0 %2681
      %2683 = vrot.lane.b32.xlu0 %v2654, 24
      %v2684 = vpop.permute.xlu0 %2683
      %2685 = vrot.lane.b32.xlu0 %v2655, 24
      %v2686 = vpop.permute.xlu0 %2685
      %2687 = vrot.lane.b32.xlu0 %v2656, 24
      %v2688 = vpop.permute.xlu0 %2687
      %vm2705 = vcmask 228544
      %2706 = vst.msk [vmem:[#allocation3] sm:$0xff] %vm2705, %v2658
      %2707 = vst.msk [vmem:[#allocation3 + $0x8] sm:$0xff] %vm2705, %v2660
      %2708 = vst.msk [vmem:[#allocation3 + $0x10] sm:$0xff] %vm2705, %v2662
      %2709 = vst.msk [vmem:[#allocation3 + $0x18] sm:$0xff] %vm2705, %v2664
      %2710 = vst.msk [vmem:[#allocation3 + $0x20] sm:$0xff] %vm2705, %v2666
      %2711 = vst.msk [vmem:[#allocation3 + $0x28] sm:$0xff] %vm2705, %v2668
      %2712 = vst.msk [vmem:[#allocation3 + $0x30] sm:$0xff] %vm2705, %v2670
      %2713 = vst.msk [vmem:[#allocation3 + $0x38] sm:$0xff] %vm2705, %v2672
      %2714 = vst.msk [vmem:[#allocation3 + $0x40] sm:$0xff] %vm2705, %v2674
      %2715 = vst.msk [vmem:[#allocation3 + $0x48] sm:$0xff] %vm2705, %v2676
      %2716 = vst.msk [vmem:[#allocation3 + $0x50] sm:$0xff] %vm2705, %v2678
      %2717 = vst.msk [vmem:[#allocation3 + $0x58] sm:$0xff] %vm2705, %v2680
      %2718 = vst.msk [vmem:[#allocation3 + $0x60] sm:$0xff] %vm2705, %v2682
      %2719 = vst.msk [vmem:[#allocation3 + $0x68] sm:$0xff] %vm2705, %v2684
      %2720 = vst.msk [vmem:[#allocation3 + $0x70] sm:$0xff] %vm2705, %v2686
      %2721 = vst.msk [vmem:[#allocation3 + $0x78] sm:$0xff] %vm2705, %v2688
      %v2722 = vld [vmem:[%s2544] sm:$0xf]
      %v2723 = vld [vmem:[%s2544 + $0x4] sm:$0xf]
      %v2724 = vld [vmem:[%s2544 + $0x8] sm:$0x1]
      %v2725 = vld [vmem:[%s2544 + $0xc] sm:$0xf]
      %v2726 = vld [vmem:[%s2544 + $0x10] sm:$0xf]
      %v2727 = vld [vmem:[%s2544 + $0x14] sm:$0x1]
      %v2728 = vld [vmem:[%s2544 + $0x18] sm:$0xf]
      %v2729 = vld [vmem:[%s2544 + $0x1c] sm:$0xf]
      %v2730 = vld [vmem:[%s2544 + $0x20] sm:$0x1]
      %v2731 = vld [vmem:[%s2544 + $0x24] sm:$0xf]
      %v2732 = vld [vmem:[%s2544 + $0x28] sm:$0xf]
      %v2733 = vld [vmem:[%s2544 + $0x2c] sm:$0x1]
      %v2734 = vld [vmem:[%s2544 + $0x30] sm:$0xf]
      %v2735 = vld [vmem:[%s2544 + $0x34] sm:$0xf]
      %v2736 = vld [vmem:[%s2544 + $0x38] sm:$0x1]
      %v2737 = vld [vmem:[%s2544 + $0x3c] sm:$0xf]
      %v2738 = vld [vmem:[%s2544 + $0x40] sm:$0xf]
      %v2739 = vld [vmem:[%s2544 + $0x44] sm:$0x1]
      %v2740 = vld [vmem:[%s2544 + $0x48] sm:$0xf]
      %v2741 = vld [vmem:[%s2544 + $0x4c] sm:$0xf]
      %v2742 = vld [vmem:[%s2544 + $0x50] sm:$0x1]
      %v2743 = vld [vmem:[%s2544 + $0x54] sm:$0xf]
      %v2744 = vld [vmem:[%s2544 + $0x58] sm:$0xf]
      %v2745 = vld [vmem:[%s2544 + $0x5c] sm:$0x1]
      %v2746 = vld [vmem:[%s2544 + $0x60] sm:$0xf]
      %v2747 = vld [vmem:[%s2544 + $0x64] sm:$0xf]
      %v2748 = vld [vmem:[%s2544 + $0x68] sm:$0x1]
      %v2749 = vld [vmem:[%s2544 + $0x6c] sm:$0xf]
      %v2750 = vld [vmem:[%s2544 + $0x70] sm:$0xf]
      %v2751 = vld [vmem:[%s2544 + $0x74] sm:$0x1]
      %v2752 = vld [vmem:[%s2544 + $0x78] sm:$0xf]
      %v2753 = vld [vmem:[%s2544 + $0x7c] sm:$0xf]
      %v2754 = vld [vmem:[%s2544 + $0x80] sm:$0x1]
      %v2755 = vld [vmem:[%s2544 + $0x84] sm:$0xf]
      %v2756 = vld [vmem:[%s2544 + $0x88] sm:$0xf]
      %v2757 = vld [vmem:[%s2544 + $0x8c] sm:$0x1]
      %v2758 = vld [vmem:[%s2544 + $0x90] sm:$0xf]
      %v2759 = vld [vmem:[%s2544 + $0x94] sm:$0xf]
      %v2760 = vld [vmem:[%s2544 + $0x98] sm:$0x1]
      %v2761 = vld [vmem:[%s2544 + $0x9c] sm:$0xf]
      %v2762 = vld [vmem:[%s2544 + $0xa0] sm:$0xf]
      %v2763 = vld [vmem:[%s2544 + $0xa4] sm:$0x1]
      %v2764 = vld [vmem:[%s2544 + $0xa8] sm:$0xf]
      %v2765 = vld [vmem:[%s2544 + $0xac] sm:$0xf]
      %v2766 = vld [vmem:[%s2544 + $0xb0] sm:$0x1]
      %v2767 = vld [vmem:[%s2544 + $0xb4] sm:$0xf]
      %v2768 = vld [vmem:[%s2544 + $0xb8] sm:$0xf]
      %v2769 = vld [vmem:[%s2544 + $0xbc] sm:$0x1]
      %v2818 = vunpack.c.l.b16 %v2722
      %v2819 = vunpack.c.l.b16 %v2723
      %v2820 = vunpack.c.l.b16 %v2724
      %v2821 = vunpack.c.l.b16 %v2725
      %v2822 = vunpack.c.l.b16 %v2726
      %v2823 = vunpack.c.l.b16 %v2727
      %v2824 = vunpack.c.l.b16 %v2728
      %v2825 = vunpack.c.l.b16 %v2729
      %v2826 = vunpack.c.l.b16 %v2730
      %v2827 = vunpack.c.l.b16 %v2731
      %v2828 = vunpack.c.l.b16 %v2732
      %v2829 = vunpack.c.l.b16 %v2733
      %v2830 = vunpack.c.l.b16 %v2734
      %v2831 = vunpack.c.l.b16 %v2735
      %v2832 = vunpack.c.l.b16 %v2736
      %v2833 = vunpack.c.l.b16 %v2737
      %v2834 = vunpack.c.l.b16 %v2738
      %v2835 = vunpack.c.l.b16 %v2739
      %v2836 = vunpack.c.l.b16 %v2740
      %v2837 = vunpack.c.l.b16 %v2741
      %v2838 = vunpack.c.l.b16 %v2742
      %v2839 = vunpack.c.l.b16 %v2743
      %v2840 = vunpack.c.l.b16 %v2744
      %v2841 = vunpack.c.l.b16 %v2745
      %v2842 = vunpack.c.l.b16 %v2746
      %v2843 = vunpack.c.l.b16 %v2747
      %v2844 = vunpack.c.l.b16 %v2748
      %v2845 = vunpack.c.l.b16 %v2749
      %v2846 = vunpack.c.l.b16 %v2750
      %v2847 = vunpack.c.l.b16 %v2751
      %v2848 = vunpack.c.l.b16 %v2752
      %v2849 = vunpack.c.l.b16 %v2753
      %v2850 = vunpack.c.l.b16 %v2754
      %v2851 = vunpack.c.l.b16 %v2755
      %v2852 = vunpack.c.l.b16 %v2756
      %v2853 = vunpack.c.l.b16 %v2757
      %v2854 = vunpack.c.l.b16 %v2758
      %v2855 = vunpack.c.l.b16 %v2759
      %v2856 = vunpack.c.l.b16 %v2760
      %v2857 = vunpack.c.l.b16 %v2761
      %v2858 = vunpack.c.l.b16 %v2762
      %v2859 = vunpack.c.l.b16 %v2763
      %v2860 = vunpack.c.l.b16 %v2764
      %v2861 = vunpack.c.l.b16 %v2765
      %v2862 = vunpack.c.l.b16 %v2766
      %v2863 = vunpack.c.l.b16 %v2767
      %v2864 = vunpack.c.l.b16 %v2768
      %v2865 = vunpack.c.l.b16 %v2769
      %v2866 = vpack.c.b16 %v2819, %v2818
      %v2867 = vpack.c.b16 %v2820, %v2820
      %v2868 = vpack.c.b16 %v2822, %v2821
      %v2869 = vpack.c.b16 %v2823, %v2823
      %v2870 = vpack.c.b16 %v2825, %v2824
      %v2871 = vpack.c.b16 %v2826, %v2826
      %v2872 = vpack.c.b16 %v2828, %v2827
      %v2873 = vpack.c.b16 %v2829, %v2829
      %v2874 = vpack.c.b16 %v2831, %v2830
      %v2875 = vpack.c.b16 %v2832, %v2832
      %v2876 = vpack.c.b16 %v2834, %v2833
      %v2877 = vpack.c.b16 %v2835, %v2835
      %v2878 = vpack.c.b16 %v2837, %v2836
      %v2879 = vpack.c.b16 %v2838, %v2838
      %v2880 = vpack.c.b16 %v2840, %v2839
      %v2881 = vpack.c.b16 %v2841, %v2841
      %v2882 = vpack.c.b16 %v2843, %v2842
      %v2883 = vpack.c.b16 %v2844, %v2844
      %v2884 = vpack.c.b16 %v2846, %v2845
      %v2885 = vpack.c.b16 %v2847, %v2847
      %v2886 = vpack.c.b16 %v2849, %v2848
      %v2887 = vpack.c.b16 %v2850, %v2850
      %v2888 = vpack.c.b16 %v2852, %v2851
      %v2889 = vpack.c.b16 %v2853, %v2853
      %v2890 = vpack.c.b16 %v2855, %v2854
      %v2891 = vpack.c.b16 %v2856, %v2856
      %v2892 = vpack.c.b16 %v2858, %v2857
      %v2893 = vpack.c.b16 %v2859, %v2859
      %v2894 = vpack.c.b16 %v2861, %v2860
      %v2895 = vpack.c.b16 %v2862, %v2862
      %v2896 = vpack.c.b16 %v2864, %v2863
      %v2897 = vpack.c.b16 %v2865, %v2865
      %v2899 = vshrl.u32 %v2866, 16
      %v2901 = vshll.u32 %v2866, 16
      %v2903 = vrot.slane %v2901, 1
      %v2904 = vor.u32 %v2899, %v2903
      %v2906 = vshll.u32 %v2867, 16
      %v2908 = vrot.slane %v2906, 1
      %v2909 = vsel %vm1097, %v2904, %v2908
      %v2911 = vshrl.u32 %v2868, 16
      %v2913 = vshll.u32 %v2868, 16
      %v2915 = vrot.slane %v2913, 1
      %v2916 = vor.u32 %v2911, %v2915
      %v2918 = vshll.u32 %v2869, 16
      %v2920 = vrot.slane %v2918, 1
      %v2921 = vsel %vm1097, %v2916, %v2920
      %v2923 = vshrl.u32 %v2870, 16
      %v2925 = vshll.u32 %v2870, 16
      %v2927 = vrot.slane %v2925, 1
      %v2928 = vor.u32 %v2923, %v2927
      %v2930 = vshll.u32 %v2871, 16
      %v2932 = vrot.slane %v2930, 1
      %v2933 = vsel %vm1097, %v2928, %v2932
      %v2935 = vshrl.u32 %v2872, 16
      %v2937 = vshll.u32 %v2872, 16
      %v2939 = vrot.slane %v2937, 1
      %v2940 = vor.u32 %v2935, %v2939
      %v2942 = vshll.u32 %v2873, 16
      %v2944 = vrot.slane %v2942, 1
      %v2945 = vsel %vm1097, %v2940, %v2944
      %v2947 = vshrl.u32 %v2874, 16
      %v2949 = vshll.u32 %v2874, 16
      %v2951 = vrot.slane %v2949, 1
      %v2952 = vor.u32 %v2947, %v2951
      %v2954 = vshll.u32 %v2875, 16
      %v2956 = vrot.slane %v2954, 1
      %v2957 = vsel %vm1097, %v2952, %v2956
      %v2959 = vshrl.u32 %v2876, 16
      %v2961 = vshll.u32 %v2876, 16
      %v2963 = vrot.slane %v2961, 1
      %v2964 = vor.u32 %v2959, %v2963
      %v2966 = vshll.u32 %v2877, 16
      %v2968 = vrot.slane %v2966, 1
      %v2969 = vsel %vm1097, %v2964, %v2968
      %v2971 = vshrl.u32 %v2878, 16
      %v2973 = vshll.u32 %v2878, 16
      %v2975 = vrot.slane %v2973, 1
      %v2976 = vor.u32 %v2971, %v2975
      %v2978 = vshll.u32 %v2879, 16
      %v2980 = vrot.slane %v2978, 1
      %v2981 = vsel %vm1097, %v2976, %v2980
      %v2983 = vshrl.u32 %v2880, 16
      %v2985 = vshll.u32 %v2880, 16
      %v2987 = vrot.slane %v2985, 1
      %v2988 = vor.u32 %v2983, %v2987
      %v2990 = vshll.u32 %v2881, 16
      %v2992 = vrot.slane %v2990, 1
      %v2993 = vsel %vm1097, %v2988, %v2992
      %v2995 = vshrl.u32 %v2882, 16
      %v2997 = vshll.u32 %v2882, 16
      %v2999 = vrot.slane %v2997, 1
      %v3000 = vor.u32 %v2995, %v2999
      %v3002 = vshll.u32 %v2883, 16
      %v3004 = vrot.slane %v3002, 1
      %v3005 = vsel %vm1097, %v3000, %v3004
      %v3007 = vshrl.u32 %v2884, 16
      %v3009 = vshll.u32 %v2884, 16
      %v3011 = vrot.slane %v3009, 1
      %v3012 = vor.u32 %v3007, %v3011
      %v3014 = vshll.u32 %v2885, 16
      %v3016 = vrot.slane %v3014, 1
      %v3017 = vsel %vm1097, %v3012, %v3016
      %v3019 = vshrl.u32 %v2886, 16
      %v3021 = vshll.u32 %v2886, 16
      %v3023 = vrot.slane %v3021, 1
      %v3024 = vor.u32 %v3019, %v3023
      %v3026 = vshll.u32 %v2887, 16
      %v3028 = vrot.slane %v3026, 1
      %v3029 = vsel %vm1097, %v3024, %v3028
      %v3031 = vshrl.u32 %v2888, 16
      %v3033 = vshll.u32 %v2888, 16
      %v3035 = vrot.slane %v3033, 1
      %v3036 = vor.u32 %v3031, %v3035
      %v3038 = vshll.u32 %v2889, 16
      %v3040 = vrot.slane %v3038, 1
      %v3041 = vsel %vm1097, %v3036, %v3040
      %v3043 = vshrl.u32 %v2890, 16
      %v3045 = vshll.u32 %v2890, 16
      %v3047 = vrot.slane %v3045, 1
      %v3048 = vor.u32 %v3043, %v3047
      %v3050 = vshll.u32 %v2891, 16
      %v3052 = vrot.slane %v3050, 1
      %v3053 = vsel %vm1097, %v3048, %v3052
      %v3055 = vshrl.u32 %v2892, 16
      %v3057 = vshll.u32 %v2892, 16
      %v3059 = vrot.slane %v3057, 1
      %v3060 = vor.u32 %v3055, %v3059
      %v3062 = vshll.u32 %v2893, 16
      %v3064 = vrot.slane %v3062, 1
      %v3065 = vsel %vm1097, %v3060, %v3064
      %v3067 = vshrl.u32 %v2894, 16
      %v3069 = vshll.u32 %v2894, 16
      %v3071 = vrot.slane %v3069, 1
      %v3072 = vor.u32 %v3067, %v3071
      %v3074 = vshll.u32 %v2895, 16
      %v3076 = vrot.slane %v3074, 1
      %v3077 = vsel %vm1097, %v3072, %v3076
      %v3079 = vshrl.u32 %v2896, 16
      %v3081 = vshll.u32 %v2896, 16
      %v3083 = vrot.slane %v3081, 1
      %v3084 = vor.u32 %v3079, %v3083
      %v3086 = vshll.u32 %v2897, 16
      %v3088 = vrot.slane %v3086, 1
      %v3089 = vsel %vm1097, %v3084, %v3088
      %3090 = vrot.lane.b32.xlu0 %v2909, 28
      %v3091 = vpop.permute.xlu0 %3090
      %3092 = vrot.lane.b32.xlu0 %v2921, 28
      %v3093 = vpop.permute.xlu0 %3092
      %3094 = vrot.lane.b32.xlu0 %v2933, 28
      %v3095 = vpop.permute.xlu0 %3094
      %3096 = vrot.lane.b32.xlu0 %v2945, 28
      %v3097 = vpop.permute.xlu0 %3096
      %3098 = vrot.lane.b32.xlu0 %v2957, 28
      %v3099 = vpop.permute.xlu0 %3098
      %3100 = vrot.lane.b32.xlu0 %v2969, 28
      %v3101 = vpop.permute.xlu0 %3100
      %3102 = vrot.lane.b32.xlu0 %v2981, 28
      %v3103 = vpop.permute.xlu0 %3102
      %3104 = vrot.lane.b32.xlu0 %v2993, 28
      %v3105 = vpop.permute.xlu0 %3104
      %3106 = vrot.lane.b32.xlu0 %v3005, 28
      %v3107 = vpop.permute.xlu0 %3106
      %3108 = vrot.lane.b32.xlu0 %v3017, 28
      %v3109 = vpop.permute.xlu0 %3108
      %3110 = vrot.lane.b32.xlu0 %v3029, 28
      %v3111 = vpop.permute.xlu0 %3110
      %3112 = vrot.lane.b32.xlu0 %v3041, 28
      %v3113 = vpop.permute.xlu0 %3112
      %3114 = vrot.lane.b32.xlu0 %v3053, 28
      %v3115 = vpop.permute.xlu0 %3114
      %3116 = vrot.lane.b32.xlu0 %v3065, 28
      %v3117 = vpop.permute.xlu0 %3116
      %3118 = vrot.lane.b32.xlu0 %v3077, 28
      %v3119 = vpop.permute.xlu0 %3118
      %3120 = vrot.lane.b32.xlu0 %v3089, 28
      %v3121 = vpop.permute.xlu0 %3120
      %vm3138 = vcmask 261344
      %3139 = vst.msk [vmem:[#allocation3] sm:$0xff] %vm3138, %v3091
      %3140 = vst.msk [vmem:[#allocation3 + $0x8] sm:$0xff] %vm3138, %v3093
      %3141 = vst.msk [vmem:[#allocation3 + $0x10] sm:$0xff] %vm3138, %v3095
      %3142 = vst.msk [vmem:[#allocation3 + $0x18] sm:$0xff] %vm3138, %v3097
      %3143 = vst.msk [vmem:[#allocation3 + $0x20] sm:$0xff] %vm3138, %v3099
      %3144 = vst.msk [vmem:[#allocation3 + $0x28] sm:$0xff] %vm3138, %v3101
      %3145 = vst.msk [vmem:[#allocation3 + $0x30] sm:$0xff] %vm3138, %v3103
      %3146 = vst.msk [vmem:[#allocation3 + $0x38] sm:$0xff] %vm3138, %v3105
      %3147 = vst.msk [vmem:[#allocation3 + $0x40] sm:$0xff] %vm3138, %v3107
      %3148 = vst.msk [vmem:[#allocation3 + $0x48] sm:$0xff] %vm3138, %v3109
      %3149 = vst.msk [vmem:[#allocation3 + $0x50] sm:$0xff] %vm3138, %v3111
      %3150 = vst.msk [vmem:[#allocation3 + $0x58] sm:$0xff] %vm3138, %v3113
      %3151 = vst.msk [vmem:[#allocation3 + $0x60] sm:$0xff] %vm3138, %v3115
      %3152 = vst.msk [vmem:[#allocation3 + $0x68] sm:$0xff] %vm3138, %v3117
      %3153 = vst.msk [vmem:[#allocation3 + $0x70] sm:$0xff] %vm3138, %v3119
      %3154 = vst.msk [vmem:[#allocation3 + $0x78] sm:$0xff] %vm3138, %v3121
      %v3155 = vld [vmem:[%s2544] sm:$0xe]
      %v3156 = vld [vmem:[%s2544 + $0x4] sm:$0xf]
      %v3157 = vld [vmem:[%s2544 + $0x8] sm:$0x1]
      %v3158 = vld [vmem:[%s2544 + $0xc] sm:$0xe]
      %v3159 = vld [vmem:[%s2544 + $0x10] sm:$0xf]
      %v3160 = vld [vmem:[%s2544 + $0x14] sm:$0x1]
      %v3161 = vld [vmem:[%s2544 + $0x18] sm:$0xe]
      %v3162 = vld [vmem:[%s2544 + $0x1c] sm:$0xf]
      %v3163 = vld [vmem:[%s2544 + $0x20] sm:$0x1]
      %v3164 = vld [vmem:[%s2544 + $0x24] sm:$0xe]
      %v3165 = vld [vmem:[%s2544 + $0x28] sm:$0xf]
      %v3166 = vld [vmem:[%s2544 + $0x2c] sm:$0x1]
      %v3167 = vld [vmem:[%s2544 + $0x30] sm:$0xe]
      %v3168 = vld [vmem:[%s2544 + $0x34] sm:$0xf]
      %v3169 = vld [vmem:[%s2544 + $0x38] sm:$0x1]
      %v3170 = vld [vmem:[%s2544 + $0x3c] sm:$0xe]
      %v3171 = vld [vmem:[%s2544 + $0x40] sm:$0xf]
      %v3172 = vld [vmem:[%s2544 + $0x44] sm:$0x1]
      %v3173 = vld [vmem:[%s2544 + $0x48] sm:$0xe]
      %v3174 = vld [vmem:[%s2544 + $0x4c] sm:$0xf]
      %v3175 = vld [vmem:[%s2544 + $0x50] sm:$0x1]
      %v3176 = vld [vmem:[%s2544 + $0x54] sm:$0xe]
      %v3177 = vld [vmem:[%s2544 + $0x58] sm:$0xf]
      %v3178 = vld [vmem:[%s2544 + $0x5c] sm:$0x1]
      %v3179 = vld [vmem:[%s2544 + $0x60] sm:$0xe]
      %v3180 = vld [vmem:[%s2544 + $0x64] sm:$0xf]
      %v3181 = vld [vmem:[%s2544 + $0x68] sm:$0x1]
      %v3182 = vld [vmem:[%s2544 + $0x6c] sm:$0xe]
      %v3183 = vld [vmem:[%s2544 + $0x70] sm:$0xf]
      %v3184 = vld [vmem:[%s2544 + $0x74] sm:$0x1]
      %v3185 = vld [vmem:[%s2544 + $0x78] sm:$0xe]
      %v3186 = vld [vmem:[%s2544 + $0x7c] sm:$0xf]
      %v3187 = vld [vmem:[%s2544 + $0x80] sm:$0x1]
      %v3188 = vld [vmem:[%s2544 + $0x84] sm:$0xe]
      %v3189 = vld [vmem:[%s2544 + $0x88] sm:$0xf]
      %v3190 = vld [vmem:[%s2544 + $0x8c] sm:$0x1]
      %v3191 = vld [vmem:[%s2544 + $0x90] sm:$0xe]
      %v3192 = vld [vmem:[%s2544 + $0x94] sm:$0xf]
      %v3193 = vld [vmem:[%s2544 + $0x98] sm:$0x1]
      %v3194 = vld [vmem:[%s2544 + $0x9c] sm:$0xe]
      %v3195 = vld [vmem:[%s2544 + $0xa0] sm:$0xf]
      %v3196 = vld [vmem:[%s2544 + $0xa4] sm:$0x1]
      %v3197 = vld [vmem:[%s2544 + $0xa8] sm:$0xe]
      %v3198 = vld [vmem:[%s2544 + $0xac] sm:$0xf]
      %v3199 = vld [vmem:[%s2544 + $0xb0] sm:$0x1]
      %v3200 = vld [vmem:[%s2544 + $0xb4] sm:$0xe]
      %v3201 = vld [vmem:[%s2544 + $0xb8] sm:$0xf]
      %v3202 = vld [vmem:[%s2544 + $0xbc] sm:$0x1]
      %v3251 = vunpack.c.l.b16 %v3155
      %v3252 = vunpack.c.l.b16 %v3156
      %v3253 = vunpack.c.l.b16 %v3157
      %v3254 = vunpack.c.l.b16 %v3158
      %v3255 = vunpack.c.l.b16 %v3159
      %v3256 = vunpack.c.l.b16 %v3160
      %v3257 = vunpack.c.l.b16 %v3161
      %v3258 = vunpack.c.l.b16 %v3162
      %v3259 = vunpack.c.l.b16 %v3163
      %v3260 = vunpack.c.l.b16 %v3164
      %v3261 = vunpack.c.l.b16 %v3165
      %v3262 = vunpack.c.l.b16 %v3166
      %v3263 = vunpack.c.l.b16 %v3167
      %v3264 = vunpack.c.l.b16 %v3168
      %v3265 = vunpack.c.l.b16 %v3169
      %v3266 = vunpack.c.l.b16 %v3170
      %v3267 = vunpack.c.l.b16 %v3171
      %v3268 = vunpack.c.l.b16 %v3172
      %v3269 = vunpack.c.l.b16 %v3173
      %v3270 = vunpack.c.l.b16 %v3174
      %v3271 = vunpack.c.l.b16 %v3175
      %v3272 = vunpack.c.l.b16 %v3176
      %v3273 = vunpack.c.l.b16 %v3177
      %v3274 = vunpack.c.l.b16 %v3178
      %v3275 = vunpack.c.l.b16 %v3179
      %v3276 = vunpack.c.l.b16 %v3180
      %v3277 = vunpack.c.l.b16 %v3181
      %v3278 = vunpack.c.l.b16 %v3182
      %v3279 = vunpack.c.l.b16 %v3183
      %v3280 = vunpack.c.l.b16 %v3184
      %v3281 = vunpack.c.l.b16 %v3185
      %v3282 = vunpack.c.l.b16 %v3186
      %v3283 = vunpack.c.l.b16 %v3187
      %v3284 = vunpack.c.l.b16 %v3188
      %v3285 = vunpack.c.l.b16 %v3189
      %v3286 = vunpack.c.l.b16 %v3190
      %v3287 = vunpack.c.l.b16 %v3191
      %v3288 = vunpack.c.l.b16 %v3192
      %v3289 = vunpack.c.l.b16 %v3193
      %v3290 = vunpack.c.l.b16 %v3194
      %v3291 = vunpack.c.l.b16 %v3195
      %v3292 = vunpack.c.l.b16 %v3196
      %v3293 = vunpack.c.l.b16 %v3197
      %v3294 = vunpack.c.l.b16 %v3198
      %v3295 = vunpack.c.l.b16 %v3199
      %v3296 = vunpack.c.l.b16 %v3200
      %v3297 = vunpack.c.l.b16 %v3201
      %v3298 = vunpack.c.l.b16 %v3202
      %v3299 = vpack.c.b16 %v3252, %v3251
      %v3300 = vpack.c.b16 %v3253, %v3253
      %v3301 = vpack.c.b16 %v3255, %v3254
      %v3302 = vpack.c.b16 %v3256, %v3256
      %v3303 = vpack.c.b16 %v3258, %v3257
      %v3304 = vpack.c.b16 %v3259, %v3259
      %v3305 = vpack.c.b16 %v3261, %v3260
      %v3306 = vpack.c.b16 %v3262, %v3262
      %v3307 = vpack.c.b16 %v3264, %v3263
      %v3308 = vpack.c.b16 %v3265, %v3265
      %v3309 = vpack.c.b16 %v3267, %v3266
      %v3310 = vpack.c.b16 %v3268, %v3268
      %v3311 = vpack.c.b16 %v3270, %v3269
      %v3312 = vpack.c.b16 %v3271, %v3271
      %v3313 = vpack.c.b16 %v3273, %v3272
      %v3314 = vpack.c.b16 %v3274, %v3274
      %v3315 = vpack.c.b16 %v3276, %v3275
      %v3316 = vpack.c.b16 %v3277, %v3277
      %v3317 = vpack.c.b16 %v3279, %v3278
      %v3318 = vpack.c.b16 %v3280, %v3280
      %v3319 = vpack.c.b16 %v3282, %v3281
      %v3320 = vpack.c.b16 %v3283, %v3283
      %v3321 = vpack.c.b16 %v3285, %v3284
      %v3322 = vpack.c.b16 %v3286, %v3286
      %v3323 = vpack.c.b16 %v3288, %v3287
      %v3324 = vpack.c.b16 %v3289, %v3289
      %v3325 = vpack.c.b16 %v3291, %v3290
      %v3326 = vpack.c.b16 %v3292, %v3292
      %v3327 = vpack.c.b16 %v3294, %v3293
      %v3328 = vpack.c.b16 %v3295, %v3295
      %v3329 = vpack.c.b16 %v3297, %v3296
      %v3330 = vpack.c.b16 %v3298, %v3298
      %v3331 = vrot.slane %v3299, 1
      %v3332 = vrot.slane %v3300, 1
      %v3333 = vsel %vm1531, %v3331, %v3332
      %v3334 = vrot.slane %v3301, 1
      %v3335 = vrot.slane %v3302, 1
      %v3336 = vsel %vm1531, %v3334, %v3335
      %v3337 = vrot.slane %v3303, 1
      %v3338 = vrot.slane %v3304, 1
      %v3339 = vsel %vm1531, %v3337, %v3338
      %v3340 = vrot.slane %v3305, 1
      %v3341 = vrot.slane %v3306, 1
      %v3342 = vsel %vm1531, %v3340, %v3341
      %v3343 = vrot.slane %v3307, 1
      %v3344 = vrot.slane %v3308, 1
      %v3345 = vsel %vm1531, %v3343, %v3344
      %v3346 = vrot.slane %v3309, 1
      %v3347 = vrot.slane %v3310, 1
      %v3348 = vsel %vm1531, %v3346, %v3347
      %v3349 = vrot.slane %v3311, 1
      %v3350 = vrot.slane %v3312, 1
      %v3351 = vsel %vm1531, %v3349, %v3350
      %v3352 = vrot.slane %v3313, 1
      %v3353 = vrot.slane %v3314, 1
      %v3354 = vsel %vm1531, %v3352, %v3353
      %v3355 = vrot.slane %v3315, 1
      %v3356 = vrot.slane %v3316, 1
      %v3357 = vsel %vm1531, %v3355, %v3356
      %v3358 = vrot.slane %v3317, 1
      %v3359 = vrot.slane %v3318, 1
      %v3360 = vsel %vm1531, %v3358, %v3359
      %v3361 = vrot.slane %v3319, 1
      %v3362 = vrot.slane %v3320, 1
      %v3363 = vsel %vm1531, %v3361, %v3362
      %v3364 = vrot.slane %v3321, 1
      %v3365 = vrot.slane %v3322, 1
      %v3366 = vsel %vm1531, %v3364, %v3365
      %v3367 = vrot.slane %v3323, 1
      %v3368 = vrot.slane %v3324, 1
      %v3369 = vsel %vm1531, %v3367, %v3368
      %v3370 = vrot.slane %v3325, 1
      %v3371 = vrot.slane %v3326, 1
      %v3372 = vsel %vm1531, %v3370, %v3371
      %v3373 = vrot.slane %v3327, 1
      %v3374 = vrot.slane %v3328, 1
      %v3375 = vsel %vm1531, %v3373, %v3374
      %v3376 = vrot.slane %v3329, 1
      %v3377 = vrot.slane %v3330, 1
      %v3378 = vsel %vm1531, %v3376, %v3377
      %3379 = vrot.lane.b32.xlu0 %v3333, 32
      %v3380 = vpop.permute.xlu0 %3379
      %3381 = vrot.lane.b32.xlu0 %v3336, 32
      %v3382 = vpop.permute.xlu0 %3381
      %3383 = vrot.lane.b32.xlu0 %v3339, 32
      %v3384 = vpop.permute.xlu0 %3383
      %3385 = vrot.lane.b32.xlu0 %v3342, 32
      %v3386 = vpop.permute.xlu0 %3385
      %3387 = vrot.lane.b32.xlu0 %v3345, 32
      %v3388 = vpop.permute.xlu0 %3387
      %3389 = vrot.lane.b32.xlu0 %v3348, 32
      %v3390 = vpop.permute.xlu0 %3389
      %3391 = vrot.lane.b32.xlu0 %v3351, 32
      %v3392 = vpop.permute.xlu0 %3391
      %3393 = vrot.lane.b32.xlu0 %v3354, 32
      %v3394 = vpop.permute.xlu0 %3393
      %3395 = vrot.lane.b32.xlu0 %v3357, 32
      %v3396 = vpop.permute.xlu0 %3395
      %3397 = vrot.lane.b32.xlu0 %v3360, 32
      %v3398 = vpop.permute.xlu0 %3397
      %3399 = vrot.lane.b32.xlu0 %v3363, 32
      %v3400 = vpop.permute.xlu0 %3399
      %3401 = vrot.lane.b32.xlu0 %v3366, 32
      %v3402 = vpop.permute.xlu0 %3401
      %3403 = vrot.lane.b32.xlu0 %v3369, 32
      %v3404 = vpop.permute.xlu0 %3403
      %3405 = vrot.lane.b32.xlu0 %v3372, 32
      %v3406 = vpop.permute.xlu0 %3405
      %3407 = vrot.lane.b32.xlu0 %v3375, 32
      %v3408 = vpop.permute.xlu0 %3407
      %3409 = vrot.lane.b32.xlu0 %v3378, 32
      %v3410 = vpop.permute.xlu0 %3409
      %vm3427 = vcmask 294144
      %3428 = vst.msk [vmem:[#allocation3] sm:$0xff] %vm3427, %v3380
      %3429 = vst.msk [vmem:[#allocation3 + $0x8] sm:$0xff] %vm3427, %v3382
      %3430 = vst.msk [vmem:[#allocation3 + $0x10] sm:$0xff] %vm3427, %v3384
      %3431 = vst.msk [vmem:[#allocation3 + $0x18] sm:$0xff] %vm3427, %v3386
      %3432 = vst.msk [vmem:[#allocation3 + $0x20] sm:$0xff] %vm3427, %v3388
      %3433 = vst.msk [vmem:[#allocation3 + $0x28] sm:$0xff] %vm3427, %v3390
      %3434 = vst.msk [vmem:[#allocation3 + $0x30] sm:$0xff] %vm3427, %v3392
      %3435 = vst.msk [vmem:[#allocation3 + $0x38] sm:$0xff] %vm3427, %v3394
      %3436 = vst.msk [vmem:[#allocation3 + $0x40] sm:$0xff] %vm3427, %v3396
      %3437 = vst.msk [vmem:[#allocation3 + $0x48] sm:$0xff] %vm3427, %v3398
      %3438 = vst.msk [vmem:[#allocation3 + $0x50] sm:$0xff] %vm3427, %v3400
      %3439 = vst.msk [vmem:[#allocation3 + $0x58] sm:$0xff] %vm3427, %v3402
      %3440 = vst.msk [vmem:[#allocation3 + $0x60] sm:$0xff] %vm3427, %v3404
      %3441 = vst.msk [vmem:[#allocation3 + $0x68] sm:$0xff] %vm3427, %v3406
      %3442 = vst.msk [vmem:[#allocation3 + $0x70] sm:$0xff] %vm3427, %v3408
      %3443 = vst.msk [vmem:[#allocation3 + $0x78] sm:$0xff] %vm3427, %v3410
      %v3444 = vld [vmem:[#allocation3] sm:$0xff]
      %v3445 = vld [vmem:[#allocation3 + $0x8] sm:$0xff]
      %v3446 = vld [vmem:[#allocation3 + $0x10] sm:$0xff]
      %v3447 = vld [vmem:[#allocation3 + $0x18] sm:$0xff]
      %v3448 = vld [vmem:[#allocation3 + $0x20] sm:$0xff]
      %v3449 = vld [vmem:[#allocation3 + $0x28] sm:$0xff]
      %v3450 = vld [vmem:[#allocation3 + $0x30] sm:$0xff]
      %v3451 = vld [vmem:[#allocation3 + $0x38] sm:$0xff]
      %v3452 = vld [vmem:[#allocation3 + $0x40] sm:$0xff]
      %v3453 = vld [vmem:[#allocation3 + $0x48] sm:$0xff]
      %v3454 = vld [vmem:[#allocation3 + $0x50] sm:$0xff]
      %v3455 = vld [vmem:[#allocation3 + $0x58] sm:$0xff]
      %v3456 = vld [vmem:[#allocation3 + $0x60] sm:$0xff]
      %v3457 = vld [vmem:[#allocation3 + $0x68] sm:$0xff]
      %v3458 = vld [vmem:[#allocation3 + $0x70] sm:$0xff]
      %v3459 = vld [vmem:[#allocation3 + $0x78] sm:$0xff]
      %v3460 = vld [vmem:[%s1] sm:$0xf]
      %v3461 = vld [vmem:[%s1 + $0x4] sm:$0xf]
      %v3462 = vld [vmem:[%s1 + $0x8] sm:$0xf]
      %v3463 = vld [vmem:[%s1 + $0xc] sm:$0xf]
      %v3464 = vld [vmem:[%s1 + $0x10] sm:$0x3]
      %v3470 = vunpack.c.l.b16 %v3460
      %v3471 = vunpack.c.l.b16 %v3461
      %v3472 = vunpack.c.l.b16 %v3462
      %v3473 = vunpack.c.l.b16 %v3463
      %v3474 = vunpack.c.l.b16 %v3464
      %v3475 = vpack.c.b16 %v3471, %v3470
      %v3476 = vpack.c.b16 %v3473, %v3472
      %v3477 = vpack.c.b16 %v3474, %v3474
      %vm3480 = vcmask 293888
      %v3482 = vsel %vm3480, %v3444, 0
      %v3485 = vsel %vm3480, %v3445, 0
      %v3488 = vsel %vm3480, %v3446, 0
      %v3491 = vsel %vm3480, %v3447, 0
      %v3494 = vsel %vm3480, %v3448, 0
      %v3497 = vsel %vm3480, %v3449, 0
      %v3500 = vsel %vm3480, %v3450, 0
      %v3503 = vsel %vm3480, %v3451, 0
      %v3506 = vsel %vm3480, %v3452, 0
      %v3509 = vsel %vm3480, %v3453, 0
      %v3512 = vsel %vm3480, %v3454, 0
      %v3515 = vsel %vm3480, %v3455, 0
      %v3518 = vsel %vm3480, %v3456, 0
      %v3521 = vsel %vm3480, %v3457, 0
      %v3524 = vsel %vm3480, %v3458, 0
      %v3527 = vsel %vm3480, %v3459, 0
      %vm3529 = vcmask 1041408
      %v3531 = vsel %vm3529, %v3477, 0
      %3533 = vmatprep.subr.bf16.mxu0 0
      %3534 = vmatpush1.bf16.msra.mxu0 %v3475
      %3535 = vmatprep.subr.bf16.mxu0 0
      %3536 = vmatpush1.bf16.msra.mxu0 %v3476
      %3537 = vmatprep.subr.bf16.mxu0 0
      %3538 = vmatpush1.bf16.msra.mxu0 %v3531
      %3539 = vmatprep.subr.bf16.mxu0 0
      %3540 = vmatpush1.bf16.msra.mxu0 0
      %3541 = vmatprep.subr.bf16.mxu0 0
      %3542 = vmatpush1.bf16.msra.mxu0 0
      %3543 = vmatprep.subr.bf16.mxu0 0
      %3544 = vmatpush1.bf16.msra.mxu0 0
      %3545 = vmatprep.subr.bf16.mxu0 0
      %3546 = vmatpush1.bf16.msra.mxu0 0
      %3547 = vmatprep.subr.bf16.mxu0 0
      %3548 = vmatpush1.bf16.msra.mxu0 0
      %3549 = vmatprep.subr.bf16.mxu0 0
      %3550 = vmatpush1.bf16.msra.mxu0 0
      %3551 = vmatprep.subr.bf16.mxu0 0
      %3552 = vmatpush1.bf16.msra.mxu0 0
      %3553 = vmatprep.subr.bf16.mxu0 0
      %3554 = vmatpush1.bf16.msra.mxu0 0
      %3555 = vmatprep.subr.bf16.mxu0 0
      %3556 = vmatpush1.bf16.msra.mxu0 0
      %3557 = vmatprep.subr.bf16.mxu0 0
      %3558 = vmatpush1.bf16.msra.mxu0 0
      %3559 = vmatprep.subr.bf16.mxu0 0
      %3560 = vmatpush1.bf16.msra.mxu0 0
      %3561 = vmatprep.subr.bf16.mxu0 0
      %3562 = vmatpush1.bf16.msra.mxu0 0
      %3563 = vmatprep.subr.bf16.mxu0 0
      %3564 = vmatpush1.bf16.msra.mxu0 0
      %3565 = vmatprep.mubr.bf16.mxu0 0
      %3566 = vmatmul.mubr.bf16.gmra.mrb[0].mxu0 %v3482
      %v3567 = vpop.f32.mrb[0].mxu0
      %v3568 = vadd.f32 0.0, %v3567
      %v3569 = vpop.f32.mrb[0].mxu0
      %v3570 = vpop.f32.mrb[0].mxu0
      %v3571 = vadd.f32 0.0, %v3570
      %v3572 = vpop.f32.mrb[0].mxu0
      %3573 = vmatprep.mubr.bf16.mxu0 0
      %3574 = vmatmul.mubr.bf16.gmra.mrb[0].mxu0 %v3485
      %v3575 = vpop.f32.mrb[0].mxu0
      %v3576 = vadd.f32 0.0, %v3575
      %v3577 = vpop.f32.mrb[0].mxu0
      %v3578 = vpop.f32.mrb[0].mxu0
      %v3579 = vadd.f32 0.0, %v3578
      %v3580 = vpop.f32.mrb[0].mxu0
      %3581 = vmatprep.mubr.bf16.mxu0 0
      %3582 = vmatmul.mubr.bf16.gmra.mrb[0].mxu0 %v3488
      %v3583 = vpop.f32.mrb[0].mxu0
      %v3584 = vadd.f32 0.0, %v3583
      %v3585 = vpop.f32.mrb[0].mxu0
      %v3586 = vpop.f32.mrb[0].mxu0
      %v3587 = vadd.f32 0.0, %v3586
      %v3588 = vpop.f32.mrb[0].mxu0
      %3589 = vmatprep.mubr.bf16.mxu0 0
      %3590 = vmatmul.mubr.bf16.gmra.mrb[0].mxu0 %v3491
      %v3591 = vpop.f32.mrb[0].mxu0
      %v3592 = vadd.f32 0.0, %v3591
      %v3593 = vpop.f32.mrb[0].mxu0
      %v3594 = vpop.f32.mrb[0].mxu0
      %v3595 = vadd.f32 0.0, %v3594
      %v3596 = vpop.f32.mrb[0].mxu0
      %3597 = vmatprep.mubr.bf16.mxu0 0
      %3598 = vmatmul.mubr.bf16.gmra.mrb[0].mxu0 %v3494
      %v3599 = vpop.f32.mrb[0].mxu0
      %v3600 = vadd.f32 0.0, %v3599
      %v3601 = vpop.f32.mrb[0].mxu0
      %v3602 = vpop.f32.mrb[0].mxu0
      %v3603 = vadd.f32 0.0, %v3602
      %v3604 = vpop.f32.mrb[0].mxu0
      %3605 = vmatprep.mubr.bf16.mxu0 0
      %3606 = vmatmul.mubr.bf16.gmra.mrb[0].mxu0 %v3497
      %v3607 = vpop.f32.mrb[0].mxu0
      %v3608 = vadd.f32 0.0, %v3607
      %v3609 = vpop.f32.mrb[0].mxu0
      %v3610 = vpop.f32.mrb[0].mxu0
      %v3611 = vadd.f32 0.0, %v3610
      %v3612 = vpop.f32.mrb[0].mxu0
      %3613 = vmatprep.mubr.bf16.mxu0 0
      %3614 = vmatmul.mubr.bf16.gmra.mrb[0].mxu0 %v3500
      %v3615 = vpop.f32.mrb[0].mxu0
      %v3616 = vadd.f32 0.0, %v3615
      %v3617 = vpop.f32.mrb[0].mxu0
      %v3618 = vpop.f32.mrb[0].mxu0
      %v3619 = vadd.f32 0.0, %v3618
      %v3620 = vpop.f32.mrb[0].mxu0
      %3621 = vmatprep.mubr.bf16.mxu0 0
      %3622 = vmatmul.mubr.bf16.gmra.mrb[0].mxu0 %v3503
      %v3623 = vpop.f32.mrb[0].mxu0
      %v3624 = vadd.f32 0.0, %v3623
      %v3625 = vpop.f32.mrb[0].mxu0
      %v3626 = vpop.f32.mrb[0].mxu0
      %v3627 = vadd.f32 0.0, %v3626
      %v3628 = vpop.f32.mrb[0].mxu0
      %3629 = vmatprep.mubr.bf16.mxu0 0
      %3630 = vmatmul.mubr.bf16.gmra.mrb[0].mxu0 %v3506
      %v3631 = vpop.f32.mrb[0].mxu0
      %v3632 = vadd.f32 0.0, %v3631
      %v3633 = vpop.f32.mrb[0].mxu0
      %v3634 = vpop.f32.mrb[0].mxu0
      %v3635 = vadd.f32 0.0, %v3634
      %v3636 = vpop.f32.mrb[0].mxu0
      %3637 = vmatprep.mubr.bf16.mxu0 0
      %3638 = vmatmul.mubr.bf16.gmra.mrb[0].mxu0 %v3509
      %v3639 = vpop.f32.mrb[0].mxu0
      %v3640 = vadd.f32 0.0, %v3639
      %v3641 = vpop.f32.mrb[0].mxu0
      %v3642 = vpop.f32.mrb[0].mxu0
      %v3643 = vadd.f32 0.0, %v3642
      %v3644 = vpop.f32.mrb[0].mxu0
      %3645 = vmatprep.mubr.bf16.mxu0 0
      %3646 = vmatmul.mubr.bf16.gmra.mrb[0].mxu0 %v3512
      %v3647 = vpop.f32.mrb[0].mxu0
      %v3648 = vadd.f32 0.0, %v3647
      %v3649 = vpop.f32.mrb[0].mxu0
      %v3650 = vpop.f32.mrb[0].mxu0
      %v3651 = vadd.f32 0.0, %v3650
      %v3652 = vpop.f32.mrb[0].mxu0
      %3653 = vmatprep.mubr.bf16.mxu0 0
      %3654 = vmatmul.mubr.bf16.gmra.mrb[0].mxu0 %v3515
      %v3655 = vpop.f32.mrb[0].mxu0
      %v3656 = vadd.f32 0.0, %v3655
      %v3657 = vpop.f32.mrb[0].mxu0
      %v3658 = vpop.f32.mrb[0].mxu0
      %v3659 = vadd.f32 0.0, %v3658
      %v3660 = vpop.f32.mrb[0].mxu0
      %3661 = vmatprep.mubr.bf16.mxu0 0
      %3662 = vmatmul.mubr.bf16.gmra.mrb[0].mxu0 %v3518
      %v3663 = vpop.f32.mrb[0].mxu0
      %v3664 = vadd.f32 0.0, %v3663
      %v3665 = vpop.f32.mrb[0].mxu0
      %v3666 = vpop.f32.mrb[0].mxu0
      %v3667 = vadd.f32 0.0, %v3666
      %v3668 = vpop.f32.mrb[0].mxu0
      %3669 = vmatprep.mubr.bf16.mxu0 0
      %3670 = vmatmul.mubr.bf16.gmra.mrb[0].mxu0 %v3521
      %v3671 = vpop.f32.mrb[0].mxu0
      %v3672 = vadd.f32 0.0, %v3671
      %v3673 = vpop.f32.mrb[0].mxu0
      %v3674 = vpop.f32.mrb[0].mxu0
      %v3675 = vadd.f32 0.0, %v3674
      %v3676 = vpop.f32.mrb[0].mxu0
      %3677 = vmatprep.mubr.bf16.mxu0 0
      %3678 = vmatmul.mubr.bf16.gmra.mrb[0].mxu0 %v3524
      %v3679 = vpop.f32.mrb[0].mxu0
      %v3680 = vadd.f32 0.0, %v3679
      %v3681 = vpop.f32.mrb[0].mxu0
      %v3682 = vpop.f32.mrb[0].mxu0
      %v3683 = vadd.f32 0.0, %v3682
      %v3684 = vpop.f32.mrb[0].mxu0
      %3685 = vmatprep.mubr.bf16.mxu0 0
      %3686 = vmatmul.mubr.bf16.gmra.mrb[0].mxu0 %v3527
      %v3687 = vpop.f32.mrb[0].mxu0
      %v3688 = vadd.f32 0.0, %v3687
      %v3689 = vpop.f32.mrb[0].mxu0
      %v3690 = vpop.f32.mrb[0].mxu0
      %v3691 = vadd.f32 0.0, %v3690
      %v3692 = vpop.f32.mrb[0].mxu0
      %3693 = vdwg.mxu0
      %v3694 = vmul.f32 %v3568, 0.5
      %v3695 = vmul.f32 %v3571, 0.5
      %v3696 = vmul.f32 %v3576, 0.5
      %v3697 = vmul.f32 %v3579, 0.5
      %v3698 = vmul.f32 %v3584, 0.5
      %v3699 = vmul.f32 %v3587, 0.5
      %v3700 = vmul.f32 %v3592, 0.5
      %v3701 = vmul.f32 %v3595, 0.5
      %v3702 = vmul.f32 %v3600, 0.5
      %v3703 = vmul.f32 %v3603, 0.5
      %v3704 = vmul.f32 %v3608, 0.5
      %v3705 = vmul.f32 %v3611, 0.5
      %v3706 = vmul.f32 %v3616, 0.5
      %v3707 = vmul.f32 %v3619, 0.5
      %v3708 = vmul.f32 %v3624, 0.5
      %v3709 = vmul.f32 %v3627, 0.5
      %v3710 = vmul.f32 %v3632, 0.5
      %v3711 = vmul.f32 %v3635, 0.5
      %v3712 = vmul.f32 %v3640, 0.5
      %v3713 = vmul.f32 %v3643, 0.5
      %v3714 = vmul.f32 %v3648, 0.5
      %v3715 = vmul.f32 %v3651, 0.5
      %v3716 = vmul.f32 %v3656, 0.5
      %v3717 = vmul.f32 %v3659, 0.5
      %v3718 = vmul.f32 %v3664, 0.5
      %v3719 = vmul.f32 %v3667, 0.5
      %v3720 = vmul.f32 %v3672, 0.5
      %v3721 = vmul.f32 %v3675, 0.5
      %v3722 = vmul.f32 %v3680, 0.5
      %v3723 = vmul.f32 %v3683, 0.5
      %v3724 = vmul.f32 %v3688, 0.5
      %v3725 = vmul.f32 %v3691, 0.5
      %v3726 = vmul.f32 %v3568, 0.70710677
      %v3727 = vmul.f32 %v3571, 0.70710677
      %v3728 = vmul.f32 %v3576, 0.70710677
      %v3729 = vmul.f32 %v3579, 0.70710677
      %v3730 = vmul.f32 %v3584, 0.70710677
      %v3731 = vmul.f32 %v3587, 0.70710677
      %v3732 = vmul.f32 %v3592, 0.70710677
      %v3733 = vmul.f32 %v3595, 0.70710677
      %v3734 = vmul.f32 %v3600, 0.70710677
      %v3735 = vmul.f32 %v3603, 0.70710677
      %v3736 = vmul.f32 %v3608, 0.70710677
      %v3737 = vmul.f32 %v3611, 0.70710677
      %v3738 = vmul.f32 %v3616, 0.70710677
      %v3739 = vmul.f32 %v3619, 0.70710677
      %v3740 = vmul.f32 %v3624, 0.70710677
      %v3741 = vmul.f32 %v3627, 0.70710677
      %v3742 = vmul.f32 %v3632, 0.70710677
      %v3743 = vmul.f32 %v3635, 0.70710677
      %v3744 = vmul.f32 %v3640, 0.70710677
      %v3745 = vmul.f32 %v3643, 0.70710677
      %v3746 = vmul.f32 %v3648, 0.70710677
      %v3747 = vmul.f32 %v3651, 0.70710677
      %v3748 = vmul.f32 %v3656, 0.70710677
      %v3749 = vmul.f32 %v3659, 0.70710677
      %v3750 = vmul.f32 %v3664, 0.70710677
      %v3751 = vmul.f32 %v3667, 0.70710677
      %v3752 = vmul.f32 %v3672, 0.70710677
      %v3753 = vmul.f32 %v3675, 0.70710677
      %v3754 = vmul.f32 %v3680, 0.70710677
      %v3755 = vmul.f32 %v3683, 0.70710677
      %v3756 = vmul.f32 %v3688, 0.70710677
      %v3757 = vmul.f32 %v3691, 0.70710677
      %v3758 = verf.f32.pop %v3726
      %v3759 = verf.f32.pop %v3727
      %v3760 = verf.f32.pop %v3728
      %v3761 = verf.f32.pop %v3729
      %v3762 = verf.f32.pop %v3730
      %v3763 = verf.f32.pop %v3731
      %v3764 = verf.f32.pop %v3732
      %v3765 = verf.f32.pop %v3733
      %v3766 = verf.f32.pop %v3734
      %v3767 = verf.f32.pop %v3735
      %v3768 = verf.f32.pop %v3736
      %v3769 = verf.f32.pop %v3737
      %v3770 = verf.f32.pop %v3738
      %v3771 = verf.f32.pop %v3739
      %v3772 = verf.f32.pop %v3740
      %v3773 = verf.f32.pop %v3741
      %v3774 = verf.f32.pop %v3742
      %v3775 = verf.f32.pop %v3743
      %v3776 = verf.f32.pop %v3744
      %v3777 = verf.f32.pop %v3745
      %v3778 = verf.f32.pop %v3746
      %v3779 = verf.f32.pop %v3747
      %v3780 = verf.f32.pop %v3748
      %v3781 = verf.f32.pop %v3749
      %v3782 = verf.f32.pop %v3750
      %v3783 = verf.f32.pop %v3751
      %v3784 = verf.f32.pop %v3752
      %v3785 = verf.f32.pop %v3753
      %v3786 = verf.f32.pop %v3754
      %v3787 = verf.f32.pop %v3755
      %v3788 = verf.f32.pop %v3756
      %v3789 = verf.f32.pop %v3757
      %v3790 = vadd.f32 %v3758, 1.0
      %v3791 = vadd.f32 %v3759, 1.0
      %v3792 = vadd.f32 %v3760, 1.0
      %v3793 = vadd.f32 %v3761, 1.0
      %v3794 = vadd.f32 %v3762, 1.0
      %v3795 = vadd.f32 %v3763, 1.0
      %v3796 = vadd.f32 %v3764, 1.0
      %v3797 = vadd.f32 %v3765, 1.0
      %v3798 = vadd.f32 %v3766, 1.0
      %v3799 = vadd.f32 %v3767, 1.0
      %v3800 = vadd.f32 %v3768, 1.0
      %v3801 = vadd.f32 %v3769, 1.0
      %v3802 = vadd.f32 %v3770, 1.0
      %v3803 = vadd.f32 %v3771, 1.0
      %v3804 = vadd.f32 %v3772, 1.0
      %v3805 = vadd.f32 %v3773, 1.0
      %v3806 = vadd.f32 %v3774, 1.0
      %v3807 = vadd.f32 %v3775, 1.0
      %v3808 = vadd.f32 %v3776, 1.0
      %v3809 = vadd.f32 %v3777, 1.0
      %v3810 = vadd.f32 %v3778, 1.0
      %v3811 = vadd.f32 %v3779, 1.0
      %v3812 = vadd.f32 %v3780, 1.0
      %v3813 = vadd.f32 %v3781, 1.0
      %v3814 = vadd.f32 %v3782, 1.0
      %v3815 = vadd.f32 %v3783, 1.0
      %v3816 = vadd.f32 %v3784, 1.0
      %v3817 = vadd.f32 %v3785, 1.0
      %v3818 = vadd.f32 %v3786, 1.0
      %v3819 = vadd.f32 %v3787, 1.0
      %v3820 = vadd.f32 %v3788, 1.0
      %v3821 = vadd.f32 %v3789, 1.0
      %v3822 = vmul.f32 %v3694, %v3790
      %v3823 = vmul.f32 %v3695, %v3791
      %v3824 = vmul.f32 %v3696, %v3792
      %v3825 = vmul.f32 %v3697, %v3793
      %v3826 = vmul.f32 %v3698, %v3794
      %v3827 = vmul.f32 %v3699, %v3795
      %v3828 = vmul.f32 %v3700, %v3796
      %v3829 = vmul.f32 %v3701, %v3797
      %v3830 = vmul.f32 %v3702, %v3798
      %v3831 = vmul.f32 %v3703, %v3799
      %v3832 = vmul.f32 %v3704, %v3800
      %v3833 = vmul.f32 %v3705, %v3801
      %v3834 = vmul.f32 %v3706, %v3802
      %v3835 = vmul.f32 %v3707, %v3803
      %v3836 = vmul.f32 %v3708, %v3804
      %v3837 = vmul.f32 %v3709, %v3805
      %v3838 = vmul.f32 %v3710, %v3806
      %v3839 = vmul.f32 %v3711, %v3807
      %v3840 = vmul.f32 %v3712, %v3808
      %v3841 = vmul.f32 %v3713, %v3809
      %v3842 = vmul.f32 %v3714, %v3810
      %v3843 = vmul.f32 %v3715, %v3811
      %v3844 = vmul.f32 %v3716, %v3812
      %v3845 = vmul.f32 %v3717, %v3813
      %v3846 = vmul.f32 %v3718, %v3814
      %v3847 = vmul.f32 %v3719, %v3815
      %v3848 = vmul.f32 %v3720, %v3816
      %v3849 = vmul.f32 %v3721, %v3817
      %v3850 = vmul.f32 %v3722, %v3818
      %v3851 = vmul.f32 %v3723, %v3819
      %v3852 = vmul.f32 %v3724, %v3820
      %v3853 = vmul.f32 %v3725, %v3821
      %vm3854 = vcmask 64512
      %v3855 = vsel %vm3854, %v3822, 0.0
      %v3856 = vsel %vm3854, %v3823, 0.0
      %v3857 = vadd.f32 %v3855, %v3856
      %v3858 = vsel %vm3854, %v3824, 0.0
      %v3859 = vadd.f32 %v3857, %v3858
      %v3860 = vsel %vm3854, %v3825, 0.0
      %v3861 = vadd.f32 %v3859, %v3860
      %v3862 = vsel %vm3854, %v3826, 0.0
      %v3863 = vadd.f32 %v3861, %v3862
      %v3864 = vsel %vm3854, %v3827, 0.0
      %v3865 = vadd.f32 %v3863, %v3864
      %v3866 = vsel %vm3854, %v3828, 0.0
      %v3867 = vadd.f32 %v3865, %v3866
      %v3868 = vsel %vm3854, %v3829, 0.0
      %v3869 = vadd.f32 %v3867, %v3868
      %v3870 = vsel %vm3854, %v3830, 0.0
      %v3871 = vadd.f32 %v3869, %v3870
      %v3872 = vsel %vm3854, %v3831, 0.0
      %v3873 = vadd.f32 %v3871, %v3872
      %v3874 = vsel %vm3854, %v3832, 0.0
      %v3875 = vadd.f32 %v3873, %v3874
      %v3876 = vsel %vm3854, %v3833, 0.0
      %v3877 = vadd.f32 %v3875, %v3876
      %v3878 = vsel %vm3854, %v3834, 0.0
      %v3879 = vadd.f32 %v3877, %v3878
      %v3880 = vsel %vm3854, %v3835, 0.0
      %v3881 = vadd.f32 %v3879, %v3880
      %v3882 = vsel %vm3854, %v3836, 0.0
      %v3883 = vadd.f32 %v3881, %v3882
      %v3884 = vsel %vm3854, %v3837, 0.0
      %v3885 = vadd.f32 %v3883, %v3884
      %v3886 = vsel %vm3854, %v3838, 0.0
      %v3887 = vadd.f32 %v3885, %v3886
      %v3888 = vsel %vm3854, %v3839, 0.0
      %v3889 = vadd.f32 %v3887, %v3888
      %v3890 = vsel %vm3854, %v3840, 0.0
      %v3891 = vadd.f32 %v3889, %v3890
      %v3892 = vsel %vm3854, %v3841, 0.0
      %v3893 = vadd.f32 %v3891, %v3892
      %v3894 = vsel %vm3854, %v3842, 0.0
      %v3895 = vadd.f32 %v3893, %v3894
      %v3896 = vsel %vm3854, %v3843, 0.0
      %v3897 = vadd.f32 %v3895, %v3896
      %v3898 = vsel %vm3854, %v3844, 0.0
      %v3899 = vadd.f32 %v3897, %v3898
      %v3900 = vsel %vm3854, %v3845, 0.0
      %v3901 = vadd.f32 %v3899, %v3900
      %v3902 = vsel %vm3854, %v3846, 0.0
      %v3903 = vadd.f32 %v3901, %v3902
      %v3904 = vsel %vm3854, %v3847, 0.0
      %v3905 = vadd.f32 %v3903, %v3904
      %v3906 = vsel %vm3854, %v3848, 0.0
      %v3907 = vadd.f32 %v3905, %v3906
      %v3908 = vsel %vm3854, %v3849, 0.0
      %v3909 = vadd.f32 %v3907, %v3908
      %v3910 = vsel %vm3854, %v3850, 0.0
      %v3911 = vadd.f32 %v3909, %v3910
      %v3912 = vsel %vm3854, %v3851, 0.0
      %v3913 = vadd.f32 %v3911, %v3912
      %v3914 = vsel %vm3854, %v3852, 0.0
      %v3915 = vadd.f32 %v3913, %v3914
      %v3916 = vsel %vm3854, %v3853, 0.0
      %v3917 = vadd.f32 %v3915, %v3916
      %v3918 = vrot.slane %v3917, 4
      %v3919 = vadd.f32 %v3917, %v3918
      %v3920 = vrot.slane %v3919, 2
      %v3921 = vadd.f32 %v3919, %v3920
      %v3922 = vrot.slane %v3921, 1
      %v3923 = vadd.f32 %v3921, %v3922
      %v3924 = vmul.f32 %v3923, 0.00390625
      %v3925 = vsub.f32 %v3822, %v3924
      %v3926 = vsub.f32 %v3823, %v3924
      %v3927 = vsub.f32 %v3824, %v3924
      %v3928 = vsub.f32 %v3825, %v3924
      %v3929 = vsub.f32 %v3826, %v3924
      %v3930 = vsub.f32 %v3827, %v3924
      %v3931 = vsub.f32 %v3828, %v3924
      %v3932 = vsub.f32 %v3829, %v3924
      %v3933 = vsub.f32 %v3830, %v3924
      %v3934 = vsub.f32 %v3831, %v3924
      %v3935 = vsub.f32 %v3832, %v3924
      %v3936 = vsub.f32 %v3833, %v3924
      %v3937 = vsub.f32 %v3834, %v3924
      %v3938 = vsub.f32 %v3835, %v3924
      %v3939 = vsub.f32 %v3836, %v3924
      %v3940 = vsub.f32 %v3837, %v3924
      %v3941 = vsub.f32 %v3838, %v3924
      %v3942 = vsub.f32 %v3839, %v3924
      %v3943 = vsub.f32 %v3840, %v3924
      %v3944 = vsub.f32 %v3841, %v3924
      %v3945 = vsub.f32 %v3842, %v3924
      %v3946 = vsub.f32 %v3843, %v3924
      %v3947 = vsub.f32 %v3844, %v3924
      %v3948 = vsub.f32 %v3845, %v3924
      %v3949 = vsub.f32 %v3846, %v3924
      %v3950 = vsub.f32 %v3847, %v3924
      %v3951 = vsub.f32 %v3848, %v3924
      %v3952 = vsub.f32 %v3849, %v3924
      %v3953 = vsub.f32 %v3850, %v3924
      %v3954 = vsub.f32 %v3851, %v3924
      %v3955 = vsub.f32 %v3852, %v3924
      %v3956 = vsub.f32 %v3853, %v3924
      %v3957 = vmul.f32 %v3925, %v3925
      %v3958 = vmul.f32 %v3926, %v3926
      %v3959 = vmul.f32 %v3927, %v3927
      %v3960 = vmul.f32 %v3928, %v3928
      %v3961 = vmul.f32 %v3929, %v3929
      %v3962 = vmul.f32 %v3930, %v3930
      %v3963 = vmul.f32 %v3931, %v3931
      %v3964 = vmul.f32 %v3932, %v3932
      %v3965 = vmul.f32 %v3933, %v3933
      %v3966 = vmul.f32 %v3934, %v3934
      %v3967 = vmul.f32 %v3935, %v3935
      %v3968 = vmul.f32 %v3936, %v3936
      %v3969 = vmul.f32 %v3937, %v3937
      %v3970 = vmul.f32 %v3938, %v3938
      %v3971 = vmul.f32 %v3939, %v3939
      %v3972 = vmul.f32 %v3940, %v3940
      %v3973 = vmul.f32 %v3941, %v3941
      %v3974 = vmul.f32 %v3942, %v3942
      %v3975 = vmul.f32 %v3943, %v3943
      %v3976 = vmul.f32 %v3944, %v3944
      %v3977 = vmul.f32 %v3945, %v3945
      %v3978 = vmul.f32 %v3946, %v3946
      %v3979 = vmul.f32 %v3947, %v3947
      %v3980 = vmul.f32 %v3948, %v3948
      %v3981 = vmul.f32 %v3949, %v3949
      %v3982 = vmul.f32 %v3950, %v3950
      %v3983 = vmul.f32 %v3951, %v3951
      %v3984 = vmul.f32 %v3952, %v3952
      %v3985 = vmul.f32 %v3953, %v3953
      %v3986 = vmul.f32 %v3954, %v3954
      %v3987 = vmul.f32 %v3955, %v3955
      %v3988 = vmul.f32 %v3956, %v3956
      %v3989 = vsel %vm3854, %v3957, 0.0
      %v3990 = vsel %vm3854, %v3958, 0.0
      %v3991 = vadd.f32 %v3989, %v3990
      %v3992 = vsel %vm3854, %v3959, 0.0
      %v3993 = vadd.f32 %v3991, %v3992
      %v3994 = vsel %vm3854, %v3960, 0.0
      %v3995 = vadd.f32 %v3993, %v3994
      %v3996 = vsel %vm3854, %v3961, 0.0
      %v3997 = vadd.f32 %v3995, %v3996
      %v3998 = vsel %vm3854, %v3962, 0.0
      %v3999 = vadd.f32 %v3997, %v3998
      %v4000 = vsel %vm3854, %v3963, 0.0
      %v4001 = vadd.f32 %v3999, %v4000
      %v4002 = vsel %vm3854, %v3964, 0.0
      %v4003 = vadd.f32 %v4001, %v4002
      %v4004 = vsel %vm3854, %v3965, 0.0
      %v4005 = vadd.f32 %v4003, %v4004
      %v4006 = vsel %vm3854, %v3966, 0.0
      %v4007 = vadd.f32 %v4005, %v4006
      %v4008 = vsel %vm3854, %v3967, 0.0
      %v4009 = vadd.f32 %v4007, %v4008
      %v4010 = vsel %vm3854, %v3968, 0.0
      %v4011 = vadd.f32 %v4009, %v4010
      %v4012 = vsel %vm3854, %v3969, 0.0
      %v4013 = vadd.f32 %v4011, %v4012
      %v4014 = vsel %vm3854, %v3970, 0.0
      %v4015 = vadd.f32 %v4013, %v4014
      %v4016 = vsel %vm3854, %v3971, 0.0
      %v4017 = vadd.f32 %v4015, %v4016
      %v4018 = vsel %vm3854, %v3972, 0.0
      %v4019 = vadd.f32 %v4017, %v4018
      %v4020 = vsel %vm3854, %v3973, 0.0
      %v4021 = vadd.f32 %v4019, %v4020
      %v4022 = vsel %vm3854, %v3974, 0.0
      %v4023 = vadd.f32 %v4021, %v4022
      %v4024 = vsel %vm3854, %v3975, 0.0
      %v4025 = vadd.f32 %v4023, %v4024
      %v4026 = vsel %vm3854, %v3976, 0.0
      %v4027 = vadd.f32 %v4025, %v4026
      %v4028 = vsel %vm3854, %v3977, 0.0
      %v4029 = vadd.f32 %v4027, %v4028
      %v4030 = vsel %vm3854, %v3978, 0.0
      %v4031 = vadd.f32 %v4029, %v4030
      %v4032 = vsel %vm3854, %v3979, 0.0
      %v4033 = vadd.f32 %v4031, %v4032
      %v4034 = vsel %vm3854, %v3980, 0.0
      %v4035 = vadd.f32 %v4033, %v4034
      %v4036 = vsel %vm3854, %v3981, 0.0
      %v4037 = vadd.f32 %v4035, %v4036
      %v4038 = vsel %vm3854, %v3982, 0.0
      %v4039 = vadd.f32 %v4037, %v4038
      %v4040 = vsel %vm3854, %v3983, 0.0
      %v4041 = vadd.f32 %v4039, %v4040
      %v4042 = vsel %vm3854, %v3984, 0.0
      %v4043 = vadd.f32 %v4041, %v4042
      %v4044 = vsel %vm3854, %v3985, 0.0
      %v4045 = vadd.f32 %v4043, %v4044
      %v4046 = vsel %vm3854, %v3986, 0.0
      %v4047 = vadd.f32 %v4045, %v4046
      %v4048 = vsel %vm3854, %v3987, 0.0
      %v4049 = vadd.f32 %v4047, %v4048
      %v4050 = vsel %vm3854, %v3988, 0.0
      %v4051 = vadd.f32 %v4049, %v4050
      %v4052 = vrot.slane %v4051, 4
      %v4053 = vadd.f32 %v4051, %v4052
      %v4054 = vrot.slane %v4053, 2
      %v4055 = vadd.f32 %v4053, %v4054
      %v4056 = vrot.slane %v4055, 1
      %v4057 = vadd.f32 %v4055, %v4056
      %v4058 = vld [vmem:[#allocation4] sm:$0x1]
      %v4059 = vld [vmem:[#allocation4 + $0x1] sm:$0x1]
      %v4060 = vsub.f32 %v3924, %v4058
      %v4061 = vadd.f32 %v4058, %v4060
      %vm4062 = vcmask 57344
      %4063 = vst.msk [vmem:[#allocation4] sm:$0x1] %vm4062, %v4061
      %v4064 = vadd.f32 %v4059, %v4057
      %v4065 = vmul.f32 %v4060, %v4060
      %v4066 = vmul.f32 %v4065, 0.0
      %v4067 = vadd.f32 %v4064, %v4066
      %4068 = vst.msk [vmem:[#allocation4 + $0x1] sm:$0x1] %vm4062, %v4067
      %v4069 = vpack.c.bf16 %v3823, %v3822
      %v4070 = vpack.c.bf16 %v3825, %v3824
      %v4071 = vpack.c.bf16 %v3827, %v3826
      %v4072 = vpack.c.bf16 %v3829, %v3828
      %v4073 = vpack.c.bf16 %v3831, %v3830
      %v4074 = vpack.c.bf16 %v3833, %v3832
      %v4075 = vpack.c.bf16 %v3835, %v3834
      %v4076 = vpack.c.bf16 %v3837, %v3836
      %v4077 = vpack.c.bf16 %v3839, %v3838
      %v4078 = vpack.c.bf16 %v3841, %v3840
      %v4079 = vpack.c.bf16 %v3843, %v3842
      %v4080 = vpack.c.bf16 %v3845, %v3844
      %v4081 = vpack.c.bf16 %v3847, %v3846
      %v4082 = vpack.c.bf16 %v3849, %v3848
      %v4083 = vpack.c.bf16 %v3851, %v3850
      %v4084 = vpack.c.bf16 %v3853, %v3852
      %v4101 = vunpack.c.l.b16 %v4069
      %v4102 = vunpack.c.h.b16 %v4069
      %v4103 = vunpack.c.l.b16 %v4070
      %v4104 = vunpack.c.h.b16 %v4070
      %v4105 = vunpack.c.l.b16 %v4071
      %v4106 = vunpack.c.h.b16 %v4071
      %v4107 = vunpack.c.l.b16 %v4072
      %v4108 = vunpack.c.h.b16 %v4072
      %v4109 = vunpack.c.l.b16 %v4073
      %v4110 = vunpack.c.h.b16 %v4073
      %v4111 = vunpack.c.l.b16 %v4074
      %v4112 = vunpack.c.h.b16 %v4074
      %v4113 = vunpack.c.l.b16 %v4075
      %v4114 = vunpack.c.h.b16 %v4075
      %v4115 = vunpack.c.l.b16 %v4076
      %v4116 = vunpack.c.h.b16 %v4076
      %v4117 = vunpack.c.l.b16 %v4077
      %v4118 = vunpack.c.h.b16 %v4077
      %v4119 = vunpack.c.l.b16 %v4078
      %v4120 = vunpack.c.h.b16 %v4078
      %v4121 = vunpack.c.l.b16 %v4079
      %v4122 = vunpack.c.h.b16 %v4079
      %v4123 = vunpack.c.l.b16 %v4080
      %v4124 = vunpack.c.h.b16 %v4080
      %v4125 = vunpack.c.l.b16 %v4081
      %v4126 = vunpack.c.h.b16 %v4081
      %v4127 = vunpack.c.l.b16 %v4082
      %v4128 = vunpack.c.h.b16 %v4082
      %v4129 = vunpack.c.l.b16 %v4083
      %v4130 = vunpack.c.h.b16 %v4083
      %v4131 = vunpack.c.l.b16 %v4084
      %v4132 = vunpack.c.h.b16 %v4084
      %v4133 = vpack.c.b16 %v4101, %v4101
      %v4134 = vpack.c.b16 %v4102, %v4102
      %v4135 = vpack.c.b16 %v4103, %v4103
      %v4136 = vpack.c.b16 %v4104, %v4104
      %v4137 = vpack.c.b16 %v4105, %v4105
      %v4138 = vpack.c.b16 %v4106, %v4106
      %v4139 = vpack.c.b16 %v4107, %v4107
      %v4140 = vpack.c.b16 %v4108, %v4108
      %v4141 = vpack.c.b16 %v4109, %v4109
      %v4142 = vpack.c.b16 %v4110, %v4110
      %v4143 = vpack.c.b16 %v4111, %v4111
      %v4144 = vpack.c.b16 %v4112, %v4112
      %v4145 = vpack.c.b16 %v4113, %v4113
      %v4146 = vpack.c.b16 %v4114, %v4114
      %v4147 = vpack.c.b16 %v4115, %v4115
      %v4148 = vpack.c.b16 %v4116, %v4116
      %v4149 = vpack.c.b16 %v4117, %v4117
      %v4150 = vpack.c.b16 %v4118, %v4118
      %v4151 = vpack.c.b16 %v4119, %v4119
      %v4152 = vpack.c.b16 %v4120, %v4120
      %v4153 = vpack.c.b16 %v4121, %v4121
      %v4154 = vpack.c.b16 %v4122, %v4122
      %v4155 = vpack.c.b16 %v4123, %v4123
      %v4156 = vpack.c.b16 %v4124, %v4124
      %v4157 = vpack.c.b16 %v4125, %v4125
      %v4158 = vpack.c.b16 %v4126, %v4126
      %v4159 = vpack.c.b16 %v4127, %v4127
      %v4160 = vpack.c.b16 %v4128, %v4128
      %v4161 = vpack.c.b16 %v4129, %v4129
      %v4162 = vpack.c.b16 %v4130, %v4130
      %v4163 = vpack.c.b16 %v4131, %v4131
      %v4164 = vpack.c.b16 %v4132, %v4132
      %vm4197 = vcmask 60416
      %4198 = vst.msk [vmem:[%s177] sm:$0xf] %vm4197, %v4133
      %4199 = vst.msk [vmem:[%s177 + $0x4] sm:$0xf] %vm4197, %v4134
      %4200 = vst.msk [vmem:[%s177 + $0x8] sm:$0xf] %vm4197, %v4135
      %4201 = vst.msk [vmem:[%s177 + $0xc] sm:$0xf] %vm4197, %v4136
      %4202 = vst.msk [vmem:[%s177 + $0x10] sm:$0xf] %vm4197, %v4137
      %4203 = vst.msk [vmem:[%s177 + $0x14] sm:$0xf] %vm4197, %v4138
      %4204 = vst.msk [vmem:[%s177 + $0x18] sm:$0xf] %vm4197, %v4139
      %4205 = vst.msk [vmem:[%s177 + $0x1c] sm:$0xf] %vm4197, %v4140
      %4206 = vst.msk [vmem:[%s177 + $0x20] sm:$0xf] %vm4197, %v4141
      %4207 = vst.msk [vmem:[%s177 + $0x24] sm:$0xf] %vm4197, %v4142
      %4208 = vst.msk [vmem:[%s177 + $0x28] sm:$0xf] %vm4197, %v4143
      %4209 = vst.msk [vmem:[%s177 + $0x2c] sm:$0xf] %vm4197, %v4144
      %4210 = vst.msk [vmem:[%s177 + $0x30] sm:$0xf] %vm4197, %v4145
      %4211 = vst.msk [vmem:[%s177 + $0x34] sm:$0xf] %vm4197, %v4146
      %4212 = vst.msk [vmem:[%s177 + $0x38] sm:$0xf] %vm4197, %v4147
      %4213 = vst.msk [vmem:[%s177 + $0x3c] sm:$0xf] %vm4197, %v4148
      %4214 = vst.msk [vmem:[%s177 + $0x40] sm:$0xf] %vm4197, %v4149
      %4215 = vst.msk [vmem:[%s177 + $0x44] sm:$0xf] %vm4197, %v4150
      %4216 = vst.msk [vmem:[%s177 + $0x48] sm:$0xf] %vm4197, %v4151
      %4217 = vst.msk [vmem:[%s177 + $0x4c] sm:$0xf] %vm4197, %v4152
      %4218 = vst.msk [vmem:[%s177 + $0x50] sm:$0xf] %vm4197, %v4153
      %4219 = vst.msk [vmem:[%s177 + $0x54] sm:$0xf] %vm4197, %v4154
      %4220 = vst.msk [vmem:[%s177 + $0x58] sm:$0xf] %vm4197, %v4155
      %4221 = vst.msk [vmem:[%s177 + $0x5c] sm:$0xf] %vm4197, %v4156
      %4222 = vst.msk [vmem:[%s177 + $0x60] sm:$0xf] %vm4197, %v4157
      %4223 = vst.msk [vmem:[%s177 + $0x64] sm:$0xf] %vm4197, %v4158
      %4224 = vst.msk [vmem:[%s177 + $0x68] sm:$0xf] %vm4197, %v4159
      %4225 = vst.msk [vmem:[%s177 + $0x6c] sm:$0xf] %vm4197, %v4160
      %4226 = vst.msk [vmem:[%s177 + $0x70] sm:$0xf] %vm4197, %v4161
      %4227 = vst.msk [vmem:[%s177 + $0x74] sm:$0xf] %vm4197, %v4162
      %4228 = vst.msk [vmem:[%s177 + $0x78] sm:$0xf] %vm4197, %v4163
      %4229 = vst.msk [vmem:[%s177 + $0x7c] sm:$0xf] %vm4197, %v4164
      %v4230 = vld [vmem:[#allocation4] sm:$0x3]
      %4231 = vst.msk [vmem:[%s181] sm:$0x3] %vm774, %v4230
      %p4232 = scmp.lt.s32.totalorder %s15, 1
      %s4233 = scalar_select %p4232, %s15, 1
      %s4234 = smul.addr %s4233, 32
      %s4235 = smul.addr %s4234, 4
      %s4236 = scalar_lea.vmem %s2, %s4235
      %p4237 = scmp.lt.s32.totalorder %s15, 1
      %s4238 = scalar_select %p4237, %s15, 1
      %s4239 = smul.addr %s4238, 2
      %s4240 = scalar_lea.vmem %s3, %s4239
      // Predicated region
      $region29: #{down_forward.2} parent=27 // pred_check
        %p4241 = pneg %p80
      $region30: #{down_forward.2} parent=27 // pred_check_branch
        %4243 = sbr.rel (%p4241) target = $region32
      $region31: #{down_forward.2} parent=27 // pred_region
        _
      $region32: #{down_forward.2} parent=27 // pred_fallthru
        _
      // Predicated region
      $region33: #{down_forward.2} parent=27 // pred_check
        %p4244 = pneg %p106
      $region34: #{down_forward.2} parent=27 // pred_check_branch
        %4246 = sbr.rel (%p4244) target = $region36
      $region35: #{down_forward.2} parent=27 // pred_region
        _
      $region36: #{down_forward.2} parent=27 // pred_fallthru
        _
    $region28: #{down_forward.2} parent=5 // pred_fallthru
      _
    %p4247 = scmp.le.s32.totalorder 2, %s10
    // Predicated region
    $region37: #{down_forward.2} parent=5 // pred_check
      %p4248 = pneg %p4247
    $region38: #{down_forward.2} parent=5 // pred_check_branch
      %4250 = sbr.rel (%p4248) target = $region40
    $region39: #{down_forward.2} parent=5 // pred_region
      %s4251 = ssub.s32 %s10, 2
      // Predicated region
      $region41: #{down_forward.2} parent=39 // pred_check
        %p4252 = pneg %p86
      $region42: #{down_forward.2} parent=39 // pred_check_branch
        %4254 = sbr.rel (%p4252) target = $region44
      $region43: #{down_forward.2} parent=39 // pred_region
        %p4255 = scmp.lt.s32.totalorder %s16, 1
        %s4256 = scalar_select %p4255, %s16, 1
        %s4257 = smul.addr %s4256, 32
        %s4258 = smul.addr %s4257, 4
        %s4259 = scalar_lea.vmem %s2, %s4258
      $region44: #{down_forward.2} parent=39 // pred_fallthru
        _
      // Predicated region
      $region45: #{down_forward.2} parent=39 // pred_check
        %p4260 = pneg %p112
      $region46: #{down_forward.2} parent=39 // pred_check_branch
        %4262 = sbr.rel (%p4260) target = $region48
      $region47: #{down_forward.2} parent=39 // pred_region
        %p4263 = scmp.lt.s32.totalorder %s16, 1
        %s4264 = scalar_select %p4263, %s16, 1
        %s4265 = smul.addr %s4264, 2
        %s4266 = scalar_lea.vmem %s3, %s4265
      $region48: #{down_forward.2} parent=39 // pred_fallthru
        _
    $region40: #{down_forward.2} parent=5 // pred_fallthru
      _
  $region6: #{down_forward.2} parent=0 // loop_footer
    %s14 = sadd.s32 1, %s10
  $region7: #{down_forward.2} parent=0 // loop_footer_branch
    %9 = sbr.rel target = $region3
  $region8: #{down_forward.2} parent=0 // loop_exit
    _

// kernel: down_forward.3
$region0: #{down_forward.3}
  #allocation0 [shape = 'u32[]', space=smem, size = 0x4, offset = 0x4, fixed_abs, tag = 'smem constant byte address 0x4 - core index']
  #allocation1 [shape = 'u32[144,128]{1,0:T(1,128)}', space=vmem, size = 0x12000, scoped, tag = 'internal scratch']
  #allocation2 [shape = 'bf16[18,18,8]{2,1,0:T(8,128)(2,1)}', space=vmem, size = 0x1b000, scoped, tag = 'scratch operand']
  #allocation3 [shape = 'bf16[16,16,72]{2,1,0:T(16,128)(2,1)}', space=vmem, size = 0x10000, scoped, tag = 'scratch operand']
  #allocation4 [shape = 'f32[2,8]{1,0:T(2,128)}', space=vmem, size = 0x400, scoped, tag = 'scratch operand']
  %s0 = inlined_call_operand.vmem [shape: bf16[2,16,16,8], index: 0, kind: input, shape index: {}]
  %s1 = inlined_call_operand.vmem [shape: f32[1,8], index: 1, kind: input, shape index: {}]
  %s2 = inlined_call_operand.vmem [shape: bf16[72,8], index: 2, kind: input, shape index: {}]
  %s3 = inlined_call_operand.vmem [shape: bf16[2,8,8,8], index: 3, kind: output, shape index: {0}]
  %s4 = inlined_call_operand.vmem [shape: f32[2,2,8], index: 4, kind: output, shape index: {1}]
  %5 = xla_tuple %s3, %s4
  %s6 = sld [smem:[#allocation0]]
  $region53: #{down_forward.3} parent=0
    _
  %s8 = ssub.s32 1, %s6
  %s9 = scalar_select 0, %s8, %s6
  loop: start=0, step=1, limit=4
  $region2: #{down_forward.3} parent=0 // loop_pre_header
    _
  $region3: #{down_forward.3} parent=0 // loop_header
    %s11 = sphi 0, %s15
    %p12 = scmp.ge.s32.totalorder %s11, 4
    %s21 = sphi 0, %s23
    %s24 = sphi 0, %s21
    %s25 = sphi 0, %s24
    %s41 = sphi 0, %s25
    %s45 = sphi 0, %s45
    %s47 = sphi 0, %s45
    %s48 = sphi 0, %s47
    %s62 = sphi 0, %s48
    %s66 = sphi 0, %s66
    %s68 = sphi 0, %s66
    %s69 = sphi 0, %s68
    %s83 = sphi 0, %s69
    %s89 = sphi 0, %s91
    %s92 = sphi 0, %s89
    %s93 = sphi 0, %s92
    %s109 = sphi 0, %s93
    %s115 = sphi 0, %s117
    %s118 = sphi 0, %s115
    %s119 = sphi 0, %s118
    %s135 = sphi 0, %s119
  $region4: #{down_forward.3} parent=0 // loop_header_branch
    %14 = sbr.rel (%p12) target = $region8
  $region5: #{down_forward.3} parent=0 // loop_body
    %s16 = ssub.s32 %s11, 1
    %s17 = ssub.s32 %s11, 2
    %s18 = sadd.s32 %s11, 1
    %s19 = ssub.s32 %s11, %s18
    %p20 = scmp.eq.s32.totalorder %s19, 0
    %s22 = sadd.s32 %s21, 1
    %s23 = scalar_select %p20, %s21, %s22
    %p26 = pneg %p20
    %p27 = scmp.eq.s32.totalorder %s11, 1
    %p28 = por %p26, %p27
    %p29 = scmp.ne.s32.totalorder %s21, %s24
    %p30 = scmp.eq.s32.totalorder %s11, 0
    %p31 = por %p29, %p30
    %p32 = scmp.ne.s32.totalorder %s21, %s24
    %p33 = scmp.eq.s32.totalorder %s16, 1
    %p34 = por %p32, %p33
    %p35 = scmp.ne.s32.totalorder %s24, %s25
    %p36 = scmp.eq.s32.totalorder %s16, 0
    %p37 = por %p35, %p36
    %p38 = scmp.ne.s32.totalorder %s24, %s25
    %p39 = scmp.eq.s32.totalorder %s17, 1
    %p40 = por %p38, %p39
    %p42 = scmp.ne.s32.totalorder %s25, %s41
    %p43 = scmp.eq.s32.totalorder %s17, 0
    %p44 = por %p42, %p43
    %s46 = sadd.s32 %s45, 1
    %p49 = scmp.eq.s32.totalorder %s11, 1
    %p50 = scmp.ne.s32.totalorder %s45, %s47
    %p51 = scmp.eq.s32.totalorder %s11, 0
    %p52 = por %p50, %p51
    %p53 = scmp.ne.s32.totalorder %s45, %s47
    %p54 = scmp.eq.s32.totalorder %s16, 1
    %p55 = por %p53, %p54
    %p56 = scmp.ne.s32.totalorder %s47, %s48
    %p57 = scmp.eq.s32.totalorder %s16, 0
    %p58 = por %p56, %p57
    %p59 = scmp.ne.s32.totalorder %s47, %s48
    %p60 = scmp.eq.s32.totalorder %s17, 1
    %p61 = por %p59, %p60
    %p63 = scmp.ne.s32.totalorder %s48, %s62
    %p64 = scmp.eq.s32.totalorder %s17, 0
    %p65 = por %p63, %p64
    %s67 = sadd.s32 %s66, 1
    %p70 = scmp.eq.s32.totalorder %s11, 1
    %p71 = scmp.ne.s32.totalorder %s66, %s68
    %p72 = scmp.eq.s32.totalorder %s11, 0
    %p73 = por %p71, %p72
    %p74 = scmp.ne.s32.totalorder %s66, %s68
    %p75 = scmp.eq.s32.totalorder %s16, 1
    %p76 = por %p74, %p75
    %p77 = scmp.ne.s32.totalorder %s68, %s69
    %p78 = scmp.eq.s32.totalorder %s16, 0
    %p79 = por %p77, %p78
    %p80 = scmp.ne.s32.totalorder %s68, %s69
    %p81 = scmp.eq.s32.totalorder %s17, 1
    %p82 = por %p80, %p81
    %p84 = scmp.ne.s32.totalorder %s69, %s83
    %p85 = scmp.eq.s32.totalorder %s17, 0
    %p86 = por %p84, %p85
    %s87 = ssub.s32 %s11, %s18
    %p88 = scmp.eq.s32.totalorder %s87, 0
    %s90 = sadd.s32 %s89, 1
    %s91 = scalar_select %p88, %s89, %s90
    %p94 = pneg %p88
    %p95 = scmp.eq.s32.totalorder %s11, 1
    %p96 = por %p94, %p95
    %p97 = scmp.ne.s32.totalorder %s89, %s92
    %p98 = scmp.eq.s32.totalorder %s11, 0
    %p99 = por %p97, %p98
    %p100 = scmp.ne.s32.totalorder %s89, %s92
    %p101 = scmp.eq.s32.totalorder %s16, 1
    %p102 = por %p100, %p101
    %p103 = scmp.ne.s32.totalorder %s92, %s93
    %p104 = scmp.eq.s32.totalorder %s16, 0
    %p105 = por %p103, %p104
    %p106 = scmp.ne.s32.totalorder %s92, %s93
    %p107 = scmp.eq.s32.totalorder %s17, 1
    %p108 = por %p106, %p107
    %p110 = scmp.ne.s32.totalorder %s93, %s109
    %p111 = scmp.eq.s32.totalorder %s17, 0
    %p112 = por %p110, %p111
    %s113 = ssub.s32 %s11, %s18
    %p114 = scmp.eq.s32.totalorder %s113, 0
    %s116 = sadd.s32 %s115, 1
    %s117 = scalar_select %p114, %s115, %s116
    %p120 = pneg %p114
    %p121 = scmp.eq.s32.totalorder %s11, 1
    %p122 = por %p120, %p121
    %p123 = scmp.ne.s32.totalorder %s115, %s118
    %p124 = scmp.eq.s32.totalorder %s11, 0
    %p125 = por %p123, %p124
    %p126 = scmp.ne.s32.totalorder %s115, %s118
    %p127 = scmp.eq.s32.totalorder %s16, 1
    %p128 = por %p126, %p127
    %p129 = scmp.ne.s32.totalorder %s118, %s119
    %p130 = scmp.eq.s32.totalorder %s16, 0
    %p131 = por %p129, %p130
    %p132 = scmp.ne.s32.totalorder %s118, %s119
    %p133 = scmp.eq.s32.totalorder %s17, 1
    %p134 = por %p132, %p133
    %p136 = scmp.ne.s32.totalorder %s119, %s135
    %p137 = scmp.eq.s32.totalorder %s17, 0
    %p138 = por %p136, %p137
    %p139 = scmp.le.s32.totalorder 1, %s11
    %p140 = scmp.lt.s32.totalorder %s11, 3
    %p141 = pnand %p139, %p140
    %p142 = pneg %p141
    // Predicated region
    $region9: #{down_forward.3} parent=5 // pred_check
      _
    $region10: #{down_forward.3} parent=5 // pred_check_branch
      %144 = sbr.rel (%p141) target = $region12
    $region11: #{down_forward.3} parent=5 // pred_region
      %s145 = ssub.s32 %s11, 1
      // Predicated region
      $region13: #{down_forward.3} parent=11 // pred_check
        %p146 = pneg %p58
      $region14: #{down_forward.3} parent=11 // pred_check_branch
        %148 = sbr.rel (%p146) target = $region16
      $region15: #{down_forward.3} parent=11 // pred_region
        _
      $region16: #{down_forward.3} parent=11 // pred_fallthru
        _
      // Predicated region
      $region17: #{down_forward.3} parent=11 // pred_check
        %p149 = pneg %p79
      $region18: #{down_forward.3} parent=11 // pred_check_branch
        %151 = sbr.rel (%p149) target = $region20
      $region19: #{down_forward.3} parent=11 // pred_region
        _
      $region20: #{down_forward.3} parent=11 // pred_fallthru
        _
    $region12: #{down_forward.3} parent=5 // pred_fallthru
      _
    %p152 = scmp.lt.s32.totalorder %s11, 2
    // Predicated region
    $region21: #{down_forward.3} parent=5 // pred_check
      %p153 = pneg %p152
    $region22: #{down_forward.3} parent=5 // pred_check_branch
      %155 = sbr.rel (%p153) target = $region24
    $region23: #{down_forward.3} parent=5 // pred_region
      // Predicated region
      $region25: #{down_forward.3} parent=23 // pred_check
        %p156 = pneg %p31
      $region26: #{down_forward.3} parent=23 // pred_check_branch
        %158 = sbr.rel (%p156) target = $region28
      $region27: #{down_forward.3} parent=23 // pred_region
        %p159 = scmp.lt.s32.totalorder %s11, 1
        %s160 = scalar_select %p159, %s11, 1
        %s161 = smul.addr %s160, 32
        %s162 = smul.addr %s161, 4
        %s163 = scalar_lea.vmem %s0, %s162
      $region28: #{down_forward.3} parent=23 // pred_fallthru
        _
    $region24: #{down_forward.3} parent=5 // pred_fallthru
      _
    %p164 = scmp.le.s32.totalorder 1, %s11
    %p165 = scmp.lt.s32.totalorder %s11, 3
    %p166 = pnand %p164, %p165
    %p167 = pneg %p166
    // Predicated region
    $region29: #{down_forward.3} parent=5 // pred_check
      _
    $region30: #{down_forward.3} parent=5 // pred_check_branch
      %169 = sbr.rel (%p166) target = $region32
    $region31: #{down_forward.3} parent=5 // pred_region
      %s170 = ssub.s32 %s11, 1
      %p171 = scmp.lt.s32.totalorder %s16, 1
      %s172 = scalar_select %p171, %s16, 1
      %s173 = smul.addr %s172, 32
      %s174 = smul.addr %s173, 4
      %s175 = scalar_lea.vmem %s0, %s174
      %p176 = pneg %p37
      %p177 = pneg %p34
      %p178 = pneg %p58
      %p179 = pneg %p55
      %p180 = pneg %p79
      %p181 = pneg %p76
      %p182 = pneg %p105
      %p183 = pneg %p102
      %p184 = scmp.lt.s32.totalorder %s16, 1
      %s185 = scalar_select %p184, %s16, 1
      %s186 = smul.addr %s185, 8
      %s187 = smul.addr %s186, 4
      %s188 = scalar_lea.vmem %s3, %s187
      %p189 = pneg %p131
      %p190 = pneg %p128
      %p191 = scmp.lt.s32.totalorder %s16, 1
      %s192 = scalar_select %p191, %s16, 1
      %s193 = smul.addr %s192, 2
      %s194 = scalar_lea.vmem %s4, %s193
      %p195 = scmp.lt.s32.totalorder %s16, 1
      %s196 = scalar_select %p195, %s16, 1
      %s197 = smul.addr %s196, 32
      %s198 = smul.addr %s197, 4
      %s199 = scalar_lea.vmem %s0, %s198
      %p200 = scmp.lt.s32.totalorder %s16, 1
      %s201 = scalar_select %p200, %s16, 1
      %s202 = smul.addr %s201, 8
      %s203 = smul.addr %s202, 4
      %s204 = scalar_lea.vmem %s3, %s203
      %p205 = scmp.lt.s32.totalorder %s16, 1
      %s206 = scalar_select %p205, %s16, 1
      %s207 = smul.addr %s206, 2
      %s208 = scalar_lea.vmem %s4, %s207
      %v210 = vld [vmem:[%s1] sm:$0x1]
      %v211 = vpack.c.bf16 %v210, %v210
      %v212 = vld [vmem:[%s199] sm:$0xf]
      %v213 = vld [vmem:[%s199 + $0x4] sm:$0xf]
      %v214 = vld [vmem:[%s199 + $0x8] sm:$0xf]
      %v215 = vld [vmem:[%s199 + $0xc] sm:$0xf]
      %v216 = vld [vmem:[%s199 + $0x10] sm:$0xf]
      %v217 = vld [vmem:[%s199 + $0x14] sm:$0xf]
      %v218 = vld [vmem:[%s199 + $0x18] sm:$0xf]
      %v219 = vld [vmem:[%s199 + $0x1c] sm:$0xf]
      %v220 = vld [vmem:[%s199 + $0x20] sm:$0xf]
      %v221 = vld [vmem:[%s199 + $0x24] sm:$0xf]
      %v222 = vld [vmem:[%s199 + $0x28] sm:$0xf]
      %v223 = vld [vmem:[%s199 + $0x2c] sm:$0xf]
      %v224 = vld [vmem:[%s199 + $0x30] sm:$0xf]
      %v225 = vld [vmem:[%s199 + $0x34] sm:$0xf]
      %v226 = vld [vmem:[%s199 + $0x38] sm:$0xf]
      %v227 = vld [vmem:[%s199 + $0x3c] sm:$0xf]
      %v228 = vld [vmem:[%s199 + $0x40] sm:$0xf]
      %v229 = vld [vmem:[%s199 + $0x44] sm:$0xf]
      %v230 = vld [vmem:[%s199 + $0x48] sm:$0xf]
      %v231 = vld [vmem:[%s199 + $0x4c] sm:$0xf]
      %v232 = vld [vmem:[%s199 + $0x50] sm:$0xf]
      %v233 = vld [vmem:[%s199 + $0x54] sm:$0xf]
      %v234 = vld [vmem:[%s199 + $0x58] sm:$0xf]
      %v235 = vld [vmem:[%s199 + $0x5c] sm:$0xf]
      %v236 = vld [vmem:[%s199 + $0x60] sm:$0xf]
      %v237 = vld [vmem:[%s199 + $0x64] sm:$0xf]
      %v238 = vld [vmem:[%s199 + $0x68] sm:$0xf]
      %v239 = vld [vmem:[%s199 + $0x6c] sm:$0xf]
      %v240 = vld [vmem:[%s199 + $0x70] sm:$0xf]
      %v241 = vld [vmem:[%s199 + $0x74] sm:$0xf]
      %v242 = vld [vmem:[%s199 + $0x78] sm:$0xf]
      %v243 = vld [vmem:[%s199 + $0x7c] sm:$0xf]
      %v245 = vpack.i.b16 %v211, %v211
      %v247 = vlaneseq
      %v248 = vshrl.u32 %v247, 7
      %v249 = vsub.s32 0, %v248
      %v250 = vrot.slane %v245, %v249
      %v252 = vunpack.c.l.b16 %v250
      %v253 = vpack.c.b16 %v252, %v252
      %v255 = vadd.bf16 %v212, %v253
      %v256 = vadd.bf16 %v213, %v253
      %v257 = vadd.bf16 %v214, %v253
      %v258 = vadd.bf16 %v215, %v253
      %v259 = vadd.bf16 %v216, %v253
      %v260 = vadd.bf16 %v217, %v253
      %v261 = vadd.bf16 %v218, %v253
      %v262 = vadd.bf16 %v219, %v253
      %v263 = vadd.bf16 %v220, %v253
      %v264 = vadd.bf16 %v221, %v253
      %v265 = vadd.bf16 %v222, %v253
      %v266 = vadd.bf16 %v223, %v253
      %v267 = vadd.bf16 %v224, %v253
      %v268 = vadd.bf16 %v225, %v253
      %v269 = vadd.bf16 %v226, %v253
      %v270 = vadd.bf16 %v227, %v253
      %v271 = vadd.bf16 %v228, %v253
      %v272 = vadd.bf16 %v229, %v253
      %v273 = vadd.bf16 %v230, %v253
      %v274 = vadd.bf16 %v231, %v253
      %v275 = vadd.bf16 %v232, %v253
      %v276 = vadd.bf16 %v233, %v253
      %v277 = vadd.bf16 %v234, %v253
      %v278 = vadd.bf16 %v235, %v253
      %v279 = vadd.bf16 %v236, %v253
      %v280 = vadd.bf16 %v237, %v253
      %v281 = vadd.bf16 %v238, %v253
      %v282 = vadd.bf16 %v239, %v253
      %v283 = vadd.bf16 %v240, %v253
      %v284 = vadd.bf16 %v241, %v253
      %v285 = vadd.bf16 %v242, %v253
      %v286 = vadd.bf16 %v243, %v253
      %vm287 = vcmask 60416
      %288 = vst.msk [vmem:[#allocation2] sm:$0xf] %vm287, 0
      %289 = vst.msk [vmem:[#allocation2 + $0x4] sm:$0xf] %vm287, 0
      %vm290 = vcmask 57344
      %291 = vst.msk [vmem:[#allocation2 + $0x8] sm:$0x1] %vm290, 0
      %s292 = scalar_lea.vmem [#allocation2], 204
      %293 = vst.msk [vmem:[%s292] sm:$0xf] %vm287, 0
      %294 = vst.msk [vmem:[%s292 + $0x4] sm:$0xf] %vm287, 0
      %295 = vst.msk [vmem:[%s292 + $0x8] sm:$0x1] %vm290, 0
      %vm296 = vcmask 57344
      %vm297 = vsmask.f32 256
      %vm298 = vmand %vm296, %vm297
      %v299 = vld [vmem:[#allocation2] sm:$0x1]
      %v300 = vsel %vm298, 0, %v299
      %301 = vst [vmem:[#allocation2] sm:$0x1] %v300
      %v302 = vld [vmem:[#allocation2 + $0xc] sm:$0x1]
      %v303 = vsel %vm298, 0, %v302
      %304 = vst [vmem:[#allocation2 + $0xc] sm:$0x1] %v303
      %v305 = vld [vmem:[#allocation2 + $0x18] sm:$0x1]
      %v306 = vsel %vm298, 0, %v305
      %307 = vst [vmem:[#allocation2 + $0x18] sm:$0x1] %v306
      %v308 = vld [vmem:[#allocation2 + $0x24] sm:$0x1]
      %v309 = vsel %vm298, 0, %v308
      %310 = vst [vmem:[#allocation2 + $0x24] sm:$0x1] %v309
      %v311 = vld [vmem:[#allocation2 + $0x30] sm:$0x1]
      %v312 = vsel %vm298, 0, %v311
      %313 = vst [vmem:[#allocation2 + $0x30] sm:$0x1] %v312
      %v314 = vld [vmem:[#allocation2 + $0x3c] sm:$0x1]
      %v315 = vsel %vm298, 0, %v314
      %316 = vst [vmem:[#allocation2 + $0x3c] sm:$0x1] %v315
      %v317 = vld [vmem:[#allocation2 + $0x48] sm:$0x1]
      %v318 = vsel %vm298, 0, %v317
      %319 = vst [vmem:[#allocation2 + $0x48] sm:$0x1] %v318
      %v320 = vld [vmem:[#allocation2 + $0x54] sm:$0x1]
      %v321 = vsel %vm298, 0, %v320
      %322 = vst [vmem:[#allocation2 + $0x54] sm:$0x1] %v321
      %v323 = vld [vmem:[#allocation2 + $0x60] sm:$0x1]
      %v324 = vsel %vm298, 0, %v323
      %325 = vst [vmem:[#allocation2 + $0x60] sm:$0x1] %v324
      %v326 = vld [vmem:[#allocation2 + $0x6c] sm:$0x1]
      %v327 = vsel %vm298, 0, %v326
      %328 = vst [vmem:[#allocation2 + $0x6c] sm:$0x1] %v327
      %v329 = vld [vmem:[#allocation2 + $0x78] sm:$0x1]
      %v330 = vsel %vm298, 0, %v329
      %331 = vst [vmem:[#allocation2 + $0x78] sm:$0x1] %v330
      %v332 = vld [vmem:[#allocation2 + $0x84] sm:$0x1]
      %v333 = vsel %vm298, 0, %v332
      %334 = vst [vmem:[#allocation2 + $0x84] sm:$0x1] %v333
      %v335 = vld [vmem:[#allocation2 + $0x90] sm:$0x1]
      %v336 = vsel %vm298, 0, %v335
      %337 = vst [vmem:[#allocation2 + $0x90] sm:$0x1] %v336
      %v338 = vld [vmem:[#allocation2 + $0x9c] sm:$0x1]
      %v339 = vsel %vm298, 0, %v338
      %340 = vst [vmem:[#allocation2 + $0x9c] sm:$0x1] %v339
      %v341 = vld [vmem:[#allocation2 + $0xa8] sm:$0x1]
      %v342 = vsel %vm298, 0, %v341
      %343 = vst [vmem:[#allocation2 + $0xa8] sm:$0x1] %v342
      %v344 = vld [vmem:[#allocation2 + $0xb4] sm:$0x1]
      %v345 = vsel %vm298, 0, %v344
      %346 = vst [vmem:[#allocation2 + $0xb4] sm:$0x1] %v345
      %v347 = vld [vmem:[#allocation2 + $0xc0] sm:$0x1]
      %v348 = vsel %vm298, 0, %v347
      %349 = vst [vmem:[#allocation2 + $0xc0] sm:$0x1] %v348
      %v350 = vld [vmem:[#allocation2 + $0xcc] sm:$0x1]
      %v351 = vsel %vm298, 0, %v350
      %352 = vst [vmem:[#allocation2 + $0xcc] sm:$0x1] %v351
      %vm353 = vsmask.f32 7938
      %vm354 = vmand %vm296, %vm353
      %v355 = vld [vmem:[#allocation2 + $0x8] sm:$0x1]
      %v356 = vsel %vm354, 0, %v355
      %357 = vst [vmem:[#allocation2 + $0x8] sm:$0x1] %v356
      %v358 = vld [vmem:[#allocation2 + $0x14] sm:$0x1]
      %v359 = vsel %vm354, 0, %v358
      %360 = vst [vmem:[#allocation2 + $0x14] sm:$0x1] %v359
      %v361 = vld [vmem:[#allocation2 + $0x20] sm:$0x1]
      %v362 = vsel %vm354, 0, %v361
      %363 = vst [vmem:[#allocation2 + $0x20] sm:$0x1] %v362
      %v364 = vld [vmem:[#allocation2 + $0x2c] sm:$0x1]
      %v365 = vsel %vm354, 0, %v364
      %366 = vst [vmem:[#allocation2 + $0x2c] sm:$0x1] %v365
      %v367 = vld [vmem:[#allocation2 + $0x38] sm:$0x1]
      %v368 = vsel %vm354, 0, %v367
      %369 = vst [vmem:[#allocation2 + $0x38] sm:$0x1] %v368
      %v370 = vld [vmem:[#allocation2 + $0x44] sm:$0x1]
      %v371 = vsel %vm354, 0, %v370
      %372 = vst [vmem:[#allocation2 + $0x44] sm:$0x1] %v371
      %v373 = vld [vmem:[#allocation2 + $0x50] sm:$0x1]
      %v374 = vsel %vm354, 0, %v373
      %375 = vst [vmem:[#allocation2 + $0x50] sm:$0x1] %v374
      %v376 = vld [vmem:[#allocation2 + $0x5c] sm:$0x1]
      %v377 = vsel %vm354, 0, %v376
      %378 = vst [vmem:[#allocation2 + $0x5c] sm:$0x1] %v377
      %v379 = vld [vmem:[#allocation2 + $0x68] sm:$0x1]
      %v380 = vsel %vm354, 0, %v379
      %381 = vst [vmem:[#allocation2 + $0x68] sm:$0x1] %v380
      %v382 = vld [vmem:[#allocation2 + $0x74] sm:$0x1]
      %v383 = vsel %vm354, 0, %v382
      %384 = vst [vmem:[#allocation2 + $0x74] sm:$0x1] %v383
      %v385 = vld [vmem:[#allocation2 + $0x80] sm:$0x1]
      %v386 = vsel %vm354, 0, %v385
      %387 = vst [vmem:[#allocation2 + $0x80] sm:$0x1] %v386
      %v388 = vld [vmem:[#allocation2 + $0x8c] sm:$0x1]
      %v389 = vsel %vm354, 0, %v388
      %390 = vst [vmem:[#allocation2 + $0x8c] sm:$0x1] %v389
      %v391 = vld [vmem:[#allocation2 + $0x98] sm:$0x1]
      %v392 = vsel %vm354, 0, %v391
      %393 = vst [vmem:[#allocation2 + $0x98] sm:$0x1] %v392
      %v394 = vld [vmem:[#allocation2 + $0xa4] sm:$0x1]
      %v395 = vsel %vm354, 0, %v394
      %396 = vst [vmem:[#allocation2 + $0xa4] sm:$0x1] %v395
      %v397 = vld [vmem:[#allocation2 + $0xb0] sm:$0x1]
      %v398 = vsel %vm354, 0, %v397
      %399 = vst [vmem:[#allocation2 + $0xb0] sm:$0x1] %v398
      %v400 = vld [vmem:[#allocation2 + $0xbc] sm:$0x1]
      %v401 = vsel %vm354, 0, %v400
      %402 = vst [vmem:[#allocation2 + $0xbc] sm:$0x1] %v401
      %v403 = vld [vmem:[#allocation2 + $0xc8] sm:$0x1]
      %v404 = vsel %vm354, 0, %v403
      %405 = vst [vmem:[#allocation2 + $0xc8] sm:$0x1] %v404
      %v406 = vld [vmem:[#allocation2 + $0xd4] sm:$0x1]
      %v407 = vsel %vm354, 0, %v406
      %408 = vst [vmem:[#allocation2 + $0xd4] sm:$0x1] %v407
      %vm409 = vsmask.f32 4368
      %vm410 = vmor %vm297, %vm409
      %v412 = vshrl.u32 %v255, 16
      %v414 = vrot.slane %v412, 7
      %v415 = vshll.u32 %v255, 16
      %v417 = vor.u32 %v414, %v415
      %v418 = vrot.slane %v414, 4
      %v420 = vshrl.u32 %v256, 16
      %v422 = vrot.slane %v420, 7
      %v423 = vshll.u32 %v256, 16
      %v425 = vor.u32 %v422, %v423
      %v426 = vsel %vm410, %v418, %v425
      %v427 = vrot.slane %v422, 4
      %v429 = vshrl.u32 %v257, 16
      %v431 = vrot.slane %v429, 7
      %v432 = vshll.u32 %v257, 16
      %v434 = vor.u32 %v431, %v432
      %v435 = vrot.slane %v431, 4
      %v437 = vshrl.u32 %v258, 16
      %v439 = vrot.slane %v437, 7
      %v440 = vshll.u32 %v258, 16
      %v442 = vor.u32 %v439, %v440
      %v443 = vsel %vm410, %v435, %v442
      %v444 = vrot.slane %v439, 4
      %v446 = vshrl.u32 %v259, 16
      %v448 = vrot.slane %v446, 7
      %v449 = vshll.u32 %v259, 16
      %v451 = vor.u32 %v448, %v449
      %v452 = vrot.slane %v448, 4
      %v454 = vshrl.u32 %v260, 16
      %v456 = vrot.slane %v454, 7
      %v457 = vshll.u32 %v260, 16
      %v459 = vor.u32 %v456, %v457
      %v460 = vsel %vm410, %v452, %v459
      %v461 = vrot.slane %v456, 4
      %v463 = vshrl.u32 %v261, 16
      %v465 = vrot.slane %v463, 7
      %v466 = vshll.u32 %v261, 16
      %v468 = vor.u32 %v465, %v466
      %v469 = vrot.slane %v465, 4
      %v471 = vshrl.u32 %v262, 16
      %v473 = vrot.slane %v471, 7
      %v474 = vshll.u32 %v262, 16
      %v476 = vor.u32 %v473, %v474
      %v477 = vsel %vm410, %v469, %v476
      %v478 = vrot.slane %v473, 4
      %v480 = vshrl.u32 %v263, 16
      %v482 = vrot.slane %v480, 7
      %v483 = vshll.u32 %v263, 16
      %v485 = vor.u32 %v482, %v483
      %v486 = vrot.slane %v482, 4
      %v488 = vshrl.u32 %v264, 16
      %v490 = vrot.slane %v488, 7
      %v491 = vshll.u32 %v264, 16
      %v493 = vor.u32 %v490, %v491
      %v494 = vsel %vm410, %v486, %v493
      %v495 = vrot.slane %v490, 4
      %v497 = vshrl.u32 %v265, 16
      %v499 = vrot.slane %v497, 7
      %v500 = vshll.u32 %v265, 16
      %v502 = vor.u32 %v499, %v500
      %v503 = vrot.slane %v499, 4
      %v505 = vshrl.u32 %v266, 16
      %v507 = vrot.slane %v505, 7
      %v508 = vshll.u32 %v266, 16
      %v510 = vor.u32 %v507, %v508
      %v511 = vsel %vm410, %v503, %v510
      %v512 = vrot.slane %v507, 4
      %v514 = vshrl.u32 %v267, 16
      %v516 = vrot.slane %v514, 7
      %v517 = vshll.u32 %v267, 16
      %v519 = vor.u32 %v516, %v517
      %v520 = vrot.slane %v516, 4
      %v522 = vshrl.u32 %v268, 16
      %v524 = vrot.slane %v522, 7
      %v525 = vshll.u32 %v268, 16
      %v527 = vor.u32 %v524, %v525
      %v528 = vsel %vm410, %v520, %v527
      %v529 = vrot.slane %v524, 4
      %v531 = vshrl.u32 %v269, 16
      %v533 = vrot.slane %v531, 7
      %v534 = vshll.u32 %v269, 16
      %v536 = vor.u32 %v533, %v534
      %v537 = vrot.slane %v533, 4
      %v539 = vshrl.u32 %v270, 16
      %v541 = vrot.slane %v539, 7
      %v542 = vshll.u32 %v270, 16
      %v544 = vor.u32 %v541, %v542
      %v545 = vsel %vm410, %v537, %v544
      %v546 = vrot.slane %v541, 4
      %v548 = vshrl.u32 %v271, 16
      %v550 = vrot.slane %v548, 7
      %v551 = vshll.u32 %v271, 16
      %v553 = vor.u32 %v550, %v551
      %v554 = vrot.slane %v550, 4
      %v556 = vshrl.u32 %v272, 16
      %v558 = vrot.slane %v556, 7
      %v559 = vshll.u32 %v272, 16
      %v561 = vor.u32 %v558, %v559
      %v562 = vsel %vm410, %v554, %v561
      %v563 = vrot.slane %v558, 4
      %v565 = vshrl.u32 %v273, 16
      %v567 = vrot.slane %v565, 7
      %v568 = vshll.u32 %v273, 16
      %v570 = vor.u32 %v567, %v568
      %v571 = vrot.slane %v567, 4
      %v573 = vshrl.u32 %v274, 16
      %v575 = vrot.slane %v573, 7
      %v576 = vshll.u32 %v274, 16
      %v578 = vor.u32 %v575, %v576
      %v579 = vsel %vm410, %v571, %v578
      %v580 = vrot.slane %v575, 4
      %v582 = vshrl.u32 %v275, 16
      %v584 = vrot.slane %v582, 7
      %v585 = vshll.u32 %v275, 16
      %v587 = vor.u32 %v584, %v585
      %v588 = vrot.slane %v584, 4
      %v590 = vshrl.u32 %v276, 16
      %v592 = vrot.slane %v590, 7
      %v593 = vshll.u32 %v276, 16
      %v595 = vor.u32 %v592, %v593
      %v596 = vsel %vm410, %v588, %v595
      %v597 = vrot.slane %v592, 4
      %v599 = vshrl.u32 %v277, 16
      %v601 = vrot.slane %v599, 7
      %v602 = vshll.u32 %v277, 16
      %v604 = vor.u32 %v601, %v602
      %v605 = vrot.slane %v601, 4
      %v607 = vshrl.u32 %v278, 16
      %v609 = vrot.slane %v607, 7
      %v610 = vshll.u32 %v278, 16
      %v612 = vor.u32 %v609, %v610
      %v613 = vsel %vm410, %v605, %v612
      %v614 = vrot.slane %v609, 4
      %v616 = vshrl.u32 %v279, 16
      %v618 = vrot.slane %v616, 7
      %v619 = vshll.u32 %v279, 16
      %v621 = vor.u32 %v618, %v619
      %v622 = vrot.slane %v618, 4
      %v624 = vshrl.u32 %v280, 16
      %v626 = vrot.slane %v624, 7
      %v627 = vshll.u32 %v280, 16
      %v629 = vor.u32 %v626, %v627
      %v630 = vsel %vm410, %v622, %v629
      %v631 = vrot.slane %v626, 4
      %v633 = vshrl.u32 %v281, 16
      %v635 = vrot.slane %v633, 7
      %v636 = vshll.u32 %v281, 16
      %v638 = vor.u32 %v635, %v636
      %v639 = vrot.slane %v635, 4
      %v641 = vshrl.u32 %v282, 16
      %v643 = vrot.slane %v641, 7
      %v644 = vshll.u32 %v282, 16
      %v646 = vor.u32 %v643, %v644
      %v647 = vsel %vm410, %v639, %v646
      %v648 = vrot.slane %v643, 4
      %v650 = vshrl.u32 %v283, 16
      %v652 = vrot.slane %v650, 7
      %v653 = vshll.u32 %v283, 16
      %v655 = vor.u32 %v652, %v653
      %v656 = vrot.slane %v652, 4
      %v658 = vshrl.u32 %v284, 16
      %v660 = vrot.slane %v658, 7
      %v661 = vshll.u32 %v284, 16
      %v663 = vor.u32 %v660, %v661
      %v664 = vsel %vm410, %v656, %v663
      %v665 = vrot.slane %v660, 4
      %v667 = vshrl.u32 %v285, 16
      %v669 = vrot.slane %v667, 7
      %v670 = vshll.u32 %v285, 16
      %v672 = vor.u32 %v669, %v670
      %v673 = vrot.slane %v669, 4
      %v675 = vshrl.u32 %v286, 16
      %v677 = vrot.slane %v675, 7
      %v678 = vshll.u32 %v286, 16
      %v680 = vor.u32 %v677, %v678
      %v681 = vsel %vm410, %v673, %v680
      %v682 = vrot.slane %v677, 4
      %s731 = scalar_lea.vmem [#allocation2], 12
      %vm732 = vcmask 60416
      %vm733 = vmand %vm732, %vm353
      %v734 = vld [vmem:[%s731] sm:$0xf]
      %v735 = vsel %vm733, %v417, %v734
      %736 = vst [vmem:[%s731] sm:$0xf] %v735
      %737 = vst.msk [vmem:[%s731 + $0x4] sm:$0xf] %vm287, %v426
      %v738 = vld [vmem:[%s731 + $0x8] sm:$0x1]
      %v739 = vsel %vm298, %v427, %v738
      %740 = vst [vmem:[%s731 + $0x8] sm:$0x1] %v739
      %v741 = vld [vmem:[%s731 + $0xc] sm:$0xf]
      %v742 = vsel %vm733, %v434, %v741
      %743 = vst [vmem:[%s731 + $0xc] sm:$0xf] %v742
      %744 = vst.msk [vmem:[%s731 + $0x10] sm:$0xf] %vm287, %v443
      %v745 = vld [vmem:[%s731 + $0x14] sm:$0x1]
      %v746 = vsel %vm298, %v444, %v745
      %747 = vst [vmem:[%s731 + $0x14] sm:$0x1] %v746
      %v748 = vld [vmem:[%s731 + $0x18] sm:$0xf]
      %v749 = vsel %vm733, %v451, %v748
      %750 = vst [vmem:[%s731 + $0x18] sm:$0xf] %v749
      %751 = vst.msk [vmem:[%s731 + $0x1c] sm:$0xf] %vm287, %v460
      %v752 = vld [vmem:[%s731 + $0x20] sm:$0x1]
      %v753 = vsel %vm298, %v461, %v752
      %754 = vst [vmem:[%s731 + $0x20] sm:$0x1] %v753
      %v755 = vld [vmem:[%s731 + $0x24] sm:$0xf]
      %v756 = vsel %vm733, %v468, %v755
      %757 = vst [vmem:[%s731 + $0x24] sm:$0xf] %v756
      %758 = vst.msk [vmem:[%s731 + $0x28] sm:$0xf] %vm287, %v477
      %v759 = vld [vmem:[%s731 + $0x2c] sm:$0x1]
      %v760 = vsel %vm298, %v478, %v759
      %761 = vst [vmem:[%s731 + $0x2c] sm:$0x1] %v760
      %v762 = vld [vmem:[%s731 + $0x30] sm:$0xf]
      %v763 = vsel %vm733, %v485, %v762
      %764 = vst [vmem:[%s731 + $0x30] sm:$0xf] %v763
      %765 = vst.msk [vmem:[%s731 + $0x34] sm:$0xf] %vm287, %v494
      %v766 = vld [vmem:[%s731 + $0x38] sm:$0x1]
      %v767 = vsel %vm298, %v495, %v766
      %768 = vst [vmem:[%s731 + $0x38] sm:$0x1] %v767
      %v769 = vld [vmem:[%s731 + $0x3c] sm:$0xf]
      %v770 = vsel %vm733, %v502, %v769
      %771 = vst [vmem:[%s731 + $0x3c] sm:$0xf] %v770
      %772 = vst.msk [vmem:[%s731 + $0x40] sm:$0xf] %vm287, %v511
      %v773 = vld [vmem:[%s731 + $0x44] sm:$0x1]
      %v774 = vsel %vm298, %v512, %v773
      %775 = vst [vmem:[%s731 + $0x44] sm:$0x1] %v774
      %v776 = vld [vmem:[%s731 + $0x48] sm:$0xf]
      %v777 = vsel %vm733, %v519, %v776
      %778 = vst [vmem:[%s731 + $0x48] sm:$0xf] %v777
      %779 = vst.msk [vmem:[%s731 + $0x4c] sm:$0xf] %vm287, %v528
      %v780 = vld [vmem:[%s731 + $0x50] sm:$0x1]
      %v781 = vsel %vm298, %v529, %v780
      %782 = vst [vmem:[%s731 + $0x50] sm:$0x1] %v781
      %v783 = vld [vmem:[%s731 + $0x54] sm:$0xf]
      %v784 = vsel %vm733, %v536, %v783
      %785 = vst [vmem:[%s731 + $0x54] sm:$0xf] %v784
      %786 = vst.msk [vmem:[%s731 + $0x58] sm:$0xf] %vm287, %v545
      %v787 = vld [vmem:[%s731 + $0x5c] sm:$0x1]
      %v788 = vsel %vm298, %v546, %v787
      %789 = vst [vmem:[%s731 + $0x5c] sm:$0x1] %v788
      %v790 = vld [vmem:[%s731 + $0x60] sm:$0xf]
      %v791 = vsel %vm733, %v553, %v790
      %792 = vst [vmem:[%s731 + $0x60] sm:$0xf] %v791
      %793 = vst.msk [vmem:[%s731 + $0x64] sm:$0xf] %vm287, %v562
      %v794 = vld [vmem:[%s731 + $0x68] sm:$0x1]
      %v795 = vsel %vm298, %v563, %v794
      %796 = vst [vmem:[%s731 + $0x68] sm:$0x1] %v795
      %v797 = vld [vmem:[%s731 + $0x6c] sm:$0xf]
      %v798 = vsel %vm733, %v570, %v797
      %799 = vst [vmem:[%s731 + $0x6c] sm:$0xf] %v798
      %800 = vst.msk [vmem:[%s731 + $0x70] sm:$0xf] %vm287, %v579
      %v801 = vld [vmem:[%s731 + $0x74] sm:$0x1]
      %v802 = vsel %vm298, %v580, %v801
      %803 = vst [vmem:[%s731 + $0x74] sm:$0x1] %v802
      %v804 = vld [vmem:[%s731 + $0x78] sm:$0xf]
      %v805 = vsel %vm733, %v587, %v804
      %806 = vst [vmem:[%s731 + $0x78] sm:$0xf] %v805
      %807 = vst.msk [vmem:[%s731 + $0x7c] sm:$0xf] %vm287, %v596
      %v808 = vld [vmem:[%s731 + $0x80] sm:$0x1]
      %v809 = vsel %vm298, %v597, %v808
      %810 = vst [vmem:[%s731 + $0x80] sm:$0x1] %v809
      %v811 = vld [vmem:[%s731 + $0x84] sm:$0xf]
      %v812 = vsel %vm733, %v604, %v811
      %813 = vst [vmem:[%s731 + $0x84] sm:$0xf] %v812
      %814 = vst.msk [vmem:[%s731 + $0x88] sm:$0xf] %vm287, %v613
      %v815 = vld [vmem:[%s731 + $0x8c] sm:$0x1]
      %v816 = vsel %vm298, %v614, %v815
      %817 = vst [vmem:[%s731 + $0x8c] sm:$0x1] %v816
      %v818 = vld [vmem:[%s731 + $0x90] sm:$0xf]
      %v819 = vsel %vm733, %v621, %v818
      %820 = vst [vmem:[%s731 + $0x90] sm:$0xf] %v819
      %821 = vst.msk [vmem:[%s731 + $0x94] sm:$0xf] %vm287, %v630
      %v822 = vld [vmem:[%s731 + $0x98] sm:$0x1]
      %v823 = vsel %vm298, %v631, %v822
      %824 = vst [vmem:[%s731 + $0x98] sm:$0x1] %v823
      %v825 = vld [vmem:[%s731 + $0x9c] sm:$0xf]
      %v826 = vsel %vm733, %v638, %v825
      %827 = vst [vmem:[%s731 + $0x9c] sm:$0xf] %v826
      %828 = vst.msk [vmem:[%s731 + $0xa0] sm:$0xf] %vm287, %v647
      %v829 = vld [vmem:[%s731 + $0xa4] sm:$0x1]
      %v830 = vsel %vm298, %v648, %v829
      %831 = vst [vmem:[%s731 + $0xa4] sm:$0x1] %v830
      %v832 = vld [vmem:[%s731 + $0xa8] sm:$0xf]
      %v833 = vsel %vm733, %v655, %v832
      %834 = vst [vmem:[%s731 + $0xa8] sm:$0xf] %v833
      %835 = vst.msk [vmem:[%s731 + $0xac] sm:$0xf] %vm287, %v664
      %v836 = vld [vmem:[%s731 + $0xb0] sm:$0x1]
      %v837 = vsel %vm298, %v665, %v836
      %838 = vst [vmem:[%s731 + $0xb0] sm:$0x1] %v837
      %v839 = vld [vmem:[%s731 + $0xb4] sm:$0xf]
      %v840 = vsel %vm733, %v672, %v839
      %841 = vst [vmem:[%s731 + $0xb4] sm:$0xf] %v840
      %842 = vst.msk [vmem:[%s731 + $0xb8] sm:$0xf] %vm287, %v681
      %v843 = vld [vmem:[%s731 + $0xbc] sm:$0x1]
      %v844 = vsel %vm298, %v682, %v843
      %845 = vst [vmem:[%s731 + $0xbc] sm:$0x1] %v844
      %vm846 = vcmask 58368
      %847 = vst.msk [vmem:[#allocation4] sm:$0x3] %vm846, 0.0
      %v848 = vld [vmem:[#allocation2] sm:$0xf]
      %v849 = vld [vmem:[#allocation2 + $0x4] sm:$0xf]
      %v850 = vld [vmem:[#allocation2 + $0xc] sm:$0xf]
      %v851 = vld [vmem:[#allocation2 + $0x10] sm:$0xf]
      %v852 = vld [vmem:[#allocation2 + $0x18] sm:$0xf]
      %v853 = vld [vmem:[#allocation2 + $0x1c] sm:$0xf]
      %v854 = vld [vmem:[#allocation2 + $0x24] sm:$0xf]
      %v855 = vld [vmem:[#allocation2 + $0x28] sm:$0xf]
      %v856 = vld [vmem:[#allocation2 + $0x30] sm:$0xf]
      %v857 = vld [vmem:[#allocation2 + $0x34] sm:$0xf]
      %v858 = vld [vmem:[#allocation2 + $0x3c] sm:$0xf]
      %v859 = vld [vmem:[#allocation2 + $0x40] sm:$0xf]
      %v860 = vld [vmem:[#allocation2 + $0x48] sm:$0xf]
      %v861 = vld [vmem:[#allocation2 + $0x4c] sm:$0xf]
      %v862 = vld [vmem:[#allocation2 + $0x54] sm:$0xf]
      %v863 = vld [vmem:[#allocation2 + $0x58] sm:$0xf]
      %v864 = vld [vmem:[#allocation2 + $0x60] sm:$0xf]
      %v865 = vld [vmem:[#allocation2 + $0x64] sm:$0xf]
      %v866 = vld [vmem:[#allocation2 + $0x6c] sm:$0xf]
      %v867 = vld [vmem:[#allocation2 + $0x70] sm:$0xf]
      %v868 = vld [vmem:[#allocation2 + $0x78] sm:$0xf]
      %v869 = vld [vmem:[#allocation2 + $0x7c] sm:$0xf]
      %v870 = vld [vmem:[#allocation2 + $0x84] sm:$0xf]
      %v871 = vld [vmem:[#allocation2 + $0x88] sm:$0xf]
      %v872 = vld [vmem:[#allocation2 + $0x90] sm:$0xf]
      %v873 = vld [vmem:[#allocation2 + $0x94] sm:$0xf]
      %v874 = vld [vmem:[#allocation2 + $0x9c] sm:$0xf]
      %v875 = vld [vmem:[#allocation2 + $0xa0] sm:$0xf]
      %v876 = vld [vmem:[#allocation2 + $0xa8] sm:$0xf]
      %v877 = vld [vmem:[#allocation2 + $0xac] sm:$0xf]
      %v878 = vld [vmem:[#allocation2 + $0xb4] sm:$0xf]
      %v879 = vld [vmem:[#allocation2 + $0xb8] sm:$0xf]
      %v912 = vunpack.c.l.b16 %v848
      %v913 = vunpack.c.l.b16 %v849
      %v914 = vunpack.c.l.b16 %v850
      %v915 = vunpack.c.l.b16 %v851
      %v916 = vunpack.c.l.b16 %v852
      %v917 = vunpack.c.l.b16 %v853
      %v918 = vunpack.c.l.b16 %v854
      %v919 = vunpack.c.l.b16 %v855
      %v920 = vunpack.c.l.b16 %v856
      %v921 = vunpack.c.l.b16 %v857
      %v922 = vunpack.c.l.b16 %v858
      %v923 = vunpack.c.l.b16 %v859
      %v924 = vunpack.c.l.b16 %v860
      %v925 = vunpack.c.l.b16 %v861
      %v926 = vunpack.c.l.b16 %v862
      %v927 = vunpack.c.l.b16 %v863
      %v928 = vunpack.c.l.b16 %v864
      %v929 = vunpack.c.l.b16 %v865
      %v930 = vunpack.c.l.b16 %v866
      %v931 = vunpack.c.l.b16 %v867
      %v932 = vunpack.c.l.b16 %v868
      %v933 = vunpack.c.l.b16 %v869
      %v934 = vunpack.c.l.b16 %v870
      %v935 = vunpack.c.l.b16 %v871
      %v936 = vunpack.c.l.b16 %v872
      %v937 = vunpack.c.l.b16 %v873
      %v938 = vunpack.c.l.b16 %v874
      %v939 = vunpack.c.l.b16 %v875
      %v940 = vunpack.c.l.b16 %v876
      %v941 = vunpack.c.l.b16 %v877
      %v942 = vunpack.c.l.b16 %v878
      %v943 = vunpack.c.l.b16 %v879
      %v944 = vpack.c.b16 %v913, %v912
      %v945 = vpack.c.b16 %v915, %v914
      %v946 = vpack.c.b16 %v917, %v916
      %v947 = vpack.c.b16 %v919, %v918
      %v948 = vpack.c.b16 %v921, %v920
      %v949 = vpack.c.b16 %v923, %v922
      %v950 = vpack.c.b16 %v925, %v924
      %v951 = vpack.c.b16 %v927, %v926
      %v952 = vpack.c.b16 %v929, %v928
      %v953 = vpack.c.b16 %v931, %v930
      %v954 = vpack.c.b16 %v933, %v932
      %v955 = vpack.c.b16 %v935, %v934
      %v956 = vpack.c.b16 %v937, %v936
      %v957 = vpack.c.b16 %v939, %v938
      %v958 = vpack.c.b16 %v941, %v940
      %v959 = vpack.c.b16 %v943, %v942
      %vm976 = vcmask 64512
      %977 = vst.msk [vmem:[#allocation3] sm:$0xff] %vm976, %v944
      %978 = vst.msk [vmem:[#allocation3 + $0x8] sm:$0xff] %vm976, %v945
      %979 = vst.msk [vmem:[#allocation3 + $0x10] sm:$0xff] %vm976, %v946
      %980 = vst.msk [vmem:[#allocation3 + $0x18] sm:$0xff] %vm976, %v947
      %981 = vst.msk [vmem:[#allocation3 + $0x20] sm:$0xff] %vm976, %v948
      %982 = vst.msk [vmem:[#allocation3 + $0x28] sm:$0xff] %vm976, %v949
      %983 = vst.msk [vmem:[#allocation3 + $0x30] sm:$0xff] %vm976, %v950
      %984 = vst.msk [vmem:[#allocation3 + $0x38] sm:$0xff] %vm976, %v951
      %985 = vst.msk [vmem:[#allocation3 + $0x40] sm:$0xff] %vm976, %v952
      %986 = vst.msk [vmem:[#allocation3 + $0x48] sm:$0xff] %vm976, %v953
      %987 = vst.msk [vmem:[#allocation3 + $0x50] sm:$0xff] %vm976, %v954
      %988 = vst.msk [vmem:[#allocation3 + $0x58] sm:$0xff] %vm976, %v955
      %989 = vst.msk [vmem:[#allocation3 + $0x60] sm:$0xff] %vm976, %v956
      %990 = vst.msk [vmem:[#allocation3 + $0x68] sm:$0xff] %vm976, %v957
      %991 = vst.msk [vmem:[#allocation3 + $0x70] sm:$0xff] %vm976, %v958
      %992 = vst.msk [vmem:[#allocation3 + $0x78] sm:$0xff] %vm976, %v959
      %v993 = vld [vmem:[#allocation2] sm:$0xf]
      %v994 = vld [vmem:[#allocation2 + $0x4] sm:$0xf]
      %v995 = vld [vmem:[#allocation2 + $0x8] sm:$0x1]
      %v996 = vld [vmem:[#allocation2 + $0xc] sm:$0xf]
      %v997 = vld [vmem:[#allocation2 + $0x10] sm:$0xf]
      %v998 = vld [vmem:[#allocation2 + $0x14] sm:$0x1]
      %v999 = vld [vmem:[#allocation2 + $0x18] sm:$0xf]
      %v1000 = vld [vmem:[#allocation2 + $0x1c] sm:$0xf]
      %v1001 = vld [vmem:[#allocation2 + $0x20] sm:$0x1]
      %v1002 = vld [vmem:[#allocation2 + $0x24] sm:$0xf]
      %v1003 = vld [vmem:[#allocation2 + $0x28] sm:$0xf]
      %v1004 = vld [vmem:[#allocation2 + $0x2c] sm:$0x1]
      %v1005 = vld [vmem:[#allocation2 + $0x30] sm:$0xf]
      %v1006 = vld [vmem:[#allocation2 + $0x34] sm:$0xf]
      %v1007 = vld [vmem:[#allocation2 + $0x38] sm:$0x1]
      %v1008 = vld [vmem:[#allocation2 + $0x3c] sm:$0xf]
      %v1009 = vld [vmem:[#allocation2 + $0x40] sm:$0xf]
      %v1010 = vld [vmem:[#allocation2 + $0x44] sm:$0x1]
      %v1011 = vld [vmem:[#allocation2 + $0x48] sm:$0xf]
      %v1012 = vld [vmem:[#allocation2 + $0x4c] sm:$0xf]
      %v1013 = vld [vmem:[#allocation2 + $0x50] sm:$0x1]
      %v1014 = vld [vmem:[#allocation2 + $0x54] sm:$0xf]
      %v1015 = vld [vmem:[#allocation2 + $0x58] sm:$0xf]
      %v1016 = vld [vmem:[#allocation2 + $0x5c] sm:$0x1]
      %v1017 = vld [vmem:[#allocation2 + $0x60] sm:$0xf]
      %v1018 = vld [vmem:[#allocation2 + $0x64] sm:$0xf]
      %v1019 = vld [vmem:[#allocation2 + $0x68] sm:$0x1]
      %v1020 = vld [vmem:[#allocation2 + $0x6c] sm:$0xf]
      %v1021 = vld [vmem:[#allocation2 + $0x70] sm:$0xf]
      %v1022 = vld [vmem:[#allocation2 + $0x74] sm:$0x1]
      %v1023 = vld [vmem:[#allocation2 + $0x78] sm:$0xf]
      %v1024 = vld [vmem:[#allocation2 + $0x7c] sm:$0xf]
      %v1025 = vld [vmem:[#allocation2 + $0x80] sm:$0x1]
      %v1026 = vld [vmem:[#allocation2 + $0x84] sm:$0xf]
      %v1027 = vld [vmem:[#allocation2 + $0x88] sm:$0xf]
      %v1028 = vld [vmem:[#allocation2 + $0x8c] sm:$0x1]
      %v1029 = vld [vmem:[#allocation2 + $0x90] sm:$0xf]
      %v1030 = vld [vmem:[#allocation2 + $0x94] sm:$0xf]
      %v1031 = vld [vmem:[#allocation2 + $0x98] sm:$0x1]
      %v1032 = vld [vmem:[#allocation2 + $0x9c] sm:$0xf]
      %v1033 = vld [vmem:[#allocation2 + $0xa0] sm:$0xf]
      %v1034 = vld [vmem:[#allocation2 + $0xa4] sm:$0x1]
      %v1035 = vld [vmem:[#allocation2 + $0xa8] sm:$0xf]
      %v1036 = vld [vmem:[#allocation2 + $0xac] sm:$0xf]
      %v1037 = vld [vmem:[#allocation2 + $0xb0] sm:$0x1]
      %v1038 = vld [vmem:[#allocation2 + $0xb4] sm:$0xf]
      %v1039 = vld [vmem:[#allocation2 + $0xb8] sm:$0xf]
      %v1040 = vld [vmem:[#allocation2 + $0xbc] sm:$0x1]
      %v1089 = vunpack.c.l.b16 %v993
      %v1090 = vunpack.c.l.b16 %v994
      %v1091 = vunpack.c.l.b16 %v995
      %v1092 = vunpack.c.l.b16 %v996
      %v1093 = vunpack.c.l.b16 %v997
      %v1094 = vunpack.c.l.b16 %v998
      %v1095 = vunpack.c.l.b16 %v999
      %v1096 = vunpack.c.l.b16 %v1000
      %v1097 = vunpack.c.l.b16 %v1001
      %v1098 = vunpack.c.l.b16 %v1002
      %v1099 = vunpack.c.l.b16 %v1003
      %v1100 = vunpack.c.l.b16 %v1004
      %v1101 = vunpack.c.l.b16 %v1005
      %v1102 = vunpack.c.l.b16 %v1006
      %v1103 = vunpack.c.l.b16 %v1007
      %v1104 = vunpack.c.l.b16 %v1008
      %v1105 = vunpack.c.l.b16 %v1009
      %v1106 = vunpack.c.l.b16 %v1010
      %v1107 = vunpack.c.l.b16 %v1011
      %v1108 = vunpack.c.l.b16 %v1012
      %v1109 = vunpack.c.l.b16 %v1013
      %v1110 = vunpack.c.l.b16 %v1014
      %v1111 = vunpack.c.l.b16 %v1015
      %v1112 = vunpack.c.l.b16 %v1016
      %v1113 = vunpack.c.l.b16 %v1017
      %v1114 = vunpack.c.l.b16 %v1018
      %v1115 = vunpack.c.l.b16 %v1019
      %v1116 = vunpack.c.l.b16 %v1020
      %v1117 = vunpack.c.l.b16 %v1021
      %v1118 = vunpack.c.l.b16 %v1022
      %v1119 = vunpack.c.l.b16 %v1023
      %v1120 = vunpack.c.l.b16 %v1024
      %v1121 = vunpack.c.l.b16 %v1025
      %v1122 = vunpack.c.l.b16 %v1026
      %v1123 = vunpack.c.l.b16 %v1027
      %v1124 = vunpack.c.l.b16 %v1028
      %v1125 = vunpack.c.l.b16 %v1029
      %v1126 = vunpack.c.l.b16 %v1030
      %v1127 = vunpack.c.l.b16 %v1031
      %v1128 = vunpack.c.l.b16 %v1032
      %v1129 = vunpack.c.l.b16 %v1033
      %v1130 = vunpack.c.l.b16 %v1034
      %v1131 = vunpack.c.l.b16 %v1035
      %v1132 = vunpack.c.l.b16 %v1036
      %v1133 = vunpack.c.l.b16 %v1037
      %v1134 = vunpack.c.l.b16 %v1038
      %v1135 = vunpack.c.l.b16 %v1039
      %v1136 = vunpack.c.l.b16 %v1040
      %v1137 = vpack.c.b16 %v1090, %v1089
      %v1138 = vpack.c.b16 %v1091, %v1091
      %v1139 = vpack.c.b16 %v1093, %v1092
      %v1140 = vpack.c.b16 %v1094, %v1094
      %v1141 = vpack.c.b16 %v1096, %v1095
      %v1142 = vpack.c.b16 %v1097, %v1097
      %v1143 = vpack.c.b16 %v1099, %v1098
      %v1144 = vpack.c.b16 %v1100, %v1100
      %v1145 = vpack.c.b16 %v1102, %v1101
      %v1146 = vpack.c.b16 %v1103, %v1103
      %v1147 = vpack.c.b16 %v1105, %v1104
      %v1148 = vpack.c.b16 %v1106, %v1106
      %v1149 = vpack.c.b16 %v1108, %v1107
      %v1150 = vpack.c.b16 %v1109, %v1109
      %v1151 = vpack.c.b16 %v1111, %v1110
      %v1152 = vpack.c.b16 %v1112, %v1112
      %v1153 = vpack.c.b16 %v1114, %v1113
      %v1154 = vpack.c.b16 %v1115, %v1115
      %v1155 = vpack.c.b16 %v1117, %v1116
      %v1156 = vpack.c.b16 %v1118, %v1118
      %v1157 = vpack.c.b16 %v1120, %v1119
      %v1158 = vpack.c.b16 %v1121, %v1121
      %v1159 = vpack.c.b16 %v1123, %v1122
      %v1160 = vpack.c.b16 %v1124, %v1124
      %v1161 = vpack.c.b16 %v1126, %v1125
      %v1162 = vpack.c.b16 %v1127, %v1127
      %v1163 = vpack.c.b16 %v1129, %v1128
      %v1164 = vpack.c.b16 %v1130, %v1130
      %v1165 = vpack.c.b16 %v1132, %v1131
      %v1166 = vpack.c.b16 %v1133, %v1133
      %v1167 = vpack.c.b16 %v1135, %v1134
      %v1168 = vpack.c.b16 %v1136, %v1136
      %vm1169 = vsmask.f32 7424
      %v1171 = vshrl.u32 %v1137, 16
      %v1173 = vshll.u32 %v1137, 16
      %v1175 = vrot.slane %v1173, 1
      %v1176 = vor.u32 %v1171, %v1175
      %v1178 = vshll.u32 %v1138, 16
      %v1180 = vrot.slane %v1178, 1
      %v1181 = vsel %vm1169, %v1176, %v1180
      %v1183 = vshrl.u32 %v1139, 16
      %v1185 = vshll.u32 %v1139, 16
      %v1187 = vrot.slane %v1185, 1
      %v1188 = vor.u32 %v1183, %v1187
      %v1190 = vshll.u32 %v1140, 16
      %v1192 = vrot.slane %v1190, 1
      %v1193 = vsel %vm1169, %v1188, %v1192
      %v1195 = vshrl.u32 %v1141, 16
      %v1197 = vshll.u32 %v1141, 16
      %v1199 = vrot.slane %v1197, 1
      %v1200 = vor.u32 %v1195, %v1199
      %v1202 = vshll.u32 %v1142, 16
      %v1204 = vrot.slane %v1202, 1
      %v1205 = vsel %vm1169, %v1200, %v1204
      %v1207 = vshrl.u32 %v1143, 16
      %v1209 = vshll.u32 %v1143, 16
      %v1211 = vrot.slane %v1209, 1
      %v1212 = vor.u32 %v1207, %v1211
      %v1214 = vshll.u32 %v1144, 16
      %v1216 = vrot.slane %v1214, 1
      %v1217 = vsel %vm1169, %v1212, %v1216
      %v1219 = vshrl.u32 %v1145, 16
      %v1221 = vshll.u32 %v1145, 16
      %v1223 = vrot.slane %v1221, 1
      %v1224 = vor.u32 %v1219, %v1223
      %v1226 = vshll.u32 %v1146, 16
      %v1228 = vrot.slane %v1226, 1
      %v1229 = vsel %vm1169, %v1224, %v1228
      %v1231 = vshrl.u32 %v1147, 16
      %v1233 = vshll.u32 %v1147, 16
      %v1235 = vrot.slane %v1233, 1
      %v1236 = vor.u32 %v1231, %v1235
      %v1238 = vshll.u32 %v1148, 16
      %v1240 = vrot.slane %v1238, 1
      %v1241 = vsel %vm1169, %v1236, %v1240
      %v1243 = vshrl.u32 %v1149, 16
      %v1245 = vshll.u32 %v1149, 16
      %v1247 = vrot.slane %v1245, 1
      %v1248 = vor.u32 %v1243, %v1247
      %v1250 = vshll.u32 %v1150, 16
      %v1252 = vrot.slane %v1250, 1
      %v1253 = vsel %vm1169, %v1248, %v1252
      %v1255 = vshrl.u32 %v1151, 16
      %v1257 = vshll.u32 %v1151, 16
      %v1259 = vrot.slane %v1257, 1
      %v1260 = vor.u32 %v1255, %v1259
      %v1262 = vshll.u32 %v1152, 16
      %v1264 = vrot.slane %v1262, 1
      %v1265 = vsel %vm1169, %v1260, %v1264
      %v1267 = vshrl.u32 %v1153, 16
      %v1269 = vshll.u32 %v1153, 16
      %v1271 = vrot.slane %v1269, 1
      %v1272 = vor.u32 %v1267, %v1271
      %v1274 = vshll.u32 %v1154, 16
      %v1276 = vrot.slane %v1274, 1
      %v1277 = vsel %vm1169, %v1272, %v1276
      %v1279 = vshrl.u32 %v1155, 16
      %v1281 = vshll.u32 %v1155, 16
      %v1283 = vrot.slane %v1281, 1
      %v1284 = vor.u32 %v1279, %v1283
      %v1286 = vshll.u32 %v1156, 16
      %v1288 = vrot.slane %v1286, 1
      %v1289 = vsel %vm1169, %v1284, %v1288
      %v1291 = vshrl.u32 %v1157, 16
      %v1293 = vshll.u32 %v1157, 16
      %v1295 = vrot.slane %v1293, 1
      %v1296 = vor.u32 %v1291, %v1295
      %v1298 = vshll.u32 %v1158, 16
      %v1300 = vrot.slane %v1298, 1
      %v1301 = vsel %vm1169, %v1296, %v1300
      %v1303 = vshrl.u32 %v1159, 16
      %v1305 = vshll.u32 %v1159, 16
      %v1307 = vrot.slane %v1305, 1
      %v1308 = vor.u32 %v1303, %v1307
      %v1310 = vshll.u32 %v1160, 16
      %v1312 = vrot.slane %v1310, 1
      %v1313 = vsel %vm1169, %v1308, %v1312
      %v1315 = vshrl.u32 %v1161, 16
      %v1317 = vshll.u32 %v1161, 16
      %v1319 = vrot.slane %v1317, 1
      %v1320 = vor.u32 %v1315, %v1319
      %v1322 = vshll.u32 %v1162, 16
      %v1324 = vrot.slane %v1322, 1
      %v1325 = vsel %vm1169, %v1320, %v1324
      %v1327 = vshrl.u32 %v1163, 16
      %v1329 = vshll.u32 %v1163, 16
      %v1331 = vrot.slane %v1329, 1
      %v1332 = vor.u32 %v1327, %v1331
      %v1334 = vshll.u32 %v1164, 16
      %v1336 = vrot.slane %v1334, 1
      %v1337 = vsel %vm1169, %v1332, %v1336
      %v1339 = vshrl.u32 %v1165, 16
      %v1341 = vshll.u32 %v1165, 16
      %v1343 = vrot.slane %v1341, 1
      %v1344 = vor.u32 %v1339, %v1343
      %v1346 = vshll.u32 %v1166, 16
      %v1348 = vrot.slane %v1346, 1
      %v1349 = vsel %vm1169, %v1344, %v1348
      %v1351 = vshrl.u32 %v1167, 16
      %v1353 = vshll.u32 %v1167, 16
      %v1355 = vrot.slane %v1353, 1
      %v1356 = vor.u32 %v1351, %v1355
      %v1358 = vshll.u32 %v1168, 16
      %v1360 = vrot.slane %v1358, 1
      %v1361 = vsel %vm1169, %v1356, %v1360
      %1362 = vrot.lane.b32.xlu0 %v1181, 8
      %v1363 = vpop.permute.xlu0 %1362
      %1364 = vrot.lane.b32.xlu0 %v1193, 8
      %v1365 = vpop.permute.xlu0 %1364
      %1366 = vrot.lane.b32.xlu0 %v1205, 8
      %v1367 = vpop.permute.xlu0 %1366
      %1368 = vrot.lane.b32.xlu0 %v1217, 8
      %v1369 = vpop.permute.xlu0 %1368
      %1370 = vrot.lane.b32.xlu0 %v1229, 8
      %v1371 = vpop.permute.xlu0 %1370
      %1372 = vrot.lane.b32.xlu0 %v1241, 8
      %v1373 = vpop.permute.xlu0 %1372
      %1374 = vrot.lane.b32.xlu0 %v1253, 8
      %v1375 = vpop.permute.xlu0 %1374
      %1376 = vrot.lane.b32.xlu0 %v1265, 8
      %v1377 = vpop.permute.xlu0 %1376
      %1378 = vrot.lane.b32.xlu0 %v1277, 8
      %v1379 = vpop.permute.xlu0 %1378
      %1380 = vrot.lane.b32.xlu0 %v1289, 8
      %v1381 = vpop.permute.xlu0 %1380
      %1382 = vrot.lane.b32.xlu0 %v1301, 8
      %v1383 = vpop.permute.xlu0 %1382
      %1384 = vrot.lane.b32.xlu0 %v1313, 8
      %v1385 = vpop.permute.xlu0 %1384
      %1386 = vrot.lane.b32.xlu0 %v1325, 8
      %v1387 = vpop.permute.xlu0 %1386
      %1388 = vrot.lane.b32.xlu0 %v1337, 8
      %v1389 = vpop.permute.xlu0 %1388
      %1390 = vrot.lane.b32.xlu0 %v1349, 8
      %v1391 = vpop.permute.xlu0 %1390
      %1392 = vrot.lane.b32.xlu0 %v1361, 8
      %v1393 = vpop.permute.xlu0 %1392
      %vm1410 = vcmask 130112
      %1411 = vst.msk [vmem:[#allocation3] sm:$0xff] %vm1410, %v1363
      %1412 = vst.msk [vmem:[#allocation3 + $0x8] sm:$0xff] %vm1410, %v1365
      %1413 = vst.msk [vmem:[#allocation3 + $0x10] sm:$0xff] %vm1410, %v1367
      %1414 = vst.msk [vmem:[#allocation3 + $0x18] sm:$0xff] %vm1410, %v1369
      %1415 = vst.msk [vmem:[#allocation3 + $0x20] sm:$0xff] %vm1410, %v1371
      %1416 = vst.msk [vmem:[#allocation3 + $0x28] sm:$0xff] %vm1410, %v1373
      %1417 = vst.msk [vmem:[#allocation3 + $0x30] sm:$0xff] %vm1410, %v1375
      %1418 = vst.msk [vmem:[#allocation3 + $0x38] sm:$0xff] %vm1410, %v1377
      %1419 = vst.msk [vmem:[#allocation3 + $0x40] sm:$0xff] %vm1410, %v1379
      %1420 = vst.msk [vmem:[#allocation3 + $0x48] sm:$0xff] %vm1410, %v1381
      %1421 = vst.msk [vmem:[#allocation3 + $0x50] sm:$0xff] %vm1410, %v1383
      %1422 = vst.msk [vmem:[#allocation3 + $0x58] sm:$0xff] %vm1410, %v1385
      %1423 = vst.msk [vmem:[#allocation3 + $0x60] sm:$0xff] %vm1410, %v1387
      %1424 = vst.msk [vmem:[#allocation3 + $0x68] sm:$0xff] %vm1410, %v1389
      %1425 = vst.msk [vmem:[#allocation3 + $0x70] sm:$0xff] %vm1410, %v1391
      %1426 = vst.msk [vmem:[#allocation3 + $0x78] sm:$0xff] %vm1410, %v1393
      %v1427 = vld [vmem:[#allocation2] sm:$0xe]
      %v1428 = vld [vmem:[#allocation2 + $0x4] sm:$0xf]
      %v1429 = vld [vmem:[#allocation2 + $0x8] sm:$0x1]
      %v1430 = vld [vmem:[#allocation2 + $0xc] sm:$0xe]
      %v1431 = vld [vmem:[#allocation2 + $0x10] sm:$0xf]
      %v1432 = vld [vmem:[#allocation2 + $0x14] sm:$0x1]
      %v1433 = vld [vmem:[#allocation2 + $0x18] sm:$0xe]
      %v1434 = vld [vmem:[#allocation2 + $0x1c] sm:$0xf]
      %v1435 = vld [vmem:[#allocation2 + $0x20] sm:$0x1]
      %v1436 = vld [vmem:[#allocation2 + $0x24] sm:$0xe]
      %v1437 = vld [vmem:[#allocation2 + $0x28] sm:$0xf]
      %v1438 = vld [vmem:[#allocation2 + $0x2c] sm:$0x1]
      %v1439 = vld [vmem:[#allocation2 + $0x30] sm:$0xe]
      %v1440 = vld [vmem:[#allocation2 + $0x34] sm:$0xf]
      %v1441 = vld [vmem:[#allocation2 + $0x38] sm:$0x1]
      %v1442 = vld [vmem:[#allocation2 + $0x3c] sm:$0xe]
      %v1443 = vld [vmem:[#allocation2 + $0x40] sm:$0xf]
      %v1444 = vld [vmem:[#allocation2 + $0x44] sm:$0x1]
      %v1445 = vld [vmem:[#allocation2 + $0x48] sm:$0xe]
      %v1446 = vld [vmem:[#allocation2 + $0x4c] sm:$0xf]
      %v1447 = vld [vmem:[#allocation2 + $0x50] sm:$0x1]
      %v1448 = vld [vmem:[#allocation2 + $0x54] sm:$0xe]
      %v1449 = vld [vmem:[#allocation2 + $0x58] sm:$0xf]
      %v1450 = vld [vmem:[#allocation2 + $0x5c] sm:$0x1]
      %v1451 = vld [vmem:[#allocation2 + $0x60] sm:$0xe]
      %v1452 = vld [vmem:[#allocation2 + $0x64] sm:$0xf]
      %v1453 = vld [vmem:[#allocation2 + $0x68] sm:$0x1]
      %v1454 = vld [vmem:[#allocation2 + $0x6c] sm:$0xe]
      %v1455 = vld [vmem:[#allocation2 + $0x70] sm:$0xf]
      %v1456 = vld [vmem:[#allocation2 + $0x74] sm:$0x1]
      %v1457 = vld [vmem:[#allocation2 + $0x78] sm:$0xe]
      %v1458 = vld [vmem:[#allocation2 + $0x7c] sm:$0xf]
      %v1459 = vld [vmem:[#allocation2 + $0x80] sm:$0x1]
      %v1460 = vld [vmem:[#allocation2 + $0x84] sm:$0xe]
      %v1461 = vld [vmem:[#allocation2 + $0x88] sm:$0xf]
      %v1462 = vld [vmem:[#allocation2 + $0x8c] sm:$0x1]
      %v1463 = vld [vmem:[#allocation2 + $0x90] sm:$0xe]
      %v1464 = vld [vmem:[#allocation2 + $0x94] sm:$0xf]
      %v1465 = vld [vmem:[#allocation2 + $0x98] sm:$0x1]
      %v1466 = vld [vmem:[#allocation2 + $0x9c] sm:$0xe]
      %v1467 = vld [vmem:[#allocation2 + $0xa0] sm:$0xf]
      %v1468 = vld [vmem:[#allocation2 + $0xa4] sm:$0x1]
      %v1469 = vld [vmem:[#allocation2 + $0xa8] sm:$0xe]
      %v1470 = vld [vmem:[#allocation2 + $0xac] sm:$0xf]
      %v1471 = vld [vmem:[#allocation2 + $0xb0] sm:$0x1]
      %v1472 = vld [vmem:[#allocation2 + $0xb4] sm:$0xe]
      %v1473 = vld [vmem:[#allocation2 + $0xb8] sm:$0xf]
      %v1474 = vld [vmem:[#allocation2 + $0xbc] sm:$0x1]
      %v1523 = vunpack.c.l.b16 %v1427
      %v1524 = vunpack.c.l.b16 %v1428
      %v1525 = vunpack.c.l.b16 %v1429
      %v1526 = vunpack.c.l.b16 %v1430
      %v1527 = vunpack.c.l.b16 %v1431
      %v1528 = vunpack.c.l.b16 %v1432
      %v1529 = vunpack.c.l.b16 %v1433
      %v1530 = vunpack.c.l.b16 %v1434
      %v1531 = vunpack.c.l.b16 %v1435
      %v1532 = vunpack.c.l.b16 %v1436
      %v1533 = vunpack.c.l.b16 %v1437
      %v1534 = vunpack.c.l.b16 %v1438
      %v1535 = vunpack.c.l.b16 %v1439
      %v1536 = vunpack.c.l.b16 %v1440
      %v1537 = vunpack.c.l.b16 %v1441
      %v1538 = vunpack.c.l.b16 %v1442
      %v1539 = vunpack.c.l.b16 %v1443
      %v1540 = vunpack.c.l.b16 %v1444
      %v1541 = vunpack.c.l.b16 %v1445
      %v1542 = vunpack.c.l.b16 %v1446
      %v1543 = vunpack.c.l.b16 %v1447
      %v1544 = vunpack.c.l.b16 %v1448
      %v1545 = vunpack.c.l.b16 %v1449
      %v1546 = vunpack.c.l.b16 %v1450
      %v1547 = vunpack.c.l.b16 %v1451
      %v1548 = vunpack.c.l.b16 %v1452
      %v1549 = vunpack.c.l.b16 %v1453
      %v1550 = vunpack.c.l.b16 %v1454
      %v1551 = vunpack.c.l.b16 %v1455
      %v1552 = vunpack.c.l.b16 %v1456
      %v1553 = vunpack.c.l.b16 %v1457
      %v1554 = vunpack.c.l.b16 %v1458
      %v1555 = vunpack.c.l.b16 %v1459
      %v1556 = vunpack.c.l.b16 %v1460
      %v1557 = vunpack.c.l.b16 %v1461
      %v1558 = vunpack.c.l.b16 %v1462
      %v1559 = vunpack.c.l.b16 %v1463
      %v1560 = vunpack.c.l.b16 %v1464
      %v1561 = vunpack.c.l.b16 %v1465
      %v1562 = vunpack.c.l.b16 %v1466
      %v1563 = vunpack.c.l.b16 %v1467
      %v1564 = vunpack.c.l.b16 %v1468
      %v1565 = vunpack.c.l.b16 %v1469
      %v1566 = vunpack.c.l.b16 %v1470
      %v1567 = vunpack.c.l.b16 %v1471
      %v1568 = vunpack.c.l.b16 %v1472
      %v1569 = vunpack.c.l.b16 %v1473
      %v1570 = vunpack.c.l.b16 %v1474
      %v1571 = vpack.c.b16 %v1524, %v1523
      %v1572 = vpack.c.b16 %v1525, %v1525
      %v1573 = vpack.c.b16 %v1527, %v1526
      %v1574 = vpack.c.b16 %v1528, %v1528
      %v1575 = vpack.c.b16 %v1530, %v1529
      %v1576 = vpack.c.b16 %v1531, %v1531
      %v1577 = vpack.c.b16 %v1533, %v1532
      %v1578 = vpack.c.b16 %v1534, %v1534
      %v1579 = vpack.c.b16 %v1536, %v1535
      %v1580 = vpack.c.b16 %v1537, %v1537
      %v1581 = vpack.c.b16 %v1539, %v1538
      %v1582 = vpack.c.b16 %v1540, %v1540
      %v1583 = vpack.c.b16 %v1542, %v1541
      %v1584 = vpack.c.b16 %v1543, %v1543
      %v1585 = vpack.c.b16 %v1545, %v1544
      %v1586 = vpack.c.b16 %v1546, %v1546
      %v1587 = vpack.c.b16 %v1548, %v1547
      %v1588 = vpack.c.b16 %v1549, %v1549
      %v1589 = vpack.c.b16 %v1551, %v1550
      %v1590 = vpack.c.b16 %v1552, %v1552
      %v1591 = vpack.c.b16 %v1554, %v1553
      %v1592 = vpack.c.b16 %v1555, %v1555
      %v1593 = vpack.c.b16 %v1557, %v1556
      %v1594 = vpack.c.b16 %v1558, %v1558
      %v1595 = vpack.c.b16 %v1560, %v1559
      %v1596 = vpack.c.b16 %v1561, %v1561
      %v1597 = vpack.c.b16 %v1563, %v1562
      %v1598 = vpack.c.b16 %v1564, %v1564
      %v1599 = vpack.c.b16 %v1566, %v1565
      %v1600 = vpack.c.b16 %v1567, %v1567
      %v1601 = vpack.c.b16 %v1569, %v1568
      %v1602 = vpack.c.b16 %v1570, %v1570
      %vm1603 = vcmask 1046528
      %v1604 = vrot.slane %v1571, 1
      %v1605 = vrot.slane %v1572, 1
      %v1606 = vsel %vm1603, %v1604, %v1605
      %v1607 = vrot.slane %v1573, 1
      %v1608 = vrot.slane %v1574, 1
      %v1609 = vsel %vm1603, %v1607, %v1608
      %v1610 = vrot.slane %v1575, 1
      %v1611 = vrot.slane %v1576, 1
      %v1612 = vsel %vm1603, %v1610, %v1611
      %v1613 = vrot.slane %v1577, 1
      %v1614 = vrot.slane %v1578, 1
      %v1615 = vsel %vm1603, %v1613, %v1614
      %v1616 = vrot.slane %v1579, 1
      %v1617 = vrot.slane %v1580, 1
      %v1618 = vsel %vm1603, %v1616, %v1617
      %v1619 = vrot.slane %v1581, 1
      %v1620 = vrot.slane %v1582, 1
      %v1621 = vsel %vm1603, %v1619, %v1620
      %v1622 = vrot.slane %v1583, 1
      %v1623 = vrot.slane %v1584, 1
      %v1624 = vsel %vm1603, %v1622, %v1623
      %v1625 = vrot.slane %v1585, 1
      %v1626 = vrot.slane %v1586, 1
      %v1627 = vsel %vm1603, %v1625, %v1626
      %v1628 = vrot.slane %v1587, 1
      %v1629 = vrot.slane %v1588, 1
      %v1630 = vsel %vm1603, %v1628, %v1629
      %v1631 = vrot.slane %v1589, 1
      %v1632 = vrot.slane %v1590, 1
      %v1633 = vsel %vm1603, %v1631, %v1632
      %v1634 = vrot.slane %v1591, 1
      %v1635 = vrot.slane %v1592, 1
      %v1636 = vsel %vm1603, %v1634, %v1635
      %v1637 = vrot.slane %v1593, 1
      %v1638 = vrot.slane %v1594, 1
      %v1639 = vsel %vm1603, %v1637, %v1638
      %v1640 = vrot.slane %v1595, 1
      %v1641 = vrot.slane %v1596, 1
      %v1642 = vsel %vm1603, %v1640, %v1641
      %v1643 = vrot.slane %v1597, 1
      %v1644 = vrot.slane %v1598, 1
      %v1645 = vsel %vm1603, %v1643, %v1644
      %v1646 = vrot.slane %v1599, 1
      %v1647 = vrot.slane %v1600, 1
      %v1648 = vsel %vm1603, %v1646, %v1647
      %v1649 = vrot.slane %v1601, 1
      %v1650 = vrot.slane %v1602, 1
      %v1651 = vsel %vm1603, %v1649, %v1650
      %1652 = vrot.lane.b32.xlu0 %v1606, 16
      %v1653 = vpop.permute.xlu0 %1652
      %1654 = vrot.lane.b32.xlu0 %v1609, 16
      %v1655 = vpop.permute.xlu0 %1654
      %1656 = vrot.lane.b32.xlu0 %v1612, 16
      %v1657 = vpop.permute.xlu0 %1656
      %1658 = vrot.lane.b32.xlu0 %v1615, 16
      %v1659 = vpop.permute.xlu0 %1658
      %1660 = vrot.lane.b32.xlu0 %v1618, 16
      %v1661 = vpop.permute.xlu0 %1660
      %1662 = vrot.lane.b32.xlu0 %v1621, 16
      %v1663 = vpop.permute.xlu0 %1662
      %1664 = vrot.lane.b32.xlu0 %v1624, 16
      %v1665 = vpop.permute.xlu0 %1664
      %1666 = vrot.lane.b32.xlu0 %v1627, 16
      %v1667 = vpop.permute.xlu0 %1666
      %1668 = vrot.lane.b32.xlu0 %v1630, 16
      %v1669 = vpop.permute.xlu0 %1668
      %1670 = vrot.lane.b32.xlu0 %v1633, 16
      %v1671 = vpop.permute.xlu0 %1670
      %1672 = vrot.lane.b32.xlu0 %v1636, 16
      %v1673 = vpop.permute.xlu0 %1672
      %1674 = vrot.lane.b32.xlu0 %v1639, 16
      %v1675 = vpop.permute.xlu0 %1674
      %1676 = vrot.lane.b32.xlu0 %v1642, 16
      %v1677 = vpop.permute.xlu0 %1676
      %1678 = vrot.lane.b32.xlu0 %v1645, 16
      %v1679 = vpop.permute.xlu0 %1678
      %1680 = vrot.lane.b32.xlu0 %v1648, 16
      %v1681 = vpop.permute.xlu0 %1680
      %1682 = vrot.lane.b32.xlu0 %v1651, 16
      %v1683 = vpop.permute.xlu0 %1682
      %vm1700 = vcmask 195712
      %1701 = vst.msk [vmem:[#allocation3] sm:$0xff] %vm1700, %v1653
      %1702 = vst.msk [vmem:[#allocation3 + $0x8] sm:$0xff] %vm1700, %v1655
      %1703 = vst.msk [vmem:[#allocation3 + $0x10] sm:$0xff] %vm1700, %v1657
      %1704 = vst.msk [vmem:[#allocation3 + $0x18] sm:$0xff] %vm1700, %v1659
      %1705 = vst.msk [vmem:[#allocation3 + $0x20] sm:$0xff] %vm1700, %v1661
      %1706 = vst.msk [vmem:[#allocation3 + $0x28] sm:$0xff] %vm1700, %v1663
      %1707 = vst.msk [vmem:[#allocation3 + $0x30] sm:$0xff] %vm1700, %v1665
      %1708 = vst.msk [vmem:[#allocation3 + $0x38] sm:$0xff] %vm1700, %v1667
      %1709 = vst.msk [vmem:[#allocation3 + $0x40] sm:$0xff] %vm1700, %v1669
      %1710 = vst.msk [vmem:[#allocation3 + $0x48] sm:$0xff] %vm1700, %v1671
      %1711 = vst.msk [vmem:[#allocation3 + $0x50] sm:$0xff] %vm1700, %v1673
      %1712 = vst.msk [vmem:[#allocation3 + $0x58] sm:$0xff] %vm1700, %v1675
      %1713 = vst.msk [vmem:[#allocation3 + $0x60] sm:$0xff] %vm1700, %v1677
      %1714 = vst.msk [vmem:[#allocation3 + $0x68] sm:$0xff] %vm1700, %v1679
      %1715 = vst.msk [vmem:[#allocation3 + $0x70] sm:$0xff] %vm1700, %v1681
      %1716 = vst.msk [vmem:[#allocation3 + $0x78] sm:$0xff] %vm1700, %v1683
      %v1717 = vld [vmem:[%s731] sm:$0xf]
      %v1718 = vld [vmem:[%s731 + $0x4] sm:$0xf]
      %v1719 = vld [vmem:[%s731 + $0xc] sm:$0xf]
      %v1720 = vld [vmem:[%s731 + $0x10] sm:$0xf]
      %v1721 = vld [vmem:[%s731 + $0x18] sm:$0xf]
      %v1722 = vld [vmem:[%s731 + $0x1c] sm:$0xf]
      %v1723 = vld [vmem:[%s731 + $0x24] sm:$0xf]
      %v1724 = vld [vmem:[%s731 + $0x28] sm:$0xf]
      %v1725 = vld [vmem:[%s731 + $0x30] sm:$0xf]
      %v1726 = vld [vmem:[%s731 + $0x34] sm:$0xf]
      %v1727 = vld [vmem:[%s731 + $0x3c] sm:$0xf]
      %v1728 = vld [vmem:[%s731 + $0x40] sm:$0xf]
      %v1729 = vld [vmem:[%s731 + $0x48] sm:$0xf]
      %v1730 = vld [vmem:[%s731 + $0x4c] sm:$0xf]
      %v1731 = vld [vmem:[%s731 + $0x54] sm:$0xf]
      %v1732 = vld [vmem:[%s731 + $0x58] sm:$0xf]
      %v1733 = vld [vmem:[%s731 + $0x60] sm:$0xf]
      %v1734 = vld [vmem:[%s731 + $0x64] sm:$0xf]
      %v1735 = vld [vmem:[%s731 + $0x6c] sm:$0xf]
      %v1736 = vld [vmem:[%s731 + $0x70] sm:$0xf]
      %v1737 = vld [vmem:[%s731 + $0x78] sm:$0xf]
      %v1738 = vld [vmem:[%s731 + $0x7c] sm:$0xf]
      %v1739 = vld [vmem:[%s731 + $0x84] sm:$0xf]
      %v1740 = vld [vmem:[%s731 + $0x88] sm:$0xf]
      %v1741 = vld [vmem:[%s731 + $0x90] sm:$0xf]
      %v1742 = vld [vmem:[%s731 + $0x94] sm:$0xf]
      %v1743 = vld [vmem:[%s731 + $0x9c] sm:$0xf]
      %v1744 = vld [vmem:[%s731 + $0xa0] sm:$0xf]
      %v1745 = vld [vmem:[%s731 + $0xa8] sm:$0xf]
      %v1746 = vld [vmem:[%s731 + $0xac] sm:$0xf]
      %v1747 = vld [vmem:[%s731 + $0xb4] sm:$0xf]
      %v1748 = vld [vmem:[%s731 + $0xb8] sm:$0xf]
      %v1781 = vunpack.c.l.b16 %v1717
      %v1782 = vunpack.c.l.b16 %v1718
      %v1783 = vunpack.c.l.b16 %v1719
      %v1784 = vunpack.c.l.b16 %v1720
      %v1785 = vunpack.c.l.b16 %v1721
      %v1786 = vunpack.c.l.b16 %v1722
      %v1787 = vunpack.c.l.b16 %v1723
      %v1788 = vunpack.c.l.b16 %v1724
      %v1789 = vunpack.c.l.b16 %v1725
      %v1790 = vunpack.c.l.b16 %v1726
      %v1791 = vunpack.c.l.b16 %v1727
      %v1792 = vunpack.c.l.b16 %v1728
      %v1793 = vunpack.c.l.b16 %v1729
      %v1794 = vunpack.c.l.b16 %v1730
      %v1795 = vunpack.c.l.b16 %v1731
      %v1796 = vunpack.c.l.b16 %v1732
      %v1797 = vunpack.c.l.b16 %v1733
      %v1798 = vunpack.c.l.b16 %v1734
      %v1799 = vunpack.c.l.b16 %v1735
      %v1800 = vunpack.c.l.b16 %v1736
      %v1801 = vunpack.c.l.b16 %v1737
      %v1802 = vunpack.c.l.b16 %v1738
      %v1803 = vunpack.c.l.b16 %v1739
      %v1804 = vunpack.c.l.b16 %v1740
      %v1805 = vunpack.c.l.b16 %v1741
      %v1806 = vunpack.c.l.b16 %v1742
      %v1807 = vunpack.c.l.b16 %v1743
      %v1808 = vunpack.c.l.b16 %v1744
      %v1809 = vunpack.c.l.b16 %v1745
      %v1810 = vunpack.c.l.b16 %v1746
      %v1811 = vunpack.c.l.b16 %v1747
      %v1812 = vunpack.c.l.b16 %v1748
      %v1813 = vpack.c.b16 %v1782, %v1781
      %v1814 = vpack.c.b16 %v1784, %v1783
      %v1815 = vpack.c.b16 %v1786, %v1785
      %v1816 = vpack.c.b16 %v1788, %v1787
      %v1817 = vpack.c.b16 %v1790, %v1789
      %v1818 = vpack.c.b16 %v1792, %v1791
      %v1819 = vpack.c.b16 %v1794, %v1793
      %v1820 = vpack.c.b16 %v1796, %v1795
      %v1821 = vpack.c.b16 %v1798, %v1797
      %v1822 = vpack.c.b16 %v1800, %v1799
      %v1823 = vpack.c.b16 %v1802, %v1801
      %v1824 = vpack.c.b16 %v1804, %v1803
      %v1825 = vpack.c.b16 %v1806, %v1805
      %v1826 = vpack.c.b16 %v1808, %v1807
      %v1827 = vpack.c.b16 %v1810, %v1809
      %v1828 = vpack.c.b16 %v1812, %v1811
      %1829 = vrot.lane.b32.xlu0 %v1813, 24
      %v1830 = vpop.permute.xlu0 %1829
      %1831 = vrot.lane.b32.xlu0 %v1814, 24
      %v1832 = vpop.permute.xlu0 %1831
      %1833 = vrot.lane.b32.xlu0 %v1815, 24
      %v1834 = vpop.permute.xlu0 %1833
      %1835 = vrot.lane.b32.xlu0 %v1816, 24
      %v1836 = vpop.permute.xlu0 %1835
      %1837 = vrot.lane.b32.xlu0 %v1817, 24
      %v1838 = vpop.permute.xlu0 %1837
      %1839 = vrot.lane.b32.xlu0 %v1818, 24
      %v1840 = vpop.permute.xlu0 %1839
      %1841 = vrot.lane.b32.xlu0 %v1819, 24
      %v1842 = vpop.permute.xlu0 %1841
      %1843 = vrot.lane.b32.xlu0 %v1820, 24
      %v1844 = vpop.permute.xlu0 %1843
      %1845 = vrot.lane.b32.xlu0 %v1821, 24
      %v1846 = vpop.permute.xlu0 %1845
      %1847 = vrot.lane.b32.xlu0 %v1822, 24
      %v1848 = vpop.permute.xlu0 %1847
      %1849 = vrot.lane.b32.xlu0 %v1823, 24
      %v1850 = vpop.permute.xlu0 %1849
      %1851 = vrot.lane.b32.xlu0 %v1824, 24
      %v1852 = vpop.permute.xlu0 %1851
      %1853 = vrot.lane.b32.xlu0 %v1825, 24
      %v1854 = vpop.permute.xlu0 %1853
      %1855 = vrot.lane.b32.xlu0 %v1826, 24
      %v1856 = vpop.permute.xlu0 %1855
      %1857 = vrot.lane.b32.xlu0 %v1827, 24
      %v1858 = vpop.permute.xlu0 %1857
      %1859 = vrot.lane.b32.xlu0 %v1828, 24
      %v1860 = vpop.permute.xlu0 %1859
      %vm1877 = vcmask 261312
      %1878 = vst.msk [vmem:[#allocation3] sm:$0xff] %vm1877, %v1830
      %1879 = vst.msk [vmem:[#allocation3 + $0x8] sm:$0xff] %vm1877, %v1832
      %1880 = vst.msk [vmem:[#allocation3 + $0x10] sm:$0xff] %vm1877, %v1834
      %1881 = vst.msk [vmem:[#allocation3 + $0x18] sm:$0xff] %vm1877, %v1836
      %1882 = vst.msk [vmem:[#allocation3 + $0x20] sm:$0xff] %vm1877, %v1838
      %1883 = vst.msk [vmem:[#allocation3 + $0x28] sm:$0xff] %vm1877, %v1840
      %1884 = vst.msk [vmem:[#allocation3 + $0x30] sm:$0xff] %vm1877, %v1842
      %1885 = vst.msk [vmem:[#allocation3 + $0x38] sm:$0xff] %vm1877, %v1844
      %1886 = vst.msk [vmem:[#allocation3 + $0x40] sm:$0xff] %vm1877, %v1846
      %1887 = vst.msk [vmem:[#allocation3 + $0x48] sm:$0xff] %vm1877, %v1848
      %1888 = vst.msk [vmem:[#allocation3 + $0x50] sm:$0xff] %vm1877, %v1850
      %1889 = vst.msk [vmem:[#allocation3 + $0x58] sm:$0xff] %vm1877, %v1852
      %1890 = vst.msk [vmem:[#allocation3 + $0x60] sm:$0xff] %vm1877, %v1854
      %1891 = vst.msk [vmem:[#allocation3 + $0x68] sm:$0xff] %vm1877, %v1856
      %1892 = vst.msk [vmem:[#allocation3 + $0x70] sm:$0xff] %vm1877, %v1858
      %1893 = vst.msk [vmem:[#allocation3 + $0x78] sm:$0xff] %vm1877, %v1860
      %v1894 = vld [vmem:[%s731] sm:$0xf]
      %v1895 = vld [vmem:[%s731 + $0x4] sm:$0xf]
      %v1896 = vld [vmem:[%s731 + $0x8] sm:$0x1]
      %v1897 = vld [vmem:[%s731 + $0xc] sm:$0xf]
      %v1898 = vld [vmem:[%s731 + $0x10] sm:$0xf]
      %v1899 = vld [vmem:[%s731 + $0x14] sm:$0x1]
      %v1900 = vld [vmem:[%s731 + $0x18] sm:$0xf]
      %v1901 = vld [vmem:[%s731 + $0x1c] sm:$0xf]
      %v1902 = vld [vmem:[%s731 + $0x20] sm:$0x1]
      %v1903 = vld [vmem:[%s731 + $0x24] sm:$0xf]
      %v1904 = vld [vmem:[%s731 + $0x28] sm:$0xf]
      %v1905 = vld [vmem:[%s731 + $0x2c] sm:$0x1]
      %v1906 = vld [vmem:[%s731 + $0x30] sm:$0xf]
      %v1907 = vld [vmem:[%s731 + $0x34] sm:$0xf]
      %v1908 = vld [vmem:[%s731 + $0x38] sm:$0x1]
      %v1909 = vld [vmem:[%s731 + $0x3c] sm:$0xf]
      %v1910 = vld [vmem:[%s731 + $0x40] sm:$0xf]
      %v1911 = vld [vmem:[%s731 + $0x44] sm:$0x1]
      %v1912 = vld [vmem:[%s731 + $0x48] sm:$0xf]
      %v1913 = vld [vmem:[%s731 + $0x4c] sm:$0xf]
      %v1914 = vld [vmem:[%s731 + $0x50] sm:$0x1]
      %v1915 = vld [vmem:[%s731 + $0x54] sm:$0xf]
      %v1916 = vld [vmem:[%s731 + $0x58] sm:$0xf]
      %v1917 = vld [vmem:[%s731 + $0x5c] sm:$0x1]
      %v1918 = vld [vmem:[%s731 + $0x60] sm:$0xf]
      %v1919 = vld [vmem:[%s731 + $0x64] sm:$0xf]
      %v1920 = vld [vmem:[%s731 + $0x68] sm:$0x1]
      %v1921 = vld [vmem:[%s731 + $0x6c] sm:$0xf]
      %v1922 = vld [vmem:[%s731 + $0x70] sm:$0xf]
      %v1923 = vld [vmem:[%s731 + $0x74] sm:$0x1]
      %v1924 = vld [vmem:[%s731 + $0x78] sm:$0xf]
      %v1925 = vld [vmem:[%s731 + $0x7c] sm:$0xf]
      %v1926 = vld [vmem:[%s731 + $0x80] sm:$0x1]
      %v1927 = vld [vmem:[%s731 + $0x84] sm:$0xf]
      %v1928 = vld [vmem:[%s731 + $0x88] sm:$0xf]
      %v1929 = vld [vmem:[%s731 + $0x8c] sm:$0x1]
      %v1930 = vld [vmem:[%s731 + $0x90] sm:$0xf]
      %v1931 = vld [vmem:[%s731 + $0x94] sm:$0xf]
      %v1932 = vld [vmem:[%s731 + $0x98] sm:$0x1]
      %v1933 = vld [vmem:[%s731 + $0x9c] sm:$0xf]
      %v1934 = vld [vmem:[%s731 + $0xa0] sm:$0xf]
      %v1935 = vld [vmem:[%s731 + $0xa4] sm:$0x1]
      %v1936 = vld [vmem:[%s731 + $0xa8] sm:$0xf]
      %v1937 = vld [vmem:[%s731 + $0xac] sm:$0xf]
      %v1938 = vld [vmem:[%s731 + $0xb0] sm:$0x1]
      %v1939 = vld [vmem:[%s731 + $0xb4] sm:$0xf]
      %v1940 = vld [vmem:[%s731 + $0xb8] sm:$0xf]
      %v1941 = vld [vmem:[%s731 + $0xbc] sm:$0x1]
      %v1990 = vunpack.c.l.b16 %v1894
      %v1991 = vunpack.c.l.b16 %v1895
      %v1992 = vunpack.c.l.b16 %v1896
      %v1993 = vunpack.c.l.b16 %v1897
      %v1994 = vunpack.c.l.b16 %v1898
      %v1995 = vunpack.c.l.b16 %v1899
      %v1996 = vunpack.c.l.b16 %v1900
      %v1997 = vunpack.c.l.b16 %v1901
      %v1998 = vunpack.c.l.b16 %v1902
      %v1999 = vunpack.c.l.b16 %v1903
      %v2000 = vunpack.c.l.b16 %v1904
      %v2001 = vunpack.c.l.b16 %v1905
      %v2002 = vunpack.c.l.b16 %v1906
      %v2003 = vunpack.c.l.b16 %v1907
      %v2004 = vunpack.c.l.b16 %v1908
      %v2005 = vunpack.c.l.b16 %v1909
      %v2006 = vunpack.c.l.b16 %v1910
      %v2007 = vunpack.c.l.b16 %v1911
      %v2008 = vunpack.c.l.b16 %v1912
      %v2009 = vunpack.c.l.b16 %v1913
      %v2010 = vunpack.c.l.b16 %v1914
      %v2011 = vunpack.c.l.b16 %v1915
      %v2012 = vunpack.c.l.b16 %v1916
      %v2013 = vunpack.c.l.b16 %v1917
      %v2014 = vunpack.c.l.b16 %v1918
      %v2015 = vunpack.c.l.b16 %v1919
      %v2016 = vunpack.c.l.b16 %v1920
      %v2017 = vunpack.c.l.b16 %v1921
      %v2018 = vunpack.c.l.b16 %v1922
      %v2019 = vunpack.c.l.b16 %v1923
      %v2020 = vunpack.c.l.b16 %v1924
      %v2021 = vunpack.c.l.b16 %v1925
      %v2022 = vunpack.c.l.b16 %v1926
      %v2023 = vunpack.c.l.b16 %v1927
      %v2024 = vunpack.c.l.b16 %v1928
      %v2025 = vunpack.c.l.b16 %v1929
      %v2026 = vunpack.c.l.b16 %v1930
      %v2027 = vunpack.c.l.b16 %v1931
      %v2028 = vunpack.c.l.b16 %v1932
      %v2029 = vunpack.c.l.b16 %v1933
      %v2030 = vunpack.c.l.b16 %v1934
      %v2031 = vunpack.c.l.b16 %v1935
      %v2032 = vunpack.c.l.b16 %v1936
      %v2033 = vunpack.c.l.b16 %v1937
      %v2034 = vunpack.c.l.b16 %v1938
      %v2035 = vunpack.c.l.b16 %v1939
      %v2036 = vunpack.c.l.b16 %v1940
      %v2037 = vunpack.c.l.b16 %v1941
      %v2038 = vpack.c.b16 %v1991, %v1990
      %v2039 = vpack.c.b16 %v1992, %v1992
      %v2040 = vpack.c.b16 %v1994, %v1993
      %v2041 = vpack.c.b16 %v1995, %v1995
      %v2042 = vpack.c.b16 %v1997, %v1996
      %v2043 = vpack.c.b16 %v1998, %v1998
      %v2044 = vpack.c.b16 %v2000, %v1999
      %v2045 = vpack.c.b16 %v2001, %v2001
      %v2046 = vpack.c.b16 %v2003, %v2002
      %v2047 = vpack.c.b16 %v2004, %v2004
      %v2048 = vpack.c.b16 %v2006, %v2005
      %v2049 = vpack.c.b16 %v2007, %v2007
      %v2050 = vpack.c.b16 %v2009, %v2008
      %v2051 = vpack.c.b16 %v2010, %v2010
      %v2052 = vpack.c.b16 %v2012, %v2011
      %v2053 = vpack.c.b16 %v2013, %v2013
      %v2054 = vpack.c.b16 %v2015, %v2014
      %v2055 = vpack.c.b16 %v2016, %v2016
      %v2056 = vpack.c.b16 %v2018, %v2017
      %v2057 = vpack.c.b16 %v2019, %v2019
      %v2058 = vpack.c.b16 %v2021, %v2020
      %v2059 = vpack.c.b16 %v2022, %v2022
      %v2060 = vpack.c.b16 %v2024, %v2023
      %v2061 = vpack.c.b16 %v2025, %v2025
      %v2062 = vpack.c.b16 %v2027, %v2026
      %v2063 = vpack.c.b16 %v2028, %v2028
      %v2064 = vpack.c.b16 %v2030, %v2029
      %v2065 = vpack.c.b16 %v2031, %v2031
      %v2066 = vpack.c.b16 %v2033, %v2032
      %v2067 = vpack.c.b16 %v2034, %v2034
      %v2068 = vpack.c.b16 %v2036, %v2035
      %v2069 = vpack.c.b16 %v2037, %v2037
      %v2071 = vshrl.u32 %v2038, 16
      %v2073 = vshll.u32 %v2038, 16
      %v2075 = vrot.slane %v2073, 1
      %v2076 = vor.u32 %v2071, %v2075
      %v2078 = vshll.u32 %v2039, 16
      %v2080 = vrot.slane %v2078, 1
      %v2081 = vsel %vm1169, %v2076, %v2080
      %v2083 = vshrl.u32 %v2040, 16
      %v2085 = vshll.u32 %v2040, 16
      %v2087 = vrot.slane %v2085, 1
      %v2088 = vor.u32 %v2083, %v2087
      %v2090 = vshll.u32 %v2041, 16
      %v2092 = vrot.slane %v2090, 1
      %v2093 = vsel %vm1169, %v2088, %v2092
      %v2095 = vshrl.u32 %v2042, 16
      %v2097 = vshll.u32 %v2042, 16
      %v2099 = vrot.slane %v2097, 1
      %v2100 = vor.u32 %v2095, %v2099
      %v2102 = vshll.u32 %v2043, 16
      %v2104 = vrot.slane %v2102, 1
      %v2105 = vsel %vm1169, %v2100, %v2104
      %v2107 = vshrl.u32 %v2044, 16
      %v2109 = vshll.u32 %v2044, 16
      %v2111 = vrot.slane %v2109, 1
      %v2112 = vor.u32 %v2107, %v2111
      %v2114 = vshll.u32 %v2045, 16
      %v2116 = vrot.slane %v2114, 1
      %v2117 = vsel %vm1169, %v2112, %v2116
      %v2119 = vshrl.u32 %v2046, 16
      %v2121 = vshll.u32 %v2046, 16
      %v2123 = vrot.slane %v2121, 1
      %v2124 = vor.u32 %v2119, %v2123
      %v2126 = vshll.u32 %v2047, 16
      %v2128 = vrot.slane %v2126, 1
      %v2129 = vsel %vm1169, %v2124, %v2128
      %v2131 = vshrl.u32 %v2048, 16
      %v2133 = vshll.u32 %v2048, 16
      %v2135 = vrot.slane %v2133, 1
      %v2136 = vor.u32 %v2131, %v2135
      %v2138 = vshll.u32 %v2049, 16
      %v2140 = vrot.slane %v2138, 1
      %v2141 = vsel %vm1169, %v2136, %v2140
      %v2143 = vshrl.u32 %v2050, 16
      %v2145 = vshll.u32 %v2050, 16
      %v2147 = vrot.slane %v2145, 1
      %v2148 = vor.u32 %v2143, %v2147
      %v2150 = vshll.u32 %v2051, 16
      %v2152 = vrot.slane %v2150, 1
      %v2153 = vsel %vm1169, %v2148, %v2152
      %v2155 = vshrl.u32 %v2052, 16
      %v2157 = vshll.u32 %v2052, 16
      %v2159 = vrot.slane %v2157, 1
      %v2160 = vor.u32 %v2155, %v2159
      %v2162 = vshll.u32 %v2053, 16
      %v2164 = vrot.slane %v2162, 1
      %v2165 = vsel %vm1169, %v2160, %v2164
      %v2167 = vshrl.u32 %v2054, 16
      %v2169 = vshll.u32 %v2054, 16
      %v2171 = vrot.slane %v2169, 1
      %v2172 = vor.u32 %v2167, %v2171
      %v2174 = vshll.u32 %v2055, 16
      %v2176 = vrot.slane %v2174, 1
      %v2177 = vsel %vm1169, %v2172, %v2176
      %v2179 = vshrl.u32 %v2056, 16
      %v2181 = vshll.u32 %v2056, 16
      %v2183 = vrot.slane %v2181, 1
      %v2184 = vor.u32 %v2179, %v2183
      %v2186 = vshll.u32 %v2057, 16
      %v2188 = vrot.slane %v2186, 1
      %v2189 = vsel %vm1169, %v2184, %v2188
      %v2191 = vshrl.u32 %v2058, 16
      %v2193 = vshll.u32 %v2058, 16
      %v2195 = vrot.slane %v2193, 1
      %v2196 = vor.u32 %v2191, %v2195
      %v2198 = vshll.u32 %v2059, 16
      %v2200 = vrot.slane %v2198, 1
      %v2201 = vsel %vm1169, %v2196, %v2200
      %v2203 = vshrl.u32 %v2060, 16
      %v2205 = vshll.u32 %v2060, 16
      %v2207 = vrot.slane %v2205, 1
      %v2208 = vor.u32 %v2203, %v2207
      %v2210 = vshll.u32 %v2061, 16
      %v2212 = vrot.slane %v2210, 1
      %v2213 = vsel %vm1169, %v2208, %v2212
      %v2215 = vshrl.u32 %v2062, 16
      %v2217 = vshll.u32 %v2062, 16
      %v2219 = vrot.slane %v2217, 1
      %v2220 = vor.u32 %v2215, %v2219
      %v2222 = vshll.u32 %v2063, 16
      %v2224 = vrot.slane %v2222, 1
      %v2225 = vsel %vm1169, %v2220, %v2224
      %v2227 = vshrl.u32 %v2064, 16
      %v2229 = vshll.u32 %v2064, 16
      %v2231 = vrot.slane %v2229, 1
      %v2232 = vor.u32 %v2227, %v2231
      %v2234 = vshll.u32 %v2065, 16
      %v2236 = vrot.slane %v2234, 1
      %v2237 = vsel %vm1169, %v2232, %v2236
      %v2239 = vshrl.u32 %v2066, 16
      %v2241 = vshll.u32 %v2066, 16
      %v2243 = vrot.slane %v2241, 1
      %v2244 = vor.u32 %v2239, %v2243
      %v2246 = vshll.u32 %v2067, 16
      %v2248 = vrot.slane %v2246, 1
      %v2249 = vsel %vm1169, %v2244, %v2248
      %v2251 = vshrl.u32 %v2068, 16
      %v2253 = vshll.u32 %v2068, 16
      %v2255 = vrot.slane %v2253, 1
      %v2256 = vor.u32 %v2251, %v2255
      %v2258 = vshll.u32 %v2069, 16
      %v2260 = vrot.slane %v2258, 1
      %v2261 = vsel %vm1169, %v2256, %v2260
      %2262 = vrot.lane.b32.xlu0 %v2081, 32
      %v2263 = vpop.permute.xlu0 %2262
      %2264 = vrot.lane.b32.xlu0 %v2093, 32
      %v2265 = vpop.permute.xlu0 %2264
      %2266 = vrot.lane.b32.xlu0 %v2105, 32
      %v2267 = vpop.permute.xlu0 %2266
      %2268 = vrot.lane.b32.xlu0 %v2117, 32
      %v2269 = vpop.permute.xlu0 %2268
      %2270 = vrot.lane.b32.xlu0 %v2129, 32
      %v2271 = vpop.permute.xlu0 %2270
      %2272 = vrot.lane.b32.xlu0 %v2141, 32
      %v2273 = vpop.permute.xlu0 %2272
      %2274 = vrot.lane.b32.xlu0 %v2153, 32
      %v2275 = vpop.permute.xlu0 %2274
      %2276 = vrot.lane.b32.xlu0 %v2165, 32
      %v2277 = vpop.permute.xlu0 %2276
      %2278 = vrot.lane.b32.xlu0 %v2177, 32
      %v2279 = vpop.permute.xlu0 %2278
      %2280 = vrot.lane.b32.xlu0 %v2189, 32
      %v2281 = vpop.permute.xlu0 %2280
      %2282 = vrot.lane.b32.xlu0 %v2201, 32
      %v2283 = vpop.permute.xlu0 %2282
      %2284 = vrot.lane.b32.xlu0 %v2213, 32
      %v2285 = vpop.permute.xlu0 %2284
      %2286 = vrot.lane.b32.xlu0 %v2225, 32
      %v2287 = vpop.permute.xlu0 %2286
      %2288 = vrot.lane.b32.xlu0 %v2237, 32
      %v2289 = vpop.permute.xlu0 %2288
      %2290 = vrot.lane.b32.xlu0 %v2249, 32
      %v2291 = vpop.permute.xlu0 %2290
      %2292 = vrot.lane.b32.xlu0 %v2261, 32
      %v2293 = vpop.permute.xlu0 %2292
      %vm2310 = vcmask 326912
      %2311 = vst.msk [vmem:[#allocation3] sm:$0xff] %vm2310, %v2263
      %2312 = vst.msk [vmem:[#allocation3 + $0x8] sm:$0xff] %vm2310, %v2265
      %2313 = vst.msk [vmem:[#allocation3 + $0x10] sm:$0xff] %vm2310, %v2267
      %2314 = vst.msk [vmem:[#allocation3 + $0x18] sm:$0xff] %vm2310, %v2269
      %2315 = vst.msk [vmem:[#allocation3 + $0x20] sm:$0xff] %vm2310, %v2271
      %2316 = vst.msk [vmem:[#allocation3 + $0x28] sm:$0xff] %vm2310, %v2273
      %2317 = vst.msk [vmem:[#allocation3 + $0x30] sm:$0xff] %vm2310, %v2275
      %2318 = vst.msk [vmem:[#allocation3 + $0x38] sm:$0xff] %vm2310, %v2277
      %2319 = vst.msk [vmem:[#allocation3 + $0x40] sm:$0xff] %vm2310, %v2279
      %2320 = vst.msk [vmem:[#allocation3 + $0x48] sm:$0xff] %vm2310, %v2281
      %2321 = vst.msk [vmem:[#allocation3 + $0x50] sm:$0xff] %vm2310, %v2283
      %2322 = vst.msk [vmem:[#allocation3 + $0x58] sm:$0xff] %vm2310, %v2285
      %2323 = vst.msk [vmem:[#allocation3 + $0x60] sm:$0xff] %vm2310, %v2287
      %2324 = vst.msk [vmem:[#allocation3 + $0x68] sm:$0xff] %vm2310, %v2289
      %2325 = vst.msk [vmem:[#allocation3 + $0x70] sm:$0xff] %vm2310, %v2291
      %2326 = vst.msk [vmem:[#allocation3 + $0x78] sm:$0xff] %vm2310, %v2293
      %v2327 = vld [vmem:[%s731] sm:$0xe]
      %v2328 = vld [vmem:[%s731 + $0x4] sm:$0xf]
      %v2329 = vld [vmem:[%s731 + $0x8] sm:$0x1]
      %v2330 = vld [vmem:[%s731 + $0xc] sm:$0xe]
      %v2331 = vld [vmem:[%s731 + $0x10] sm:$0xf]
      %v2332 = vld [vmem:[%s731 + $0x14] sm:$0x1]
      %v2333 = vld [vmem:[%s731 + $0x18] sm:$0xe]
      %v2334 = vld [vmem:[%s731 + $0x1c] sm:$0xf]
      %v2335 = vld [vmem:[%s731 + $0x20] sm:$0x1]
      %v2336 = vld [vmem:[%s731 + $0x24] sm:$0xe]
      %v2337 = vld [vmem:[%s731 + $0x28] sm:$0xf]
      %v2338 = vld [vmem:[%s731 + $0x2c] sm:$0x1]
      %v2339 = vld [vmem:[%s731 + $0x30] sm:$0xe]
      %v2340 = vld [vmem:[%s731 + $0x34] sm:$0xf]
      %v2341 = vld [vmem:[%s731 + $0x38] sm:$0x1]
      %v2342 = vld [vmem:[%s731 + $0x3c] sm:$0xe]
      %v2343 = vld [vmem:[%s731 + $0x40] sm:$0xf]
      %v2344 = vld [vmem:[%s731 + $0x44] sm:$0x1]
      %v2345 = vld [vmem:[%s731 + $0x48] sm:$0xe]
      %v2346 = vld [vmem:[%s731 + $0x4c] sm:$0xf]
      %v2347 = vld [vmem:[%s731 + $0x50] sm:$0x1]
      %v2348 = vld [vmem:[%s731 + $0x54] sm:$0xe]
      %v2349 = vld [vmem:[%s731 + $0x58] sm:$0xf]
      %v2350 = vld [vmem:[%s731 + $0x5c] sm:$0x1]
      %v2351 = vld [vmem:[%s731 + $0x60] sm:$0xe]
      %v2352 = vld [vmem:[%s731 + $0x64] sm:$0xf]
      %v2353 = vld [vmem:[%s731 + $0x68] sm:$0x1]
      %v2354 = vld [vmem:[%s731 + $0x6c] sm:$0xe]
      %v2355 = vld [vmem:[%s731 + $0x70] sm:$0xf]
      %v2356 = vld [vmem:[%s731 + $0x74] sm:$0x1]
      %v2357 = vld [vmem:[%s731 + $0x78] sm:$0xe]
      %v2358 = vld [vmem:[%s731 + $0x7c] sm:$0xf]
      %v2359 = vld [vmem:[%s731 + $0x80] sm:$0x1]
      %v2360 = vld [vmem:[%s731 + $0x84] sm:$0xe]
      %v2361 = vld [vmem:[%s731 + $0x88] sm:$0xf]
      %v2362 = vld [vmem:[%s731 + $0x8c] sm:$0x1]
      %v2363 = vld [vmem:[%s731 + $0x90] sm:$0xe]
      %v2364 = vld [vmem:[%s731 + $0x94] sm:$0xf]
      %v2365 = vld [vmem:[%s731 + $0x98] sm:$0x1]
      %v2366 = vld [vmem:[%s731 + $0x9c] sm:$0xe]
      %v2367 = vld [vmem:[%s731 + $0xa0] sm:$0xf]
      %v2368 = vld [vmem:[%s731 + $0xa4] sm:$0x1]
      %v2369 = vld [vmem:[%s731 + $0xa8] sm:$0xe]
      %v2370 = vld [vmem:[%s731 + $0xac] sm:$0xf]
      %v2371 = vld [vmem:[%s731 + $0xb0] sm:$0x1]
      %v2372 = vld [vmem:[%s731 + $0xb4] sm:$0xe]
      %v2373 = vld [vmem:[%s731 + $0xb8] sm:$0xf]
      %v2374 = vld [vmem:[%s731 + $0xbc] sm:$0x1]
      %v2423 = vunpack.c.l.b16 %v2327
      %v2424 = vunpack.c.l.b16 %v2328
      %v2425 = vunpack.c.l.b16 %v2329
      %v2426 = vunpack.c.l.b16 %v2330
      %v2427 = vunpack.c.l.b16 %v2331
      %v2428 = vunpack.c.l.b16 %v2332
      %v2429 = vunpack.c.l.b16 %v2333
      %v2430 = vunpack.c.l.b16 %v2334
      %v2431 = vunpack.c.l.b16 %v2335
      %v2432 = vunpack.c.l.b16 %v2336
      %v2433 = vunpack.c.l.b16 %v2337
      %v2434 = vunpack.c.l.b16 %v2338
      %v2435 = vunpack.c.l.b16 %v2339
      %v2436 = vunpack.c.l.b16 %v2340
      %v2437 = vunpack.c.l.b16 %v2341
      %v2438 = vunpack.c.l.b16 %v2342
      %v2439 = vunpack.c.l.b16 %v2343
      %v2440 = vunpack.c.l.b16 %v2344
      %v2441 = vunpack.c.l.b16 %v2345
      %v2442 = vunpack.c.l.b16 %v2346
      %v2443 = vunpack.c.l.b16 %v2347
      %v2444 = vunpack.c.l.b16 %v2348
      %v2445 = vunpack.c.l.b16 %v2349
      %v2446 = vunpack.c.l.b16 %v2350
      %v2447 = vunpack.c.l.b16 %v2351
      %v2448 = vunpack.c.l.b16 %v2352
      %v2449 = vunpack.c.l.b16 %v2353
      %v2450 = vunpack.c.l.b16 %v2354
      %v2451 = vunpack.c.l.b16 %v2355
      %v2452 = vunpack.c.l.b16 %v2356
      %v2453 = vunpack.c.l.b16 %v2357
      %v2454 = vunpack.c.l.b16 %v2358
      %v2455 = vunpack.c.l.b16 %v2359
      %v2456 = vunpack.c.l.b16 %v2360
      %v2457 = vunpack.c.l.b16 %v2361
      %v2458 = vunpack.c.l.b16 %v2362
      %v2459 = vunpack.c.l.b16 %v2363
      %v2460 = vunpack.c.l.b16 %v2364
      %v2461 = vunpack.c.l.b16 %v2365
      %v2462 = vunpack.c.l.b16 %v2366
      %v2463 = vunpack.c.l.b16 %v2367
      %v2464 = vunpack.c.l.b16 %v2368
      %v2465 = vunpack.c.l.b16 %v2369
      %v2466 = vunpack.c.l.b16 %v2370
      %v2467 = vunpack.c.l.b16 %v2371
      %v2468 = vunpack.c.l.b16 %v2372
      %v2469 = vunpack.c.l.b16 %v2373
      %v2470 = vunpack.c.l.b16 %v2374
      %v2471 = vpack.c.b16 %v2424, %v2423
      %v2472 = vpack.c.b16 %v2425, %v2425
      %v2473 = vpack.c.b16 %v2427, %v2426
      %v2474 = vpack.c.b16 %v2428, %v2428
      %v2475 = vpack.c.b16 %v2430, %v2429
      %v2476 = vpack.c.b16 %v2431, %v2431
      %v2477 = vpack.c.b16 %v2433, %v2432
      %v2478 = vpack.c.b16 %v2434, %v2434
      %v2479 = vpack.c.b16 %v2436, %v2435
      %v2480 = vpack.c.b16 %v2437, %v2437
      %v2481 = vpack.c.b16 %v2439, %v2438
      %v2482 = vpack.c.b16 %v2440, %v2440
      %v2483 = vpack.c.b16 %v2442, %v2441
      %v2484 = vpack.c.b16 %v2443, %v2443
      %v2485 = vpack.c.b16 %v2445, %v2444
      %v2486 = vpack.c.b16 %v2446, %v2446
      %v2487 = vpack.c.b16 %v2448, %v2447
      %v2488 = vpack.c.b16 %v2449, %v2449
      %v2489 = vpack.c.b16 %v2451, %v2450
      %v2490 = vpack.c.b16 %v2452, %v2452
      %v2491 = vpack.c.b16 %v2454, %v2453
      %v2492 = vpack.c.b16 %v2455, %v2455
      %v2493 = vpack.c.b16 %v2457, %v2456
      %v2494 = vpack.c.b16 %v2458, %v2458
      %v2495 = vpack.c.b16 %v2460, %v2459
      %v2496 = vpack.c.b16 %v2461, %v2461
      %v2497 = vpack.c.b16 %v2463, %v2462
      %v2498 = vpack.c.b16 %v2464, %v2464
      %v2499 = vpack.c.b16 %v2466, %v2465
      %v2500 = vpack.c.b16 %v2467, %v2467
      %v2501 = vpack.c.b16 %v2469, %v2468
      %v2502 = vpack.c.b16 %v2470, %v2470
      %v2503 = vrot.slane %v2471, 1
      %v2504 = vrot.slane %v2472, 1
      %v2505 = vsel %vm1603, %v2503, %v2504
      %v2506 = vrot.slane %v2473, 1
      %v2507 = vrot.slane %v2474, 1
      %v2508 = vsel %vm1603, %v2506, %v2507
      %v2509 = vrot.slane %v2475, 1
      %v2510 = vrot.slane %v2476, 1
      %v2511 = vsel %vm1603, %v2509, %v2510
      %v2512 = vrot.slane %v2477, 1
      %v2513 = vrot.slane %v2478, 1
      %v2514 = vsel %vm1603, %v2512, %v2513
      %v2515 = vrot.slane %v2479, 1
      %v2516 = vrot.slane %v2480, 1
      %v2517 = vsel %vm1603, %v2515, %v2516
      %v2518 = vrot.slane %v2481, 1
      %v2519 = vrot.slane %v2482, 1
      %v2520 = vsel %vm1603, %v2518, %v2519
      %v2521 = vrot.slane %v2483, 1
      %v2522 = vrot.slane %v2484, 1
      %v2523 = vsel %vm1603, %v2521, %v2522
      %v2524 = vrot.slane %v2485, 1
      %v2525 = vrot.slane %v2486, 1
      %v2526 = vsel %vm1603, %v2524, %v2525
      %v2527 = vrot.slane %v2487, 1
      %v2528 = vrot.slane %v2488, 1
      %v2529 = vsel %vm1603, %v2527, %v2528
      %v2530 = vrot.slane %v2489, 1
      %v2531 = vrot.slane %v2490, 1
      %v2532 = vsel %vm1603, %v2530, %v2531
      %v2533 = vrot.slane %v2491, 1
      %v2534 = vrot.slane %v2492, 1
      %v2535 = vsel %vm1603, %v2533, %v2534
      %v2536 = vrot.slane %v2493, 1
      %v2537 = vrot.slane %v2494, 1
      %v2538 = vsel %vm1603, %v2536, %v2537
      %v2539 = vrot.slane %v2495, 1
      %v2540 = vrot.slane %v2496, 1
      %v2541 = vsel %vm1603, %v2539, %v2540
      %v2542 = vrot.slane %v2497, 1
      %v2543 = vrot.slane %v2498, 1
      %v2544 = vsel %vm1603, %v2542, %v2543
      %v2545 = vrot.slane %v2499, 1
      %v2546 = vrot.slane %v2500, 1
      %v2547 = vsel %vm1603, %v2545, %v2546
      %v2548 = vrot.slane %v2501, 1
      %v2549 = vrot.slane %v2502, 1
      %v2550 = vsel %vm1603, %v2548, %v2549
      %2551 = vrot.lane.b32.xlu0 %v2505, 40
      %v2552 = vpop.permute.xlu0 %2551
      %2553 = vrot.lane.b32.xlu0 %v2508, 40
      %v2554 = vpop.permute.xlu0 %2553
      %2555 = vrot.lane.b32.xlu0 %v2511, 40
      %v2556 = vpop.permute.xlu0 %2555
      %2557 = vrot.lane.b32.xlu0 %v2514, 40
      %v2558 = vpop.permute.xlu0 %2557
      %2559 = vrot.lane.b32.xlu0 %v2517, 40
      %v2560 = vpop.permute.xlu0 %2559
      %2561 = vrot.lane.b32.xlu0 %v2520, 40
      %v2562 = vpop.permute.xlu0 %2561
      %2563 = vrot.lane.b32.xlu0 %v2523, 40
      %v2564 = vpop.permute.xlu0 %2563
      %2565 = vrot.lane.b32.xlu0 %v2526, 40
      %v2566 = vpop.permute.xlu0 %2565
      %2567 = vrot.lane.b32.xlu0 %v2529, 40
      %v2568 = vpop.permute.xlu0 %2567
      %2569 = vrot.lane.b32.xlu0 %v2532, 40
      %v2570 = vpop.permute.xlu0 %2569
      %2571 = vrot.lane.b32.xlu0 %v2535, 40
      %v2572 = vpop.permute.xlu0 %2571
      %2573 = vrot.lane.b32.xlu0 %v2538, 40
      %v2574 = vpop.permute.xlu0 %2573
      %2575 = vrot.lane.b32.xlu0 %v2541, 40
      %v2576 = vpop.permute.xlu0 %2575
      %2577 = vrot.lane.b32.xlu0 %v2544, 40
      %v2578 = vpop.permute.xlu0 %2577
      %2579 = vrot.lane.b32.xlu0 %v2547, 40
      %v2580 = vpop.permute.xlu0 %2579
      %2581 = vrot.lane.b32.xlu0 %v2550, 40
      %v2582 = vpop.permute.xlu0 %2581
      %vm2599 = vcmask 392512
      %2600 = vst.msk [vmem:[#allocation3] sm:$0xff] %vm2599, %v2552
      %2601 = vst.msk [vmem:[#allocation3 + $0x8] sm:$0xff] %vm2599, %v2554
      %2602 = vst.msk [vmem:[#allocation3 + $0x10] sm:$0xff] %vm2599, %v2556
      %2603 = vst.msk [vmem:[#allocation3 + $0x18] sm:$0xff] %vm2599, %v2558
      %2604 = vst.msk [vmem:[#allocation3 + $0x20] sm:$0xff] %vm2599, %v2560
      %2605 = vst.msk [vmem:[#allocation3 + $0x28] sm:$0xff] %vm2599, %v2562
      %2606 = vst.msk [vmem:[#allocation3 + $0x30] sm:$0xff] %vm2599, %v2564
      %2607 = vst.msk [vmem:[#allocation3 + $0x38] sm:$0xff] %vm2599, %v2566
      %2608 = vst.msk [vmem:[#allocation3 + $0x40] sm:$0xff] %vm2599, %v2568
      %2609 = vst.msk [vmem:[#allocation3 + $0x48] sm:$0xff] %vm2599, %v2570
      %2610 = vst.msk [vmem:[#allocation3 + $0x50] sm:$0xff] %vm2599, %v2572
      %2611 = vst.msk [vmem:[#allocation3 + $0x58] sm:$0xff] %vm2599, %v2574
      %2612 = vst.msk [vmem:[#allocation3 + $0x60] sm:$0xff] %vm2599, %v2576
      %2613 = vst.msk [vmem:[#allocation3 + $0x68] sm:$0xff] %vm2599, %v2578
      %2614 = vst.msk [vmem:[#allocation3 + $0x70] sm:$0xff] %vm2599, %v2580
      %2615 = vst.msk [vmem:[#allocation3 + $0x78] sm:$0xff] %vm2599, %v2582
      %s2616 = scalar_lea.vmem [#allocation2], 24
      %v2617 = vld [vmem:[%s2616] sm:$0xf]
      %v2618 = vld [vmem:[%s2616 + $0x4] sm:$0xf]
      %v2619 = vld [vmem:[%s2616 + $0xc] sm:$0xf]
      %v2620 = vld [vmem:[%s2616 + $0x10] sm:$0xf]
      %v2621 = vld [vmem:[%s2616 + $0x18] sm:$0xf]
      %v2622 = vld [vmem:[%s2616 + $0x1c] sm:$0xf]
      %v2623 = vld [vmem:[%s2616 + $0x24] sm:$0xf]
      %v2624 = vld [vmem:[%s2616 + $0x28] sm:$0xf]
      %v2625 = vld [vmem:[%s2616 + $0x30] sm:$0xf]
      %v2626 = vld [vmem:[%s2616 + $0x34] sm:$0xf]
      %v2627 = vld [vmem:[%s2616 + $0x3c] sm:$0xf]
      %v2628 = vld [vmem:[%s2616 + $0x40] sm:$0xf]
      %v2629 = vld [vmem:[%s2616 + $0x48] sm:$0xf]
      %v2630 = vld [vmem:[%s2616 + $0x4c] sm:$0xf]
      %v2631 = vld [vmem:[%s2616 + $0x54] sm:$0xf]
      %v2632 = vld [vmem:[%s2616 + $0x58] sm:$0xf]
      %v2633 = vld [vmem:[%s2616 + $0x60] sm:$0xf]
      %v2634 = vld [vmem:[%s2616 + $0x64] sm:$0xf]
      %v2635 = vld [vmem:[%s2616 + $0x6c] sm:$0xf]
      %v2636 = vld [vmem:[%s2616 + $0x70] sm:$0xf]
      %v2637 = vld [vmem:[%s2616 + $0x78] sm:$0xf]
      %v2638 = vld [vmem:[%s2616 + $0x7c] sm:$0xf]
      %v2639 = vld [vmem:[%s2616 + $0x84] sm:$0xf]
      %v2640 = vld [vmem:[%s2616 + $0x88] sm:$0xf]
      %v2641 = vld [vmem:[%s2616 + $0x90] sm:$0xf]
      %v2642 = vld [vmem:[%s2616 + $0x94] sm:$0xf]
      %v2643 = vld [vmem:[%s2616 + $0x9c] sm:$0xf]
      %v2644 = vld [vmem:[%s2616 + $0xa0] sm:$0xf]
      %v2645 = vld [vmem:[%s2616 + $0xa8] sm:$0xf]
      %v2646 = vld [vmem:[%s2616 + $0xac] sm:$0xf]
      %v2647 = vld [vmem:[%s2616 + $0xb4] sm:$0xf]
      %v2648 = vld [vmem:[%s2616 + $0xb8] sm:$0xf]
      %v2681 = vunpack.c.l.b16 %v2617
      %v2682 = vunpack.c.l.b16 %v2618
      %v2683 = vunpack.c.l.b16 %v2619
      %v2684 = vunpack.c.l.b16 %v2620
      %v2685 = vunpack.c.l.b16 %v2621
      %v2686 = vunpack.c.l.b16 %v2622
      %v2687 = vunpack.c.l.b16 %v2623
      %v2688 = vunpack.c.l.b16 %v2624
      %v2689 = vunpack.c.l.b16 %v2625
      %v2690 = vunpack.c.l.b16 %v2626
      %v2691 = vunpack.c.l.b16 %v2627
      %v2692 = vunpack.c.l.b16 %v2628
      %v2693 = vunpack.c.l.b16 %v2629
      %v2694 = vunpack.c.l.b16 %v2630
      %v2695 = vunpack.c.l.b16 %v2631
      %v2696 = vunpack.c.l.b16 %v2632
      %v2697 = vunpack.c.l.b16 %v2633
      %v2698 = vunpack.c.l.b16 %v2634
      %v2699 = vunpack.c.l.b16 %v2635
      %v2700 = vunpack.c.l.b16 %v2636
      %v2701 = vunpack.c.l.b16 %v2637
      %v2702 = vunpack.c.l.b16 %v2638
      %v2703 = vunpack.c.l.b16 %v2639
      %v2704 = vunpack.c.l.b16 %v2640
      %v2705 = vunpack.c.l.b16 %v2641
      %v2706 = vunpack.c.l.b16 %v2642
      %v2707 = vunpack.c.l.b16 %v2643
      %v2708 = vunpack.c.l.b16 %v2644
      %v2709 = vunpack.c.l.b16 %v2645
      %v2710 = vunpack.c.l.b16 %v2646
      %v2711 = vunpack.c.l.b16 %v2647
      %v2712 = vunpack.c.l.b16 %v2648
      %v2713 = vpack.c.b16 %v2682, %v2681
      %v2714 = vpack.c.b16 %v2684, %v2683
      %v2715 = vpack.c.b16 %v2686, %v2685
      %v2716 = vpack.c.b16 %v2688, %v2687
      %v2717 = vpack.c.b16 %v2690, %v2689
      %v2718 = vpack.c.b16 %v2692, %v2691
      %v2719 = vpack.c.b16 %v2694, %v2693
      %v2720 = vpack.c.b16 %v2696, %v2695
      %v2721 = vpack.c.b16 %v2698, %v2697
      %v2722 = vpack.c.b16 %v2700, %v2699
      %v2723 = vpack.c.b16 %v2702, %v2701
      %v2724 = vpack.c.b16 %v2704, %v2703
      %v2725 = vpack.c.b16 %v2706, %v2705
      %v2726 = vpack.c.b16 %v2708, %v2707
      %v2727 = vpack.c.b16 %v2710, %v2709
      %v2728 = vpack.c.b16 %v2712, %v2711
      %2729 = vrot.lane.b32.xlu0 %v2713, 48
      %v2730 = vpop.permute.xlu0 %2729
      %2731 = vrot.lane.b32.xlu0 %v2714, 48
      %v2732 = vpop.permute.xlu0 %2731
      %2733 = vrot.lane.b32.xlu0 %v2715, 48
      %v2734 = vpop.permute.xlu0 %2733
      %2735 = vrot.lane.b32.xlu0 %v2716, 48
      %v2736 = vpop.permute.xlu0 %2735
      %2737 = vrot.lane.b32.xlu0 %v2717, 48
      %v2738 = vpop.permute.xlu0 %2737
      %2739 = vrot.lane.b32.xlu0 %v2718, 48
      %v2740 = vpop.permute.xlu0 %2739
      %2741 = vrot.lane.b32.xlu0 %v2719, 48
      %v2742 = vpop.permute.xlu0 %2741
      %2743 = vrot.lane.b32.xlu0 %v2720, 48
      %v2744 = vpop.permute.xlu0 %2743
      %2745 = vrot.lane.b32.xlu0 %v2721, 48
      %v2746 = vpop.permute.xlu0 %2745
      %2747 = vrot.lane.b32.xlu0 %v2722, 48
      %v2748 = vpop.permute.xlu0 %2747
      %2749 = vrot.lane.b32.xlu0 %v2723, 48
      %v2750 = vpop.permute.xlu0 %2749
      %2751 = vrot.lane.b32.xlu0 %v2724, 48
      %v2752 = vpop.permute.xlu0 %2751
      %2753 = vrot.lane.b32.xlu0 %v2725, 48
      %v2754 = vpop.permute.xlu0 %2753
      %2755 = vrot.lane.b32.xlu0 %v2726, 48
      %v2756 = vpop.permute.xlu0 %2755
      %2757 = vrot.lane.b32.xlu0 %v2727, 48
      %v2758 = vpop.permute.xlu0 %2757
      %2759 = vrot.lane.b32.xlu0 %v2728, 48
      %v2760 = vpop.permute.xlu0 %2759
      %vm2777 = vcmask 458112
      %2778 = vst.msk [vmem:[#allocation3] sm:$0xff] %vm2777, %v2730
      %2779 = vst.msk [vmem:[#allocation3 + $0x8] sm:$0xff] %vm2777, %v2732
      %2780 = vst.msk [vmem:[#allocation3 + $0x10] sm:$0xff] %vm2777, %v2734
      %2781 = vst.msk [vmem:[#allocation3 + $0x18] sm:$0xff] %vm2777, %v2736
      %2782 = vst.msk [vmem:[#allocation3 + $0x20] sm:$0xff] %vm2777, %v2738
      %2783 = vst.msk [vmem:[#allocation3 + $0x28] sm:$0xff] %vm2777, %v2740
      %2784 = vst.msk [vmem:[#allocation3 + $0x30] sm:$0xff] %vm2777, %v2742
      %2785 = vst.msk [vmem:[#allocation3 + $0x38] sm:$0xff] %vm2777, %v2744
      %2786 = vst.msk [vmem:[#allocation3 + $0x40] sm:$0xff] %vm2777, %v2746
      %2787 = vst.msk [vmem:[#allocation3 + $0x48] sm:$0xff] %vm2777, %v2748
      %2788 = vst.msk [vmem:[#allocation3 + $0x50] sm:$0xff] %vm2777, %v2750
      %2789 = vst.msk [vmem:[#allocation3 + $0x58] sm:$0xff] %vm2777, %v2752
      %2790 = vst.msk [vmem:[#allocation3 + $0x60] sm:$0xff] %vm2777, %v2754
      %2791 = vst.msk [vmem:[#allocation3 + $0x68] sm:$0xff] %vm2777, %v2756
      %2792 = vst.msk [vmem:[#allocation3 + $0x70] sm:$0xff] %vm2777, %v2758
      %2793 = vst.msk [vmem:[#allocation3 + $0x78] sm:$0xff] %vm2777, %v2760
      %v2794 = vld [vmem:[%s2616] sm:$0xf]
      %v2795 = vld [vmem:[%s2616 + $0x4] sm:$0xf]
      %v2796 = vld [vmem:[%s2616 + $0x8] sm:$0x1]
      %v2797 = vld [vmem:[%s2616 + $0xc] sm:$0xf]
      %v2798 = vld [vmem:[%s2616 + $0x10] sm:$0xf]
      %v2799 = vld [vmem:[%s2616 + $0x14] sm:$0x1]
      %v2800 = vld [vmem:[%s2616 + $0x18] sm:$0xf]
      %v2801 = vld [vmem:[%s2616 + $0x1c] sm:$0xf]
      %v2802 = vld [vmem:[%s2616 + $0x20] sm:$0x1]
      %v2803 = vld [vmem:[%s2616 + $0x24] sm:$0xf]
      %v2804 = vld [vmem:[%s2616 + $0x28] sm:$0xf]
      %v2805 = vld [vmem:[%s2616 + $0x2c] sm:$0x1]
      %v2806 = vld [vmem:[%s2616 + $0x30] sm:$0xf]
      %v2807 = vld [vmem:[%s2616 + $0x34] sm:$0xf]
      %v2808 = vld [vmem:[%s2616 + $0x38] sm:$0x1]
      %v2809 = vld [vmem:[%s2616 + $0x3c] sm:$0xf]
      %v2810 = vld [vmem:[%s2616 + $0x40] sm:$0xf]
      %v2811 = vld [vmem:[%s2616 + $0x44] sm:$0x1]
      %v2812 = vld [vmem:[%s2616 + $0x48] sm:$0xf]
      %v2813 = vld [vmem:[%s2616 + $0x4c] sm:$0xf]
      %v2814 = vld [vmem:[%s2616 + $0x50] sm:$0x1]
      %v2815 = vld [vmem:[%s2616 + $0x54] sm:$0xf]
      %v2816 = vld [vmem:[%s2616 + $0x58] sm:$0xf]
      %v2817 = vld [vmem:[%s2616 + $0x5c] sm:$0x1]
      %v2818 = vld [vmem:[%s2616 + $0x60] sm:$0xf]
      %v2819 = vld [vmem:[%s2616 + $0x64] sm:$0xf]
      %v2820 = vld [vmem:[%s2616 + $0x68] sm:$0x1]
      %v2821 = vld [vmem:[%s2616 + $0x6c] sm:$0xf]
      %v2822 = vld [vmem:[%s2616 + $0x70] sm:$0xf]
      %v2823 = vld [vmem:[%s2616 + $0x74] sm:$0x1]
      %v2824 = vld [vmem:[%s2616 + $0x78] sm:$0xf]
      %v2825 = vld [vmem:[%s2616 + $0x7c] sm:$0xf]
      %v2826 = vld [vmem:[%s2616 + $0x80] sm:$0x1]
      %v2827 = vld [vmem:[%s2616 + $0x84] sm:$0xf]
      %v2828 = vld [vmem:[%s2616 + $0x88] sm:$0xf]
      %v2829 = vld [vmem:[%s2616 + $0x8c] sm:$0x1]
      %v2830 = vld [vmem:[%s2616 + $0x90] sm:$0xf]
      %v2831 = vld [vmem:[%s2616 + $0x94] sm:$0xf]
      %v2832 = vld [vmem:[%s2616 + $0x98] sm:$0x1]
      %v2833 = vld [vmem:[%s2616 + $0x9c] sm:$0xf]
      %v2834 = vld [vmem:[%s2616 + $0xa0] sm:$0xf]
      %v2835 = vld [vmem:[%s2616 + $0xa4] sm:$0x1]
      %v2836 = vld [vmem:[%s2616 + $0xa8] sm:$0xf]
      %v2837 = vld [vmem:[%s2616 + $0xac] sm:$0xf]
      %v2838 = vld [vmem:[%s2616 + $0xb0] sm:$0x1]
      %v2839 = vld [vmem:[%s2616 + $0xb4] sm:$0xf]
      %v2840 = vld [vmem:[%s2616 + $0xb8] sm:$0xf]
      %v2841 = vld [vmem:[%s2616 + $0xbc] sm:$0x1]
      %v2890 = vunpack.c.l.b16 %v2794
      %v2891 = vunpack.c.l.b16 %v2795
      %v2892 = vunpack.c.l.b16 %v2796
      %v2893 = vunpack.c.l.b16 %v2797
      %v2894 = vunpack.c.l.b16 %v2798
      %v2895 = vunpack.c.l.b16 %v2799
      %v2896 = vunpack.c.l.b16 %v2800
      %v2897 = vunpack.c.l.b16 %v2801
      %v2898 = vunpack.c.l.b16 %v2802
      %v2899 = vunpack.c.l.b16 %v2803
      %v2900 = vunpack.c.l.b16 %v2804
      %v2901 = vunpack.c.l.b16 %v2805
      %v2902 = vunpack.c.l.b16 %v2806
      %v2903 = vunpack.c.l.b16 %v2807
      %v2904 = vunpack.c.l.b16 %v2808
      %v2905 = vunpack.c.l.b16 %v2809
      %v2906 = vunpack.c.l.b16 %v2810
      %v2907 = vunpack.c.l.b16 %v2811
      %v2908 = vunpack.c.l.b16 %v2812
      %v2909 = vunpack.c.l.b16 %v2813
      %v2910 = vunpack.c.l.b16 %v2814
      %v2911 = vunpack.c.l.b16 %v2815
      %v2912 = vunpack.c.l.b16 %v2816
      %v2913 = vunpack.c.l.b16 %v2817
      %v2914 = vunpack.c.l.b16 %v2818
      %v2915 = vunpack.c.l.b16 %v2819
      %v2916 = vunpack.c.l.b16 %v2820
      %v2917 = vunpack.c.l.b16 %v2821
      %v2918 = vunpack.c.l.b16 %v2822
      %v2919 = vunpack.c.l.b16 %v2823
      %v2920 = vunpack.c.l.b16 %v2824
      %v2921 = vunpack.c.l.b16 %v2825
      %v2922 = vunpack.c.l.b16 %v2826
      %v2923 = vunpack.c.l.b16 %v2827
      %v2924 = vunpack.c.l.b16 %v2828
      %v2925 = vunpack.c.l.b16 %v2829
      %v2926 = vunpack.c.l.b16 %v2830
      %v2927 = vunpack.c.l.b16 %v2831
      %v2928 = vunpack.c.l.b16 %v2832
      %v2929 = vunpack.c.l.b16 %v2833
      %v2930 = vunpack.c.l.b16 %v2834
      %v2931 = vunpack.c.l.b16 %v2835
      %v2932 = vunpack.c.l.b16 %v2836
      %v2933 = vunpack.c.l.b16 %v2837
      %v2934 = vunpack.c.l.b16 %v2838
      %v2935 = vunpack.c.l.b16 %v2839
      %v2936 = vunpack.c.l.b16 %v2840
      %v2937 = vunpack.c.l.b16 %v2841
      %v2938 = vpack.c.b16 %v2891, %v2890
      %v2939 = vpack.c.b16 %v2892, %v2892
      %v2940 = vpack.c.b16 %v2894, %v2893
      %v2941 = vpack.c.b16 %v2895, %v2895
      %v2942 = vpack.c.b16 %v2897, %v2896
      %v2943 = vpack.c.b16 %v2898, %v2898
      %v2944 = vpack.c.b16 %v2900, %v2899
      %v2945 = vpack.c.b16 %v2901, %v2901
      %v2946 = vpack.c.b16 %v2903, %v2902
      %v2947 = vpack.c.b16 %v2904, %v2904
      %v2948 = vpack.c.b16 %v2906, %v2905
      %v2949 = vpack.c.b16 %v2907, %v2907
      %v2950 = vpack.c.b16 %v2909, %v2908
      %v2951 = vpack.c.b16 %v2910, %v2910
      %v2952 = vpack.c.b16 %v2912, %v2911
      %v2953 = vpack.c.b16 %v2913, %v2913
      %v2954 = vpack.c.b16 %v2915, %v2914
      %v2955 = vpack.c.b16 %v2916, %v2916
      %v2956 = vpack.c.b16 %v2918, %v2917
      %v2957 = vpack.c.b16 %v2919, %v2919
      %v2958 = vpack.c.b16 %v2921, %v2920
      %v2959 = vpack.c.b16 %v2922, %v2922
      %v2960 = vpack.c.b16 %v2924, %v2923
      %v2961 = vpack.c.b16 %v2925, %v2925
      %v2962 = vpack.c.b16 %v2927, %v2926
      %v2963 = vpack.c.b16 %v2928, %v2928
      %v2964 = vpack.c.b16 %v2930, %v2929
      %v2965 = vpack.c.b16 %v2931, %v2931
      %v2966 = vpack.c.b16 %v2933, %v2932
      %v2967 = vpack.c.b16 %v2934, %v2934
      %v2968 = vpack.c.b16 %v2936, %v2935
      %v2969 = vpack.c.b16 %v2937, %v2937
      %v2971 = vshrl.u32 %v2938, 16
      %v2973 = vshll.u32 %v2938, 16
      %v2975 = vrot.slane %v2973, 1
      %v2976 = vor.u32 %v2971, %v2975
      %v2978 = vshll.u32 %v2939, 16
      %v2980 = vrot.slane %v2978, 1
      %v2981 = vsel %vm1169, %v2976, %v2980
      %v2983 = vshrl.u32 %v2940, 16
      %v2985 = vshll.u32 %v2940, 16
      %v2987 = vrot.slane %v2985, 1
      %v2988 = vor.u32 %v2983, %v2987
      %v2990 = vshll.u32 %v2941, 16
      %v2992 = vrot.slane %v2990, 1
      %v2993 = vsel %vm1169, %v2988, %v2992
      %v2995 = vshrl.u32 %v2942, 16
      %v2997 = vshll.u32 %v2942, 16
      %v2999 = vrot.slane %v2997, 1
      %v3000 = vor.u32 %v2995, %v2999
      %v3002 = vshll.u32 %v2943, 16
      %v3004 = vrot.slane %v3002, 1
      %v3005 = vsel %vm1169, %v3000, %v3004
      %v3007 = vshrl.u32 %v2944, 16
      %v3009 = vshll.u32 %v2944, 16
      %v3011 = vrot.slane %v3009, 1
      %v3012 = vor.u32 %v3007, %v3011
      %v3014 = vshll.u32 %v2945, 16
      %v3016 = vrot.slane %v3014, 1
      %v3017 = vsel %vm1169, %v3012, %v3016
      %v3019 = vshrl.u32 %v2946, 16
      %v3021 = vshll.u32 %v2946, 16
      %v3023 = vrot.slane %v3021, 1
      %v3024 = vor.u32 %v3019, %v3023
      %v3026 = vshll.u32 %v2947, 16
      %v3028 = vrot.slane %v3026, 1
      %v3029 = vsel %vm1169, %v3024, %v3028
      %v3031 = vshrl.u32 %v2948, 16
      %v3033 = vshll.u32 %v2948, 16
      %v3035 = vrot.slane %v3033, 1
      %v3036 = vor.u32 %v3031, %v3035
      %v3038 = vshll.u32 %v2949, 16
      %v3040 = vrot.slane %v3038, 1
      %v3041 = vsel %vm1169, %v3036, %v3040
      %v3043 = vshrl.u32 %v2950, 16
      %v3045 = vshll.u32 %v2950, 16
      %v3047 = vrot.slane %v3045, 1
      %v3048 = vor.u32 %v3043, %v3047
      %v3050 = vshll.u32 %v2951, 16
      %v3052 = vrot.slane %v3050, 1
      %v3053 = vsel %vm1169, %v3048, %v3052
      %v3055 = vshrl.u32 %v2952, 16
      %v3057 = vshll.u32 %v2952, 16
      %v3059 = vrot.slane %v3057, 1
      %v3060 = vor.u32 %v3055, %v3059
      %v3062 = vshll.u32 %v2953, 16
      %v3064 = vrot.slane %v3062, 1
      %v3065 = vsel %vm1169, %v3060, %v3064
      %v3067 = vshrl.u32 %v2954, 16
      %v3069 = vshll.u32 %v2954, 16
      %v3071 = vrot.slane %v3069, 1
      %v3072 = vor.u32 %v3067, %v3071
      %v3074 = vshll.u32 %v2955, 16
      %v3076 = vrot.slane %v3074, 1
      %v3077 = vsel %vm1169, %v3072, %v3076
      %v3079 = vshrl.u32 %v2956, 16
      %v3081 = vshll.u32 %v2956, 16
      %v3083 = vrot.slane %v3081, 1
      %v3084 = vor.u32 %v3079, %v3083
      %v3086 = vshll.u32 %v2957, 16
      %v3088 = vrot.slane %v3086, 1
      %v3089 = vsel %vm1169, %v3084, %v3088
      %v3091 = vshrl.u32 %v2958, 16
      %v3093 = vshll.u32 %v2958, 16
      %v3095 = vrot.slane %v3093, 1
      %v3096 = vor.u32 %v3091, %v3095
      %v3098 = vshll.u32 %v2959, 16
      %v3100 = vrot.slane %v3098, 1
      %v3101 = vsel %vm1169, %v3096, %v3100
      %v3103 = vshrl.u32 %v2960, 16
      %v3105 = vshll.u32 %v2960, 16
      %v3107 = vrot.slane %v3105, 1
      %v3108 = vor.u32 %v3103, %v3107
      %v3110 = vshll.u32 %v2961, 16
      %v3112 = vrot.slane %v3110, 1
      %v3113 = vsel %vm1169, %v3108, %v3112
      %v3115 = vshrl.u32 %v2962, 16
      %v3117 = vshll.u32 %v2962, 16
      %v3119 = vrot.slane %v3117, 1
      %v3120 = vor.u32 %v3115, %v3119
      %v3122 = vshll.u32 %v2963, 16
      %v3124 = vrot.slane %v3122, 1
      %v3125 = vsel %vm1169, %v3120, %v3124
      %v3127 = vshrl.u32 %v2964, 16
      %v3129 = vshll.u32 %v2964, 16
      %v3131 = vrot.slane %v3129, 1
      %v3132 = vor.u32 %v3127, %v3131
      %v3134 = vshll.u32 %v2965, 16
      %v3136 = vrot.slane %v3134, 1
      %v3137 = vsel %vm1169, %v3132, %v3136
      %v3139 = vshrl.u32 %v2966, 16
      %v3141 = vshll.u32 %v2966, 16
      %v3143 = vrot.slane %v3141, 1
      %v3144 = vor.u32 %v3139, %v3143
      %v3146 = vshll.u32 %v2967, 16
      %v3148 = vrot.slane %v3146, 1
      %v3149 = vsel %vm1169, %v3144, %v3148
      %v3151 = vshrl.u32 %v2968, 16
      %v3153 = vshll.u32 %v2968, 16
      %v3155 = vrot.slane %v3153, 1
      %v3156 = vor.u32 %v3151, %v3155
      %v3158 = vshll.u32 %v2969, 16
      %v3160 = vrot.slane %v3158, 1
      %v3161 = vsel %vm1169, %v3156, %v3160
      %3162 = vrot.lane.b32.xlu0 %v2981, 56
      %v3163 = vpop.permute.xlu0 %3162
      %3164 = vrot.lane.b32.xlu0 %v2993, 56
      %v3165 = vpop.permute.xlu0 %3164
      %3166 = vrot.lane.b32.xlu0 %v3005, 56
      %v3167 = vpop.permute.xlu0 %3166
      %3168 = vrot.lane.b32.xlu0 %v3017, 56
      %v3169 = vpop.permute.xlu0 %3168
      %3170 = vrot.lane.b32.xlu0 %v3029, 56
      %v3171 = vpop.permute.xlu0 %3170
      %3172 = vrot.lane.b32.xlu0 %v3041, 56
      %v3173 = vpop.permute.xlu0 %3172
      %3174 = vrot.lane.b32.xlu0 %v3053, 56
      %v3175 = vpop.permute.xlu0 %3174
      %3176 = vrot.lane.b32.xlu0 %v3065, 56
      %v3177 = vpop.permute.xlu0 %3176
      %3178 = vrot.lane.b32.xlu0 %v3077, 56
      %v3179 = vpop.permute.xlu0 %3178
      %3180 = vrot.lane.b32.xlu0 %v3089, 56
      %v3181 = vpop.permute.xlu0 %3180
      %3182 = vrot.lane.b32.xlu0 %v3101, 56
      %v3183 = vpop.permute.xlu0 %3182
      %3184 = vrot.lane.b32.xlu0 %v3113, 56
      %v3185 = vpop.permute.xlu0 %3184
      %3186 = vrot.lane.b32.xlu0 %v3125, 56
      %v3187 = vpop.permute.xlu0 %3186
      %3188 = vrot.lane.b32.xlu0 %v3137, 56
      %v3189 = vpop.permute.xlu0 %3188
      %3190 = vrot.lane.b32.xlu0 %v3149, 56
      %v3191 = vpop.permute.xlu0 %3190
      %3192 = vrot.lane.b32.xlu0 %v3161, 56
      %v3193 = vpop.permute.xlu0 %3192
      %vm3210 = vcmask 523712
      %3211 = vst.msk [vmem:[#allocation3] sm:$0xff] %vm3210, %v3163
      %3212 = vst.msk [vmem:[#allocation3 + $0x8] sm:$0xff] %vm3210, %v3165
      %3213 = vst.msk [vmem:[#allocation3 + $0x10] sm:$0xff] %vm3210, %v3167
      %3214 = vst.msk [vmem:[#allocation3 + $0x18] sm:$0xff] %vm3210, %v3169
      %3215 = vst.msk [vmem:[#allocation3 + $0x20] sm:$0xff] %vm3210, %v3171
      %3216 = vst.msk [vmem:[#allocation3 + $0x28] sm:$0xff] %vm3210, %v3173
      %3217 = vst.msk [vmem:[#allocation3 + $0x30] sm:$0xff] %vm3210, %v3175
      %3218 = vst.msk [vmem:[#allocation3 + $0x38] sm:$0xff] %vm3210, %v3177
      %3219 = vst.msk [vmem:[#allocation3 + $0x40] sm:$0xff] %vm3210, %v3179
      %3220 = vst.msk [vmem:[#allocation3 + $0x48] sm:$0xff] %vm3210, %v3181
      %3221 = vst.msk [vmem:[#allocation3 + $0x50] sm:$0xff] %vm3210, %v3183
      %3222 = vst.msk [vmem:[#allocation3 + $0x58] sm:$0xff] %vm3210, %v3185
      %3223 = vst.msk [vmem:[#allocation3 + $0x60] sm:$0xff] %vm3210, %v3187
      %3224 = vst.msk [vmem:[#allocation3 + $0x68] sm:$0xff] %vm3210, %v3189
      %3225 = vst.msk [vmem:[#allocation3 + $0x70] sm:$0xff] %vm3210, %v3191
      %3226 = vst.msk [vmem:[#allocation3 + $0x78] sm:$0xff] %vm3210, %v3193
      %v3227 = vld [vmem:[%s2616] sm:$0xe]
      %v3228 = vld [vmem:[%s2616 + $0x4] sm:$0xf]
      %v3229 = vld [vmem:[%s2616 + $0x8] sm:$0x1]
      %v3230 = vld [vmem:[%s2616 + $0xc] sm:$0xe]
      %v3231 = vld [vmem:[%s2616 + $0x10] sm:$0xf]
      %v3232 = vld [vmem:[%s2616 + $0x14] sm:$0x1]
      %v3233 = vld [vmem:[%s2616 + $0x18] sm:$0xe]
      %v3234 = vld [vmem:[%s2616 + $0x1c] sm:$0xf]
      %v3235 = vld [vmem:[%s2616 + $0x20] sm:$0x1]
      %v3236 = vld [vmem:[%s2616 + $0x24] sm:$0xe]
      %v3237 = vld [vmem:[%s2616 + $0x28] sm:$0xf]
      %v3238 = vld [vmem:[%s2616 + $0x2c] sm:$0x1]
      %v3239 = vld [vmem:[%s2616 + $0x30] sm:$0xe]
      %v3240 = vld [vmem:[%s2616 + $0x34] sm:$0xf]
      %v3241 = vld [vmem:[%s2616 + $0x38] sm:$0x1]
      %v3242 = vld [vmem:[%s2616 + $0x3c] sm:$0xe]
      %v3243 = vld [vmem:[%s2616 + $0x40] sm:$0xf]
      %v3244 = vld [vmem:[%s2616 + $0x44] sm:$0x1]
      %v3245 = vld [vmem:[%s2616 + $0x48] sm:$0xe]
      %v3246 = vld [vmem:[%s2616 + $0x4c] sm:$0xf]
      %v3247 = vld [vmem:[%s2616 + $0x50] sm:$0x1]
      %v3248 = vld [vmem:[%s2616 + $0x54] sm:$0xe]
      %v3249 = vld [vmem:[%s2616 + $0x58] sm:$0xf]
      %v3250 = vld [vmem:[%s2616 + $0x5c] sm:$0x1]
      %v3251 = vld [vmem:[%s2616 + $0x60] sm:$0xe]
      %v3252 = vld [vmem:[%s2616 + $0x64] sm:$0xf]
      %v3253 = vld [vmem:[%s2616 + $0x68] sm:$0x1]
      %v3254 = vld [vmem:[%s2616 + $0x6c] sm:$0xe]
      %v3255 = vld [vmem:[%s2616 + $0x70] sm:$0xf]
      %v3256 = vld [vmem:[%s2616 + $0x74] sm:$0x1]
      %v3257 = vld [vmem:[%s2616 + $0x78] sm:$0xe]
      %v3258 = vld [vmem:[%s2616 + $0x7c] sm:$0xf]
      %v3259 = vld [vmem:[%s2616 + $0x80] sm:$0x1]
      %v3260 = vld [vmem:[%s2616 + $0x84] sm:$0xe]
      %v3261 = vld [vmem:[%s2616 + $0x88] sm:$0xf]
      %v3262 = vld [vmem:[%s2616 + $0x8c] sm:$0x1]
      %v3263 = vld [vmem:[%s2616 + $0x90] sm:$0xe]
      %v3264 = vld [vmem:[%s2616 + $0x94] sm:$0xf]
      %v3265 = vld [vmem:[%s2616 + $0x98] sm:$0x1]
      %v3266 = vld [vmem:[%s2616 + $0x9c] sm:$0xe]
      %v3267 = vld [vmem:[%s2616 + $0xa0] sm:$0xf]
      %v3268 = vld [vmem:[%s2616 + $0xa4] sm:$0x1]
      %v3269 = vld [vmem:[%s2616 + $0xa8] sm:$0xe]
      %v3270 = vld [vmem:[%s2616 + $0xac] sm:$0xf]
      %v3271 = vld [vmem:[%s2616 + $0xb0] sm:$0x1]
      %v3272 = vld [vmem:[%s2616 + $0xb4] sm:$0xe]
      %v3273 = vld [vmem:[%s2616 + $0xb8] sm:$0xf]
      %v3274 = vld [vmem:[%s2616 + $0xbc] sm:$0x1]
      %v3323 = vunpack.c.l.b16 %v3227
      %v3324 = vunpack.c.l.b16 %v3228
      %v3325 = vunpack.c.l.b16 %v3229
      %v3326 = vunpack.c.l.b16 %v3230
      %v3327 = vunpack.c.l.b16 %v3231
      %v3328 = vunpack.c.l.b16 %v3232
      %v3329 = vunpack.c.l.b16 %v3233
      %v3330 = vunpack.c.l.b16 %v3234
      %v3331 = vunpack.c.l.b16 %v3235
      %v3332 = vunpack.c.l.b16 %v3236
      %v3333 = vunpack.c.l.b16 %v3237
      %v3334 = vunpack.c.l.b16 %v3238
      %v3335 = vunpack.c.l.b16 %v3239
      %v3336 = vunpack.c.l.b16 %v3240
      %v3337 = vunpack.c.l.b16 %v3241
      %v3338 = vunpack.c.l.b16 %v3242
      %v3339 = vunpack.c.l.b16 %v3243
      %v3340 = vunpack.c.l.b16 %v3244
      %v3341 = vunpack.c.l.b16 %v3245
      %v3342 = vunpack.c.l.b16 %v3246
      %v3343 = vunpack.c.l.b16 %v3247
      %v3344 = vunpack.c.l.b16 %v3248
      %v3345 = vunpack.c.l.b16 %v3249
      %v3346 = vunpack.c.l.b16 %v3250
      %v3347 = vunpack.c.l.b16 %v3251
      %v3348 = vunpack.c.l.b16 %v3252
      %v3349 = vunpack.c.l.b16 %v3253
      %v3350 = vunpack.c.l.b16 %v3254
      %v3351 = vunpack.c.l.b16 %v3255
      %v3352 = vunpack.c.l.b16 %v3256
      %v3353 = vunpack.c.l.b16 %v3257
      %v3354 = vunpack.c.l.b16 %v3258
      %v3355 = vunpack.c.l.b16 %v3259
      %v3356 = vunpack.c.l.b16 %v3260
      %v3357 = vunpack.c.l.b16 %v3261
      %v3358 = vunpack.c.l.b16 %v3262
      %v3359 = vunpack.c.l.b16 %v3263
      %v3360 = vunpack.c.l.b16 %v3264
      %v3361 = vunpack.c.l.b16 %v3265
      %v3362 = vunpack.c.l.b16 %v3266
      %v3363 = vunpack.c.l.b16 %v3267
      %v3364 = vunpack.c.l.b16 %v3268
      %v3365 = vunpack.c.l.b16 %v3269
      %v3366 = vunpack.c.l.b16 %v3270
      %v3367 = vunpack.c.l.b16 %v3271
      %v3368 = vunpack.c.l.b16 %v3272
      %v3369 = vunpack.c.l.b16 %v3273
      %v3370 = vunpack.c.l.b16 %v3274
      %v3371 = vpack.c.b16 %v3324, %v3323
      %v3372 = vpack.c.b16 %v3325, %v3325
      %v3373 = vpack.c.b16 %v3327, %v3326
      %v3374 = vpack.c.b16 %v3328, %v3328
      %v3375 = vpack.c.b16 %v3330, %v3329
      %v3376 = vpack.c.b16 %v3331, %v3331
      %v3377 = vpack.c.b16 %v3333, %v3332
      %v3378 = vpack.c.b16 %v3334, %v3334
      %v3379 = vpack.c.b16 %v3336, %v3335
      %v3380 = vpack.c.b16 %v3337, %v3337
      %v3381 = vpack.c.b16 %v3339, %v3338
      %v3382 = vpack.c.b16 %v3340, %v3340
      %v3383 = vpack.c.b16 %v3342, %v3341
      %v3384 = vpack.c.b16 %v3343, %v3343
      %v3385 = vpack.c.b16 %v3345, %v3344
      %v3386 = vpack.c.b16 %v3346, %v3346
      %v3387 = vpack.c.b16 %v3348, %v3347
      %v3388 = vpack.c.b16 %v3349, %v3349
      %v3389 = vpack.c.b16 %v3351, %v3350
      %v3390 = vpack.c.b16 %v3352, %v3352
      %v3391 = vpack.c.b16 %v3354, %v3353
      %v3392 = vpack.c.b16 %v3355, %v3355
      %v3393 = vpack.c.b16 %v3357, %v3356
      %v3394 = vpack.c.b16 %v3358, %v3358
      %v3395 = vpack.c.b16 %v3360, %v3359
      %v3396 = vpack.c.b16 %v3361, %v3361
      %v3397 = vpack.c.b16 %v3363, %v3362
      %v3398 = vpack.c.b16 %v3364, %v3364
      %v3399 = vpack.c.b16 %v3366, %v3365
      %v3400 = vpack.c.b16 %v3367, %v3367
      %v3401 = vpack.c.b16 %v3369, %v3368
      %v3402 = vpack.c.b16 %v3370, %v3370
      %v3403 = vrot.slane %v3371, 1
      %v3404 = vrot.slane %v3372, 1
      %v3405 = vsel %vm1603, %v3403, %v3404
      %v3406 = vrot.slane %v3373, 1
      %v3407 = vrot.slane %v3374, 1
      %v3408 = vsel %vm1603, %v3406, %v3407
      %v3409 = vrot.slane %v3375, 1
      %v3410 = vrot.slane %v3376, 1
      %v3411 = vsel %vm1603, %v3409, %v3410
      %v3412 = vrot.slane %v3377, 1
      %v3413 = vrot.slane %v3378, 1
      %v3414 = vsel %vm1603, %v3412, %v3413
      %v3415 = vrot.slane %v3379, 1
      %v3416 = vrot.slane %v3380, 1
      %v3417 = vsel %vm1603, %v3415, %v3416
      %v3418 = vrot.slane %v3381, 1
      %v3419 = vrot.slane %v3382, 1
      %v3420 = vsel %vm1603, %v3418, %v3419
      %v3421 = vrot.slane %v3383, 1
      %v3422 = vrot.slane %v3384, 1
      %v3423 = vsel %vm1603, %v3421, %v3422
      %v3424 = vrot.slane %v3385, 1
      %v3425 = vrot.slane %v3386, 1
      %v3426 = vsel %vm1603, %v3424, %v3425
      %v3427 = vrot.slane %v3387, 1
      %v3428 = vrot.slane %v3388, 1
      %v3429 = vsel %vm1603, %v3427, %v3428
      %v3430 = vrot.slane %v3389, 1
      %v3431 = vrot.slane %v3390, 1
      %v3432 = vsel %vm1603, %v3430, %v3431
      %v3433 = vrot.slane %v3391, 1
      %v3434 = vrot.slane %v3392, 1
      %v3435 = vsel %vm1603, %v3433, %v3434
      %v3436 = vrot.slane %v3393, 1
      %v3437 = vrot.slane %v3394, 1
      %v3438 = vsel %vm1603, %v3436, %v3437
      %v3439 = vrot.slane %v3395, 1
      %v3440 = vrot.slane %v3396, 1
      %v3441 = vsel %vm1603, %v3439, %v3440
      %v3442 = vrot.slane %v3397, 1
      %v3443 = vrot.slane %v3398, 1
      %v3444 = vsel %vm1603, %v3442, %v3443
      %v3445 = vrot.slane %v3399, 1
      %v3446 = vrot.slane %v3400, 1
      %v3447 = vsel %vm1603, %v3445, %v3446
      %v3448 = vrot.slane %v3401, 1
      %v3449 = vrot.slane %v3402, 1
      %v3450 = vsel %vm1603, %v3448, %v3449
      %3451 = vrot.lane.b32.xlu0 %v3405, 64
      %v3452 = vpop.permute.xlu0 %3451
      %3453 = vrot.lane.b32.xlu0 %v3408, 64
      %v3454 = vpop.permute.xlu0 %3453
      %3455 = vrot.lane.b32.xlu0 %v3411, 64
      %v3456 = vpop.permute.xlu0 %3455
      %3457 = vrot.lane.b32.xlu0 %v3414, 64
      %v3458 = vpop.permute.xlu0 %3457
      %3459 = vrot.lane.b32.xlu0 %v3417, 64
      %v3460 = vpop.permute.xlu0 %3459
      %3461 = vrot.lane.b32.xlu0 %v3420, 64
      %v3462 = vpop.permute.xlu0 %3461
      %3463 = vrot.lane.b32.xlu0 %v3423, 64
      %v3464 = vpop.permute.xlu0 %3463
      %3465 = vrot.lane.b32.xlu0 %v3426, 64
      %v3466 = vpop.permute.xlu0 %3465
      %3467 = vrot.lane.b32.xlu0 %v3429, 64
      %v3468 = vpop.permute.xlu0 %3467
      %3469 = vrot.lane.b32.xlu0 %v3432, 64
      %v3470 = vpop.permute.xlu0 %3469
      %3471 = vrot.lane.b32.xlu0 %v3435, 64
      %v3472 = vpop.permute.xlu0 %3471
      %3473 = vrot.lane.b32.xlu0 %v3438, 64
      %v3474 = vpop.permute.xlu0 %3473
      %3475 = vrot.lane.b32.xlu0 %v3441, 64
      %v3476 = vpop.permute.xlu0 %3475
      %3477 = vrot.lane.b32.xlu0 %v3444, 64
      %v3478 = vpop.permute.xlu0 %3477
      %3479 = vrot.lane.b32.xlu0 %v3447, 64
      %v3480 = vpop.permute.xlu0 %3479
      %3481 = vrot.lane.b32.xlu0 %v3450, 64
      %v3482 = vpop.permute.xlu0 %3481
      %vm3499 = vcmask 589312
      %3500 = vst.msk [vmem:[#allocation3] sm:$0xff] %vm3499, %v3452
      %3501 = vst.msk [vmem:[#allocation3 + $0x8] sm:$0xff] %vm3499, %v3454
      %3502 = vst.msk [vmem:[#allocation3 + $0x10] sm:$0xff] %vm3499, %v3456
      %3503 = vst.msk [vmem:[#allocation3 + $0x18] sm:$0xff] %vm3499, %v3458
      %3504 = vst.msk [vmem:[#allocation3 + $0x20] sm:$0xff] %vm3499, %v3460
      %3505 = vst.msk [vmem:[#allocation3 + $0x28] sm:$0xff] %vm3499, %v3462
      %3506 = vst.msk [vmem:[#allocation3 + $0x30] sm:$0xff] %vm3499, %v3464
      %3507 = vst.msk [vmem:[#allocation3 + $0x38] sm:$0xff] %vm3499, %v3466
      %3508 = vst.msk [vmem:[#allocation3 + $0x40] sm:$0xff] %vm3499, %v3468
      %3509 = vst.msk [vmem:[#allocation3 + $0x48] sm:$0xff] %vm3499, %v3470
      %3510 = vst.msk [vmem:[#allocation3 + $0x50] sm:$0xff] %vm3499, %v3472
      %3511 = vst.msk [vmem:[#allocation3 + $0x58] sm:$0xff] %vm3499, %v3474
      %3512 = vst.msk [vmem:[#allocation3 + $0x60] sm:$0xff] %vm3499, %v3476
      %3513 = vst.msk [vmem:[#allocation3 + $0x68] sm:$0xff] %vm3499, %v3478
      %3514 = vst.msk [vmem:[#allocation3 + $0x70] sm:$0xff] %vm3499, %v3480
      %3515 = vst.msk [vmem:[#allocation3 + $0x78] sm:$0xff] %vm3499, %v3482
      %v3516 = vld [vmem:[#allocation3] sm:$0xff]
      %v3517 = vld [vmem:[#allocation3 + $0x8] sm:$0xff]
      %v3518 = vld [vmem:[#allocation3 + $0x10] sm:$0xff]
      %v3519 = vld [vmem:[#allocation3 + $0x18] sm:$0xff]
      %v3520 = vld [vmem:[#allocation3 + $0x20] sm:$0xff]
      %v3521 = vld [vmem:[#allocation3 + $0x28] sm:$0xff]
      %v3522 = vld [vmem:[#allocation3 + $0x30] sm:$0xff]
      %v3523 = vld [vmem:[#allocation3 + $0x38] sm:$0xff]
      %v3524 = vld [vmem:[#allocation3 + $0x40] sm:$0xff]
      %v3525 = vld [vmem:[#allocation3 + $0x48] sm:$0xff]
      %v3526 = vld [vmem:[#allocation3 + $0x50] sm:$0xff]
      %v3527 = vld [vmem:[#allocation3 + $0x58] sm:$0xff]
      %v3528 = vld [vmem:[#allocation3 + $0x60] sm:$0xff]
      %v3529 = vld [vmem:[#allocation3 + $0x68] sm:$0xff]
      %v3530 = vld [vmem:[#allocation3 + $0x70] sm:$0xff]
      %v3531 = vld [vmem:[#allocation3 + $0x78] sm:$0xff]
      %v3532 = vld [vmem:[%s2] sm:$0xf]
      %v3533 = vld [vmem:[%s2 + $0x4] sm:$0xf]
      %v3534 = vld [vmem:[%s2 + $0x8] sm:$0xf]
      %v3535 = vld [vmem:[%s2 + $0xc] sm:$0xf]
      %v3536 = vld [vmem:[%s2 + $0x10] sm:$0xf]
      %v3537 = vld [vmem:[%s2 + $0x14] sm:$0xf]
      %v3538 = vld [vmem:[%s2 + $0x18] sm:$0xf]
      %v3539 = vld [vmem:[%s2 + $0x1c] sm:$0xf]
      %v3540 = vld [vmem:[%s2 + $0x20] sm:$0xf]
      %v3550 = vunpack.c.l.b16 %v3532
      %v3551 = vunpack.c.l.b16 %v3533
      %v3552 = vunpack.c.l.b16 %v3534
      %v3553 = vunpack.c.l.b16 %v3535
      %v3554 = vunpack.c.l.b16 %v3536
      %v3555 = vunpack.c.l.b16 %v3537
      %v3556 = vunpack.c.l.b16 %v3538
      %v3557 = vunpack.c.l.b16 %v3539
      %v3558 = vunpack.c.l.b16 %v3540
      %v3559 = vpack.c.b16 %v3551, %v3550
      %v3560 = vpack.c.b16 %v3553, %v3552
      %v3561 = vpack.c.b16 %v3555, %v3554
      %v3562 = vpack.c.b16 %v3557, %v3556
      %v3563 = vpack.c.b16 %v3558, %v3558
      %vm3568 = vcmask 588800
      %v3570 = vsel %vm3568, %v3516, 0
      %v3573 = vsel %vm3568, %v3517, 0
      %v3576 = vsel %vm3568, %v3518, 0
      %v3579 = vsel %vm3568, %v3519, 0
      %v3582 = vsel %vm3568, %v3520, 0
      %v3585 = vsel %vm3568, %v3521, 0
      %v3588 = vsel %vm3568, %v3522, 0
      %v3591 = vsel %vm3568, %v3523, 0
      %v3594 = vsel %vm3568, %v3524, 0
      %v3597 = vsel %vm3568, %v3525, 0
      %v3600 = vsel %vm3568, %v3526, 0
      %v3603 = vsel %vm3568, %v3527, 0
      %v3606 = vsel %vm3568, %v3528, 0
      %v3609 = vsel %vm3568, %v3529, 0
      %v3612 = vsel %vm3568, %v3530, 0
      %v3615 = vsel %vm3568, %v3531, 0
      %vm3617 = vcmask 1043456
      %v3619 = vsel %vm3617, %v3563, 0
      %3621 = vmatprep.subr.bf16.mxu0 0
      %3622 = vmatpush1.bf16.msra.mxu0 %v3559
      %3623 = vmatprep.subr.bf16.mxu0 0
      %3624 = vmatpush1.bf16.msra.mxu0 %v3560
      %3625 = vmatprep.subr.bf16.mxu0 0
      %3626 = vmatpush1.bf16.msra.mxu0 %v3561
      %3627 = vmatprep.subr.bf16.mxu0 0
      %3628 = vmatpush1.bf16.msra.mxu0 %v3562
      %3629 = vmatprep.subr.bf16.mxu0 0
      %3630 = vmatpush1.bf16.msra.mxu0 %v3619
      %3631 = vmatprep.subr.bf16.mxu0 0
      %3632 = vmatpush1.bf16.msra.mxu0 0
      %3633 = vmatprep.subr.bf16.mxu0 0
      %3634 = vmatpush1.bf16.msra.mxu0 0
      %3635 = vmatprep.subr.bf16.mxu0 0
      %3636 = vmatpush1.bf16.msra.mxu0 0
      %3637 = vmatprep.subr.bf16.mxu0 0
      %3638 = vmatpush1.bf16.msra.mxu0 0
      %3639 = vmatprep.subr.bf16.mxu0 0
      %3640 = vmatpush1.bf16.msra.mxu0 0
      %3641 = vmatprep.subr.bf16.mxu0 0
      %3642 = vmatpush1.bf16.msra.mxu0 0
      %3643 = vmatprep.subr.bf16.mxu0 0
      %3644 = vmatpush1.bf16.msra.mxu0 0
      %3645 = vmatprep.subr.bf16.mxu0 0
      %3646 = vmatpush1.bf16.msra.mxu0 0
      %3647 = vmatprep.subr.bf16.mxu0 0
      %3648 = vmatpush1.bf16.msra.mxu0 0
      %3649 = vmatprep.subr.bf16.mxu0 0
      %3650 = vmatpush1.bf16.msra.mxu0 0
      %3651 = vmatprep.subr.bf16.mxu0 0
      %3652 = vmatpush1.bf16.msra.mxu0 0
      %3653 = vmatprep.mubr.bf16.mxu0 0
      %3654 = vmatmul.mubr.bf16.gmra.mrb[0].mxu0 %v3570
      %v3655 = vpop.f32.mrb[0].mxu0
      %v3656 = vadd.f32 0.0, %v3655
      %v3657 = vpop.f32.mrb[0].mxu0
      %v3658 = vpop.f32.mrb[0].mxu0
      %v3659 = vadd.f32 0.0, %v3658
      %v3660 = vpop.f32.mrb[0].mxu0
      %3661 = vmatprep.mubr.bf16.mxu0 0
      %3662 = vmatmul.mubr.bf16.gmra.mrb[0].mxu0 %v3573
      %v3663 = vpop.f32.mrb[0].mxu0
      %v3664 = vadd.f32 0.0, %v3663
      %v3665 = vpop.f32.mrb[0].mxu0
      %v3666 = vpop.f32.mrb[0].mxu0
      %v3667 = vadd.f32 0.0, %v3666
      %v3668 = vpop.f32.mrb[0].mxu0
      %3669 = vmatprep.mubr.bf16.mxu0 0
      %3670 = vmatmul.mubr.bf16.gmra.mrb[0].mxu0 %v3576
      %v3671 = vpop.f32.mrb[0].mxu0
      %v3672 = vadd.f32 0.0, %v3671
      %v3673 = vpop.f32.mrb[0].mxu0
      %v3674 = vpop.f32.mrb[0].mxu0
      %v3675 = vadd.f32 0.0, %v3674
      %v3676 = vpop.f32.mrb[0].mxu0
      %3677 = vmatprep.mubr.bf16.mxu0 0
      %3678 = vmatmul.mubr.bf16.gmra.mrb[0].mxu0 %v3579
      %v3679 = vpop.f32.mrb[0].mxu0
      %v3680 = vadd.f32 0.0, %v3679
      %v3681 = vpop.f32.mrb[0].mxu0
      %v3682 = vpop.f32.mrb[0].mxu0
      %v3683 = vadd.f32 0.0, %v3682
      %v3684 = vpop.f32.mrb[0].mxu0
      %3685 = vmatprep.mubr.bf16.mxu0 0
      %3686 = vmatmul.mubr.bf16.gmra.mrb[0].mxu0 %v3582
      %v3687 = vpop.f32.mrb[0].mxu0
      %v3688 = vadd.f32 0.0, %v3687
      %v3689 = vpop.f32.mrb[0].mxu0
      %v3690 = vpop.f32.mrb[0].mxu0
      %v3691 = vadd.f32 0.0, %v3690
      %v3692 = vpop.f32.mrb[0].mxu0
      %3693 = vmatprep.mubr.bf16.mxu0 0
      %3694 = vmatmul.mubr.bf16.gmra.mrb[0].mxu0 %v3585
      %v3695 = vpop.f32.mrb[0].mxu0
      %v3696 = vadd.f32 0.0, %v3695
      %v3697 = vpop.f32.mrb[0].mxu0
      %v3698 = vpop.f32.mrb[0].mxu0
      %v3699 = vadd.f32 0.0, %v3698
      %v3700 = vpop.f32.mrb[0].mxu0
      %3701 = vmatprep.mubr.bf16.mxu0 0
      %3702 = vmatmul.mubr.bf16.gmra.mrb[0].mxu0 %v3588
      %v3703 = vpop.f32.mrb[0].mxu0
      %v3704 = vadd.f32 0.0, %v3703
      %v3705 = vpop.f32.mrb[0].mxu0
      %v3706 = vpop.f32.mrb[0].mxu0
      %v3707 = vadd.f32 0.0, %v3706
      %v3708 = vpop.f32.mrb[0].mxu0
      %3709 = vmatprep.mubr.bf16.mxu0 0
      %3710 = vmatmul.mubr.bf16.gmra.mrb[0].mxu0 %v3591
      %v3711 = vpop.f32.mrb[0].mxu0
      %v3712 = vadd.f32 0.0, %v3711
      %v3713 = vpop.f32.mrb[0].mxu0
      %v3714 = vpop.f32.mrb[0].mxu0
      %v3715 = vadd.f32 0.0, %v3714
      %v3716 = vpop.f32.mrb[0].mxu0
      %3717 = vmatprep.mubr.bf16.mxu0 0
      %3718 = vmatmul.mubr.bf16.gmra.mrb[0].mxu0 %v3594
      %v3719 = vpop.f32.mrb[0].mxu0
      %v3720 = vadd.f32 0.0, %v3719
      %v3721 = vpop.f32.mrb[0].mxu0
      %v3722 = vpop.f32.mrb[0].mxu0
      %v3723 = vadd.f32 0.0, %v3722
      %v3724 = vpop.f32.mrb[0].mxu0
      %3725 = vmatprep.mubr.bf16.mxu0 0
      %3726 = vmatmul.mubr.bf16.gmra.mrb[0].mxu0 %v3597
      %v3727 = vpop.f32.mrb[0].mxu0
      %v3728 = vadd.f32 0.0, %v3727
      %v3729 = vpop.f32.mrb[0].mxu0
      %v3730 = vpop.f32.mrb[0].mxu0
      %v3731 = vadd.f32 0.0, %v3730
      %v3732 = vpop.f32.mrb[0].mxu0
      %3733 = vmatprep.mubr.bf16.mxu0 0
      %3734 = vmatmul.mubr.bf16.gmra.mrb[0].mxu0 %v3600
      %v3735 = vpop.f32.mrb[0].mxu0
      %v3736 = vadd.f32 0.0, %v3735
      %v3737 = vpop.f32.mrb[0].mxu0
      %v3738 = vpop.f32.mrb[0].mxu0
      %v3739 = vadd.f32 0.0, %v3738
      %v3740 = vpop.f32.mrb[0].mxu0
      %3741 = vmatprep.mubr.bf16.mxu0 0
      %3742 = vmatmul.mubr.bf16.gmra.mrb[0].mxu0 %v3603
      %v3743 = vpop.f32.mrb[0].mxu0
      %v3744 = vadd.f32 0.0, %v3743
      %v3745 = vpop.f32.mrb[0].mxu0
      %v3746 = vpop.f32.mrb[0].mxu0
      %v3747 = vadd.f32 0.0, %v3746
      %v3748 = vpop.f32.mrb[0].mxu0
      %3749 = vmatprep.mubr.bf16.mxu0 0
      %3750 = vmatmul.mubr.bf16.gmra.mrb[0].mxu0 %v3606
      %v3751 = vpop.f32.mrb[0].mxu0
      %v3752 = vadd.f32 0.0, %v3751
      %v3753 = vpop.f32.mrb[0].mxu0
      %v3754 = vpop.f32.mrb[0].mxu0
      %v3755 = vadd.f32 0.0, %v3754
      %v3756 = vpop.f32.mrb[0].mxu0
      %3757 = vmatprep.mubr.bf16.mxu0 0
      %3758 = vmatmul.mubr.bf16.gmra.mrb[0].mxu0 %v3609
      %v3759 = vpop.f32.mrb[0].mxu0
      %v3760 = vadd.f32 0.0, %v3759
      %v3761 = vpop.f32.mrb[0].mxu0
      %v3762 = vpop.f32.mrb[0].mxu0
      %v3763 = vadd.f32 0.0, %v3762
      %v3764 = vpop.f32.mrb[0].mxu0
      %3765 = vmatprep.mubr.bf16.mxu0 0
      %3766 = vmatmul.mubr.bf16.gmra.mrb[0].mxu0 %v3612
      %v3767 = vpop.f32.mrb[0].mxu0
      %v3768 = vadd.f32 0.0, %v3767
      %v3769 = vpop.f32.mrb[0].mxu0
      %v3770 = vpop.f32.mrb[0].mxu0
      %v3771 = vadd.f32 0.0, %v3770
      %v3772 = vpop.f32.mrb[0].mxu0
      %3773 = vmatprep.mubr.bf16.mxu0 0
      %3774 = vmatmul.mubr.bf16.gmra.mrb[0].mxu0 %v3615
      %v3775 = vpop.f32.mrb[0].mxu0
      %v3776 = vadd.f32 0.0, %v3775
      %v3777 = vpop.f32.mrb[0].mxu0
      %v3778 = vpop.f32.mrb[0].mxu0
      %v3779 = vadd.f32 0.0, %v3778
      %v3780 = vpop.f32.mrb[0].mxu0
      %3781 = vdwg.mxu0
      %v3782 = vmul.f32 %v3656, 0.5
      %v3783 = vmul.f32 %v3659, 0.5
      %v3784 = vmul.f32 %v3664, 0.5
      %v3785 = vmul.f32 %v3667, 0.5
      %v3786 = vmul.f32 %v3672, 0.5
      %v3787 = vmul.f32 %v3675, 0.5
      %v3788 = vmul.f32 %v3680, 0.5
      %v3789 = vmul.f32 %v3683, 0.5
      %v3790 = vmul.f32 %v3688, 0.5
      %v3791 = vmul.f32 %v3691, 0.5
      %v3792 = vmul.f32 %v3696, 0.5
      %v3793 = vmul.f32 %v3699, 0.5
      %v3794 = vmul.f32 %v3704, 0.5
      %v3795 = vmul.f32 %v3707, 0.5
      %v3796 = vmul.f32 %v3712, 0.5
      %v3797 = vmul.f32 %v3715, 0.5
      %v3798 = vmul.f32 %v3720, 0.5
      %v3799 = vmul.f32 %v3723, 0.5
      %v3800 = vmul.f32 %v3728, 0.5
      %v3801 = vmul.f32 %v3731, 0.5
      %v3802 = vmul.f32 %v3736, 0.5
      %v3803 = vmul.f32 %v3739, 0.5
      %v3804 = vmul.f32 %v3744, 0.5
      %v3805 = vmul.f32 %v3747, 0.5
      %v3806 = vmul.f32 %v3752, 0.5
      %v3807 = vmul.f32 %v3755, 0.5
      %v3808 = vmul.f32 %v3760, 0.5
      %v3809 = vmul.f32 %v3763, 0.5
      %v3810 = vmul.f32 %v3768, 0.5
      %v3811 = vmul.f32 %v3771, 0.5
      %v3812 = vmul.f32 %v3776, 0.5
      %v3813 = vmul.f32 %v3779, 0.5
      %v3814 = vmul.f32 %v3656, 0.70710677
      %v3815 = vmul.f32 %v3659, 0.70710677
      %v3816 = vmul.f32 %v3664, 0.70710677
      %v3817 = vmul.f32 %v3667, 0.70710677
      %v3818 = vmul.f32 %v3672, 0.70710677
      %v3819 = vmul.f32 %v3675, 0.70710677
      %v3820 = vmul.f32 %v3680, 0.70710677
      %v3821 = vmul.f32 %v3683, 0.70710677
      %v3822 = vmul.f32 %v3688, 0.70710677
      %v3823 = vmul.f32 %v3691, 0.70710677
      %v3824 = vmul.f32 %v3696, 0.70710677
      %v3825 = vmul.f32 %v3699, 0.70710677
      %v3826 = vmul.f32 %v3704, 0.70710677
      %v3827 = vmul.f32 %v3707, 0.70710677
      %v3828 = vmul.f32 %v3712, 0.70710677
      %v3829 = vmul.f32 %v3715, 0.70710677
      %v3830 = vmul.f32 %v3720, 0.70710677
      %v3831 = vmul.f32 %v3723, 0.70710677
      %v3832 = vmul.f32 %v3728, 0.70710677
      %v3833 = vmul.f32 %v3731, 0.70710677
      %v3834 = vmul.f32 %v3736, 0.70710677
      %v3835 = vmul.f32 %v3739, 0.70710677
      %v3836 = vmul.f32 %v3744, 0.70710677
      %v3837 = vmul.f32 %v3747, 0.70710677
      %v3838 = vmul.f32 %v3752, 0.70710677
      %v3839 = vmul.f32 %v3755, 0.70710677
      %v3840 = vmul.f32 %v3760, 0.70710677
      %v3841 = vmul.f32 %v3763, 0.70710677
      %v3842 = vmul.f32 %v3768, 0.70710677
      %v3843 = vmul.f32 %v3771, 0.70710677
      %v3844 = vmul.f32 %v3776, 0.70710677
      %v3845 = vmul.f32 %v3779, 0.70710677
      %v3846 = verf.f32.pop %v3814
      %v3847 = verf.f32.pop %v3815
      %v3848 = verf.f32.pop %v3816
      %v3849 = verf.f32.pop %v3817
      %v3850 = verf.f32.pop %v3818
      %v3851 = verf.f32.pop %v3819
      %v3852 = verf.f32.pop %v3820
      %v3853 = verf.f32.pop %v3821
      %v3854 = verf.f32.pop %v3822
      %v3855 = verf.f32.pop %v3823
      %v3856 = verf.f32.pop %v3824
      %v3857 = verf.f32.pop %v3825
      %v3858 = verf.f32.pop %v3826
      %v3859 = verf.f32.pop %v3827
      %v3860 = verf.f32.pop %v3828
      %v3861 = verf.f32.pop %v3829
      %v3862 = verf.f32.pop %v3830
      %v3863 = verf.f32.pop %v3831
      %v3864 = verf.f32.pop %v3832
      %v3865 = verf.f32.pop %v3833
      %v3866 = verf.f32.pop %v3834
      %v3867 = verf.f32.pop %v3835
      %v3868 = verf.f32.pop %v3836
      %v3869 = verf.f32.pop %v3837
      %v3870 = verf.f32.pop %v3838
      %v3871 = verf.f32.pop %v3839
      %v3872 = verf.f32.pop %v3840
      %v3873 = verf.f32.pop %v3841
      %v3874 = verf.f32.pop %v3842
      %v3875 = verf.f32.pop %v3843
      %v3876 = verf.f32.pop %v3844
      %v3877 = verf.f32.pop %v3845
      %v3878 = vadd.f32 %v3846, 1.0
      %v3879 = vadd.f32 %v3847, 1.0
      %v3880 = vadd.f32 %v3848, 1.0
      %v3881 = vadd.f32 %v3849, 1.0
      %v3882 = vadd.f32 %v3850, 1.0
      %v3883 = vadd.f32 %v3851, 1.0
      %v3884 = vadd.f32 %v3852, 1.0
      %v3885 = vadd.f32 %v3853, 1.0
      %v3886 = vadd.f32 %v3854, 1.0
      %v3887 = vadd.f32 %v3855, 1.0
      %v3888 = vadd.f32 %v3856, 1.0
      %v3889 = vadd.f32 %v3857, 1.0
      %v3890 = vadd.f32 %v3858, 1.0
      %v3891 = vadd.f32 %v3859, 1.0
      %v3892 = vadd.f32 %v3860, 1.0
      %v3893 = vadd.f32 %v3861, 1.0
      %v3894 = vadd.f32 %v3862, 1.0
      %v3895 = vadd.f32 %v3863, 1.0
      %v3896 = vadd.f32 %v3864, 1.0
      %v3897 = vadd.f32 %v3865, 1.0
      %v3898 = vadd.f32 %v3866, 1.0
      %v3899 = vadd.f32 %v3867, 1.0
      %v3900 = vadd.f32 %v3868, 1.0
      %v3901 = vadd.f32 %v3869, 1.0
      %v3902 = vadd.f32 %v3870, 1.0
      %v3903 = vadd.f32 %v3871, 1.0
      %v3904 = vadd.f32 %v3872, 1.0
      %v3905 = vadd.f32 %v3873, 1.0
      %v3906 = vadd.f32 %v3874, 1.0
      %v3907 = vadd.f32 %v3875, 1.0
      %v3908 = vadd.f32 %v3876, 1.0
      %v3909 = vadd.f32 %v3877, 1.0
      %v3910 = vmul.f32 %v3782, %v3878
      %v3911 = vmul.f32 %v3783, %v3879
      %v3912 = vmul.f32 %v3784, %v3880
      %v3913 = vmul.f32 %v3785, %v3881
      %v3914 = vmul.f32 %v3786, %v3882
      %v3915 = vmul.f32 %v3787, %v3883
      %v3916 = vmul.f32 %v3788, %v3884
      %v3917 = vmul.f32 %v3789, %v3885
      %v3918 = vmul.f32 %v3790, %v3886
      %v3919 = vmul.f32 %v3791, %v3887
      %v3920 = vmul.f32 %v3792, %v3888
      %v3921 = vmul.f32 %v3793, %v3889
      %v3922 = vmul.f32 %v3794, %v3890
      %v3923 = vmul.f32 %v3795, %v3891
      %v3924 = vmul.f32 %v3796, %v3892
      %v3925 = vmul.f32 %v3797, %v3893
      %v3926 = vmul.f32 %v3798, %v3894
      %v3927 = vmul.f32 %v3799, %v3895
      %v3928 = vmul.f32 %v3800, %v3896
      %v3929 = vmul.f32 %v3801, %v3897
      %v3930 = vmul.f32 %v3802, %v3898
      %v3931 = vmul.f32 %v3803, %v3899
      %v3932 = vmul.f32 %v3804, %v3900
      %v3933 = vmul.f32 %v3805, %v3901
      %v3934 = vmul.f32 %v3806, %v3902
      %v3935 = vmul.f32 %v3807, %v3903
      %v3936 = vmul.f32 %v3808, %v3904
      %v3937 = vmul.f32 %v3809, %v3905
      %v3938 = vmul.f32 %v3810, %v3906
      %v3939 = vmul.f32 %v3811, %v3907
      %v3940 = vmul.f32 %v3812, %v3908
      %v3941 = vmul.f32 %v3813, %v3909
      %v3942 = vsel %vm976, %v3910, 0.0
      %v3943 = vsel %vm976, %v3911, 0.0
      %v3944 = vadd.f32 %v3942, %v3943
      %v3945 = vsel %vm976, %v3912, 0.0
      %v3946 = vadd.f32 %v3944, %v3945
      %v3947 = vsel %vm976, %v3913, 0.0
      %v3948 = vadd.f32 %v3946, %v3947
      %v3949 = vsel %vm976, %v3914, 0.0
      %v3950 = vadd.f32 %v3948, %v3949
      %v3951 = vsel %vm976, %v3915, 0.0
      %v3952 = vadd.f32 %v3950, %v3951
      %v3953 = vsel %vm976, %v3916, 0.0
      %v3954 = vadd.f32 %v3952, %v3953
      %v3955 = vsel %vm976, %v3917, 0.0
      %v3956 = vadd.f32 %v3954, %v3955
      %v3957 = vsel %vm976, %v3918, 0.0
      %v3958 = vadd.f32 %v3956, %v3957
      %v3959 = vsel %vm976, %v3919, 0.0
      %v3960 = vadd.f32 %v3958, %v3959
      %v3961 = vsel %vm976, %v3920, 0.0
      %v3962 = vadd.f32 %v3960, %v3961
      %v3963 = vsel %vm976, %v3921, 0.0
      %v3964 = vadd.f32 %v3962, %v3963
      %v3965 = vsel %vm976, %v3922, 0.0
      %v3966 = vadd.f32 %v3964, %v3965
      %v3967 = vsel %vm976, %v3923, 0.0
      %v3968 = vadd.f32 %v3966, %v3967
      %v3969 = vsel %vm976, %v3924, 0.0
      %v3970 = vadd.f32 %v3968, %v3969
      %v3971 = vsel %vm976, %v3925, 0.0
      %v3972 = vadd.f32 %v3970, %v3971
      %v3973 = vsel %vm976, %v3926, 0.0
      %v3974 = vadd.f32 %v3972, %v3973
      %v3975 = vsel %vm976, %v3927, 0.0
      %v3976 = vadd.f32 %v3974, %v3975
      %v3977 = vsel %vm976, %v3928, 0.0
      %v3978 = vadd.f32 %v3976, %v3977
      %v3979 = vsel %vm976, %v3929, 0.0
      %v3980 = vadd.f32 %v3978, %v3979
      %v3981 = vsel %vm976, %v3930, 0.0
      %v3982 = vadd.f32 %v3980, %v3981
      %v3983 = vsel %vm976, %v3931, 0.0
      %v3984 = vadd.f32 %v3982, %v3983
      %v3985 = vsel %vm976, %v3932, 0.0
      %v3986 = vadd.f32 %v3984, %v3985
      %v3987 = vsel %vm976, %v3933, 0.0
      %v3988 = vadd.f32 %v3986, %v3987
      %v3989 = vsel %vm976, %v3934, 0.0
      %v3990 = vadd.f32 %v3988, %v3989
      %v3991 = vsel %vm976, %v3935, 0.0
      %v3992 = vadd.f32 %v3990, %v3991
      %v3993 = vsel %vm976, %v3936, 0.0
      %v3994 = vadd.f32 %v3992, %v3993
      %v3995 = vsel %vm976, %v3937, 0.0
      %v3996 = vadd.f32 %v3994, %v3995
      %v3997 = vsel %vm976, %v3938, 0.0
      %v3998 = vadd.f32 %v3996, %v3997
      %v3999 = vsel %vm976, %v3939, 0.0
      %v4000 = vadd.f32 %v3998, %v3999
      %v4001 = vsel %vm976, %v3940, 0.0
      %v4002 = vadd.f32 %v4000, %v4001
      %v4003 = vsel %vm976, %v3941, 0.0
      %v4004 = vadd.f32 %v4002, %v4003
      %v4005 = vrot.slane %v4004, 4
      %v4006 = vadd.f32 %v4004, %v4005
      %v4007 = vrot.slane %v4006, 2
      %v4008 = vadd.f32 %v4006, %v4007
      %v4009 = vrot.slane %v4008, 1
      %v4010 = vadd.f32 %v4008, %v4009
      %v4011 = vmul.f32 %v4010, 0.00390625
      %v4012 = vsub.f32 %v3910, %v4011
      %v4013 = vsub.f32 %v3911, %v4011
      %v4014 = vsub.f32 %v3912, %v4011
      %v4015 = vsub.f32 %v3913, %v4011
      %v4016 = vsub.f32 %v3914, %v4011
      %v4017 = vsub.f32 %v3915, %v4011
      %v4018 = vsub.f32 %v3916, %v4011
      %v4019 = vsub.f32 %v3917, %v4011
      %v4020 = vsub.f32 %v3918, %v4011
      %v4021 = vsub.f32 %v3919, %v4011
      %v4022 = vsub.f32 %v3920, %v4011
      %v4023 = vsub.f32 %v3921, %v4011
      %v4024 = vsub.f32 %v3922, %v4011
      %v4025 = vsub.f32 %v3923, %v4011
      %v4026 = vsub.f32 %v3924, %v4011
      %v4027 = vsub.f32 %v3925, %v4011
      %v4028 = vsub.f32 %v3926, %v4011
      %v4029 = vsub.f32 %v3927, %v4011
      %v4030 = vsub.f32 %v3928, %v4011
      %v4031 = vsub.f32 %v3929, %v4011
      %v4032 = vsub.f32 %v3930, %v4011
      %v4033 = vsub.f32 %v3931, %v4011
      %v4034 = vsub.f32 %v3932, %v4011
      %v4035 = vsub.f32 %v3933, %v4011
      %v4036 = vsub.f32 %v3934, %v4011
      %v4037 = vsub.f32 %v3935, %v4011
      %v4038 = vsub.f32 %v3936, %v4011
      %v4039 = vsub.f32 %v3937, %v4011
      %v4040 = vsub.f32 %v3938, %v4011
      %v4041 = vsub.f32 %v3939, %v4011
      %v4042 = vsub.f32 %v3940, %v4011
      %v4043 = vsub.f32 %v3941, %v4011
      %v4044 = vmul.f32 %v4012, %v4012
      %v4045 = vmul.f32 %v4013, %v4013
      %v4046 = vmul.f32 %v4014, %v4014
      %v4047 = vmul.f32 %v4015, %v4015
      %v4048 = vmul.f32 %v4016, %v4016
      %v4049 = vmul.f32 %v4017, %v4017
      %v4050 = vmul.f32 %v4018, %v4018
      %v4051 = vmul.f32 %v4019, %v4019
      %v4052 = vmul.f32 %v4020, %v4020
      %v4053 = vmul.f32 %v4021, %v4021
      %v4054 = vmul.f32 %v4022, %v4022
      %v4055 = vmul.f32 %v4023, %v4023
      %v4056 = vmul.f32 %v4024, %v4024
      %v4057 = vmul.f32 %v4025, %v4025
      %v4058 = vmul.f32 %v4026, %v4026
      %v4059 = vmul.f32 %v4027, %v4027
      %v4060 = vmul.f32 %v4028, %v4028
      %v4061 = vmul.f32 %v4029, %v4029
      %v4062 = vmul.f32 %v4030, %v4030
      %v4063 = vmul.f32 %v4031, %v4031
      %v4064 = vmul.f32 %v4032, %v4032
      %v4065 = vmul.f32 %v4033, %v4033
      %v4066 = vmul.f32 %v4034, %v4034
      %v4067 = vmul.f32 %v4035, %v4035
      %v4068 = vmul.f32 %v4036, %v4036
      %v4069 = vmul.f32 %v4037, %v4037
      %v4070 = vmul.f32 %v4038, %v4038
      %v4071 = vmul.f32 %v4039, %v4039
      %v4072 = vmul.f32 %v4040, %v4040
      %v4073 = vmul.f32 %v4041, %v4041
      %v4074 = vmul.f32 %v4042, %v4042
      %v4075 = vmul.f32 %v4043, %v4043
      %v4076 = vsel %vm976, %v4044, 0.0
      %v4077 = vsel %vm976, %v4045, 0.0
      %v4078 = vadd.f32 %v4076, %v4077
      %v4079 = vsel %vm976, %v4046, 0.0
      %v4080 = vadd.f32 %v4078, %v4079
      %v4081 = vsel %vm976, %v4047, 0.0
      %v4082 = vadd.f32 %v4080, %v4081
      %v4083 = vsel %vm976, %v4048, 0.0
      %v4084 = vadd.f32 %v4082, %v4083
      %v4085 = vsel %vm976, %v4049, 0.0
      %v4086 = vadd.f32 %v4084, %v4085
      %v4087 = vsel %vm976, %v4050, 0.0
      %v4088 = vadd.f32 %v4086, %v4087
      %v4089 = vsel %vm976, %v4051, 0.0
      %v4090 = vadd.f32 %v4088, %v4089
      %v4091 = vsel %vm976, %v4052, 0.0
      %v4092 = vadd.f32 %v4090, %v4091
      %v4093 = vsel %vm976, %v4053, 0.0
      %v4094 = vadd.f32 %v4092, %v4093
      %v4095 = vsel %vm976, %v4054, 0.0
      %v4096 = vadd.f32 %v4094, %v4095
      %v4097 = vsel %vm976, %v4055, 0.0
      %v4098 = vadd.f32 %v4096, %v4097
      %v4099 = vsel %vm976, %v4056, 0.0
      %v4100 = vadd.f32 %v4098, %v4099
      %v4101 = vsel %vm976, %v4057, 0.0
      %v4102 = vadd.f32 %v4100, %v4101
      %v4103 = vsel %vm976, %v4058, 0.0
      %v4104 = vadd.f32 %v4102, %v4103
      %v4105 = vsel %vm976, %v4059, 0.0
      %v4106 = vadd.f32 %v4104, %v4105
      %v4107 = vsel %vm976, %v4060, 0.0
      %v4108 = vadd.f32 %v4106, %v4107
      %v4109 = vsel %vm976, %v4061, 0.0
      %v4110 = vadd.f32 %v4108, %v4109
      %v4111 = vsel %vm976, %v4062, 0.0
      %v4112 = vadd.f32 %v4110, %v4111
      %v4113 = vsel %vm976, %v4063, 0.0
      %v4114 = vadd.f32 %v4112, %v4113
      %v4115 = vsel %vm976, %v4064, 0.0
      %v4116 = vadd.f32 %v4114, %v4115
      %v4117 = vsel %vm976, %v4065, 0.0
      %v4118 = vadd.f32 %v4116, %v4117
      %v4119 = vsel %vm976, %v4066, 0.0
      %v4120 = vadd.f32 %v4118, %v4119
      %v4121 = vsel %vm976, %v4067, 0.0
      %v4122 = vadd.f32 %v4120, %v4121
      %v4123 = vsel %vm976, %v4068, 0.0
      %v4124 = vadd.f32 %v4122, %v4123
      %v4125 = vsel %vm976, %v4069, 0.0
      %v4126 = vadd.f32 %v4124, %v4125
      %v4127 = vsel %vm976, %v4070, 0.0
      %v4128 = vadd.f32 %v4126, %v4127
      %v4129 = vsel %vm976, %v4071, 0.0
      %v4130 = vadd.f32 %v4128, %v4129
      %v4131 = vsel %vm976, %v4072, 0.0
      %v4132 = vadd.f32 %v4130, %v4131
      %v4133 = vsel %vm976, %v4073, 0.0
      %v4134 = vadd.f32 %v4132, %v4133
      %v4135 = vsel %vm976, %v4074, 0.0
      %v4136 = vadd.f32 %v4134, %v4135
      %v4137 = vsel %vm976, %v4075, 0.0
      %v4138 = vadd.f32 %v4136, %v4137
      %v4139 = vrot.slane %v4138, 4
      %v4140 = vadd.f32 %v4138, %v4139
      %v4141 = vrot.slane %v4140, 2
      %v4142 = vadd.f32 %v4140, %v4141
      %v4143 = vrot.slane %v4142, 1
      %v4144 = vadd.f32 %v4142, %v4143
      %v4145 = vld [vmem:[#allocation4] sm:$0x1]
      %v4146 = vld [vmem:[#allocation4 + $0x1] sm:$0x1]
      %v4147 = vsub.f32 %v4011, %v4145
      %v4148 = vadd.f32 %v4145, %v4147
      %4149 = vst.msk [vmem:[#allocation4] sm:$0x1] %vm290, %v4148
      %v4150 = vadd.f32 %v4146, %v4144
      %v4151 = vmul.f32 %v4147, %v4147
      %v4152 = vmul.f32 %v4151, 0.0
      %v4153 = vadd.f32 %v4150, %v4152
      %4154 = vst.msk [vmem:[#allocation4 + $0x1] sm:$0x1] %vm290, %v4153
      %v4155 = vmax.f32 %v3910, %v3912
      %v4156 = vmax.f32 %v3911, %v3913
      %v4157 = vmax.f32 %v3914, %v3916
      %v4158 = vmax.f32 %v3915, %v3917
      %v4159 = vmax.f32 %v3918, %v3920
      %v4160 = vmax.f32 %v3919, %v3921
      %v4161 = vmax.f32 %v3922, %v3924
      %v4162 = vmax.f32 %v3923, %v3925
      %v4163 = vmax.f32 %v3926, %v3928
      %v4164 = vmax.f32 %v3927, %v3929
      %v4165 = vmax.f32 %v3930, %v3932
      %v4166 = vmax.f32 %v3931, %v3933
      %v4167 = vmax.f32 %v3934, %v3936
      %v4168 = vmax.f32 %v3935, %v3937
      %v4169 = vmax.f32 %v3938, %v3940
      %v4170 = vmax.f32 %v3939, %v3941
      %v4187 = vcombine.high %v4155, %v4155
      %v4189 = vunpack.c.l.s4 1983009808
      %v4190 = vunpack.c.0.s8 %v4189
      %v4191 = vlaneseq
      %v4192 = vshrl.u32 %v4191, 7
      %v4193 = vsub.s32 %v4190, %v4192
      %v4194 = vrot.slane %v4155, %v4193
      %v4196 = vunpack.c.l.s4 1983009808
      %v4197 = vunpack.c.0.s8 %v4196
      %v4198 = vlaneseq
      %v4199 = vshrl.u32 %v4198, 7
      %v4200 = vsub.s32 %v4197, %v4199
      %v4201 = vrot.slane %v4187, %v4200
      %v4202 = vcombine.high %v4194, %v4194
      %v4203 = vcombine.high %v4201, %v4201
      %v4204 = vcombine.high %v4156, %v4156
      %v4206 = vunpack.c.l.s4 1983009808
      %v4207 = vunpack.c.0.s8 %v4206
      %v4208 = vlaneseq
      %v4209 = vshrl.u32 %v4208, 7
      %v4210 = vsub.s32 %v4207, %v4209
      %v4211 = vrot.slane %v4156, %v4210
      %v4213 = vunpack.c.l.s4 1983009808
      %v4214 = vunpack.c.0.s8 %v4213
      %v4215 = vlaneseq
      %v4216 = vshrl.u32 %v4215, 7
      %v4217 = vsub.s32 %v4214, %v4216
      %v4218 = vrot.slane %v4204, %v4217
      %v4219 = vcombine.high %v4211, %v4211
      %v4220 = vcombine.high %v4218, %v4218
      %v4221 = vcombine.high %v4157, %v4157
      %v4223 = vunpack.c.l.s4 1983009808
      %v4224 = vunpack.c.0.s8 %v4223
      %v4225 = vlaneseq
      %v4226 = vshrl.u32 %v4225, 7
      %v4227 = vsub.s32 %v4224, %v4226
      %v4228 = vrot.slane %v4157, %v4227
      %v4230 = vunpack.c.l.s4 1983009808
      %v4231 = vunpack.c.0.s8 %v4230
      %v4232 = vlaneseq
      %v4233 = vshrl.u32 %v4232, 7
      %v4234 = vsub.s32 %v4231, %v4233
      %v4235 = vrot.slane %v4221, %v4234
      %v4236 = vcombine.high %v4228, %v4228
      %v4237 = vcombine.high %v4235, %v4235
      %v4238 = vcombine.high %v4158, %v4158
      %v4240 = vunpack.c.l.s4 1983009808
      %v4241 = vunpack.c.0.s8 %v4240
      %v4242 = vlaneseq
      %v4243 = vshrl.u32 %v4242, 7
      %v4244 = vsub.s32 %v4241, %v4243
      %v4245 = vrot.slane %v4158, %v4244
      %v4247 = vunpack.c.l.s4 1983009808
      %v4248 = vunpack.c.0.s8 %v4247
      %v4249 = vlaneseq
      %v4250 = vshrl.u32 %v4249, 7
      %v4251 = vsub.s32 %v4248, %v4250
      %v4252 = vrot.slane %v4238, %v4251
      %v4253 = vcombine.high %v4245, %v4245
      %v4254 = vcombine.high %v4252, %v4252
      %v4255 = vcombine.high %v4159, %v4159
      %v4257 = vunpack.c.l.s4 1983009808
      %v4258 = vunpack.c.0.s8 %v4257
      %v4259 = vlaneseq
      %v4260 = vshrl.u32 %v4259, 7
      %v4261 = vsub.s32 %v4258, %v4260
      %v4262 = vrot.slane %v4159, %v4261
      %v4264 = vunpack.c.l.s4 1983009808
      %v4265 = vunpack.c.0.s8 %v4264
      %v4266 = vlaneseq
      %v4267 = vshrl.u32 %v4266, 7
      %v4268 = vsub.s32 %v4265, %v4267
      %v4269 = vrot.slane %v4255, %v4268
      %v4270 = vcombine.high %v4262, %v4262
      %v4271 = vcombine.high %v4269, %v4269
      %v4272 = vcombine.high %v4160, %v4160
      %v4274 = vunpack.c.l.s4 1983009808
      %v4275 = vunpack.c.0.s8 %v4274
      %v4276 = vlaneseq
      %v4277 = vshrl.u32 %v4276, 7
      %v4278 = vsub.s32 %v4275, %v4277
      %v4279 = vrot.slane %v4160, %v4278
      %v4281 = vunpack.c.l.s4 1983009808
      %v4282 = vunpack.c.0.s8 %v4281
      %v4283 = vlaneseq
      %v4284 = vshrl.u32 %v4283, 7
      %v4285 = vsub.s32 %v4282, %v4284
      %v4286 = vrot.slane %v4272, %v4285
      %v4287 = vcombine.high %v4279, %v4279
      %v4288 = vcombine.high %v4286, %v4286
      %v4289 = vcombine.high %v4161, %v4161
      %v4291 = vunpack.c.l.s4 1983009808
      %v4292 = vunpack.c.0.s8 %v4291
      %v4293 = vlaneseq
      %v4294 = vshrl.u32 %v4293, 7
      %v4295 = vsub.s32 %v4292, %v4294
      %v4296 = vrot.slane %v4161, %v4295
      %v4298 = vunpack.c.l.s4 1983009808
      %v4299 = vunpack.c.0.s8 %v4298
      %v4300 = vlaneseq
      %v4301 = vshrl.u32 %v4300, 7
      %v4302 = vsub.s32 %v4299, %v4301
      %v4303 = vrot.slane %v4289, %v4302
      %v4304 = vcombine.high %v4296, %v4296
      %v4305 = vcombine.high %v4303, %v4303
      %v4306 = vcombine.high %v4162, %v4162
      %v4308 = vunpack.c.l.s4 1983009808
      %v4309 = vunpack.c.0.s8 %v4308
      %v4310 = vlaneseq
      %v4311 = vshrl.u32 %v4310, 7
      %v4312 = vsub.s32 %v4309, %v4311
      %v4313 = vrot.slane %v4162, %v4312
      %v4315 = vunpack.c.l.s4 1983009808
      %v4316 = vunpack.c.0.s8 %v4315
      %v4317 = vlaneseq
      %v4318 = vshrl.u32 %v4317, 7
      %v4319 = vsub.s32 %v4316, %v4318
      %v4320 = vrot.slane %v4306, %v4319
      %v4321 = vcombine.high %v4313, %v4313
      %v4322 = vcombine.high %v4320, %v4320
      %v4323 = vcombine.high %v4163, %v4163
      %v4325 = vunpack.c.l.s4 1983009808
      %v4326 = vunpack.c.0.s8 %v4325
      %v4327 = vlaneseq
      %v4328 = vshrl.u32 %v4327, 7
      %v4329 = vsub.s32 %v4326, %v4328
      %v4330 = vrot.slane %v4163, %v4329
      %v4332 = vunpack.c.l.s4 1983009808
      %v4333 = vunpack.c.0.s8 %v4332
      %v4334 = vlaneseq
      %v4335 = vshrl.u32 %v4334, 7
      %v4336 = vsub.s32 %v4333, %v4335
      %v4337 = vrot.slane %v4323, %v4336
      %v4338 = vcombine.high %v4330, %v4330
      %v4339 = vcombine.high %v4337, %v4337
      %v4340 = vcombine.high %v4164, %v4164
      %v4342 = vunpack.c.l.s4 1983009808
      %v4343 = vunpack.c.0.s8 %v4342
      %v4344 = vlaneseq
      %v4345 = vshrl.u32 %v4344, 7
      %v4346 = vsub.s32 %v4343, %v4345
      %v4347 = vrot.slane %v4164, %v4346
      %v4349 = vunpack.c.l.s4 1983009808
      %v4350 = vunpack.c.0.s8 %v4349
      %v4351 = vlaneseq
      %v4352 = vshrl.u32 %v4351, 7
      %v4353 = vsub.s32 %v4350, %v4352
      %v4354 = vrot.slane %v4340, %v4353
      %v4355 = vcombine.high %v4347, %v4347
      %v4356 = vcombine.high %v4354, %v4354
      %v4357 = vcombine.high %v4165, %v4165
      %v4359 = vunpack.c.l.s4 1983009808
      %v4360 = vunpack.c.0.s8 %v4359
      %v4361 = vlaneseq
      %v4362 = vshrl.u32 %v4361, 7
      %v4363 = vsub.s32 %v4360, %v4362
      %v4364 = vrot.slane %v4165, %v4363
      %v4366 = vunpack.c.l.s4 1983009808
      %v4367 = vunpack.c.0.s8 %v4366
      %v4368 = vlaneseq
      %v4369 = vshrl.u32 %v4368, 7
      %v4370 = vsub.s32 %v4367, %v4369
      %v4371 = vrot.slane %v4357, %v4370
      %v4372 = vcombine.high %v4364, %v4364
      %v4373 = vcombine.high %v4371, %v4371
      %v4374 = vcombine.high %v4166, %v4166
      %v4376 = vunpack.c.l.s4 1983009808
      %v4377 = vunpack.c.0.s8 %v4376
      %v4378 = vlaneseq
      %v4379 = vshrl.u32 %v4378, 7
      %v4380 = vsub.s32 %v4377, %v4379
      %v4381 = vrot.slane %v4166, %v4380
      %v4383 = vunpack.c.l.s4 1983009808
      %v4384 = vunpack.c.0.s8 %v4383
      %v4385 = vlaneseq
      %v4386 = vshrl.u32 %v4385, 7
      %v4387 = vsub.s32 %v4384, %v4386
      %v4388 = vrot.slane %v4374, %v4387
      %v4389 = vcombine.high %v4381, %v4381
      %v4390 = vcombine.high %v4388, %v4388
      %v4391 = vcombine.high %v4167, %v4167
      %v4393 = vunpack.c.l.s4 1983009808
      %v4394 = vunpack.c.0.s8 %v4393
      %v4395 = vlaneseq
      %v4396 = vshrl.u32 %v4395, 7
      %v4397 = vsub.s32 %v4394, %v4396
      %v4398 = vrot.slane %v4167, %v4397
      %v4400 = vunpack.c.l.s4 1983009808
      %v4401 = vunpack.c.0.s8 %v4400
      %v4402 = vlaneseq
      %v4403 = vshrl.u32 %v4402, 7
      %v4404 = vsub.s32 %v4401, %v4403
      %v4405 = vrot.slane %v4391, %v4404
      %v4406 = vcombine.high %v4398, %v4398
      %v4407 = vcombine.high %v4405, %v4405
      %v4408 = vcombine.high %v4168, %v4168
      %v4410 = vunpack.c.l.s4 1983009808
      %v4411 = vunpack.c.0.s8 %v4410
      %v4412 = vlaneseq
      %v4413 = vshrl.u32 %v4412, 7
      %v4414 = vsub.s32 %v4411, %v4413
      %v4415 = vrot.slane %v4168, %v4414
      %v4417 = vunpack.c.l.s4 1983009808
      %v4418 = vunpack.c.0.s8 %v4417
      %v4419 = vlaneseq
      %v4420 = vshrl.u32 %v4419, 7
      %v4421 = vsub.s32 %v4418, %v4420
      %v4422 = vrot.slane %v4408, %v4421
      %v4423 = vcombine.high %v4415, %v4415
      %v4424 = vcombine.high %v4422, %v4422
      %v4425 = vcombine.high %v4169, %v4169
      %v4427 = vunpack.c.l.s4 1983009808
      %v4428 = vunpack.c.0.s8 %v4427
      %v4429 = vlaneseq
      %v4430 = vshrl.u32 %v4429, 7
      %v4431 = vsub.s32 %v4428, %v4430
      %v4432 = vrot.slane %v4169, %v4431
      %v4434 = vunpack.c.l.s4 1983009808
      %v4435 = vunpack.c.0.s8 %v4434
      %v4436 = vlaneseq
      %v4437 = vshrl.u32 %v4436, 7
      %v4438 = vsub.s32 %v4435, %v4437
      %v4439 = vrot.slane %v4425, %v4438
      %v4440 = vcombine.high %v4432, %v4432
      %v4441 = vcombine.high %v4439, %v4439
      %v4442 = vcombine.high %v4170, %v4170
      %v4444 = vunpack.c.l.s4 1983009808
      %v4445 = vunpack.c.0.s8 %v4444
      %v4446 = vlaneseq
      %v4447 = vshrl.u32 %v4446, 7
      %v4448 = vsub.s32 %v4445, %v4447
      %v4449 = vrot.slane %v4170, %v4448
      %v4451 = vunpack.c.l.s4 1983009808
      %v4452 = vunpack.c.0.s8 %v4451
      %v4453 = vlaneseq
      %v4454 = vshrl.u32 %v4453, 7
      %v4455 = vsub.s32 %v4452, %v4454
      %v4456 = vrot.slane %v4442, %v4455
      %v4457 = vcombine.high %v4449, %v4449
      %v4458 = vcombine.high %v4456, %v4456
      %v4523 = vrot.slane %v4194, 7
      %v4524 = vrot.slane %v4523, 2
      %v4525 = vrot.slane %v4202, 7
      %v4526 = vrot.slane %v4525, 2
      %v4527 = vrot.slane %v4201, 7
      %v4528 = vrot.slane %v4527, 2
      %v4529 = vrot.slane %v4203, 7
      %v4530 = vrot.slane %v4529, 2
      %v4531 = vrot.slane %v4211, 7
      %v4532 = vrot.slane %v4531, 2
      %v4533 = vrot.slane %v4219, 7
      %v4534 = vrot.slane %v4533, 2
      %v4535 = vrot.slane %v4218, 7
      %v4536 = vrot.slane %v4535, 2
      %v4537 = vrot.slane %v4220, 7
      %v4538 = vrot.slane %v4537, 2
      %v4539 = vrot.slane %v4228, 7
      %v4540 = vrot.slane %v4539, 2
      %v4541 = vrot.slane %v4236, 7
      %v4542 = vrot.slane %v4541, 2
      %v4543 = vrot.slane %v4235, 7
      %v4544 = vrot.slane %v4543, 2
      %v4545 = vrot.slane %v4237, 7
      %v4546 = vrot.slane %v4545, 2
      %v4547 = vrot.slane %v4245, 7
      %v4548 = vrot.slane %v4547, 2
      %v4549 = vrot.slane %v4253, 7
      %v4550 = vrot.slane %v4549, 2
      %v4551 = vrot.slane %v4252, 7
      %v4552 = vrot.slane %v4551, 2
      %v4553 = vrot.slane %v4254, 7
      %v4554 = vrot.slane %v4553, 2
      %v4555 = vrot.slane %v4262, 7
      %v4556 = vrot.slane %v4555, 2
      %v4557 = vrot.slane %v4270, 7
      %v4558 = vrot.slane %v4557, 2
      %v4559 = vrot.slane %v4269, 7
      %v4560 = vrot.slane %v4559, 2
      %v4561 = vrot.slane %v4271, 7
      %v4562 = vrot.slane %v4561, 2
      %v4563 = vrot.slane %v4279, 7
      %v4564 = vrot.slane %v4563, 2
      %v4565 = vrot.slane %v4287, 7
      %v4566 = vrot.slane %v4565, 2
      %v4567 = vrot.slane %v4286, 7
      %v4568 = vrot.slane %v4567, 2
      %v4569 = vrot.slane %v4288, 7
      %v4570 = vrot.slane %v4569, 2
      %v4571 = vrot.slane %v4296, 7
      %v4572 = vrot.slane %v4571, 2
      %v4573 = vrot.slane %v4304, 7
      %v4574 = vrot.slane %v4573, 2
      %v4575 = vrot.slane %v4303, 7
      %v4576 = vrot.slane %v4575, 2
      %v4577 = vrot.slane %v4305, 7
      %v4578 = vrot.slane %v4577, 2
      %v4579 = vrot.slane %v4313, 7
      %v4580 = vrot.slane %v4579, 2
      %v4581 = vrot.slane %v4321, 7
      %v4582 = vrot.slane %v4581, 2
      %v4583 = vrot.slane %v4320, 7
      %v4584 = vrot.slane %v4583, 2
      %v4585 = vrot.slane %v4322, 7
      %v4586 = vrot.slane %v4585, 2
      %v4587 = vrot.slane %v4330, 7
      %v4588 = vrot.slane %v4587, 2
      %v4589 = vrot.slane %v4338, 7
      %v4590 = vrot.slane %v4589, 2
      %v4591 = vrot.slane %v4337, 7
      %v4592 = vrot.slane %v4591, 2
      %v4593 = vrot.slane %v4339, 7
      %v4594 = vrot.slane %v4593, 2
      %v4595 = vrot.slane %v4347, 7
      %v4596 = vrot.slane %v4595, 2
      %v4597 = vrot.slane %v4355, 7
      %v4598 = vrot.slane %v4597, 2
      %v4599 = vrot.slane %v4354, 7
      %v4600 = vrot.slane %v4599, 2
      %v4601 = vrot.slane %v4356, 7
      %v4602 = vrot.slane %v4601, 2
      %v4603 = vrot.slane %v4364, 7
      %v4604 = vrot.slane %v4603, 2
      %v4605 = vrot.slane %v4372, 7
      %v4606 = vrot.slane %v4605, 2
      %v4607 = vrot.slane %v4371, 7
      %v4608 = vrot.slane %v4607, 2
      %v4609 = vrot.slane %v4373, 7
      %v4610 = vrot.slane %v4609, 2
      %v4611 = vrot.slane %v4381, 7
      %v4612 = vrot.slane %v4611, 2
      %v4613 = vrot.slane %v4389, 7
      %v4614 = vrot.slane %v4613, 2
      %v4615 = vrot.slane %v4388, 7
      %v4616 = vrot.slane %v4615, 2
      %v4617 = vrot.slane %v4390, 7
      %v4618 = vrot.slane %v4617, 2
      %v4619 = vrot.slane %v4398, 7
      %v4620 = vrot.slane %v4619, 2
      %v4621 = vrot.slane %v4406, 7
      %v4622 = vrot.slane %v4621, 2
      %v4623 = vrot.slane %v4405, 7
      %v4624 = vrot.slane %v4623, 2
      %v4625 = vrot.slane %v4407, 7
      %v4626 = vrot.slane %v4625, 2
      %v4627 = vrot.slane %v4415, 7
      %v4628 = vrot.slane %v4627, 2
      %v4629 = vrot.slane %v4423, 7
      %v4630 = vrot.slane %v4629, 2
      %v4631 = vrot.slane %v4422, 7
      %v4632 = vrot.slane %v4631, 2
      %v4633 = vrot.slane %v4424, 7
      %v4634 = vrot.slane %v4633, 2
      %v4635 = vrot.slane %v4432, 7
      %v4636 = vrot.slane %v4635, 2
      %v4637 = vrot.slane %v4440, 7
      %v4638 = vrot.slane %v4637, 2
      %v4639 = vrot.slane %v4439, 7
      %v4640 = vrot.slane %v4639, 2
      %v4641 = vrot.slane %v4441, 7
      %v4642 = vrot.slane %v4641, 2
      %v4643 = vrot.slane %v4449, 7
      %v4644 = vrot.slane %v4643, 2
      %v4645 = vrot.slane %v4457, 7
      %v4646 = vrot.slane %v4645, 2
      %v4647 = vrot.slane %v4456, 7
      %v4648 = vrot.slane %v4647, 2
      %v4649 = vrot.slane %v4458, 7
      %v4650 = vrot.slane %v4649, 2
      %v4715 = vmax.f32 %v4194, %v4524
      %v4716 = vmax.f32 %v4202, %v4526
      %v4717 = vmax.f32 %v4201, %v4528
      %v4718 = vmax.f32 %v4203, %v4530
      %v4719 = vmax.f32 %v4211, %v4532
      %v4720 = vmax.f32 %v4219, %v4534
      %v4721 = vmax.f32 %v4218, %v4536
      %v4722 = vmax.f32 %v4220, %v4538
      %v4723 = vmax.f32 %v4228, %v4540
      %v4724 = vmax.f32 %v4236, %v4542
      %v4725 = vmax.f32 %v4235, %v4544
      %v4726 = vmax.f32 %v4237, %v4546
      %v4727 = vmax.f32 %v4245, %v4548
      %v4728 = vmax.f32 %v4253, %v4550
      %v4729 = vmax.f32 %v4252, %v4552
      %v4730 = vmax.f32 %v4254, %v4554
      %v4731 = vmax.f32 %v4262, %v4556
      %v4732 = vmax.f32 %v4270, %v4558
      %v4733 = vmax.f32 %v4269, %v4560
      %v4734 = vmax.f32 %v4271, %v4562
      %v4735 = vmax.f32 %v4279, %v4564
      %v4736 = vmax.f32 %v4287, %v4566
      %v4737 = vmax.f32 %v4286, %v4568
      %v4738 = vmax.f32 %v4288, %v4570
      %v4739 = vmax.f32 %v4296, %v4572
      %v4740 = vmax.f32 %v4304, %v4574
      %v4741 = vmax.f32 %v4303, %v4576
      %v4742 = vmax.f32 %v4305, %v4578
      %v4743 = vmax.f32 %v4313, %v4580
      %v4744 = vmax.f32 %v4321, %v4582
      %v4745 = vmax.f32 %v4320, %v4584
      %v4746 = vmax.f32 %v4322, %v4586
      %v4747 = vmax.f32 %v4330, %v4588
      %v4748 = vmax.f32 %v4338, %v4590
      %v4749 = vmax.f32 %v4337, %v4592
      %v4750 = vmax.f32 %v4339, %v4594
      %v4751 = vmax.f32 %v4347, %v4596
      %v4752 = vmax.f32 %v4355, %v4598
      %v4753 = vmax.f32 %v4354, %v4600
      %v4754 = vmax.f32 %v4356, %v4602
      %v4755 = vmax.f32 %v4364, %v4604
      %v4756 = vmax.f32 %v4372, %v4606
      %v4757 = vmax.f32 %v4371, %v4608
      %v4758 = vmax.f32 %v4373, %v4610
      %v4759 = vmax.f32 %v4381, %v4612
      %v4760 = vmax.f32 %v4389, %v4614
      %v4761 = vmax.f32 %v4388, %v4616
      %v4762 = vmax.f32 %v4390, %v4618
      %v4763 = vmax.f32 %v4398, %v4620
      %v4764 = vmax.f32 %v4406, %v4622
      %v4765 = vmax.f32 %v4405, %v4624
      %v4766 = vmax.f32 %v4407, %v4626
      %v4767 = vmax.f32 %v4415, %v4628
      %v4768 = vmax.f32 %v4423, %v4630
      %v4769 = vmax.f32 %v4422, %v4632
      %v4770 = vmax.f32 %v4424, %v4634
      %v4771 = vmax.f32 %v4432, %v4636
      %v4772 = vmax.f32 %v4440, %v4638
      %v4773 = vmax.f32 %v4439, %v4640
      %v4774 = vmax.f32 %v4441, %v4642
      %v4775 = vmax.f32 %v4449, %v4644
      %v4776 = vmax.f32 %v4457, %v4646
      %v4777 = vmax.f32 %v4456, %v4648
      %v4778 = vmax.f32 %v4458, %v4650
      %v4779 = vpack.c.bf16 %v4715, %v4715
      %v4780 = vpack.c.bf16 %v4716, %v4716
      %v4781 = vpack.c.bf16 %v4717, %v4717
      %v4782 = vpack.c.bf16 %v4718, %v4718
      %v4783 = vpack.c.bf16 %v4719, %v4719
      %v4784 = vpack.c.bf16 %v4720, %v4720
      %v4785 = vpack.c.bf16 %v4721, %v4721
      %v4786 = vpack.c.bf16 %v4722, %v4722
      %v4787 = vpack.c.bf16 %v4723, %v4723
      %v4788 = vpack.c.bf16 %v4724, %v4724
      %v4789 = vpack.c.bf16 %v4725, %v4725
      %v4790 = vpack.c.bf16 %v4726, %v4726
      %v4791 = vpack.c.bf16 %v4727, %v4727
      %v4792 = vpack.c.bf16 %v4728, %v4728
      %v4793 = vpack.c.bf16 %v4729, %v4729
      %v4794 = vpack.c.bf16 %v4730, %v4730
      %v4795 = vpack.c.bf16 %v4731, %v4731
      %v4796 = vpack.c.bf16 %v4732, %v4732
      %v4797 = vpack.c.bf16 %v4733, %v4733
      %v4798 = vpack.c.bf16 %v4734, %v4734
      %v4799 = vpack.c.bf16 %v4735, %v4735
      %v4800 = vpack.c.bf16 %v4736, %v4736
      %v4801 = vpack.c.bf16 %v4737, %v4737
      %v4802 = vpack.c.bf16 %v4738, %v4738
      %v4803 = vpack.c.bf16 %v4739, %v4739
      %v4804 = vpack.c.bf16 %v4740, %v4740
      %v4805 = vpack.c.bf16 %v4741, %v4741
      %v4806 = vpack.c.bf16 %v4742, %v4742
      %v4807 = vpack.c.bf16 %v4743, %v4743
      %v4808 = vpack.c.bf16 %v4744, %v4744
      %v4809 = vpack.c.bf16 %v4745, %v4745
      %v4810 = vpack.c.bf16 %v4746, %v4746
      %v4811 = vpack.c.bf16 %v4747, %v4747
      %v4812 = vpack.c.bf16 %v4748, %v4748
      %v4813 = vpack.c.bf16 %v4749, %v4749
      %v4814 = vpack.c.bf16 %v4750, %v4750
      %v4815 = vpack.c.bf16 %v4751, %v4751
      %v4816 = vpack.c.bf16 %v4752, %v4752
      %v4817 = vpack.c.bf16 %v4753, %v4753
      %v4818 = vpack.c.bf16 %v4754, %v4754
      %v4819 = vpack.c.bf16 %v4755, %v4755
      %v4820 = vpack.c.bf16 %v4756, %v4756
      %v4821 = vpack.c.bf16 %v4757, %v4757
      %v4822 = vpack.c.bf16 %v4758, %v4758
      %v4823 = vpack.c.bf16 %v4759, %v4759
      %v4824 = vpack.c.bf16 %v4760, %v4760
      %v4825 = vpack.c.bf16 %v4761, %v4761
      %v4826 = vpack.c.bf16 %v4762, %v4762
      %v4827 = vpack.c.bf16 %v4763, %v4763
      %v4828 = vpack.c.bf16 %v4764, %v4764
      %v4829 = vpack.c.bf16 %v4765, %v4765
      %v4830 = vpack.c.bf16 %v4766, %v4766
      %v4831 = vpack.c.bf16 %v4767, %v4767
      %v4832 = vpack.c.bf16 %v4768, %v4768
      %v4833 = vpack.c.bf16 %v4769, %v4769
      %v4834 = vpack.c.bf16 %v4770, %v4770
      %v4835 = vpack.c.bf16 %v4771, %v4771
      %v4836 = vpack.c.bf16 %v4772, %v4772
      %v4837 = vpack.c.bf16 %v4773, %v4773
      %v4838 = vpack.c.bf16 %v4774, %v4774
      %v4839 = vpack.c.bf16 %v4775, %v4775
      %v4840 = vpack.c.bf16 %v4776, %v4776
      %v4841 = vpack.c.bf16 %v4777, %v4777
      %v4842 = vpack.c.bf16 %v4778, %v4778
      %v4907 = vunpack.c.l.b16 %v4779
      %v4908 = vunpack.c.l.b16 %v4780
      %v4909 = vunpack.c.l.b16 %v4781
      %v4910 = vunpack.c.l.b16 %v4782
      %v4911 = vunpack.c.l.b16 %v4783
      %v4912 = vunpack.c.l.b16 %v4784
      %v4913 = vunpack.c.l.b16 %v4785
      %v4914 = vunpack.c.l.b16 %v4786
      %v4915 = vunpack.c.l.b16 %v4787
      %v4916 = vunpack.c.l.b16 %v4788
      %v4917 = vunpack.c.l.b16 %v4789
      %v4918 = vunpack.c.l.b16 %v4790
      %v4919 = vunpack.c.l.b16 %v4791
      %v4920 = vunpack.c.l.b16 %v4792
      %v4921 = vunpack.c.l.b16 %v4793
      %v4922 = vunpack.c.l.b16 %v4794
      %v4923 = vunpack.c.l.b16 %v4795
      %v4924 = vunpack.c.l.b16 %v4796
      %v4925 = vunpack.c.l.b16 %v4797
      %v4926 = vunpack.c.l.b16 %v4798
      %v4927 = vunpack.c.l.b16 %v4799
      %v4928 = vunpack.c.l.b16 %v4800
      %v4929 = vunpack.c.l.b16 %v4801
      %v4930 = vunpack.c.l.b16 %v4802
      %v4931 = vunpack.c.l.b16 %v4803
      %v4932 = vunpack.c.l.b16 %v4804
      %v4933 = vunpack.c.l.b16 %v4805
      %v4934 = vunpack.c.l.b16 %v4806
      %v4935 = vunpack.c.l.b16 %v4807
      %v4936 = vunpack.c.l.b16 %v4808
      %v4937 = vunpack.c.l.b16 %v4809
      %v4938 = vunpack.c.l.b16 %v4810
      %v4939 = vunpack.c.l.b16 %v4811
      %v4940 = vunpack.c.l.b16 %v4812
      %v4941 = vunpack.c.l.b16 %v4813
      %v4942 = vunpack.c.l.b16 %v4814
      %v4943 = vunpack.c.l.b16 %v4815
      %v4944 = vunpack.c.l.b16 %v4816
      %v4945 = vunpack.c.l.b16 %v4817
      %v4946 = vunpack.c.l.b16 %v4818
      %v4947 = vunpack.c.l.b16 %v4819
      %v4948 = vunpack.c.l.b16 %v4820
      %v4949 = vunpack.c.l.b16 %v4821
      %v4950 = vunpack.c.l.b16 %v4822
      %v4951 = vunpack.c.l.b16 %v4823
      %v4952 = vunpack.c.l.b16 %v4824
      %v4953 = vunpack.c.l.b16 %v4825
      %v4954 = vunpack.c.l.b16 %v4826
      %v4955 = vunpack.c.l.b16 %v4827
      %v4956 = vunpack.c.l.b16 %v4828
      %v4957 = vunpack.c.l.b16 %v4829
      %v4958 = vunpack.c.l.b16 %v4830
      %v4959 = vunpack.c.l.b16 %v4831
      %v4960 = vunpack.c.l.b16 %v4832
      %v4961 = vunpack.c.l.b16 %v4833
      %v4962 = vunpack.c.l.b16 %v4834
      %v4963 = vunpack.c.l.b16 %v4835
      %v4964 = vunpack.c.l.b16 %v4836
      %v4965 = vunpack.c.l.b16 %v4837
      %v4966 = vunpack.c.l.b16 %v4838
      %v4967 = vunpack.c.l.b16 %v4839
      %v4968 = vunpack.c.l.b16 %v4840
      %v4969 = vunpack.c.l.b16 %v4841
      %v4970 = vunpack.c.l.b16 %v4842
      %v4971 = vpack.c.b16 %v4907, %v4907
      %v4972 = vpack.c.b16 %v4908, %v4908
      %v4973 = vpack.c.b16 %v4909, %v4909
      %v4974 = vpack.c.b16 %v4910, %v4910
      %v4975 = vpack.c.b16 %v4911, %v4911
      %v4976 = vpack.c.b16 %v4912, %v4912
      %v4977 = vpack.c.b16 %v4913, %v4913
      %v4978 = vpack.c.b16 %v4914, %v4914
      %v4979 = vpack.c.b16 %v4915, %v4915
      %v4980 = vpack.c.b16 %v4916, %v4916
      %v4981 = vpack.c.b16 %v4917, %v4917
      %v4982 = vpack.c.b16 %v4918, %v4918
      %v4983 = vpack.c.b16 %v4919, %v4919
      %v4984 = vpack.c.b16 %v4920, %v4920
      %v4985 = vpack.c.b16 %v4921, %v4921
      %v4986 = vpack.c.b16 %v4922, %v4922
      %v4987 = vpack.c.b16 %v4923, %v4923
      %v4988 = vpack.c.b16 %v4924, %v4924
      %v4989 = vpack.c.b16 %v4925, %v4925
      %v4990 = vpack.c.b16 %v4926, %v4926
      %v4991 = vpack.c.b16 %v4927, %v4927
      %v4992 = vpack.c.b16 %v4928, %v4928
      %v4993 = vpack.c.b16 %v4929, %v4929
      %v4994 = vpack.c.b16 %v4930, %v4930
      %v4995 = vpack.c.b16 %v4931, %v4931
      %v4996 = vpack.c.b16 %v4932, %v4932
      %v4997 = vpack.c.b16 %v4933, %v4933
      %v4998 = vpack.c.b16 %v4934, %v4934
      %v4999 = vpack.c.b16 %v4935, %v4935
      %v5000 = vpack.c.b16 %v4936, %v4936
      %v5001 = vpack.c.b16 %v4937, %v4937
      %v5002 = vpack.c.b16 %v4938, %v4938
      %v5003 = vpack.c.b16 %v4939, %v4939
      %v5004 = vpack.c.b16 %v4940, %v4940
      %v5005 = vpack.c.b16 %v4941, %v4941
      %v5006 = vpack.c.b16 %v4942, %v4942
      %v5007 = vpack.c.b16 %v4943, %v4943
      %v5008 = vpack.c.b16 %v4944, %v4944
      %v5009 = vpack.c.b16 %v4945, %v4945
      %v5010 = vpack.c.b16 %v4946, %v4946
      %v5011 = vpack.c.b16 %v4947, %v4947
      %v5012 = vpack.c.b16 %v4948, %v4948
      %v5013 = vpack.c.b16 %v4949, %v4949
      %v5014 = vpack.c.b16 %v4950, %v4950
      %v5015 = vpack.c.b16 %v4951, %v4951
      %v5016 = vpack.c.b16 %v4952, %v4952
      %v5017 = vpack.c.b16 %v4953, %v4953
      %v5018 = vpack.c.b16 %v4954, %v4954
      %v5019 = vpack.c.b16 %v4955, %v4955
      %v5020 = vpack.c.b16 %v4956, %v4956
      %v5021 = vpack.c.b16 %v4957, %v4957
      %v5022 = vpack.c.b16 %v4958, %v4958
      %v5023 = vpack.c.b16 %v4959, %v4959
      %v5024 = vpack.c.b16 %v4960, %v4960
      %v5025 = vpack.c.b16 %v4961, %v4961
      %v5026 = vpack.c.b16 %v4962, %v4962
      %v5027 = vpack.c.b16 %v4963, %v4963
      %v5028 = vpack.c.b16 %v4964, %v4964
      %v5029 = vpack.c.b16 %v4965, %v4965
      %v5030 = vpack.c.b16 %v4966, %v4966
      %v5031 = vpack.c.b16 %v4967, %v4967
      %v5032 = vpack.c.b16 %v4968, %v4968
      %v5033 = vpack.c.b16 %v4969, %v4969
      %v5034 = vpack.c.b16 %v4970, %v4970
      %v5035 = vunpack.c.l.b16 %v4971
      %v5036 = vunpack.c.l.b16 %v4972
      %v5037 = vunpack.c.l.b16 %v4973
      %v5038 = vunpack.c.l.b16 %v4974
      %v5039 = vunpack.c.l.b16 %v4975
      %v5040 = vunpack.c.l.b16 %v4976
      %v5041 = vunpack.c.l.b16 %v4977
      %v5042 = vunpack.c.l.b16 %v4978
      %v5043 = vunpack.c.l.b16 %v4979
      %v5044 = vunpack.c.l.b16 %v4980
      %v5045 = vunpack.c.l.b16 %v4981
      %v5046 = vunpack.c.l.b16 %v4982
      %v5047 = vunpack.c.l.b16 %v4983
      %v5048 = vunpack.c.l.b16 %v4984
      %v5049 = vunpack.c.l.b16 %v4985
      %v5050 = vunpack.c.l.b16 %v4986
      %v5051 = vunpack.c.l.b16 %v4987
      %v5052 = vunpack.c.l.b16 %v4988
      %v5053 = vunpack.c.l.b16 %v4989
      %v5054 = vunpack.c.l.b16 %v4990
      %v5055 = vunpack.c.l.b16 %v4991
      %v5056 = vunpack.c.l.b16 %v4992
      %v5057 = vunpack.c.l.b16 %v4993
      %v5058 = vunpack.c.l.b16 %v4994
      %v5059 = vunpack.c.l.b16 %v4995
      %v5060 = vunpack.c.l.b16 %v4996
      %v5061 = vunpack.c.l.b16 %v4997
      %v5062 = vunpack.c.l.b16 %v4998
      %v5063 = vunpack.c.l.b16 %v4999
      %v5064 = vunpack.c.l.b16 %v5000
      %v5065 = vunpack.c.l.b16 %v5001
      %v5066 = vunpack.c.l.b16 %v5002
      %v5067 = vunpack.c.l.b16 %v5003
      %v5068 = vunpack.c.l.b16 %v5004
      %v5069 = vunpack.c.l.b16 %v5005
      %v5070 = vunpack.c.l.b16 %v5006
      %v5071 = vunpack.c.l.b16 %v5007
      %v5072 = vunpack.c.l.b16 %v5008
      %v5073 = vunpack.c.l.b16 %v5009
      %v5074 = vunpack.c.l.b16 %v5010
      %v5075 = vunpack.c.l.b16 %v5011
      %v5076 = vunpack.c.l.b16 %v5012
      %v5077 = vunpack.c.l.b16 %v5013
      %v5078 = vunpack.c.l.b16 %v5014
      %v5079 = vunpack.c.l.b16 %v5015
      %v5080 = vunpack.c.l.b16 %v5016
      %v5081 = vunpack.c.l.b16 %v5017
      %v5082 = vunpack.c.l.b16 %v5018
      %v5083 = vunpack.c.l.b16 %v5019
      %v5084 = vunpack.c.l.b16 %v5020
      %v5085 = vunpack.c.l.b16 %v5021
      %v5086 = vunpack.c.l.b16 %v5022
      %v5087 = vunpack.c.l.b16 %v5023
      %v5088 = vunpack.c.l.b16 %v5024
      %v5089 = vunpack.c.l.b16 %v5025
      %v5090 = vunpack.c.l.b16 %v5026
      %v5091 = vunpack.c.l.b16 %v5027
      %v5092 = vunpack.c.l.b16 %v5028
      %v5093 = vunpack.c.l.b16 %v5029
      %v5094 = vunpack.c.l.b16 %v5030
      %v5095 = vunpack.c.l.b16 %v5031
      %v5096 = vunpack.c.l.b16 %v5032
      %v5097 = vunpack.c.l.b16 %v5033
      %v5098 = vunpack.c.l.b16 %v5034
      %v5099 = vrot.slane %v5036, 7
      %vm5100 = vcmask 1041409
      %v5101 = vsel %vm5100, %v5099, %v5035
      %v5102 = vrot.slane %v5037, 6
      %vm5103 = vcmask 1042434
      %v5104 = vsel %vm5103, %v5102, %v5101
      %v5105 = vrot.slane %v5038, 5
      %vm5106 = vcmask 1043459
      %v5107 = vsel %vm5106, %v5105, %v5104
      %v5108 = vrot.slane %v5039, 4
      %vm5109 = vcmask 1044484
      %v5110 = vsel %vm5109, %v5108, %v5107
      %v5111 = vrot.slane %v5040, 3
      %vm5112 = vcmask 1045509
      %v5113 = vsel %vm5112, %v5111, %v5110
      %v5114 = vrot.slane %v5041, 2
      %vm5115 = vcmask 1046534
      %v5116 = vsel %vm5115, %v5114, %v5113
      %v5117 = vrot.slane %v5042, 1
      %vm5118 = vcmask 1047559
      %v5119 = vsel %vm5118, %v5117, %v5116
      %v5120 = vrot.slane %v5044, 7
      %v5121 = vsel %vm5100, %v5120, %v5043
      %v5122 = vrot.slane %v5045, 6
      %v5123 = vsel %vm5103, %v5122, %v5121
      %v5124 = vrot.slane %v5046, 5
      %v5125 = vsel %vm5106, %v5124, %v5123
      %v5126 = vrot.slane %v5047, 4
      %v5127 = vsel %vm5109, %v5126, %v5125
      %v5128 = vrot.slane %v5048, 3
      %v5129 = vsel %vm5112, %v5128, %v5127
      %v5130 = vrot.slane %v5049, 2
      %v5131 = vsel %vm5115, %v5130, %v5129
      %v5132 = vrot.slane %v5050, 1
      %v5133 = vsel %vm5118, %v5132, %v5131
      %v5134 = vrot.slane %v5052, 7
      %v5135 = vsel %vm5100, %v5134, %v5051
      %v5136 = vrot.slane %v5053, 6
      %v5137 = vsel %vm5103, %v5136, %v5135
      %v5138 = vrot.slane %v5054, 5
      %v5139 = vsel %vm5106, %v5138, %v5137
      %v5140 = vrot.slane %v5055, 4
      %v5141 = vsel %vm5109, %v5140, %v5139
      %v5142 = vrot.slane %v5056, 3
      %v5143 = vsel %vm5112, %v5142, %v5141
      %v5144 = vrot.slane %v5057, 2
      %v5145 = vsel %vm5115, %v5144, %v5143
      %v5146 = vrot.slane %v5058, 1
      %v5147 = vsel %vm5118, %v5146, %v5145
      %v5148 = vrot.slane %v5060, 7
      %v5149 = vsel %vm5100, %v5148, %v5059
      %v5150 = vrot.slane %v5061, 6
      %v5151 = vsel %vm5103, %v5150, %v5149
      %v5152 = vrot.slane %v5062, 5
      %v5153 = vsel %vm5106, %v5152, %v5151
      %v5154 = vrot.slane %v5063, 4
      %v5155 = vsel %vm5109, %v5154, %v5153
      %v5156 = vrot.slane %v5064, 3
      %v5157 = vsel %vm5112, %v5156, %v5155
      %v5158 = vrot.slane %v5065, 2
      %v5159 = vsel %vm5115, %v5158, %v5157
      %v5160 = vrot.slane %v5066, 1
      %v5161 = vsel %vm5118, %v5160, %v5159
      %v5162 = vrot.slane %v5068, 7
      %v5163 = vsel %vm5100, %v5162, %v5067
      %v5164 = vrot.slane %v5069, 6
      %v5165 = vsel %vm5103, %v5164, %v5163
      %v5166 = vrot.slane %v5070, 5
      %v5167 = vsel %vm5106, %v5166, %v5165
      %v5168 = vrot.slane %v5071, 4
      %v5169 = vsel %vm5109, %v5168, %v5167
      %v5170 = vrot.slane %v5072, 3
      %v5171 = vsel %vm5112, %v5170, %v5169
      %v5172 = vrot.slane %v5073, 2
      %v5173 = vsel %vm5115, %v5172, %v5171
      %v5174 = vrot.slane %v5074, 1
      %v5175 = vsel %vm5118, %v5174, %v5173
      %v5176 = vrot.slane %v5076, 7
      %v5177 = vsel %vm5100, %v5176, %v5075
      %v5178 = vrot.slane %v5077, 6
      %v5179 = vsel %vm5103, %v5178, %v5177
      %v5180 = vrot.slane %v5078, 5
      %v5181 = vsel %vm5106, %v5180, %v5179
      %v5182 = vrot.slane %v5079, 4
      %v5183 = vsel %vm5109, %v5182, %v5181
      %v5184 = vrot.slane %v5080, 3
      %v5185 = vsel %vm5112, %v5184, %v5183
      %v5186 = vrot.slane %v5081, 2
      %v5187 = vsel %vm5115, %v5186, %v5185
      %v5188 = vrot.slane %v5082, 1
      %v5189 = vsel %vm5118, %v5188, %v5187
      %v5190 = vrot.slane %v5084, 7
      %v5191 = vsel %vm5100, %v5190, %v5083
      %v5192 = vrot.slane %v5085, 6
      %v5193 = vsel %vm5103, %v5192, %v5191
      %v5194 = vrot.slane %v5086, 5
      %v5195 = vsel %vm5106, %v5194, %v5193
      %v5196 = vrot.slane %v5087, 4
      %v5197 = vsel %vm5109, %v5196, %v5195
      %v5198 = vrot.slane %v5088, 3
      %v5199 = vsel %vm5112, %v5198, %v5197
      %v5200 = vrot.slane %v5089, 2
      %v5201 = vsel %vm5115, %v5200, %v5199
      %v5202 = vrot.slane %v5090, 1
      %v5203 = vsel %vm5118, %v5202, %v5201
      %v5204 = vrot.slane %v5092, 7
      %v5205 = vsel %vm5100, %v5204, %v5091
      %v5206 = vrot.slane %v5093, 6
      %v5207 = vsel %vm5103, %v5206, %v5205
      %v5208 = vrot.slane %v5094, 5
      %v5209 = vsel %vm5106, %v5208, %v5207
      %v5210 = vrot.slane %v5095, 4
      %v5211 = vsel %vm5109, %v5210, %v5209
      %v5212 = vrot.slane %v5096, 3
      %v5213 = vsel %vm5112, %v5212, %v5211
      %v5214 = vrot.slane %v5097, 2
      %v5215 = vsel %vm5115, %v5214, %v5213
      %v5216 = vrot.slane %v5098, 1
      %v5217 = vsel %vm5118, %v5216, %v5215
      %v5218 = vpack.c.b16 %v5119, %v5119
      %v5219 = vpack.c.b16 %v5133, %v5133
      %v5220 = vpack.c.b16 %v5147, %v5147
      %v5221 = vpack.c.b16 %v5161, %v5161
      %v5222 = vpack.c.b16 %v5175, %v5175
      %v5223 = vpack.c.b16 %v5189, %v5189
      %v5224 = vpack.c.b16 %v5203, %v5203
      %v5225 = vpack.c.b16 %v5217, %v5217
      %5234 = vst.msk [vmem:[%s204] sm:$0xf] %vm287, %v5218
      %5235 = vst.msk [vmem:[%s204 + $0x4] sm:$0xf] %vm287, %v5219
      %5236 = vst.msk [vmem:[%s204 + $0x8] sm:$0xf] %vm287, %v5220
      %5237 = vst.msk [vmem:[%s204 + $0xc] sm:$0xf] %vm287, %v5221
      %5238 = vst.msk [vmem:[%s204 + $0x10] sm:$0xf] %vm287, %v5222
      %5239 = vst.msk [vmem:[%s204 + $0x14] sm:$0xf] %vm287, %v5223
      %5240 = vst.msk [vmem:[%s204 + $0x18] sm:$0xf] %vm287, %v5224
      %5241 = vst.msk [vmem:[%s204 + $0x1c] sm:$0xf] %vm287, %v5225
      %v5242 = vld [vmem:[#allocation4] sm:$0x3]
      %5243 = vst.msk [vmem:[%s208] sm:$0x3] %vm846, %v5242
      %p5244 = scmp.lt.s32.totalorder %s16, 1
      %s5245 = scalar_select %p5244, %s16, 1
      %s5246 = smul.addr %s5245, 8
      %s5247 = smul.addr %s5246, 4
      %s5248 = scalar_lea.vmem %s3, %s5247
      %p5249 = scmp.lt.s32.totalorder %s16, 1
      %s5250 = scalar_select %p5249, %s16, 1
      %s5251 = smul.addr %s5250, 2
      %s5252 = scalar_lea.vmem %s4, %s5251
      // Predicated region
      $region33: #{down_forward.3} parent=31 // pred_check
        %p5253 = pneg %p102
      $region34: #{down_forward.3} parent=31 // pred_check_branch
        %5255 = sbr.rel (%p5253) target = $region36
      $region35: #{down_forward.3} parent=31 // pred_region
        _
      $region36: #{down_forward.3} parent=31 // pred_fallthru
        _
      // Predicated region
      $region37: #{down_forward.3} parent=31 // pred_check
        %p5256 = pneg %p128
      $region38: #{down_forward.3} parent=31 // pred_check_branch
        %5258 = sbr.rel (%p5256) target = $region40
      $region39: #{down_forward.3} parent=31 // pred_region
        _
      $region40: #{down_forward.3} parent=31 // pred_fallthru
        _
    $region32: #{down_forward.3} parent=5 // pred_fallthru
      _
    %p5259 = scmp.le.s32.totalorder 2, %s11
    // Predicated region
    $region41: #{down_forward.3} parent=5 // pred_check
      %p5260 = pneg %p5259
    $region42: #{down_forward.3} parent=5 // pred_check_branch
      %5262 = sbr.rel (%p5260) target = $region44
    $region43: #{down_forward.3} parent=5 // pred_region
      %s5263 = ssub.s32 %s11, 2
      // Predicated region
      $region45: #{down_forward.3} parent=43 // pred_check
        %p5264 = pneg %p108
      $region46: #{down_forward.3} parent=43 // pred_check_branch
        %5266 = sbr.rel (%p5264) target = $region48
      $region47: #{down_forward.3} parent=43 // pred_region
        %p5267 = scmp.lt.s32.totalorder %s17, 1
        %s5268 = scalar_select %p5267, %s17, 1
        %s5269 = smul.addr %s5268, 8
        %s5270 = smul.addr %s5269, 4
        %s5271 = scalar_lea.vmem %s3, %s5270
      $region48: #{down_forward.3} parent=43 // pred_fallthru
        _
      // Predicated region
      $region49: #{down_forward.3} parent=43 // pred_check
        %p5272 = pneg %p134
      $region50: #{down_forward.3} parent=43 // pred_check_branch
        %5274 = sbr.rel (%p5272) target = $region52
      $region51: #{down_forward.3} parent=43 // pred_region
        %p5275 = scmp.lt.s32.totalorder %s17, 1
        %s5276 = scalar_select %p5275, %s17, 1
        %s5277 = smul.addr %s5276, 2
        %s5278 = scalar_lea.vmem %s4, %s5277
      $region52: #{down_forward.3} parent=43 // pred_fallthru
        _
    $region44: #{down_forward.3} parent=5 // pred_fallthru
      _
  $region6: #{down_forward.3} parent=0 // loop_footer
    %s15 = sadd.s32 1, %s11
  $region7: #{down_forward.3} parent=0 // loop_footer_branch
    %10 = sbr.rel target = $region3
  $region8: #{down_forward.3} parent=0 // loop_exit
    _

</llo_original>
